<compile_context>
chip_gen: v5e
topology: v5e:2x2
jax: 0.10.0
libtpu: 0.0.40
codegen_flags: <defaults>
</compile_context>

<pallas_src>
import jax
import jax.numpy as jnp
from jax.experimental import pallas as pl
from jax.experimental.pallas import tpu as pltpu

# ----------------------------- configuration --------------------------------
MINIMAP_CHANNEL = 11
SCREEN_CHANNEL = 27
NONSPATIAL_PLAYER = 11
N_ACTIONS = 12                        # arglist.NUM_ACTIONS (BuildMarines subset)
NONSPATIAL_DIM = 576                  # latent_net nonspatial output dim
HIDDEN_DIM = 256
SCREEN_ACT = 64 * 64                  # actions['screen1'/'screen2'] are 64x64 maps
K_RAW = NONSPATIAL_DIM + N_ACTIONS + 2 * SCREEN_ACT   # 576 + 12 + 8192 = 8780

TK = 4480                             # K tile (multiple of 128, 4.5 MB bf16 tile)
K_PAD = 8960                          # 2 * TK, multiple of 128, only 180 pad rows
assert K_PAD >= K_RAW and K_PAD % TK == 0 and TK % 128 == 0
TWO_H = 2 * HIDDEN_DIM                # 512 (fused Q1/Q2 hidden)


# ------------------------------ Pallas kernel --------------------------------
def _critic_kernel(x_ref, w1_ref, b1_ref, w2_ref, b2_ref, q_ref, acc_ref):
    """Streaming x @ W1 accumulation with fully fused epilogue on the last step."""
    k = pl.program_id(0)

    @pl.when(k == 0)
    def _():
        acc_ref[...] = jnp.zeros_like(acc_ref)

    # bf16 x bf16 -> f32 accumulation on the MXU.
    acc_ref[...] += jnp.dot(x_ref[...], w1_ref[...],
                            preferred_element_type=jnp.float32)

    @pl.when(k == pl.num_programs(0) - 1)
    def _():
        h = jnp.maximum(acc_ref[...] + b1_ref[...], 0.0)        # (B, 512)
        q_ref[...] = (jnp.dot(h, w2_ref[...],
                              preferred_element_type=jnp.float32)
                      + b2_ref[...])                             # (B, 2)


@jax.jit
def critic_heads(x, w1_packed, b1_packed, w2_packed, b2_packed):
    """x: (B, K_RAW) f32; w1_packed: (K_PAD, 512) bf16 -> (Q1, Q2) each (B, 1)."""
    B, K = x.shape
    Kp, two_h = w1_packed.shape
    nk = Kp // TK

    # Pad + cast activations once (tiny), so the kernel streams pure bf16.
    x_p = jnp.pad(x, ((0, 0), (0, Kp - K))).astype(jnp.bfloat16)

    bytes_accessed = (Kp * two_h * 2            # W1 stream (bf16)
                      + B * Kp * 2              # x stream (bf16)
                      + two_h * 4 + two_h * 2 * 4 + 2 * 4   # b1, W2, b2
                      + B * 2 * 4)              # output
    flops = 2 * B * Kp * two_h + 2 * B * two_h * 2

    q = pl.pallas_call(
        _critic_kernel,
        out_shape=jax.ShapeDtypeStruct((B, 2), jnp.float32),
        grid_spec=pltpu.PrefetchScalarGridSpec(
            num_scalar_prefetch=0,
            grid=(nk,),                                          # K-tile loop
            in_specs=[
                pl.BlockSpec((B, TK), lambda k: (0, k)),         # x tile
                pl.BlockSpec((TK, two_h), lambda k: (k, 0)),     # W1 tile
                pl.BlockSpec((1, two_h), lambda k: (0, 0)),      # b1 (resident)
                pl.BlockSpec((two_h, 2), lambda k: (0, 0)),      # W2 (resident)
                pl.BlockSpec((1, 2), lambda k: (0, 0)),          # b2 (resident)
            ],
            out_specs=pl.BlockSpec((B, 2), lambda k: (0, 0)),    # fused Q1|Q2
            scratch_shapes=[pltpu.VMEM((B, two_h), jnp.float32)],
        ),
        compiler_params=pltpu.CompilerParams(
            dimension_semantics=("arbitrary",),
            vmem_limit_bytes=24 << 20),
        cost_estimate=pl.CostEstimate(flops=flops, transcendentals=0,
                                      bytes_accessed=bytes_accessed),
    )(x_p, w1_packed, b1_packed, w2_packed, b2_packed)

    return q[:, 0:1], q[:, 1:2]


# -------------------------- latent net (plain JAX glue) -----------------------
# TODO(synk): SC2Net definition is not provided in the reference source; it is
# approximated here by a deterministic pooled-feature linear projection that
# produces the required 576-dim nonspatial vector.
def latent_net(minimaps, screens, players, last_actions, w_lat, b_lat):
    mm = jnp.mean(minimaps, axis=(2, 3))              # (B, 11)   from NCHW
    sc = jnp.mean(screens, axis=(2, 3))               # (B, 27)
    feat = jnp.concatenate([mm, sc, players, last_actions], axis=-1)
    nonspatial = jnp.tanh(feat @ w_lat + b_lat)       # (B, 576)
    return None, nonspatial


# ------------------------------ parameter init --------------------------------
def _linear_init(key, fan_in, fan_out):
    kw, kb = jax.random.split(key)
    bound = 1.0 / jnp.sqrt(jnp.float32(fan_in))
    w = jax.random.uniform(kw, (fan_in, fan_out), jnp.float32, -bound, bound)
    b = jax.random.uniform(kb, (1, fan_out), jnp.float32, -bound, bound)
    return w, b


def make_params(key):
    keys = jax.random.split(key, 5)
    lat_in = MINIMAP_CHANNEL + SCREEN_CHANNEL + NONSPATIAL_PLAYER + N_ACTIONS
    w_lat, b_lat = _linear_init(keys[0], lat_in, NONSPATIAL_DIM)
    w1a, b1a = _linear_init(keys[1], K_RAW, HIDDEN_DIM)
    w2a, b2a = _linear_init(keys[2], HIDDEN_DIM, 1)
    w1b, b1b = _linear_init(keys[3], K_RAW, HIDDEN_DIM)
    w2b, b2b = _linear_init(keys[4], HIDDEN_DIM, 1)

    # Pad + stack the big fan-in weights ONCE (outside the per-call hot path)
    # and keep them permanently in bf16 kernel layout (stream is HBM-BW bound).
    w1_packed = jnp.zeros((K_PAD, TWO_H), jnp.float32)
    w1_packed = w1_packed.at[:K_RAW, :HIDDEN_DIM].set(w1a)
    w1_packed = w1_packed.at[:K_RAW, HIDDEN_DIM:].set(w1b)
    w1_packed = w1_packed.astype(jnp.bfloat16)
    b1_packed = jnp.concatenate([b1a, b1b], axis=-1)                 # (1, 512)

    # Block-diagonal (512, 2) head weight so both 256->1 heads fuse into one dot.
    w2_packed = jnp.zeros((TWO_H, 2), jnp.float32)
    w2_packed = w2_packed.at[:HIDDEN_DIM, 0:1].set(w2a)
    w2_packed = w2_packed.at[HIDDEN_DIM:, 1:2].set(w2b)
    b2_packed = jnp.concatenate([b2a, b2b], axis=-1)                 # (1, 2)

    return dict(
        w_lat=w_lat, b_lat=b_lat,
        # kernel-layout weights (used by the forward pass)
        w1_packed=w1_packed, b1_packed=b1_packed,
        w2_packed=w2_packed, b2_packed=b2_packed,
        # f32 master copies (reference check / checkpointing)
        w1a=w1a, b1a=b1a, w2a=w2a, b2a=b2a,
        w1b=w1b, b1b=b1b, w2b=w2b, b2b=b2b,
    )


# ------------------------------ full forward ----------------------------------
def relational_critic_forward(params, minimaps, screens, valid_actions,
                              players, last_actions, actions):
    del valid_actions  # unused in the reference forward
    screen1 = actions["screen1"].reshape(-1, SCREEN_ACT)
    screen2 = actions["screen2"].reshape(-1, SCREEN_ACT)
    _, nonspatial = latent_net(minimaps, screens, players, last_actions,
                               params["w_lat"], params["b_lat"])
    x = jnp.concatenate([nonspatial, actions["categorical"], screen1, screen2],
                        axis=-1)                                       # (B, K_RAW)
    return critic_heads(x, params["w1_packed"], params["b1_packed"],
                        params["w2_packed"], params["b2_packed"])


def relational_critic_q_value(params, minimaps, screens, valid_actions,
                              players, last_actions, actions):
    q1, _ = relational_critic_forward(params, minimaps, screens, valid_actions,
                                      players, last_actions, actions)
    return q1


def _reference_heads(x, p):
    h1 = jnp.maximum(x @ p["w1a"] + p["b1a"], 0.0)
    h2 = jnp.maximum(x @ p["w1b"] + p["b1b"], 0.0)
    return h1 @ p["w2a"] + p["b2a"], h2 @ p["w2b"] + p["b2b"]


# ---------------------------------- main --------------------------------------
if __name__ == "__main__":
    key = jax.random.PRNGKey(0)
    kp, k1, k2, k3, k4, k5, k6, k7 = jax.random.split(key, 8)

    B = 8
    SPATIAL = 16   # synthetic spatial size for the conv-style inputs

    params = make_params(kp)

    minimaps = jax.random.normal(k1, (B, MINIMAP_CHANNEL, SPATIAL, SPATIAL), jnp.float32)
    screens = jax.random.normal(k2, (B, SCREEN_CHANNEL, SPATIAL, SPATIAL), jnp.float32)
    players = jax.random.normal(k3, (B, NONSPATIAL_PLAYER), jnp.float32)
    last_actions = jax.nn.one_hot(
        jax.random.randint(k4, (B,), 0, N_ACTIONS), N_ACTIONS, dtype=jnp.float32)
    valid_actions = jnp.ones((B, N_ACTIONS), jnp.float32)
    actions = {
        "categorical": jax.nn.one_hot(
            jax.random.randint(k5, (B,), 0, N_ACTIONS), N_ACTIONS, dtype=jnp.float32),
        "screen1": jax.random.uniform(k6, (B, 64, 64), jnp.float32),
        "screen2": jax.random.uniform(k7, (B, 64, 64), jnp.float32),
    }

    q1, q2 = relational_critic_forward(params, minimaps, screens, valid_actions,
                                       players, last_actions, actions)
    q1 = jax.block_until_ready(q1)
    q2 = jax.block_until_ready(q2)

    # Cross-check the Pallas head against a pure-JAX f32 reference (weights and
    # activations are streamed in bf16 inside the kernel, so tolerance is loose).
    _, nonspatial = latent_net(minimaps, screens, players, last_actions,
                               params["w_lat"], params["b_lat"])
    x_ref = jnp.concatenate([nonspatial, actions["categorical"],
                             actions["screen1"].reshape(-1, SCREEN_ACT),
                             actions["screen2"].reshape(-1, SCREEN_ACT)], axis=-1)
    r1, r2 = _reference_heads(x_ref, params)
    assert q1.shape == (B, 1) and q2.shape == (B, 1)
    assert jnp.allclose(q1, r1, atol=1e-2, rtol=1e-2)
    assert jnp.allclose(q2, r2, atol=1e-2, rtol=1e-2)

    print("KERNEL_OK")
</pallas_src>

<mosaic_0001>
module attributes {stable_mosaic.version = 11 : i64} {
  func.func @_critic_kernel(%arg0: i32, %arg1: memref<8x4480xbf16, #tpu.memory_space<vmem>>, %arg2: memref<4480x512xbf16, #tpu.memory_space<vmem>>, %arg3: memref<1x512xf32, #tpu.memory_space<vmem>>, %arg4: memref<512x2xf32, #tpu.memory_space<vmem>>, %arg5: memref<1x2xf32, #tpu.memory_space<vmem>>, %arg6: memref<8x2xf32, #tpu.memory_space<vmem>>, %arg7: memref<8x512xf32, #tpu.memory_space<vmem>>) attributes {dimension_semantics = [#tpu.dimension_semantics<arbitrary>], iteration_bounds = array<i64: 2>, scalar_prefetch = 0 : i64, scratch_operands = 1 : i64, tpu.core_type = #tpu.core_type<tc>, window_params = [{transform_indices = @transform_0, window_bounds = array<i64: 8, 4480>}, {transform_indices = @transform_1, window_bounds = array<i64: 4480, 512>}, {pipeline_mode = #tpu.pipeline_mode<synchronous>, transform_indices = @transform_2, window_bounds = array<i64: 1, 512>}, {pipeline_mode = #tpu.pipeline_mode<synchronous>, transform_indices = @transform_3, window_bounds = array<i64: 512, 2>}, {pipeline_mode = #tpu.pipeline_mode<synchronous>, transform_indices = @transform_4, window_bounds = array<i64: 1, 2>}, {pipeline_mode = #tpu.pipeline_mode<synchronous>, transform_indices = @transform_5, window_bounds = array<i64: 8, 2>}]} {
    %c0_i32 = arith.constant 0 : i32
    %0 = arith.cmpi eq, %arg0, %c0_i32 : i32
    %1 = arith.extui %0 : i1 to i32
    %c0_i32_0 = arith.constant 0 : i32
    %2 = arith.cmpi ne, %1, %c0_i32_0 : i32
    scf.if %2 {
      %cst_9 = arith.constant 0.000000e+00 : f32
      %12 = vector.broadcast %cst_9 : f32 to vector<8x512xf32>
      %c0_10 = arith.constant 0 : index
      %c0_11 = arith.constant 0 : index
      %13 = vector.load %arg7[%c0_10, %c0_11] : memref<8x512xf32, #tpu.memory_space<vmem>>, vector<8x512xf32>
      tpu.vector_store %arg7[%c0_10, %c0_11], %12 {strides = array<i32>} : memref<8x512xf32, #tpu.memory_space<vmem>>, vector<8x512xf32>,
    } else {
    }
    %c0 = arith.constant 0 : index
    %c0_1 = arith.constant 0 : index
    %3 = vector.load %arg7[%c0, %c0_1] : memref<8x512xf32, #tpu.memory_space<vmem>>, vector<8x512xf32>
    %c0_2 = arith.constant 0 : index
    %c0_3 = arith.constant 0 : index
    %4 = vector.load %arg1[%c0_2, %c0_3] : memref<8x4480xbf16, #tpu.memory_space<vmem>>, vector<8x4480xbf16>
    %c0_4 = arith.constant 0 : index
    %c0_5 = arith.constant 0 : index
    %5 = vector.load %arg2[%c0_4, %c0_5] : memref<4480x512xbf16, #tpu.memory_space<vmem>>, vector<4480x512xbf16>
    %cst = arith.constant dense<0.000000e+00> : vector<8x512xf32>
    %6 = tpu.matmul %4, %5, %cst {dimension_numbers = #tpu.dot_dimension_numbers<[1], [0], [0], [1], [0, 0, 1, 1], [], []>} : vector<8x4480xbf16>, vector<4480x512xbf16>, vector<8x512xf32> -> vector<8x512xf32>
    %7 = arith.addf %3, %6 : vector<8x512xf32>
    %c0_6 = arith.constant 0 : index
    %c0_7 = arith.constant 0 : index
    %8 = vector.load %arg7[%c0_6, %c0_7] : memref<8x512xf32, #tpu.memory_space<vmem>>, vector<8x512xf32>
    tpu.vector_store %arg7[%c0_6, %c0_7], %7 {strides = array<i32>} : memref<8x512xf32, #tpu.memory_space<vmem>>, vector<8x512xf32>,
    %c1_i32 = arith.constant 1 : i32
    %9 = arith.cmpi eq, %arg0, %c1_i32 : i32
    %10 = arith.extui %9 : i1 to i32
    %c0_i32_8 = arith.constant 0 : i32
    %11 = arith.cmpi ne, %10, %c0_i32_8 : i32
    scf.if %11 {
      %c0_9 = arith.constant 0 : index
      %c0_10 = arith.constant 0 : index
      %12 = vector.load %arg7[%c0_9, %c0_10] : memref<8x512xf32, #tpu.memory_space<vmem>>, vector<8x512xf32>
      %c0_11 = arith.constant 0 : index
      %c0_12 = arith.constant 0 : index
      %13 = vector.load %arg3[%c0_11, %c0_12] : memref<1x512xf32, #tpu.memory_space<vmem>>, vector<1x512xf32>
      %14 = vector.broadcast %13 : vector<1x512xf32> to vector<8x512xf32>
      %15 = arith.addf %12, %14 : vector<8x512xf32>
      %cst_13 = arith.constant 0.000000e+00 : f32
      %16 = vector.broadcast %cst_13 : f32 to vector<8x512xf32>
      %17 = arith.maximumf %15, %16 : vector<8x512xf32>
      %c0_14 = arith.constant 0 : index
      %c0_15 = arith.constant 0 : index
      %18 = vector.load %arg4[%c0_14, %c0_15] : memref<512x2xf32, #tpu.memory_space<vmem>>, vector<512x2xf32>
      %cst_16 = arith.constant dense<0.000000e+00> : vector<8x2xf32>
      %19 = tpu.matmul %17, %18, %cst_16 {dimension_numbers = #tpu.dot_dimension_numbers<[1], [0], [0], [1], [0, 0, 1, 1], [], []>} : vector<8x512xf32>, vector<512x2xf32>, vector<8x2xf32> -> vector<8x2xf32>
      %c0_17 = arith.constant 0 : index
      %c0_18 = arith.constant 0 : index
      %20 = vector.load %arg5[%c0_17, %c0_18] : memref<1x2xf32, #tpu.memory_space<vmem>>, vector<1x2xf32>
      %21 = vector.broadcast %20 : vector<1x2xf32> to vector<8x2xf32>
      %22 = arith.addf %19, %21 : vector<8x2xf32>
      %c0_19 = arith.constant 0 : index
      %c0_20 = arith.constant 0 : index
      %23 = vector.load %arg6[%c0_19, %c0_20] : memref<8x2xf32, #tpu.memory_space<vmem>>, vector<8x2xf32>
      tpu.vector_store %arg6[%c0_19, %c0_20], %22 {strides = array<i32>} : memref<8x2xf32, #tpu.memory_space<vmem>>, vector<8x2xf32>,
    } else {
    }
    return
  }
  func.func @transform_0(%arg0: i32) -> (i32, i32) {
    %c0_i32 = arith.constant 0 : i32
    %c0_i32_0 = arith.constant 0 : i32
    return %c0_i32, %arg0 : i32, i32
  }
  func.func @transform_1(%arg0: i32) -> (i32, i32) {
    %c0_i32 = arith.constant 0 : i32
    %c0_i32_0 = arith.constant 0 : i32
    return %arg0, %c0_i32 : i32, i32
  }
  func.func @transform_2(%arg0: i32) -> (i32, i32) {
    %c0_i32 = arith.constant 0 : i32
    %c0_i32_0 = arith.constant 0 : i32
    %c0_i32_1 = arith.constant 0 : i32
    return %c0_i32, %c0_i32_0 : i32, i32
  }
  func.func @transform_3(%arg0: i32) -> (i32, i32) {
    %c0_i32 = arith.constant 0 : i32
    %c0_i32_0 = arith.constant 0 : i32
    %c0_i32_1 = arith.constant 0 : i32
    return %c0_i32, %c0_i32_0 : i32, i32
  }
  func.func @transform_4(%arg0: i32) -> (i32, i32) {
    %c0_i32 = arith.constant 0 : i32
    %c0_i32_0 = arith.constant 0 : i32
    %c0_i32_1 = arith.constant 0 : i32
    return %c0_i32, %c0_i32_0 : i32, i32
  }
  func.func @transform_5(%arg0: i32) -> (i32, i32) {
    %c0_i32 = arith.constant 0 : i32
    %c0_i32_0 = arith.constant 0 : i32
    %c0_i32_1 = arith.constant 0 : i32
    return %c0_i32, %c0_i32_0 : i32, i32
  }
}

</mosaic_0001>

<llo_original>
// kernel: critic_heads.1
$region0: #{critic_heads.1}
  #allocation0 [shape = 'u32[]', space=smem, size = 0x4, offset = 0x4, fixed_abs, tag = 'smem constant byte address 0x4 - core index']
  #allocation1 [shape = 'u32[72,128]{1,0:T(1,128)}', space=vmem, size = 0x9000, scoped, tag = 'internal scratch']
  #allocation2 [shape = 'f32[8,512]{1,0:T(8,128)}', space=vmem, size = 0x4000, scoped, tag = 'scratch operand']
  %s0 = inlined_call_operand.vmem [shape: bf16[8,8960], index: 0, kind: input, shape index: {}]
  %s1 = inlined_call_operand.hbm [shape: bf16[8960,512], index: 1, kind: input, shape index: {}]
  %s2 = inlined_call_operand.hbm [shape: f32[1,512], index: 2, kind: input, shape index: {}]
  %s3 = inlined_call_operand.vmem [shape: f32[512,2], index: 3, kind: input, shape index: {}]
  %s4 = inlined_call_operand.hbm [shape: f32[1,2], index: 4, kind: input, shape index: {}]
  %s5 = inlined_call_operand.vmem [shape: f32[8,2], index: 5, kind: output, shape index: {}]
  %s6 = sld [smem:[#allocation0]]
  $region73: #{critic_heads.1} parent=0
    _
  %s8 = ssub.s32 1, %s6
  %s9 = scalar_select 0, %s8, %s6
  $region1: #{critic_heads.1} parent=0
    #allocation3 [shape = 'u8[9175040]{0}', space=vmem, size = 0x8c0000, scoped, tag = 'input window, operand 1']
    #allocation4 [shape = 's32[2]{0}', space=sflag, size = 0x8, scoped, tag = 'scoped memory for critic_heads.1']
    #allocation5 [shape = 'u8[2048]{0}', space=vmem, size = 0x800, scoped, tag = 'input window, operand 2, single buffered']
    #allocation6 [shape = 's32[1]{0}', space=sflag, size = 0x4, scoped, tag = 'scoped memory for critic_heads.1']
    #allocation7 [shape = 'u8[512]{0}', space=vmem, size = 0x400, scoped, tag = 'input window, operand 4, single buffered']
    %10 = vsyncpa [#allocation4], 0
    %s11 = scalar_lea.sflag [#allocation4], 1
    %12 = vsyncpa %s11, 0
    %13 = vsyncpa [#allocation6], 0
    loop: start=0, step=1, limit=4
    $region2: #{critic_heads.1} parent=1 // loop_pre_header
      _
    $region3: #{critic_heads.1} parent=1 // loop_header
      %s15 = sphi 0, %s19
      %p16 = scmp.ge.s32.totalorder %s15, 4
      %s25 = sphi 0, %s27
      %s28 = sphi 0, %s25
      %s29 = sphi 0, %s28
      %s45 = sphi 0, %s29
      %s51 = sphi 0, %s53
      %s54 = sphi 0, %s51
      %s55 = sphi 0, %s54
      %s71 = sphi 0, %s55
      %s75 = sphi 0, %s75
      %s77 = sphi 0, %s75
      %s78 = sphi 0, %s77
      %s92 = sphi 0, %s78
      %s96 = sphi 0, %s96
      %s98 = sphi 0, %s96
      %s99 = sphi 0, %s98
      %s113 = sphi 0, %s99
      %s117 = sphi 0, %s117
      %s119 = sphi 0, %s117
      %s120 = sphi 0, %s119
      %s134 = sphi 0, %s120
      %s138 = sphi 0, %s138
      %s140 = sphi 0, %s138
      %s141 = sphi 0, %s140
      %s155 = sphi 0, %s141
    $region4: #{critic_heads.1} parent=1 // loop_header_branch
      %18 = sbr.rel (%p16) target = $region8
    $region5: #{critic_heads.1} parent=1 // loop_body
      %s20 = ssub.s32 %s15, 1
      %s21 = ssub.s32 %s15, 2
      %s22 = sadd.s32 %s15, 1
      %s23 = ssub.s32 %s15, %s22
      %p24 = scmp.eq.s32.totalorder %s23, 0
      %s26 = sadd.s32 %s25, 1
      %s27 = scalar_select %p24, %s25, %s26
      %p30 = pneg %p24
      %p31 = scmp.eq.s32.totalorder %s15, 1
      %p32 = por %p30, %p31
      %p33 = scmp.ne.s32.totalorder %s25, %s28
      %p34 = scmp.eq.s32.totalorder %s15, 0
      %p35 = por %p33, %p34
      %p36 = scmp.ne.s32.totalorder %s25, %s28
      %p37 = scmp.eq.s32.totalorder %s20, 1
      %p38 = por %p36, %p37
      %p39 = scmp.ne.s32.totalorder %s28, %s29
      %p40 = scmp.eq.s32.totalorder %s20, 0
      %p41 = por %p39, %p40
      %p42 = scmp.ne.s32.totalorder %s28, %s29
      %p43 = scmp.eq.s32.totalorder %s21, 1
      %p44 = por %p42, %p43
      %p46 = scmp.ne.s32.totalorder %s29, %s45
      %p47 = scmp.eq.s32.totalorder %s21, 0
      %p48 = por %p46, %p47
      %s49 = ssub.s32 %s15, %s22
      %p50 = scmp.eq.s32.totalorder %s49, 0
      %s52 = sadd.s32 %s51, 1
      %s53 = scalar_select %p50, %s51, %s52
      %p56 = pneg %p50
      %p57 = scmp.eq.s32.totalorder %s15, 1
      %p58 = por %p56, %p57
      %p59 = scmp.ne.s32.totalorder %s51, %s54
      %p60 = scmp.eq.s32.totalorder %s15, 0
      %p61 = por %p59, %p60
      %p62 = scmp.ne.s32.totalorder %s51, %s54
      %p63 = scmp.eq.s32.totalorder %s20, 1
      %p64 = por %p62, %p63
      %p65 = scmp.ne.s32.totalorder %s54, %s55
      %p66 = scmp.eq.s32.totalorder %s20, 0
      %p67 = por %p65, %p66
      %p68 = scmp.ne.s32.totalorder %s54, %s55
      %p69 = scmp.eq.s32.totalorder %s21, 1
      %p70 = por %p68, %p69
      %p72 = scmp.ne.s32.totalorder %s55, %s71
      %p73 = scmp.eq.s32.totalorder %s21, 0
      %p74 = por %p72, %p73
      %s76 = sadd.s32 %s75, 1
      %p79 = scmp.eq.s32.totalorder %s15, 1
      %p80 = scmp.ne.s32.totalorder %s75, %s77
      %p81 = scmp.eq.s32.totalorder %s15, 0
      %p82 = por %p80, %p81
      %p83 = scmp.ne.s32.totalorder %s75, %s77
      %p84 = scmp.eq.s32.totalorder %s20, 1
      %p85 = por %p83, %p84
      %p86 = scmp.ne.s32.totalorder %s77, %s78
      %p87 = scmp.eq.s32.totalorder %s20, 0
      %p88 = por %p86, %p87
      %p89 = scmp.ne.s32.totalorder %s77, %s78
      %p90 = scmp.eq.s32.totalorder %s21, 1
      %p91 = por %p89, %p90
      %p93 = scmp.ne.s32.totalorder %s78, %s92
      %p94 = scmp.eq.s32.totalorder %s21, 0
      %p95 = por %p93, %p94
      %s97 = sadd.s32 %s96, 1
      %p100 = scmp.eq.s32.totalorder %s15, 1
      %p101 = scmp.ne.s32.totalorder %s96, %s98
      %p102 = scmp.eq.s32.totalorder %s15, 0
      %p103 = por %p101, %p102
      %p104 = scmp.ne.s32.totalorder %s96, %s98
      %p105 = scmp.eq.s32.totalorder %s20, 1
      %p106 = por %p104, %p105
      %p107 = scmp.ne.s32.totalorder %s98, %s99
      %p108 = scmp.eq.s32.totalorder %s20, 0
      %p109 = por %p107, %p108
      %p110 = scmp.ne.s32.totalorder %s98, %s99
      %p111 = scmp.eq.s32.totalorder %s21, 1
      %p112 = por %p110, %p111
      %p114 = scmp.ne.s32.totalorder %s99, %s113
      %p115 = scmp.eq.s32.totalorder %s21, 0
      %p116 = por %p114, %p115
      %s118 = sadd.s32 %s117, 1
      %p121 = scmp.eq.s32.totalorder %s15, 1
      %p122 = scmp.ne.s32.totalorder %s117, %s119
      %p123 = scmp.eq.s32.totalorder %s15, 0
      %p124 = por %p122, %p123
      %p125 = scmp.ne.s32.totalorder %s117, %s119
      %p126 = scmp.eq.s32.totalorder %s20, 1
      %p127 = por %p125, %p126
      %p128 = scmp.ne.s32.totalorder %s119, %s120
      %p129 = scmp.eq.s32.totalorder %s20, 0
      %p130 = por %p128, %p129
      %p131 = scmp.ne.s32.totalorder %s119, %s120
      %p132 = scmp.eq.s32.totalorder %s21, 1
      %p133 = por %p131, %p132
      %p135 = scmp.ne.s32.totalorder %s120, %s134
      %p136 = scmp.eq.s32.totalorder %s21, 0
      %p137 = por %p135, %p136
      %s139 = sadd.s32 %s138, 1
      %p142 = scmp.eq.s32.totalorder %s15, 1
      %p143 = scmp.ne.s32.totalorder %s138, %s140
      %p144 = scmp.eq.s32.totalorder %s15, 0
      %p145 = por %p143, %p144
      %p146 = scmp.ne.s32.totalorder %s138, %s140
      %p147 = scmp.eq.s32.totalorder %s20, 1
      %p148 = por %p146, %p147
      %p149 = scmp.ne.s32.totalorder %s140, %s141
      %p150 = scmp.eq.s32.totalorder %s20, 0
      %p151 = por %p149, %p150
      %p152 = scmp.ne.s32.totalorder %s140, %s141
      %p153 = scmp.eq.s32.totalorder %s21, 1
      %p154 = por %p152, %p153
      %p156 = scmp.ne.s32.totalorder %s141, %s155
      %p157 = scmp.eq.s32.totalorder %s21, 0
      %p158 = por %p156, %p157
      %p159 = scmp.le.s32.totalorder 1, %s15
      %p160 = scmp.lt.s32.totalorder %s15, 3
      %p161 = pnand %p159, %p160
      %p162 = pneg %p161
      // Predicated region
      $region9: #{critic_heads.1} parent=5 // pred_check
        _
      $region10: #{critic_heads.1} parent=5 // pred_check_branch
        %164 = sbr.rel (%p161) target = $region12
      $region11: #{critic_heads.1} parent=5 // pred_region
        %s165 = ssub.s32 %s15, 1
        // Predicated region
        $region13: #{critic_heads.1} parent=11 // pred_check
          %p166 = pneg %p88
        $region14: #{critic_heads.1} parent=11 // pred_check_branch
          %168 = sbr.rel (%p166) target = $region16
        $region15: #{critic_heads.1} parent=11 // pred_region
          %170 = vsyncadd [#allocation6], 0
          %s172 = sshll.u32 %s2, 4
          %s173 = int_to_ptr.hbm [resolvable:$true] %s172
          %s174 = sshll.u32 [#allocation5], 4
          %s175 = int_to_ptr.vmem [resolvable:$true] %s174
          %177 = dma.hbm_to_vmem [thread:$0]  %s173, 64, %s175, [#allocation6]
        $region16: #{critic_heads.1} parent=11 // pred_fallthru
          _
        // Predicated region
        $region17: #{critic_heads.1} parent=11 // pred_check
          %p178 = pneg %p109
        $region18: #{critic_heads.1} parent=11 // pred_check_branch
          %180 = sbr.rel (%p178) target = $region20
        $region19: #{critic_heads.1} parent=11 // pred_region
          _
        $region20: #{critic_heads.1} parent=11 // pred_fallthru
          _
        // Predicated region
        $region21: #{critic_heads.1} parent=11 // pred_check
          %p181 = pneg %p130
        $region22: #{critic_heads.1} parent=11 // pred_check_branch
          %183 = sbr.rel (%p181) target = $region24
        $region23: #{critic_heads.1} parent=11 // pred_region
          %185 = vsyncadd [#allocation6], 0
          %s187 = sshll.u32 %s4, 4
          %s188 = int_to_ptr.hbm [resolvable:$true] %s187
          %s189 = sshll.u32 [#allocation7], 4
          %s190 = int_to_ptr.vmem [resolvable:$true] %s189
          %192 = dma.hbm_to_vmem [thread:$0]  %s188, 16, %s190, [#allocation6]
        $region24: #{critic_heads.1} parent=11 // pred_fallthru
          _
      $region12: #{critic_heads.1} parent=5 // pred_fallthru
        _
      %p193 = scmp.lt.s32.totalorder %s15, 2
      // Predicated region
      $region25: #{critic_heads.1} parent=5 // pred_check
        %p194 = pneg %p193
      $region26: #{critic_heads.1} parent=5 // pred_check_branch
        %196 = sbr.rel (%p194) target = $region28
      $region27: #{critic_heads.1} parent=5 // pred_region
        // Predicated region
        $region29: #{critic_heads.1} parent=27 // pred_check
          %p197 = pneg %p35
        $region30: #{critic_heads.1} parent=27 // pred_check_branch
          %199 = sbr.rel (%p197) target = $region32
        $region31: #{critic_heads.1} parent=27 // pred_region
          %s200 = smul.u32 35, %s15
          %p201 = scmp.lt.s32.totalorder %s200, 69
          %s202 = scalar_select %p201, %s200, 69
          %s203 = smul.addr %s202, 4
          %s204 = scalar_lea.vmem %s0, %s203
          %s205 = smul.u32 35, %s15
        $region32: #{critic_heads.1} parent=27 // pred_fallthru
          _
        // Predicated region
        $region33: #{critic_heads.1} parent=27 // pred_check
          %p206 = pneg %p61
        $region34: #{critic_heads.1} parent=27 // pred_check_branch
          %208 = sbr.rel (%p206) target = $region36
        $region35: #{critic_heads.1} parent=27 // pred_region
          %s209 = sand.u32 %s51, 1
          %s210 = scalar_lea.sflag [#allocation4], %s209
          %s211 = sand.u32 %s51, 1
          %s212 = smul.addr %s211, 8960
          %s213 = scalar_lea.vmem [#allocation3], %s212
          %s214 = smul.u32 560, %s15
          %216 = vsyncadd %s210, 0
          %s217 = smul.addr %s214, 4
          %s218 = smul.addr %s217, 4
          %s219 = scalar_lea.hbm %s1, %s218
          %s220 = sshll.u32 %s219, 4
          %s221 = int_to_ptr.hbm [resolvable:$true] %s220
          %s222 = sshll.u32 %s213, 4
          %s223 = int_to_ptr.vmem [resolvable:$true] %s222
          %228 = dma.hbm_to_vmem [thread:$0]  %s221, 143360, %s223, %s210, 256, 256, 16
        $region36: #{critic_heads.1} parent=27 // pred_fallthru
          _
      $region28: #{critic_heads.1} parent=5 // pred_fallthru
        _
      %p229 = scmp.le.s32.totalorder 1, %s15
      %p230 = scmp.lt.s32.totalorder %s15, 3
      %p231 = pnand %p229, %p230
      %p232 = pneg %p231
      // Predicated region
      $region37: #{critic_heads.1} parent=5 // pred_check
        _
      $region38: #{critic_heads.1} parent=5 // pred_check_branch
        %234 = sbr.rel (%p231) target = $region40
      $region39: #{critic_heads.1} parent=5 // pred_region
        %s235 = ssub.s32 %s15, 1
        %s236 = sand.u32 %s54, 1
        %s237 = scalar_lea.sflag [#allocation4], %s236
        %s238 = sand.u32 %s54, 1
        %s239 = smul.addr %s238, 8960
        %s240 = scalar_lea.vmem [#allocation3], %s239
        // Predicated region
        $region41: #{critic_heads.1} parent=39 // pred_check
          %p241 = pneg %p67
        $region42: #{critic_heads.1} parent=39 // pred_check_branch
          %243 = sbr.rel (%p241) target = $region44
        $region43: #{critic_heads.1} parent=39 // pred_region
          %245 = dma.done %s237, 143360
        $region44: #{critic_heads.1} parent=39 // pred_fallthru
          _
        // Predicated region
        $region45: #{critic_heads.1} parent=39 // pred_check
          %p246 = pneg %p88
        $region46: #{critic_heads.1} parent=39 // pred_check_branch
          %248 = sbr.rel (%p246) target = $region48
        $region47: #{critic_heads.1} parent=39 // pred_region
          %250 = dma.done [#allocation6], 64
        $region48: #{critic_heads.1} parent=39 // pred_fallthru
          _
        // Predicated region
        $region49: #{critic_heads.1} parent=39 // pred_check
          %p251 = pneg %p130
        $region50: #{critic_heads.1} parent=39 // pred_check_branch
          %253 = sbr.rel (%p251) target = $region52
        $region51: #{critic_heads.1} parent=39 // pred_region
          %255 = dma.done [#allocation6], 16
        $region52: #{critic_heads.1} parent=39 // pred_fallthru
          _
        %s256 = smul.u32 35, %s20
        %p257 = scmp.lt.s32.totalorder %s256, 69
        %s258 = scalar_select %p257, %s256, 69
        %s259 = smul.addr %s258, 4
        %s260 = scalar_lea.vmem %s0, %s259
        %p261 = pneg %p41
        %p262 = pneg %p38
        %s263 = sand.u32 %s54, 1
        %s264 = scalar_lea.sflag [#allocation4], %s263
        %s265 = sand.u32 %s54, 1
        %s266 = smul.addr %s265, 8960
        %s267 = scalar_lea.vmem [#allocation3], %s266
        %p268 = pneg %p67
        %p269 = pneg %p64
        %p270 = pneg %p88
        %p271 = pneg %p85
        %p272 = pneg %p109
        %p273 = pneg %p106
        %p274 = pneg %p130
        %p275 = pneg %p127
        %p276 = pneg %p151
        %p277 = pneg %p148
        %s278 = smul.u32 35, %s20
        %p279 = scmp.lt.s32.totalorder %s278, 69
        %s280 = scalar_select %p279, %s278, 69
        %s281 = smul.addr %s280, 4
        %s282 = scalar_lea.vmem %s0, %s281
        %s283 = smul.u32 35, %s20
        %s284 = smul.u32 560, %s20
        %p285 = scmp.eq.s32.totalorder %s20, 0
        // Predicated region
        $region53: #{critic_heads.1} parent=39 // pred_check
          %p286 = pneg %p285
        $region54: #{critic_heads.1} parent=39 // pred_check_branch
          %288 = sbr.rel (%p286) target = $region56
        $region55: #{critic_heads.1} parent=39 // pred_region
          %289 = vst [vmem:[#allocation2] sm:$0xff] 0.0
          %290 = vst [vmem:[#allocation2 + $0x8] sm:$0xff] 0.0
          %291 = vst [vmem:[#allocation2 + $0x10] sm:$0xff] 0.0
          %292 = vst [vmem:[#allocation2 + $0x18] sm:$0xff] 0.0
        $region56: #{critic_heads.1} parent=39 // pred_fallthru
          _
        %v293 = vld [vmem:[#allocation2] sm:$0xff]
        %v294 = vld [vmem:[#allocation2 + $0x8] sm:$0xff]
        %v295 = vld [vmem:[#allocation2 + $0x10] sm:$0xff]
        %v296 = vld [vmem:[#allocation2 + $0x18] sm:$0xff]
        %v297 = vld [vmem:[%s282] sm:$0xff]
        %v298 = vld [vmem:[%s282 + $0x8] sm:$0xff]
        %v299 = vld [vmem:[%s282 + $0x10] sm:$0xff]
        %v300 = vld [vmem:[%s282 + $0x18] sm:$0xff]
        %v301 = vld [vmem:[%s282 + $0x20] sm:$0xff]
        %v302 = vld [vmem:[%s282 + $0x28] sm:$0xff]
        %v303 = vld [vmem:[%s282 + $0x30] sm:$0xff]
        %v304 = vld [vmem:[%s282 + $0x38] sm:$0xff]
        %v305 = vld [vmem:[%s282 + $0x40] sm:$0xff]
        %v306 = vld [vmem:[%s282 + $0x48] sm:$0xff]
        %v307 = vld [vmem:[%s282 + $0x50] sm:$0xff]
        %v308 = vld [vmem:[%s282 + $0x58] sm:$0xff]
        %v309 = vld [vmem:[%s282 + $0x60] sm:$0xff]
        %v310 = vld [vmem:[%s282 + $0x68] sm:$0xff]
        %v311 = vld [vmem:[%s282 + $0x70] sm:$0xff]
        %v312 = vld [vmem:[%s282 + $0x78] sm:$0xff]
        %v313 = vld [vmem:[%s282 + $0x80] sm:$0xff]
        %v314 = vld [vmem:[%s282 + $0x88] sm:$0xf]
        %v315 = vld [vmem:[%s240] sm:$0xff]
        %v316 = vld [vmem:[%s240 + $0x8] sm:$0xff]
        %v317 = vld [vmem:[%s240 + $0x10] sm:$0xff]
        %v318 = vld [vmem:[%s240 + $0x18] sm:$0xff]
        %v319 = vld [vmem:[%s240 + $0x20] sm:$0xff]
        %v320 = vld [vmem:[%s240 + $0x28] sm:$0xff]
        %v321 = vld [vmem:[%s240 + $0x30] sm:$0xff]
        %v322 = vld [vmem:[%s240 + $0x38] sm:$0xff]
        %v323 = vld [vmem:[%s240 + $0x40] sm:$0xff]
        %v324 = vld [vmem:[%s240 + $0x48] sm:$0xff]
        %v325 = vld [vmem:[%s240 + $0x50] sm:$0xff]
        %v326 = vld [vmem:[%s240 + $0x58] sm:$0xff]
        %v327 = vld [vmem:[%s240 + $0x60] sm:$0xff]
        %v328 = vld [vmem:[%s240 + $0x68] sm:$0xff]
        %v329 = vld [vmem:[%s240 + $0x70] sm:$0xff]
        %v330 = vld [vmem:[%s240 + $0x78] sm:$0xff]
        %v331 = vld [vmem:[%s240 + $0x80] sm:$0xff]
        %v332 = vld [vmem:[%s240 + $0x88] sm:$0xff]
        %v333 = vld [vmem:[%s240 + $0x90] sm:$0xff]
        %v334 = vld [vmem:[%s240 + $0x98] sm:$0xff]
        %v335 = vld [vmem:[%s240 + $0xa0] sm:$0xff]
        %v336 = vld [vmem:[%s240 + $0xa8] sm:$0xff]
        %v337 = vld [vmem:[%s240 + $0xb0] sm:$0xff]
        %v338 = vld [vmem:[%s240 + $0xb8] sm:$0xff]
        %v339 = vld [vmem:[%s240 + $0xc0] sm:$0xff]
        %v340 = vld [vmem:[%s240 + $0xc8] sm:$0xff]
        %v341 = vld [vmem:[%s240 + $0xd0] sm:$0xff]
        %v342 = vld [vmem:[%s240 + $0xd8] sm:$0xff]
        %v343 = vld [vmem:[%s240 + $0xe0] sm:$0xff]
        %v344 = vld [vmem:[%s240 + $0xe8] sm:$0xff]
        %v345 = vld [vmem:[%s240 + $0xf0] sm:$0xff]
        %v346 = vld [vmem:[%s240 + $0xf8] sm:$0xff]
        %v347 = vld [vmem:[%s240 + $0x100] sm:$0xff]
        %v348 = vld [vmem:[%s240 + $0x108] sm:$0xff]
        %v349 = vld [vmem:[%s240 + $0x110] sm:$0xff]
        %v350 = vld [vmem:[%s240 + $0x118] sm:$0xff]
        %v351 = vld [vmem:[%s240 + $0x120] sm:$0xff]
        %v352 = vld [vmem:[%s240 + $0x128] sm:$0xff]
        %v353 = vld [vmem:[%s240 + $0x130] sm:$0xff]
        %v354 = vld [vmem:[%s240 + $0x138] sm:$0xff]
        %v355 = vld [vmem:[%s240 + $0x140] sm:$0xff]
        %v356 = vld [vmem:[%s240 + $0x148] sm:$0xff]
        %v357 = vld [vmem:[%s240 + $0x150] sm:$0xff]
        %v358 = vld [vmem:[%s240 + $0x158] sm:$0xff]
        %v359 = vld [vmem:[%s240 + $0x160] sm:$0xff]
        %v360 = vld [vmem:[%s240 + $0x168] sm:$0xff]
        %v361 = vld [vmem:[%s240 + $0x170] sm:$0xff]
        %v362 = vld [vmem:[%s240 + $0x178] sm:$0xff]
        %v363 = vld [vmem:[%s240 + $0x180] sm:$0xff]
        %v364 = vld [vmem:[%s240 + $0x188] sm:$0xff]
        %v365 = vld [vmem:[%s240 + $0x190] sm:$0xff]
        %v366 = vld [vmem:[%s240 + $0x198] sm:$0xff]
        %v367 = vld [vmem:[%s240 + $0x1a0] sm:$0xff]
        %v368 = vld [vmem:[%s240 + $0x1a8] sm:$0xff]
        %v369 = vld [vmem:[%s240 + $0x1b0] sm:$0xff]
        %v370 = vld [vmem:[%s240 + $0x1b8] sm:$0xff]
        %v371 = vld [vmem:[%s240 + $0x1c0] sm:$0xff]
        %v372 = vld [vmem:[%s240 + $0x1c8] sm:$0xff]
        %v373 = vld [vmem:[%s240 + $0x1d0] sm:$0xff]
        %v374 = vld [vmem:[%s240 + $0x1d8] sm:$0xff]
        %v375 = vld [vmem:[%s240 + $0x1e0] sm:$0xff]
        %v376 = vld [vmem:[%s240 + $0x1e8] sm:$0xff]
        %v377 = vld [vmem:[%s240 + $0x1f0] sm:$0xff]
        %v378 = vld [vmem:[%s240 + $0x1f8] sm:$0xff]
        %v379 = vld [vmem:[%s240 + $0x200] sm:$0xff]
        %v380 = vld [vmem:[%s240 + $0x208] sm:$0xff]
        %v381 = vld [vmem:[%s240 + $0x210] sm:$0xff]
        %v382 = vld [vmem:[%s240 + $0x218] sm:$0xff]
        %v383 = vld [vmem:[%s240 + $0x220] sm:$0xff]
        %v384 = vld [vmem:[%s240 + $0x228] sm:$0xff]
        %v385 = vld [vmem:[%s240 + $0x230] sm:$0xff]
        %v386 = vld [vmem:[%s240 + $0x238] sm:$0xff]
        %v387 = vld [vmem:[%s240 + $0x240] sm:$0xff]
        %v388 = vld [vmem:[%s240 + $0x248] sm:$0xff]
        %v389 = vld [vmem:[%s240 + $0x250] sm:$0xff]
        %v390 = vld [vmem:[%s240 + $0x258] sm:$0xff]
        %v391 = vld [vmem:[%s240 + $0x260] sm:$0xff]
        %v392 = vld [vmem:[%s240 + $0x268] sm:$0xff]
        %v393 = vld [vmem:[%s240 + $0x270] sm:$0xff]
        %v394 = vld [vmem:[%s240 + $0x278] sm:$0xff]
        %v395 = vld [vmem:[%s240 + $0x280] sm:$0xff]
        %v396 = vld [vmem:[%s240 + $0x288] sm:$0xff]
        %v397 = vld [vmem:[%s240 + $0x290] sm:$0xff]
        %v398 = vld [vmem:[%s240 + $0x298] sm:$0xff]
        %v399 = vld [vmem:[%s240 + $0x2a0] sm:$0xff]
        %v400 = vld [vmem:[%s240 + $0x2a8] sm:$0xff]
        %v401 = vld [vmem:[%s240 + $0x2b0] sm:$0xff]
        %v402 = vld [vmem:[%s240 + $0x2b8] sm:$0xff]
        %v403 = vld [vmem:[%s240 + $0x2c0] sm:$0xff]
        %v404 = vld [vmem:[%s240 + $0x2c8] sm:$0xff]
        %v405 = vld [vmem:[%s240 + $0x2d0] sm:$0xff]
        %v406 = vld [vmem:[%s240 + $0x2d8] sm:$0xff]
        %v407 = vld [vmem:[%s240 + $0x2e0] sm:$0xff]
        %v408 = vld [vmem:[%s240 + $0x2e8] sm:$0xff]
        %v409 = vld [vmem:[%s240 + $0x2f0] sm:$0xff]
        %v410 = vld [vmem:[%s240 + $0x2f8] sm:$0xff]
        %v411 = vld [vmem:[%s240 + $0x300] sm:$0xff]
        %v412 = vld [vmem:[%s240 + $0x308] sm:$0xff]
        %v413 = vld [vmem:[%s240 + $0x310] sm:$0xff]
        %v414 = vld [vmem:[%s240 + $0x318] sm:$0xff]
        %v415 = vld [vmem:[%s240 + $0x320] sm:$0xff]
        %v416 = vld [vmem:[%s240 + $0x328] sm:$0xff]
        %v417 = vld [vmem:[%s240 + $0x330] sm:$0xff]
        %v418 = vld [vmem:[%s240 + $0x338] sm:$0xff]
        %v419 = vld [vmem:[%s240 + $0x340] sm:$0xff]
        %v420 = vld [vmem:[%s240 + $0x348] sm:$0xff]
        %v421 = vld [vmem:[%s240 + $0x350] sm:$0xff]
        %v422 = vld [vmem:[%s240 + $0x358] sm:$0xff]
        %v423 = vld [vmem:[%s240 + $0x360] sm:$0xff]
        %v424 = vld [vmem:[%s240 + $0x368] sm:$0xff]
        %v425 = vld [vmem:[%s240 + $0x370] sm:$0xff]
        %v426 = vld [vmem:[%s240 + $0x378] sm:$0xff]
        %v427 = vld [vmem:[%s240 + $0x380] sm:$0xff]
        %v428 = vld [vmem:[%s240 + $0x388] sm:$0xff]
        %v429 = vld [vmem:[%s240 + $0x390] sm:$0xff]
        %v430 = vld [vmem:[%s240 + $0x398] sm:$0xff]
        %v431 = vld [vmem:[%s240 + $0x3a0] sm:$0xff]
        %v432 = vld [vmem:[%s240 + $0x3a8] sm:$0xff]
        %v433 = vld [vmem:[%s240 + $0x3b0] sm:$0xff]
        %v434 = vld [vmem:[%s240 + $0x3b8] sm:$0xff]
        %v435 = vld [vmem:[%s240 + $0x3c0] sm:$0xff]
        %v436 = vld [vmem:[%s240 + $0x3c8] sm:$0xff]
        %v437 = vld [vmem:[%s240 + $0x3d0] sm:$0xff]
        %v438 = vld [vmem:[%s240 + $0x3d8] sm:$0xff]
        %v439 = vld [vmem:[%s240 + $0x3e0] sm:$0xff]
        %v440 = vld [vmem:[%s240 + $0x3e8] sm:$0xff]
        %v441 = vld [vmem:[%s240 + $0x3f0] sm:$0xff]
        %v442 = vld [vmem:[%s240 + $0x3f8] sm:$0xff]
        %v443 = vld [vmem:[%s240 + $0x400] sm:$0xff]
        %v444 = vld [vmem:[%s240 + $0x408] sm:$0xff]
        %v445 = vld [vmem:[%s240 + $0x410] sm:$0xff]
        %v446 = vld [vmem:[%s240 + $0x418] sm:$0xff]
        %v447 = vld [vmem:[%s240 + $0x420] sm:$0xff]
        %v448 = vld [vmem:[%s240 + $0x428] sm:$0xff]
        %v449 = vld [vmem:[%s240 + $0x430] sm:$0xff]
        %v450 = vld [vmem:[%s240 + $0x438] sm:$0xff]
        %v451 = vld [vmem:[%s240 + $0x440] sm:$0xff]
        %v452 = vld [vmem:[%s240 + $0x448] sm:$0xff]
        %v453 = vld [vmem:[%s240 + $0x450] sm:$0xff]
        %v454 = vld [vmem:[%s240 + $0x458] sm:$0xff]
        %v455 = vld [vmem:[%s240 + $0x460] sm:$0xff]
        %v456 = vld [vmem:[%s240 + $0x468] sm:$0xff]
        %v457 = vld [vmem:[%s240 + $0x470] sm:$0xff]
        %v458 = vld [vmem:[%s240 + $0x478] sm:$0xff]
        %v459 = vld [vmem:[%s240 + $0x480] sm:$0xff]
        %v460 = vld [vmem:[%s240 + $0x488] sm:$0xff]
        %v461 = vld [vmem:[%s240 + $0x490] sm:$0xff]
        %v462 = vld [vmem:[%s240 + $0x498] sm:$0xff]
        %v463 = vld [vmem:[%s240 + $0x4a0] sm:$0xff]
        %v464 = vld [vmem:[%s240 + $0x4a8] sm:$0xff]
        %v465 = vld [vmem:[%s240 + $0x4b0] sm:$0xff]
        %v466 = vld [vmem:[%s240 + $0x4b8] sm:$0xff]
        %v467 = vld [vmem:[%s240 + $0x4c0] sm:$0xff]
        %v468 = vld [vmem:[%s240 + $0x4c8] sm:$0xff]
        %v469 = vld [vmem:[%s240 + $0x4d0] sm:$0xff]
        %v470 = vld [vmem:[%s240 + $0x4d8] sm:$0xff]
        %v471 = vld [vmem:[%s240 + $0x4e0] sm:$0xff]
        %v472 = vld [vmem:[%s240 + $0x4e8] sm:$0xff]
        %v473 = vld [vmem:[%s240 + $0x4f0] sm:$0xff]
        %v474 = vld [vmem:[%s240 + $0x4f8] sm:$0xff]
        %v475 = vld [vmem:[%s240 + $0x500] sm:$0xff]
        %v476 = vld [vmem:[%s240 + $0x508] sm:$0xff]
        %v477 = vld [vmem:[%s240 + $0x510] sm:$0xff]
        %v478 = vld [vmem:[%s240 + $0x518] sm:$0xff]
        %v479 = vld [vmem:[%s240 + $0x520] sm:$0xff]
        %v480 = vld [vmem:[%s240 + $0x528] sm:$0xff]
        %v481 = vld [vmem:[%s240 + $0x530] sm:$0xff]
        %v482 = vld [vmem:[%s240 + $0x538] sm:$0xff]
        %v483 = vld [vmem:[%s240 + $0x540] sm:$0xff]
        %v484 = vld [vmem:[%s240 + $0x548] sm:$0xff]
        %v485 = vld [vmem:[%s240 + $0x550] sm:$0xff]
        %v486 = vld [vmem:[%s240 + $0x558] sm:$0xff]
        %v487 = vld [vmem:[%s240 + $0x560] sm:$0xff]
        %v488 = vld [vmem:[%s240 + $0x568] sm:$0xff]
        %v489 = vld [vmem:[%s240 + $0x570] sm:$0xff]
        %v490 = vld [vmem:[%s240 + $0x578] sm:$0xff]
        %v491 = vld [vmem:[%s240 + $0x580] sm:$0xff]
        %v492 = vld [vmem:[%s240 + $0x588] sm:$0xff]
        %v493 = vld [vmem:[%s240 + $0x590] sm:$0xff]
        %v494 = vld [vmem:[%s240 + $0x598] sm:$0xff]
        %v495 = vld [vmem:[%s240 + $0x5a0] sm:$0xff]
        %v496 = vld [vmem:[%s240 + $0x5a8] sm:$0xff]
        %v497 = vld [vmem:[%s240 + $0x5b0] sm:$0xff]
        %v498 = vld [vmem:[%s240 + $0x5b8] sm:$0xff]
        %v499 = vld [vmem:[%s240 + $0x5c0] sm:$0xff]
        %v500 = vld [vmem:[%s240 + $0x5c8] sm:$0xff]
        %v501 = vld [vmem:[%s240 + $0x5d0] sm:$0xff]
        %v502 = vld [vmem:[%s240 + $0x5d8] sm:$0xff]
        %v503 = vld [vmem:[%s240 + $0x5e0] sm:$0xff]
        %v504 = vld [vmem:[%s240 + $0x5e8] sm:$0xff]
        %v505 = vld [vmem:[%s240 + $0x5f0] sm:$0xff]
        %v506 = vld [vmem:[%s240 + $0x5f8] sm:$0xff]
        %v507 = vld [vmem:[%s240 + $0x600] sm:$0xff]
        %v508 = vld [vmem:[%s240 + $0x608] sm:$0xff]
        %v509 = vld [vmem:[%s240 + $0x610] sm:$0xff]
        %v510 = vld [vmem:[%s240 + $0x618] sm:$0xff]
        %v511 = vld [vmem:[%s240 + $0x620] sm:$0xff]
        %v512 = vld [vmem:[%s240 + $0x628] sm:$0xff]
        %v513 = vld [vmem:[%s240 + $0x630] sm:$0xff]
        %v514 = vld [vmem:[%s240 + $0x638] sm:$0xff]
        %v515 = vld [vmem:[%s240 + $0x640] sm:$0xff]
        %v516 = vld [vmem:[%s240 + $0x648] sm:$0xff]
        %v517 = vld [vmem:[%s240 + $0x650] sm:$0xff]
        %v518 = vld [vmem:[%s240 + $0x658] sm:$0xff]
        %v519 = vld [vmem:[%s240 + $0x660] sm:$0xff]
        %v520 = vld [vmem:[%s240 + $0x668] sm:$0xff]
        %v521 = vld [vmem:[%s240 + $0x670] sm:$0xff]
        %v522 = vld [vmem:[%s240 + $0x678] sm:$0xff]
        %v523 = vld [vmem:[%s240 + $0x680] sm:$0xff]
        %v524 = vld [vmem:[%s240 + $0x688] sm:$0xff]
        %v525 = vld [vmem:[%s240 + $0x690] sm:$0xff]
        %v526 = vld [vmem:[%s240 + $0x698] sm:$0xff]
        %v527 = vld [vmem:[%s240 + $0x6a0] sm:$0xff]
        %v528 = vld [vmem:[%s240 + $0x6a8] sm:$0xff]
        %v529 = vld [vmem:[%s240 + $0x6b0] sm:$0xff]
        %v530 = vld [vmem:[%s240 + $0x6b8] sm:$0xff]
        %v531 = vld [vmem:[%s240 + $0x6c0] sm:$0xff]
        %v532 = vld [vmem:[%s240 + $0x6c8] sm:$0xff]
        %v533 = vld [vmem:[%s240 + $0x6d0] sm:$0xff]
        %v534 = vld [vmem:[%s240 + $0x6d8] sm:$0xff]
        %v535 = vld [vmem:[%s240 + $0x6e0] sm:$0xff]
        %v536 = vld [vmem:[%s240 + $0x6e8] sm:$0xff]
        %v537 = vld [vmem:[%s240 + $0x6f0] sm:$0xff]
        %v538 = vld [vmem:[%s240 + $0x6f8] sm:$0xff]
        %v539 = vld [vmem:[%s240 + $0x700] sm:$0xff]
        %v540 = vld [vmem:[%s240 + $0x708] sm:$0xff]
        %v541 = vld [vmem:[%s240 + $0x710] sm:$0xff]
        %v542 = vld [vmem:[%s240 + $0x718] sm:$0xff]
        %v543 = vld [vmem:[%s240 + $0x720] sm:$0xff]
        %v544 = vld [vmem:[%s240 + $0x728] sm:$0xff]
        %v545 = vld [vmem:[%s240 + $0x730] sm:$0xff]
        %v546 = vld [vmem:[%s240 + $0x738] sm:$0xff]
        %v547 = vld [vmem:[%s240 + $0x740] sm:$0xff]
        %v548 = vld [vmem:[%s240 + $0x748] sm:$0xff]
        %v549 = vld [vmem:[%s240 + $0x750] sm:$0xff]
        %v550 = vld [vmem:[%s240 + $0x758] sm:$0xff]
        %v551 = vld [vmem:[%s240 + $0x760] sm:$0xff]
        %v552 = vld [vmem:[%s240 + $0x768] sm:$0xff]
        %v553 = vld [vmem:[%s240 + $0x770] sm:$0xff]
        %v554 = vld [vmem:[%s240 + $0x778] sm:$0xff]
        %v555 = vld [vmem:[%s240 + $0x780] sm:$0xff]
        %v556 = vld [vmem:[%s240 + $0x788] sm:$0xff]
        %v557 = vld [vmem:[%s240 + $0x790] sm:$0xff]
        %v558 = vld [vmem:[%s240 + $0x798] sm:$0xff]
        %v559 = vld [vmem:[%s240 + $0x7a0] sm:$0xff]
        %v560 = vld [vmem:[%s240 + $0x7a8] sm:$0xff]
        %v561 = vld [vmem:[%s240 + $0x7b0] sm:$0xff]
        %v562 = vld [vmem:[%s240 + $0x7b8] sm:$0xff]
        %v563 = vld [vmem:[%s240 + $0x7c0] sm:$0xff]
        %v564 = vld [vmem:[%s240 + $0x7c8] sm:$0xff]
        %v565 = vld [vmem:[%s240 + $0x7d0] sm:$0xff]
        %v566 = vld [vmem:[%s240 + $0x7d8] sm:$0xff]
        %v567 = vld [vmem:[%s240 + $0x7e0] sm:$0xff]
        %v568 = vld [vmem:[%s240 + $0x7e8] sm:$0xff]
        %v569 = vld [vmem:[%s240 + $0x7f0] sm:$0xff]
        %v570 = vld [vmem:[%s240 + $0x7f8] sm:$0xff]
        %v571 = vld [vmem:[%s240 + $0x800] sm:$0xff]
        %v572 = vld [vmem:[%s240 + $0x808] sm:$0xff]
        %v573 = vld [vmem:[%s240 + $0x810] sm:$0xff]
        %v574 = vld [vmem:[%s240 + $0x818] sm:$0xff]
        %v575 = vld [vmem:[%s240 + $0x820] sm:$0xff]
        %v576 = vld [vmem:[%s240 + $0x828] sm:$0xff]
        %v577 = vld [vmem:[%s240 + $0x830] sm:$0xff]
        %v578 = vld [vmem:[%s240 + $0x838] sm:$0xff]
        %v579 = vld [vmem:[%s240 + $0x840] sm:$0xff]
        %v580 = vld [vmem:[%s240 + $0x848] sm:$0xff]
        %v581 = vld [vmem:[%s240 + $0x850] sm:$0xff]
        %v582 = vld [vmem:[%s240 + $0x858] sm:$0xff]
        %v583 = vld [vmem:[%s240 + $0x860] sm:$0xff]
        %v584 = vld [vmem:[%s240 + $0x868] sm:$0xff]
        %v585 = vld [vmem:[%s240 + $0x870] sm:$0xff]
        %v586 = vld [vmem:[%s240 + $0x878] sm:$0xff]
        %v587 = vld [vmem:[%s240 + $0x880] sm:$0xff]
        %v588 = vld [vmem:[%s240 + $0x888] sm:$0xff]
        %v589 = vld [vmem:[%s240 + $0x890] sm:$0xff]
        %v590 = vld [vmem:[%s240 + $0x898] sm:$0xff]
        %v591 = vld [vmem:[%s240 + $0x8a0] sm:$0xff]
        %v592 = vld [vmem:[%s240 + $0x8a8] sm:$0xff]
        %v593 = vld [vmem:[%s240 + $0x8b0] sm:$0xff]
        %v594 = vld [vmem:[%s240 + $0x8b8] sm:$0xff]
        %v595 = vld [vmem:[%s240 + $0x8c0] sm:$0xff]
        %v596 = vld [vmem:[%s240 + $0x8c8] sm:$0xff]
        %v597 = vld [vmem:[%s240 + $0x8d0] sm:$0xff]
        %v598 = vld [vmem:[%s240 + $0x8d8] sm:$0xff]
        %v599 = vld [vmem:[%s240 + $0x8e0] sm:$0xff]
        %v600 = vld [vmem:[%s240 + $0x8e8] sm:$0xff]
        %v601 = vld [vmem:[%s240 + $0x8f0] sm:$0xff]
        %v602 = vld [vmem:[%s240 + $0x8f8] sm:$0xff]
        %v603 = vld [vmem:[%s240 + $0x900] sm:$0xff]
        %v604 = vld [vmem:[%s240 + $0x908] sm:$0xff]
        %v605 = vld [vmem:[%s240 + $0x910] sm:$0xff]
        %v606 = vld [vmem:[%s240 + $0x918] sm:$0xff]
        %v607 = vld [vmem:[%s240 + $0x920] sm:$0xff]
        %v608 = vld [vmem:[%s240 + $0x928] sm:$0xff]
        %v609 = vld [vmem:[%s240 + $0x930] sm:$0xff]
        %v610 = vld [vmem:[%s240 + $0x938] sm:$0xff]
        %v611 = vld [vmem:[%s240 + $0x940] sm:$0xff]
        %v612 = vld [vmem:[%s240 + $0x948] sm:$0xff]
        %v613 = vld [vmem:[%s240 + $0x950] sm:$0xff]
        %v614 = vld [vmem:[%s240 + $0x958] sm:$0xff]
        %v615 = vld [vmem:[%s240 + $0x960] sm:$0xff]
        %v616 = vld [vmem:[%s240 + $0x968] sm:$0xff]
        %v617 = vld [vmem:[%s240 + $0x970] sm:$0xff]
        %v618 = vld [vmem:[%s240 + $0x978] sm:$0xff]
        %v619 = vld [vmem:[%s240 + $0x980] sm:$0xff]
        %v620 = vld [vmem:[%s240 + $0x988] sm:$0xff]
        %v621 = vld [vmem:[%s240 + $0x990] sm:$0xff]
        %v622 = vld [vmem:[%s240 + $0x998] sm:$0xff]
        %v623 = vld [vmem:[%s240 + $0x9a0] sm:$0xff]
        %v624 = vld [vmem:[%s240 + $0x9a8] sm:$0xff]
        %v625 = vld [vmem:[%s240 + $0x9b0] sm:$0xff]
        %v626 = vld [vmem:[%s240 + $0x9b8] sm:$0xff]
        %v627 = vld [vmem:[%s240 + $0x9c0] sm:$0xff]
        %v628 = vld [vmem:[%s240 + $0x9c8] sm:$0xff]
        %v629 = vld [vmem:[%s240 + $0x9d0] sm:$0xff]
        %v630 = vld [vmem:[%s240 + $0x9d8] sm:$0xff]
        %v631 = vld [vmem:[%s240 + $0x9e0] sm:$0xff]
        %v632 = vld [vmem:[%s240 + $0x9e8] sm:$0xff]
        %v633 = vld [vmem:[%s240 + $0x9f0] sm:$0xff]
        %v634 = vld [vmem:[%s240 + $0x9f8] sm:$0xff]
        %v635 = vld [vmem:[%s240 + $0xa00] sm:$0xff]
        %v636 = vld [vmem:[%s240 + $0xa08] sm:$0xff]
        %v637 = vld [vmem:[%s240 + $0xa10] sm:$0xff]
        %v638 = vld [vmem:[%s240 + $0xa18] sm:$0xff]
        %v639 = vld [vmem:[%s240 + $0xa20] sm:$0xff]
        %v640 = vld [vmem:[%s240 + $0xa28] sm:$0xff]
        %v641 = vld [vmem:[%s240 + $0xa30] sm:$0xff]
        %v642 = vld [vmem:[%s240 + $0xa38] sm:$0xff]
        %v643 = vld [vmem:[%s240 + $0xa40] sm:$0xff]
        %v644 = vld [vmem:[%s240 + $0xa48] sm:$0xff]
        %v645 = vld [vmem:[%s240 + $0xa50] sm:$0xff]
        %v646 = vld [vmem:[%s240 + $0xa58] sm:$0xff]
        %v647 = vld [vmem:[%s240 + $0xa60] sm:$0xff]
        %v648 = vld [vmem:[%s240 + $0xa68] sm:$0xff]
        %v649 = vld [vmem:[%s240 + $0xa70] sm:$0xff]
        %v650 = vld [vmem:[%s240 + $0xa78] sm:$0xff]
        %v651 = vld [vmem:[%s240 + $0xa80] sm:$0xff]
        %v652 = vld [vmem:[%s240 + $0xa88] sm:$0xff]
        %v653 = vld [vmem:[%s240 + $0xa90] sm:$0xff]
        %v654 = vld [vmem:[%s240 + $0xa98] sm:$0xff]
        %v655 = vld [vmem:[%s240 + $0xaa0] sm:$0xff]
        %v656 = vld [vmem:[%s240 + $0xaa8] sm:$0xff]
        %v657 = vld [vmem:[%s240 + $0xab0] sm:$0xff]
        %v658 = vld [vmem:[%s240 + $0xab8] sm:$0xff]
        %v659 = vld [vmem:[%s240 + $0xac0] sm:$0xff]
        %v660 = vld [vmem:[%s240 + $0xac8] sm:$0xff]
        %v661 = vld [vmem:[%s240 + $0xad0] sm:$0xff]
        %v662 = vld [vmem:[%s240 + $0xad8] sm:$0xff]
        %v663 = vld [vmem:[%s240 + $0xae0] sm:$0xff]
        %v664 = vld [vmem:[%s240 + $0xae8] sm:$0xff]
        %v665 = vld [vmem:[%s240 + $0xaf0] sm:$0xff]
        %v666 = vld [vmem:[%s240 + $0xaf8] sm:$0xff]
        %v667 = vld [vmem:[%s240 + $0xb00] sm:$0xff]
        %v668 = vld [vmem:[%s240 + $0xb08] sm:$0xff]
        %v669 = vld [vmem:[%s240 + $0xb10] sm:$0xff]
        %v670 = vld [vmem:[%s240 + $0xb18] sm:$0xff]
        %v671 = vld [vmem:[%s240 + $0xb20] sm:$0xff]
        %v672 = vld [vmem:[%s240 + $0xb28] sm:$0xff]
        %v673 = vld [vmem:[%s240 + $0xb30] sm:$0xff]
        %v674 = vld [vmem:[%s240 + $0xb38] sm:$0xff]
        %v675 = vld [vmem:[%s240 + $0xb40] sm:$0xff]
        %v676 = vld [vmem:[%s240 + $0xb48] sm:$0xff]
        %v677 = vld [vmem:[%s240 + $0xb50] sm:$0xff]
        %v678 = vld [vmem:[%s240 + $0xb58] sm:$0xff]
        %v679 = vld [vmem:[%s240 + $0xb60] sm:$0xff]
        %v680 = vld [vmem:[%s240 + $0xb68] sm:$0xff]
        %v681 = vld [vmem:[%s240 + $0xb70] sm:$0xff]
        %v682 = vld [vmem:[%s240 + $0xb78] sm:$0xff]
        %v683 = vld [vmem:[%s240 + $0xb80] sm:$0xff]
        %v684 = vld [vmem:[%s240 + $0xb88] sm:$0xff]
        %v685 = vld [vmem:[%s240 + $0xb90] sm:$0xff]
        %v686 = vld [vmem:[%s240 + $0xb98] sm:$0xff]
        %v687 = vld [vmem:[%s240 + $0xba0] sm:$0xff]
        %v688 = vld [vmem:[%s240 + $0xba8] sm:$0xff]
        %v689 = vld [vmem:[%s240 + $0xbb0] sm:$0xff]
        %v690 = vld [vmem:[%s240 + $0xbb8] sm:$0xff]
        %v691 = vld [vmem:[%s240 + $0xbc0] sm:$0xff]
        %v692 = vld [vmem:[%s240 + $0xbc8] sm:$0xff]
        %v693 = vld [vmem:[%s240 + $0xbd0] sm:$0xff]
        %v694 = vld [vmem:[%s240 + $0xbd8] sm:$0xff]
        %v695 = vld [vmem:[%s240 + $0xbe0] sm:$0xff]
        %v696 = vld [vmem:[%s240 + $0xbe8] sm:$0xff]
        %v697 = vld [vmem:[%s240 + $0xbf0] sm:$0xff]
        %v698 = vld [vmem:[%s240 + $0xbf8] sm:$0xff]
        %v699 = vld [vmem:[%s240 + $0xc00] sm:$0xff]
        %v700 = vld [vmem:[%s240 + $0xc08] sm:$0xff]
        %v701 = vld [vmem:[%s240 + $0xc10] sm:$0xff]
        %v702 = vld [vmem:[%s240 + $0xc18] sm:$0xff]
        %v703 = vld [vmem:[%s240 + $0xc20] sm:$0xff]
        %v704 = vld [vmem:[%s240 + $0xc28] sm:$0xff]
        %v705 = vld [vmem:[%s240 + $0xc30] sm:$0xff]
        %v706 = vld [vmem:[%s240 + $0xc38] sm:$0xff]
        %v707 = vld [vmem:[%s240 + $0xc40] sm:$0xff]
        %v708 = vld [vmem:[%s240 + $0xc48] sm:$0xff]
        %v709 = vld [vmem:[%s240 + $0xc50] sm:$0xff]
        %v710 = vld [vmem:[%s240 + $0xc58] sm:$0xff]
        %v711 = vld [vmem:[%s240 + $0xc60] sm:$0xff]
        %v712 = vld [vmem:[%s240 + $0xc68] sm:$0xff]
        %v713 = vld [vmem:[%s240 + $0xc70] sm:$0xff]
        %v714 = vld [vmem:[%s240 + $0xc78] sm:$0xff]
        %v715 = vld [vmem:[%s240 + $0xc80] sm:$0xff]
        %v716 = vld [vmem:[%s240 + $0xc88] sm:$0xff]
        %v717 = vld [vmem:[%s240 + $0xc90] sm:$0xff]
        %v718 = vld [vmem:[%s240 + $0xc98] sm:$0xff]
        %v719 = vld [vmem:[%s240 + $0xca0] sm:$0xff]
        %v720 = vld [vmem:[%s240 + $0xca8] sm:$0xff]
        %v721 = vld [vmem:[%s240 + $0xcb0] sm:$0xff]
        %v722 = vld [vmem:[%s240 + $0xcb8] sm:$0xff]
        %v723 = vld [vmem:[%s240 + $0xcc0] sm:$0xff]
        %v724 = vld [vmem:[%s240 + $0xcc8] sm:$0xff]
        %v725 = vld [vmem:[%s240 + $0xcd0] sm:$0xff]
        %v726 = vld [vmem:[%s240 + $0xcd8] sm:$0xff]
        %v727 = vld [vmem:[%s240 + $0xce0] sm:$0xff]
        %v728 = vld [vmem:[%s240 + $0xce8] sm:$0xff]
        %v729 = vld [vmem:[%s240 + $0xcf0] sm:$0xff]
        %v730 = vld [vmem:[%s240 + $0xcf8] sm:$0xff]
        %v731 = vld [vmem:[%s240 + $0xd00] sm:$0xff]
        %v732 = vld [vmem:[%s240 + $0xd08] sm:$0xff]
        %v733 = vld [vmem:[%s240 + $0xd10] sm:$0xff]
        %v734 = vld [vmem:[%s240 + $0xd18] sm:$0xff]
        %v735 = vld [vmem:[%s240 + $0xd20] sm:$0xff]
        %v736 = vld [vmem:[%s240 + $0xd28] sm:$0xff]
        %v737 = vld [vmem:[%s240 + $0xd30] sm:$0xff]
        %v738 = vld [vmem:[%s240 + $0xd38] sm:$0xff]
        %v739 = vld [vmem:[%s240 + $0xd40] sm:$0xff]
        %v740 = vld [vmem:[%s240 + $0xd48] sm:$0xff]
        %v741 = vld [vmem:[%s240 + $0xd50] sm:$0xff]
        %v742 = vld [vmem:[%s240 + $0xd58] sm:$0xff]
        %v743 = vld [vmem:[%s240 + $0xd60] sm:$0xff]
        %v744 = vld [vmem:[%s240 + $0xd68] sm:$0xff]
        %v745 = vld [vmem:[%s240 + $0xd70] sm:$0xff]
        %v746 = vld [vmem:[%s240 + $0xd78] sm:$0xff]
        %v747 = vld [vmem:[%s240 + $0xd80] sm:$0xff]
        %v748 = vld [vmem:[%s240 + $0xd88] sm:$0xff]
        %v749 = vld [vmem:[%s240 + $0xd90] sm:$0xff]
        %v750 = vld [vmem:[%s240 + $0xd98] sm:$0xff]
        %v751 = vld [vmem:[%s240 + $0xda0] sm:$0xff]
        %v752 = vld [vmem:[%s240 + $0xda8] sm:$0xff]
        %v753 = vld [vmem:[%s240 + $0xdb0] sm:$0xff]
        %v754 = vld [vmem:[%s240 + $0xdb8] sm:$0xff]
        %v755 = vld [vmem:[%s240 + $0xdc0] sm:$0xff]
        %v756 = vld [vmem:[%s240 + $0xdc8] sm:$0xff]
        %v757 = vld [vmem:[%s240 + $0xdd0] sm:$0xff]
        %v758 = vld [vmem:[%s240 + $0xdd8] sm:$0xff]
        %v759 = vld [vmem:[%s240 + $0xde0] sm:$0xff]
        %v760 = vld [vmem:[%s240 + $0xde8] sm:$0xff]
        %v761 = vld [vmem:[%s240 + $0xdf0] sm:$0xff]
        %v762 = vld [vmem:[%s240 + $0xdf8] sm:$0xff]
        %v763 = vld [vmem:[%s240 + $0xe00] sm:$0xff]
        %v764 = vld [vmem:[%s240 + $0xe08] sm:$0xff]
        %v765 = vld [vmem:[%s240 + $0xe10] sm:$0xff]
        %v766 = vld [vmem:[%s240 + $0xe18] sm:$0xff]
        %v767 = vld [vmem:[%s240 + $0xe20] sm:$0xff]
        %v768 = vld [vmem:[%s240 + $0xe28] sm:$0xff]
        %v769 = vld [vmem:[%s240 + $0xe30] sm:$0xff]
        %v770 = vld [vmem:[%s240 + $0xe38] sm:$0xff]
        %v771 = vld [vmem:[%s240 + $0xe40] sm:$0xff]
        %v772 = vld [vmem:[%s240 + $0xe48] sm:$0xff]
        %v773 = vld [vmem:[%s240 + $0xe50] sm:$0xff]
        %v774 = vld [vmem:[%s240 + $0xe58] sm:$0xff]
        %v775 = vld [vmem:[%s240 + $0xe60] sm:$0xff]
        %v776 = vld [vmem:[%s240 + $0xe68] sm:$0xff]
        %v777 = vld [vmem:[%s240 + $0xe70] sm:$0xff]
        %v778 = vld [vmem:[%s240 + $0xe78] sm:$0xff]
        %v779 = vld [vmem:[%s240 + $0xe80] sm:$0xff]
        %v780 = vld [vmem:[%s240 + $0xe88] sm:$0xff]
        %v781 = vld [vmem:[%s240 + $0xe90] sm:$0xff]
        %v782 = vld [vmem:[%s240 + $0xe98] sm:$0xff]
        %v783 = vld [vmem:[%s240 + $0xea0] sm:$0xff]
        %v784 = vld [vmem:[%s240 + $0xea8] sm:$0xff]
        %v785 = vld [vmem:[%s240 + $0xeb0] sm:$0xff]
        %v786 = vld [vmem:[%s240 + $0xeb8] sm:$0xff]
        %v787 = vld [vmem:[%s240 + $0xec0] sm:$0xff]
        %v788 = vld [vmem:[%s240 + $0xec8] sm:$0xff]
        %v789 = vld [vmem:[%s240 + $0xed0] sm:$0xff]
        %v790 = vld [vmem:[%s240 + $0xed8] sm:$0xff]
        %v791 = vld [vmem:[%s240 + $0xee0] sm:$0xff]
        %v792 = vld [vmem:[%s240 + $0xee8] sm:$0xff]
        %v793 = vld [vmem:[%s240 + $0xef0] sm:$0xff]
        %v794 = vld [vmem:[%s240 + $0xef8] sm:$0xff]
        %v795 = vld [vmem:[%s240 + $0xf00] sm:$0xff]
        %v796 = vld [vmem:[%s240 + $0xf08] sm:$0xff]
        %v797 = vld [vmem:[%s240 + $0xf10] sm:$0xff]
        %v798 = vld [vmem:[%s240 + $0xf18] sm:$0xff]
        %v799 = vld [vmem:[%s240 + $0xf20] sm:$0xff]
        %v800 = vld [vmem:[%s240 + $0xf28] sm:$0xff]
        %v801 = vld [vmem:[%s240 + $0xf30] sm:$0xff]
        %v802 = vld [vmem:[%s240 + $0xf38] sm:$0xff]
        %v803 = vld [vmem:[%s240 + $0xf40] sm:$0xff]
        %v804 = vld [vmem:[%s240 + $0xf48] sm:$0xff]
        %v805 = vld [vmem:[%s240 + $0xf50] sm:$0xff]
        %v806 = vld [vmem:[%s240 + $0xf58] sm:$0xff]
        %v807 = vld [vmem:[%s240 + $0xf60] sm:$0xff]
        %v808 = vld [vmem:[%s240 + $0xf68] sm:$0xff]
        %v809 = vld [vmem:[%s240 + $0xf70] sm:$0xff]
        %v810 = vld [vmem:[%s240 + $0xf78] sm:$0xff]
        %v811 = vld [vmem:[%s240 + $0xf80] sm:$0xff]
        %v812 = vld [vmem:[%s240 + $0xf88] sm:$0xff]
        %v813 = vld [vmem:[%s240 + $0xf90] sm:$0xff]
        %v814 = vld [vmem:[%s240 + $0xf98] sm:$0xff]
        %v815 = vld [vmem:[%s240 + $0xfa0] sm:$0xff]
        %v816 = vld [vmem:[%s240 + $0xfa8] sm:$0xff]
        %v817 = vld [vmem:[%s240 + $0xfb0] sm:$0xff]
        %v818 = vld [vmem:[%s240 + $0xfb8] sm:$0xff]
        %v819 = vld [vmem:[%s240 + $0xfc0] sm:$0xff]
        %v820 = vld [vmem:[%s240 + $0xfc8] sm:$0xff]
        %v821 = vld [vmem:[%s240 + $0xfd0] sm:$0xff]
        %v822 = vld [vmem:[%s240 + $0xfd8] sm:$0xff]
        %v823 = vld [vmem:[%s240 + $0xfe0] sm:$0xff]
        %v824 = vld [vmem:[%s240 + $0xfe8] sm:$0xff]
        %v825 = vld [vmem:[%s240 + $0xff0] sm:$0xff]
        %v826 = vld [vmem:[%s240 + $0xff8] sm:$0xff]
        %v827 = vld [vmem:[%s240 + $0x1000] sm:$0xff]
        %v828 = vld [vmem:[%s240 + $0x1008] sm:$0xff]
        %v829 = vld [vmem:[%s240 + $0x1010] sm:$0xff]
        %v830 = vld [vmem:[%s240 + $0x1018] sm:$0xff]
        %v831 = vld [vmem:[%s240 + $0x1020] sm:$0xff]
        %v832 = vld [vmem:[%s240 + $0x1028] sm:$0xff]
        %v833 = vld [vmem:[%s240 + $0x1030] sm:$0xff]
        %v834 = vld [vmem:[%s240 + $0x1038] sm:$0xff]
        %v835 = vld [vmem:[%s240 + $0x1040] sm:$0xff]
        %v836 = vld [vmem:[%s240 + $0x1048] sm:$0xff]
        %v837 = vld [vmem:[%s240 + $0x1050] sm:$0xff]
        %v838 = vld [vmem:[%s240 + $0x1058] sm:$0xff]
        %v839 = vld [vmem:[%s240 + $0x1060] sm:$0xff]
        %v840 = vld [vmem:[%s240 + $0x1068] sm:$0xff]
        %v841 = vld [vmem:[%s240 + $0x1070] sm:$0xff]
        %v842 = vld [vmem:[%s240 + $0x1078] sm:$0xff]
        %v843 = vld [vmem:[%s240 + $0x1080] sm:$0xff]
        %v844 = vld [vmem:[%s240 + $0x1088] sm:$0xff]
        %v845 = vld [vmem:[%s240 + $0x1090] sm:$0xff]
        %v846 = vld [vmem:[%s240 + $0x1098] sm:$0xff]
        %v847 = vld [vmem:[%s240 + $0x10a0] sm:$0xff]
        %v848 = vld [vmem:[%s240 + $0x10a8] sm:$0xff]
        %v849 = vld [vmem:[%s240 + $0x10b0] sm:$0xff]
        %v850 = vld [vmem:[%s240 + $0x10b8] sm:$0xff]
        %v851 = vld [vmem:[%s240 + $0x10c0] sm:$0xff]
        %v852 = vld [vmem:[%s240 + $0x10c8] sm:$0xff]
        %v853 = vld [vmem:[%s240 + $0x10d0] sm:$0xff]
        %v854 = vld [vmem:[%s240 + $0x10d8] sm:$0xff]
        %v855 = vld [vmem:[%s240 + $0x10e0] sm:$0xff]
        %v856 = vld [vmem:[%s240 + $0x10e8] sm:$0xff]
        %v857 = vld [vmem:[%s240 + $0x10f0] sm:$0xff]
        %v858 = vld [vmem:[%s240 + $0x10f8] sm:$0xff]
        %v859 = vld [vmem:[%s240 + $0x1100] sm:$0xff]
        %v860 = vld [vmem:[%s240 + $0x1108] sm:$0xff]
        %v861 = vld [vmem:[%s240 + $0x1110] sm:$0xff]
        %v862 = vld [vmem:[%s240 + $0x1118] sm:$0xff]
        %v863 = vld [vmem:[%s240 + $0x1120] sm:$0xff]
        %v864 = vld [vmem:[%s240 + $0x1128] sm:$0xff]
        %v865 = vld [vmem:[%s240 + $0x1130] sm:$0xff]
        %v866 = vld [vmem:[%s240 + $0x1138] sm:$0xff]
        %v867 = vld [vmem:[%s240 + $0x1140] sm:$0xff]
        %v868 = vld [vmem:[%s240 + $0x1148] sm:$0xff]
        %v869 = vld [vmem:[%s240 + $0x1150] sm:$0xff]
        %v870 = vld [vmem:[%s240 + $0x1158] sm:$0xff]
        %v871 = vld [vmem:[%s240 + $0x1160] sm:$0xff]
        %v872 = vld [vmem:[%s240 + $0x1168] sm:$0xff]
        %v873 = vld [vmem:[%s240 + $0x1170] sm:$0xff]
        %v874 = vld [vmem:[%s240 + $0x1178] sm:$0xff]
        %v875 = vld [vmem:[%s240 + $0x1180] sm:$0xff]
        %v876 = vld [vmem:[%s240 + $0x1188] sm:$0xff]
        %v877 = vld [vmem:[%s240 + $0x1190] sm:$0xff]
        %v878 = vld [vmem:[%s240 + $0x1198] sm:$0xff]
        %v879 = vld [vmem:[%s240 + $0x11a0] sm:$0xff]
        %v880 = vld [vmem:[%s240 + $0x11a8] sm:$0xff]
        %v881 = vld [vmem:[%s240 + $0x11b0] sm:$0xff]
        %v882 = vld [vmem:[%s240 + $0x11b8] sm:$0xff]
        %v883 = vld [vmem:[%s240 + $0x11c0] sm:$0xff]
        %v884 = vld [vmem:[%s240 + $0x11c8] sm:$0xff]
        %v885 = vld [vmem:[%s240 + $0x11d0] sm:$0xff]
        %v886 = vld [vmem:[%s240 + $0x11d8] sm:$0xff]
        %v887 = vld [vmem:[%s240 + $0x11e0] sm:$0xff]
        %v888 = vld [vmem:[%s240 + $0x11e8] sm:$0xff]
        %v889 = vld [vmem:[%s240 + $0x11f0] sm:$0xff]
        %v890 = vld [vmem:[%s240 + $0x11f8] sm:$0xff]
        %v891 = vld [vmem:[%s240 + $0x1200] sm:$0xff]
        %v892 = vld [vmem:[%s240 + $0x1208] sm:$0xff]
        %v893 = vld [vmem:[%s240 + $0x1210] sm:$0xff]
        %v894 = vld [vmem:[%s240 + $0x1218] sm:$0xff]
        %v895 = vld [vmem:[%s240 + $0x1220] sm:$0xff]
        %v896 = vld [vmem:[%s240 + $0x1228] sm:$0xff]
        %v897 = vld [vmem:[%s240 + $0x1230] sm:$0xff]
        %v898 = vld [vmem:[%s240 + $0x1238] sm:$0xff]
        %v899 = vld [vmem:[%s240 + $0x1240] sm:$0xff]
        %v900 = vld [vmem:[%s240 + $0x1248] sm:$0xff]
        %v901 = vld [vmem:[%s240 + $0x1250] sm:$0xff]
        %v902 = vld [vmem:[%s240 + $0x1258] sm:$0xff]
        %v903 = vld [vmem:[%s240 + $0x1260] sm:$0xff]
        %v904 = vld [vmem:[%s240 + $0x1268] sm:$0xff]
        %v905 = vld [vmem:[%s240 + $0x1270] sm:$0xff]
        %v906 = vld [vmem:[%s240 + $0x1278] sm:$0xff]
        %v907 = vld [vmem:[%s240 + $0x1280] sm:$0xff]
        %v908 = vld [vmem:[%s240 + $0x1288] sm:$0xff]
        %v909 = vld [vmem:[%s240 + $0x1290] sm:$0xff]
        %v910 = vld [vmem:[%s240 + $0x1298] sm:$0xff]
        %v911 = vld [vmem:[%s240 + $0x12a0] sm:$0xff]
        %v912 = vld [vmem:[%s240 + $0x12a8] sm:$0xff]
        %v913 = vld [vmem:[%s240 + $0x12b0] sm:$0xff]
        %v914 = vld [vmem:[%s240 + $0x12b8] sm:$0xff]
        %v915 = vld [vmem:[%s240 + $0x12c0] sm:$0xff]
        %v916 = vld [vmem:[%s240 + $0x12c8] sm:$0xff]
        %v917 = vld [vmem:[%s240 + $0x12d0] sm:$0xff]
        %v918 = vld [vmem:[%s240 + $0x12d8] sm:$0xff]
        %v919 = vld [vmem:[%s240 + $0x12e0] sm:$0xff]
        %v920 = vld [vmem:[%s240 + $0x12e8] sm:$0xff]
        %v921 = vld [vmem:[%s240 + $0x12f0] sm:$0xff]
        %v922 = vld [vmem:[%s240 + $0x12f8] sm:$0xff]
        %v923 = vld [vmem:[%s240 + $0x1300] sm:$0xff]
        %v924 = vld [vmem:[%s240 + $0x1308] sm:$0xff]
        %v925 = vld [vmem:[%s240 + $0x1310] sm:$0xff]
        %v926 = vld [vmem:[%s240 + $0x1318] sm:$0xff]
        %v927 = vld [vmem:[%s240 + $0x1320] sm:$0xff]
        %v928 = vld [vmem:[%s240 + $0x1328] sm:$0xff]
        %v929 = vld [vmem:[%s240 + $0x1330] sm:$0xff]
        %v930 = vld [vmem:[%s240 + $0x1338] sm:$0xff]
        %v931 = vld [vmem:[%s240 + $0x1340] sm:$0xff]
        %v932 = vld [vmem:[%s240 + $0x1348] sm:$0xff]
        %v933 = vld [vmem:[%s240 + $0x1350] sm:$0xff]
        %v934 = vld [vmem:[%s240 + $0x1358] sm:$0xff]
        %v935 = vld [vmem:[%s240 + $0x1360] sm:$0xff]
        %v936 = vld [vmem:[%s240 + $0x1368] sm:$0xff]
        %v937 = vld [vmem:[%s240 + $0x1370] sm:$0xff]
        %v938 = vld [vmem:[%s240 + $0x1378] sm:$0xff]
        %v939 = vld [vmem:[%s240 + $0x1380] sm:$0xff]
        %v940 = vld [vmem:[%s240 + $0x1388] sm:$0xff]
        %v941 = vld [vmem:[%s240 + $0x1390] sm:$0xff]
        %v942 = vld [vmem:[%s240 + $0x1398] sm:$0xff]
        %v943 = vld [vmem:[%s240 + $0x13a0] sm:$0xff]
        %v944 = vld [vmem:[%s240 + $0x13a8] sm:$0xff]
        %v945 = vld [vmem:[%s240 + $0x13b0] sm:$0xff]
        %v946 = vld [vmem:[%s240 + $0x13b8] sm:$0xff]
        %v947 = vld [vmem:[%s240 + $0x13c0] sm:$0xff]
        %v948 = vld [vmem:[%s240 + $0x13c8] sm:$0xff]
        %v949 = vld [vmem:[%s240 + $0x13d0] sm:$0xff]
        %v950 = vld [vmem:[%s240 + $0x13d8] sm:$0xff]
        %v951 = vld [vmem:[%s240 + $0x13e0] sm:$0xff]
        %v952 = vld [vmem:[%s240 + $0x13e8] sm:$0xff]
        %v953 = vld [vmem:[%s240 + $0x13f0] sm:$0xff]
        %v954 = vld [vmem:[%s240 + $0x13f8] sm:$0xff]
        %v955 = vld [vmem:[%s240 + $0x1400] sm:$0xff]
        %v956 = vld [vmem:[%s240 + $0x1408] sm:$0xff]
        %v957 = vld [vmem:[%s240 + $0x1410] sm:$0xff]
        %v958 = vld [vmem:[%s240 + $0x1418] sm:$0xff]
        %v959 = vld [vmem:[%s240 + $0x1420] sm:$0xff]
        %v960 = vld [vmem:[%s240 + $0x1428] sm:$0xff]
        %v961 = vld [vmem:[%s240 + $0x1430] sm:$0xff]
        %v962 = vld [vmem:[%s240 + $0x1438] sm:$0xff]
        %v963 = vld [vmem:[%s240 + $0x1440] sm:$0xff]
        %v964 = vld [vmem:[%s240 + $0x1448] sm:$0xff]
        %v965 = vld [vmem:[%s240 + $0x1450] sm:$0xff]
        %v966 = vld [vmem:[%s240 + $0x1458] sm:$0xff]
        %v967 = vld [vmem:[%s240 + $0x1460] sm:$0xff]
        %v968 = vld [vmem:[%s240 + $0x1468] sm:$0xff]
        %v969 = vld [vmem:[%s240 + $0x1470] sm:$0xff]
        %v970 = vld [vmem:[%s240 + $0x1478] sm:$0xff]
        %v971 = vld [vmem:[%s240 + $0x1480] sm:$0xff]
        %v972 = vld [vmem:[%s240 + $0x1488] sm:$0xff]
        %v973 = vld [vmem:[%s240 + $0x1490] sm:$0xff]
        %v974 = vld [vmem:[%s240 + $0x1498] sm:$0xff]
        %v975 = vld [vmem:[%s240 + $0x14a0] sm:$0xff]
        %v976 = vld [vmem:[%s240 + $0x14a8] sm:$0xff]
        %v977 = vld [vmem:[%s240 + $0x14b0] sm:$0xff]
        %v978 = vld [vmem:[%s240 + $0x14b8] sm:$0xff]
        %v979 = vld [vmem:[%s240 + $0x14c0] sm:$0xff]
        %v980 = vld [vmem:[%s240 + $0x14c8] sm:$0xff]
        %v981 = vld [vmem:[%s240 + $0x14d0] sm:$0xff]
        %v982 = vld [vmem:[%s240 + $0x14d8] sm:$0xff]
        %v983 = vld [vmem:[%s240 + $0x14e0] sm:$0xff]
        %v984 = vld [vmem:[%s240 + $0x14e8] sm:$0xff]
        %v985 = vld [vmem:[%s240 + $0x14f0] sm:$0xff]
        %v986 = vld [vmem:[%s240 + $0x14f8] sm:$0xff]
        %v987 = vld [vmem:[%s240 + $0x1500] sm:$0xff]
        %v988 = vld [vmem:[%s240 + $0x1508] sm:$0xff]
        %v989 = vld [vmem:[%s240 + $0x1510] sm:$0xff]
        %v990 = vld [vmem:[%s240 + $0x1518] sm:$0xff]
        %v991 = vld [vmem:[%s240 + $0x1520] sm:$0xff]
        %v992 = vld [vmem:[%s240 + $0x1528] sm:$0xff]
        %v993 = vld [vmem:[%s240 + $0x1530] sm:$0xff]
        %v994 = vld [vmem:[%s240 + $0x1538] sm:$0xff]
        %v995 = vld [vmem:[%s240 + $0x1540] sm:$0xff]
        %v996 = vld [vmem:[%s240 + $0x1548] sm:$0xff]
        %v997 = vld [vmem:[%s240 + $0x1550] sm:$0xff]
        %v998 = vld [vmem:[%s240 + $0x1558] sm:$0xff]
        %v999 = vld [vmem:[%s240 + $0x1560] sm:$0xff]
        %v1000 = vld [vmem:[%s240 + $0x1568] sm:$0xff]
        %v1001 = vld [vmem:[%s240 + $0x1570] sm:$0xff]
        %v1002 = vld [vmem:[%s240 + $0x1578] sm:$0xff]
        %v1003 = vld [vmem:[%s240 + $0x1580] sm:$0xff]
        %v1004 = vld [vmem:[%s240 + $0x1588] sm:$0xff]
        %v1005 = vld [vmem:[%s240 + $0x1590] sm:$0xff]
        %v1006 = vld [vmem:[%s240 + $0x1598] sm:$0xff]
        %v1007 = vld [vmem:[%s240 + $0x15a0] sm:$0xff]
        %v1008 = vld [vmem:[%s240 + $0x15a8] sm:$0xff]
        %v1009 = vld [vmem:[%s240 + $0x15b0] sm:$0xff]
        %v1010 = vld [vmem:[%s240 + $0x15b8] sm:$0xff]
        %v1011 = vld [vmem:[%s240 + $0x15c0] sm:$0xff]
        %v1012 = vld [vmem:[%s240 + $0x15c8] sm:$0xff]
        %v1013 = vld [vmem:[%s240 + $0x15d0] sm:$0xff]
        %v1014 = vld [vmem:[%s240 + $0x15d8] sm:$0xff]
        %v1015 = vld [vmem:[%s240 + $0x15e0] sm:$0xff]
        %v1016 = vld [vmem:[%s240 + $0x15e8] sm:$0xff]
        %v1017 = vld [vmem:[%s240 + $0x15f0] sm:$0xff]
        %v1018 = vld [vmem:[%s240 + $0x15f8] sm:$0xff]
        %v1019 = vld [vmem:[%s240 + $0x1600] sm:$0xff]
        %v1020 = vld [vmem:[%s240 + $0x1608] sm:$0xff]
        %v1021 = vld [vmem:[%s240 + $0x1610] sm:$0xff]
        %v1022 = vld [vmem:[%s240 + $0x1618] sm:$0xff]
        %v1023 = vld [vmem:[%s240 + $0x1620] sm:$0xff]
        %v1024 = vld [vmem:[%s240 + $0x1628] sm:$0xff]
        %v1025 = vld [vmem:[%s240 + $0x1630] sm:$0xff]
        %v1026 = vld [vmem:[%s240 + $0x1638] sm:$0xff]
        %v1027 = vld [vmem:[%s240 + $0x1640] sm:$0xff]
        %v1028 = vld [vmem:[%s240 + $0x1648] sm:$0xff]
        %v1029 = vld [vmem:[%s240 + $0x1650] sm:$0xff]
        %v1030 = vld [vmem:[%s240 + $0x1658] sm:$0xff]
        %v1031 = vld [vmem:[%s240 + $0x1660] sm:$0xff]
        %v1032 = vld [vmem:[%s240 + $0x1668] sm:$0xff]
        %v1033 = vld [vmem:[%s240 + $0x1670] sm:$0xff]
        %v1034 = vld [vmem:[%s240 + $0x1678] sm:$0xff]
        %v1035 = vld [vmem:[%s240 + $0x1680] sm:$0xff]
        %v1036 = vld [vmem:[%s240 + $0x1688] sm:$0xff]
        %v1037 = vld [vmem:[%s240 + $0x1690] sm:$0xff]
        %v1038 = vld [vmem:[%s240 + $0x1698] sm:$0xff]
        %v1039 = vld [vmem:[%s240 + $0x16a0] sm:$0xff]
        %v1040 = vld [vmem:[%s240 + $0x16a8] sm:$0xff]
        %v1041 = vld [vmem:[%s240 + $0x16b0] sm:$0xff]
        %v1042 = vld [vmem:[%s240 + $0x16b8] sm:$0xff]
        %v1043 = vld [vmem:[%s240 + $0x16c0] sm:$0xff]
        %v1044 = vld [vmem:[%s240 + $0x16c8] sm:$0xff]
        %v1045 = vld [vmem:[%s240 + $0x16d0] sm:$0xff]
        %v1046 = vld [vmem:[%s240 + $0x16d8] sm:$0xff]
        %v1047 = vld [vmem:[%s240 + $0x16e0] sm:$0xff]
        %v1048 = vld [vmem:[%s240 + $0x16e8] sm:$0xff]
        %v1049 = vld [vmem:[%s240 + $0x16f0] sm:$0xff]
        %v1050 = vld [vmem:[%s240 + $0x16f8] sm:$0xff]
        %v1051 = vld [vmem:[%s240 + $0x1700] sm:$0xff]
        %v1052 = vld [vmem:[%s240 + $0x1708] sm:$0xff]
        %v1053 = vld [vmem:[%s240 + $0x1710] sm:$0xff]
        %v1054 = vld [vmem:[%s240 + $0x1718] sm:$0xff]
        %v1055 = vld [vmem:[%s240 + $0x1720] sm:$0xff]
        %v1056 = vld [vmem:[%s240 + $0x1728] sm:$0xff]
        %v1057 = vld [vmem:[%s240 + $0x1730] sm:$0xff]
        %v1058 = vld [vmem:[%s240 + $0x1738] sm:$0xff]
        %v1059 = vld [vmem:[%s240 + $0x1740] sm:$0xff]
        %v1060 = vld [vmem:[%s240 + $0x1748] sm:$0xff]
        %v1061 = vld [vmem:[%s240 + $0x1750] sm:$0xff]
        %v1062 = vld [vmem:[%s240 + $0x1758] sm:$0xff]
        %v1063 = vld [vmem:[%s240 + $0x1760] sm:$0xff]
        %v1064 = vld [vmem:[%s240 + $0x1768] sm:$0xff]
        %v1065 = vld [vmem:[%s240 + $0x1770] sm:$0xff]
        %v1066 = vld [vmem:[%s240 + $0x1778] sm:$0xff]
        %v1067 = vld [vmem:[%s240 + $0x1780] sm:$0xff]
        %v1068 = vld [vmem:[%s240 + $0x1788] sm:$0xff]
        %v1069 = vld [vmem:[%s240 + $0x1790] sm:$0xff]
        %v1070 = vld [vmem:[%s240 + $0x1798] sm:$0xff]
        %v1071 = vld [vmem:[%s240 + $0x17a0] sm:$0xff]
        %v1072 = vld [vmem:[%s240 + $0x17a8] sm:$0xff]
        %v1073 = vld [vmem:[%s240 + $0x17b0] sm:$0xff]
        %v1074 = vld [vmem:[%s240 + $0x17b8] sm:$0xff]
        %v1075 = vld [vmem:[%s240 + $0x17c0] sm:$0xff]
        %v1076 = vld [vmem:[%s240 + $0x17c8] sm:$0xff]
        %v1077 = vld [vmem:[%s240 + $0x17d0] sm:$0xff]
        %v1078 = vld [vmem:[%s240 + $0x17d8] sm:$0xff]
        %v1079 = vld [vmem:[%s240 + $0x17e0] sm:$0xff]
        %v1080 = vld [vmem:[%s240 + $0x17e8] sm:$0xff]
        %v1081 = vld [vmem:[%s240 + $0x17f0] sm:$0xff]
        %v1082 = vld [vmem:[%s240 + $0x17f8] sm:$0xff]
        %v1083 = vld [vmem:[%s240 + $0x1800] sm:$0xff]
        %v1084 = vld [vmem:[%s240 + $0x1808] sm:$0xff]
        %v1085 = vld [vmem:[%s240 + $0x1810] sm:$0xff]
        %v1086 = vld [vmem:[%s240 + $0x1818] sm:$0xff]
        %v1087 = vld [vmem:[%s240 + $0x1820] sm:$0xff]
        %v1088 = vld [vmem:[%s240 + $0x1828] sm:$0xff]
        %v1089 = vld [vmem:[%s240 + $0x1830] sm:$0xff]
        %v1090 = vld [vmem:[%s240 + $0x1838] sm:$0xff]
        %v1091 = vld [vmem:[%s240 + $0x1840] sm:$0xff]
        %v1092 = vld [vmem:[%s240 + $0x1848] sm:$0xff]
        %v1093 = vld [vmem:[%s240 + $0x1850] sm:$0xff]
        %v1094 = vld [vmem:[%s240 + $0x1858] sm:$0xff]
        %v1095 = vld [vmem:[%s240 + $0x1860] sm:$0xff]
        %v1096 = vld [vmem:[%s240 + $0x1868] sm:$0xff]
        %v1097 = vld [vmem:[%s240 + $0x1870] sm:$0xff]
        %v1098 = vld [vmem:[%s240 + $0x1878] sm:$0xff]
        %v1099 = vld [vmem:[%s240 + $0x1880] sm:$0xff]
        %v1100 = vld [vmem:[%s240 + $0x1888] sm:$0xff]
        %v1101 = vld [vmem:[%s240 + $0x1890] sm:$0xff]
        %v1102 = vld [vmem:[%s240 + $0x1898] sm:$0xff]
        %v1103 = vld [vmem:[%s240 + $0x18a0] sm:$0xff]
        %v1104 = vld [vmem:[%s240 + $0x18a8] sm:$0xff]
        %v1105 = vld [vmem:[%s240 + $0x18b0] sm:$0xff]
        %v1106 = vld [vmem:[%s240 + $0x18b8] sm:$0xff]
        %v1107 = vld [vmem:[%s240 + $0x18c0] sm:$0xff]
        %v1108 = vld [vmem:[%s240 + $0x18c8] sm:$0xff]
        %v1109 = vld [vmem:[%s240 + $0x18d0] sm:$0xff]
        %v1110 = vld [vmem:[%s240 + $0x18d8] sm:$0xff]
        %v1111 = vld [vmem:[%s240 + $0x18e0] sm:$0xff]
        %v1112 = vld [vmem:[%s240 + $0x18e8] sm:$0xff]
        %v1113 = vld [vmem:[%s240 + $0x18f0] sm:$0xff]
        %v1114 = vld [vmem:[%s240 + $0x18f8] sm:$0xff]
        %v1115 = vld [vmem:[%s240 + $0x1900] sm:$0xff]
        %v1116 = vld [vmem:[%s240 + $0x1908] sm:$0xff]
        %v1117 = vld [vmem:[%s240 + $0x1910] sm:$0xff]
        %v1118 = vld [vmem:[%s240 + $0x1918] sm:$0xff]
        %v1119 = vld [vmem:[%s240 + $0x1920] sm:$0xff]
        %v1120 = vld [vmem:[%s240 + $0x1928] sm:$0xff]
        %v1121 = vld [vmem:[%s240 + $0x1930] sm:$0xff]
        %v1122 = vld [vmem:[%s240 + $0x1938] sm:$0xff]
        %v1123 = vld [vmem:[%s240 + $0x1940] sm:$0xff]
        %v1124 = vld [vmem:[%s240 + $0x1948] sm:$0xff]
        %v1125 = vld [vmem:[%s240 + $0x1950] sm:$0xff]
        %v1126 = vld [vmem:[%s240 + $0x1958] sm:$0xff]
        %v1127 = vld [vmem:[%s240 + $0x1960] sm:$0xff]
        %v1128 = vld [vmem:[%s240 + $0x1968] sm:$0xff]
        %v1129 = vld [vmem:[%s240 + $0x1970] sm:$0xff]
        %v1130 = vld [vmem:[%s240 + $0x1978] sm:$0xff]
        %v1131 = vld [vmem:[%s240 + $0x1980] sm:$0xff]
        %v1132 = vld [vmem:[%s240 + $0x1988] sm:$0xff]
        %v1133 = vld [vmem:[%s240 + $0x1990] sm:$0xff]
        %v1134 = vld [vmem:[%s240 + $0x1998] sm:$0xff]
        %v1135 = vld [vmem:[%s240 + $0x19a0] sm:$0xff]
        %v1136 = vld [vmem:[%s240 + $0x19a8] sm:$0xff]
        %v1137 = vld [vmem:[%s240 + $0x19b0] sm:$0xff]
        %v1138 = vld [vmem:[%s240 + $0x19b8] sm:$0xff]
        %v1139 = vld [vmem:[%s240 + $0x19c0] sm:$0xff]
        %v1140 = vld [vmem:[%s240 + $0x19c8] sm:$0xff]
        %v1141 = vld [vmem:[%s240 + $0x19d0] sm:$0xff]
        %v1142 = vld [vmem:[%s240 + $0x19d8] sm:$0xff]
        %v1143 = vld [vmem:[%s240 + $0x19e0] sm:$0xff]
        %v1144 = vld [vmem:[%s240 + $0x19e8] sm:$0xff]
        %v1145 = vld [vmem:[%s240 + $0x19f0] sm:$0xff]
        %v1146 = vld [vmem:[%s240 + $0x19f8] sm:$0xff]
        %v1147 = vld [vmem:[%s240 + $0x1a00] sm:$0xff]
        %v1148 = vld [vmem:[%s240 + $0x1a08] sm:$0xff]
        %v1149 = vld [vmem:[%s240 + $0x1a10] sm:$0xff]
        %v1150 = vld [vmem:[%s240 + $0x1a18] sm:$0xff]
        %v1151 = vld [vmem:[%s240 + $0x1a20] sm:$0xff]
        %v1152 = vld [vmem:[%s240 + $0x1a28] sm:$0xff]
        %v1153 = vld [vmem:[%s240 + $0x1a30] sm:$0xff]
        %v1154 = vld [vmem:[%s240 + $0x1a38] sm:$0xff]
        %v1155 = vld [vmem:[%s240 + $0x1a40] sm:$0xff]
        %v1156 = vld [vmem:[%s240 + $0x1a48] sm:$0xff]
        %v1157 = vld [vmem:[%s240 + $0x1a50] sm:$0xff]
        %v1158 = vld [vmem:[%s240 + $0x1a58] sm:$0xff]
        %v1159 = vld [vmem:[%s240 + $0x1a60] sm:$0xff]
        %v1160 = vld [vmem:[%s240 + $0x1a68] sm:$0xff]
        %v1161 = vld [vmem:[%s240 + $0x1a70] sm:$0xff]
        %v1162 = vld [vmem:[%s240 + $0x1a78] sm:$0xff]
        %v1163 = vld [vmem:[%s240 + $0x1a80] sm:$0xff]
        %v1164 = vld [vmem:[%s240 + $0x1a88] sm:$0xff]
        %v1165 = vld [vmem:[%s240 + $0x1a90] sm:$0xff]
        %v1166 = vld [vmem:[%s240 + $0x1a98] sm:$0xff]
        %v1167 = vld [vmem:[%s240 + $0x1aa0] sm:$0xff]
        %v1168 = vld [vmem:[%s240 + $0x1aa8] sm:$0xff]
        %v1169 = vld [vmem:[%s240 + $0x1ab0] sm:$0xff]
        %v1170 = vld [vmem:[%s240 + $0x1ab8] sm:$0xff]
        %v1171 = vld [vmem:[%s240 + $0x1ac0] sm:$0xff]
        %v1172 = vld [vmem:[%s240 + $0x1ac8] sm:$0xff]
        %v1173 = vld [vmem:[%s240 + $0x1ad0] sm:$0xff]
        %v1174 = vld [vmem:[%s240 + $0x1ad8] sm:$0xff]
        %v1175 = vld [vmem:[%s240 + $0x1ae0] sm:$0xff]
        %v1176 = vld [vmem:[%s240 + $0x1ae8] sm:$0xff]
        %v1177 = vld [vmem:[%s240 + $0x1af0] sm:$0xff]
        %v1178 = vld [vmem:[%s240 + $0x1af8] sm:$0xff]
        %v1179 = vld [vmem:[%s240 + $0x1b00] sm:$0xff]
        %v1180 = vld [vmem:[%s240 + $0x1b08] sm:$0xff]
        %v1181 = vld [vmem:[%s240 + $0x1b10] sm:$0xff]
        %v1182 = vld [vmem:[%s240 + $0x1b18] sm:$0xff]
        %v1183 = vld [vmem:[%s240 + $0x1b20] sm:$0xff]
        %v1184 = vld [vmem:[%s240 + $0x1b28] sm:$0xff]
        %v1185 = vld [vmem:[%s240 + $0x1b30] sm:$0xff]
        %v1186 = vld [vmem:[%s240 + $0x1b38] sm:$0xff]
        %v1187 = vld [vmem:[%s240 + $0x1b40] sm:$0xff]
        %v1188 = vld [vmem:[%s240 + $0x1b48] sm:$0xff]
        %v1189 = vld [vmem:[%s240 + $0x1b50] sm:$0xff]
        %v1190 = vld [vmem:[%s240 + $0x1b58] sm:$0xff]
        %v1191 = vld [vmem:[%s240 + $0x1b60] sm:$0xff]
        %v1192 = vld [vmem:[%s240 + $0x1b68] sm:$0xff]
        %v1193 = vld [vmem:[%s240 + $0x1b70] sm:$0xff]
        %v1194 = vld [vmem:[%s240 + $0x1b78] sm:$0xff]
        %v1195 = vld [vmem:[%s240 + $0x1b80] sm:$0xff]
        %v1196 = vld [vmem:[%s240 + $0x1b88] sm:$0xff]
        %v1197 = vld [vmem:[%s240 + $0x1b90] sm:$0xff]
        %v1198 = vld [vmem:[%s240 + $0x1b98] sm:$0xff]
        %v1199 = vld [vmem:[%s240 + $0x1ba0] sm:$0xff]
        %v1200 = vld [vmem:[%s240 + $0x1ba8] sm:$0xff]
        %v1201 = vld [vmem:[%s240 + $0x1bb0] sm:$0xff]
        %v1202 = vld [vmem:[%s240 + $0x1bb8] sm:$0xff]
        %v1203 = vld [vmem:[%s240 + $0x1bc0] sm:$0xff]
        %v1204 = vld [vmem:[%s240 + $0x1bc8] sm:$0xff]
        %v1205 = vld [vmem:[%s240 + $0x1bd0] sm:$0xff]
        %v1206 = vld [vmem:[%s240 + $0x1bd8] sm:$0xff]
        %v1207 = vld [vmem:[%s240 + $0x1be0] sm:$0xff]
        %v1208 = vld [vmem:[%s240 + $0x1be8] sm:$0xff]
        %v1209 = vld [vmem:[%s240 + $0x1bf0] sm:$0xff]
        %v1210 = vld [vmem:[%s240 + $0x1bf8] sm:$0xff]
        %v1211 = vld [vmem:[%s240 + $0x1c00] sm:$0xff]
        %v1212 = vld [vmem:[%s240 + $0x1c08] sm:$0xff]
        %v1213 = vld [vmem:[%s240 + $0x1c10] sm:$0xff]
        %v1214 = vld [vmem:[%s240 + $0x1c18] sm:$0xff]
        %v1215 = vld [vmem:[%s240 + $0x1c20] sm:$0xff]
        %v1216 = vld [vmem:[%s240 + $0x1c28] sm:$0xff]
        %v1217 = vld [vmem:[%s240 + $0x1c30] sm:$0xff]
        %v1218 = vld [vmem:[%s240 + $0x1c38] sm:$0xff]
        %v1219 = vld [vmem:[%s240 + $0x1c40] sm:$0xff]
        %v1220 = vld [vmem:[%s240 + $0x1c48] sm:$0xff]
        %v1221 = vld [vmem:[%s240 + $0x1c50] sm:$0xff]
        %v1222 = vld [vmem:[%s240 + $0x1c58] sm:$0xff]
        %v1223 = vld [vmem:[%s240 + $0x1c60] sm:$0xff]
        %v1224 = vld [vmem:[%s240 + $0x1c68] sm:$0xff]
        %v1225 = vld [vmem:[%s240 + $0x1c70] sm:$0xff]
        %v1226 = vld [vmem:[%s240 + $0x1c78] sm:$0xff]
        %v1227 = vld [vmem:[%s240 + $0x1c80] sm:$0xff]
        %v1228 = vld [vmem:[%s240 + $0x1c88] sm:$0xff]
        %v1229 = vld [vmem:[%s240 + $0x1c90] sm:$0xff]
        %v1230 = vld [vmem:[%s240 + $0x1c98] sm:$0xff]
        %v1231 = vld [vmem:[%s240 + $0x1ca0] sm:$0xff]
        %v1232 = vld [vmem:[%s240 + $0x1ca8] sm:$0xff]
        %v1233 = vld [vmem:[%s240 + $0x1cb0] sm:$0xff]
        %v1234 = vld [vmem:[%s240 + $0x1cb8] sm:$0xff]
        %v1235 = vld [vmem:[%s240 + $0x1cc0] sm:$0xff]
        %v1236 = vld [vmem:[%s240 + $0x1cc8] sm:$0xff]
        %v1237 = vld [vmem:[%s240 + $0x1cd0] sm:$0xff]
        %v1238 = vld [vmem:[%s240 + $0x1cd8] sm:$0xff]
        %v1239 = vld [vmem:[%s240 + $0x1ce0] sm:$0xff]
        %v1240 = vld [vmem:[%s240 + $0x1ce8] sm:$0xff]
        %v1241 = vld [vmem:[%s240 + $0x1cf0] sm:$0xff]
        %v1242 = vld [vmem:[%s240 + $0x1cf8] sm:$0xff]
        %v1243 = vld [vmem:[%s240 + $0x1d00] sm:$0xff]
        %v1244 = vld [vmem:[%s240 + $0x1d08] sm:$0xff]
        %v1245 = vld [vmem:[%s240 + $0x1d10] sm:$0xff]
        %v1246 = vld [vmem:[%s240 + $0x1d18] sm:$0xff]
        %v1247 = vld [vmem:[%s240 + $0x1d20] sm:$0xff]
        %v1248 = vld [vmem:[%s240 + $0x1d28] sm:$0xff]
        %v1249 = vld [vmem:[%s240 + $0x1d30] sm:$0xff]
        %v1250 = vld [vmem:[%s240 + $0x1d38] sm:$0xff]
        %v1251 = vld [vmem:[%s240 + $0x1d40] sm:$0xff]
        %v1252 = vld [vmem:[%s240 + $0x1d48] sm:$0xff]
        %v1253 = vld [vmem:[%s240 + $0x1d50] sm:$0xff]
        %v1254 = vld [vmem:[%s240 + $0x1d58] sm:$0xff]
        %v1255 = vld [vmem:[%s240 + $0x1d60] sm:$0xff]
        %v1256 = vld [vmem:[%s240 + $0x1d68] sm:$0xff]
        %v1257 = vld [vmem:[%s240 + $0x1d70] sm:$0xff]
        %v1258 = vld [vmem:[%s240 + $0x1d78] sm:$0xff]
        %v1259 = vld [vmem:[%s240 + $0x1d80] sm:$0xff]
        %v1260 = vld [vmem:[%s240 + $0x1d88] sm:$0xff]
        %v1261 = vld [vmem:[%s240 + $0x1d90] sm:$0xff]
        %v1262 = vld [vmem:[%s240 + $0x1d98] sm:$0xff]
        %v1263 = vld [vmem:[%s240 + $0x1da0] sm:$0xff]
        %v1264 = vld [vmem:[%s240 + $0x1da8] sm:$0xff]
        %v1265 = vld [vmem:[%s240 + $0x1db0] sm:$0xff]
        %v1266 = vld [vmem:[%s240 + $0x1db8] sm:$0xff]
        %v1267 = vld [vmem:[%s240 + $0x1dc0] sm:$0xff]
        %v1268 = vld [vmem:[%s240 + $0x1dc8] sm:$0xff]
        %v1269 = vld [vmem:[%s240 + $0x1dd0] sm:$0xff]
        %v1270 = vld [vmem:[%s240 + $0x1dd8] sm:$0xff]
        %v1271 = vld [vmem:[%s240 + $0x1de0] sm:$0xff]
        %v1272 = vld [vmem:[%s240 + $0x1de8] sm:$0xff]
        %v1273 = vld [vmem:[%s240 + $0x1df0] sm:$0xff]
        %v1274 = vld [vmem:[%s240 + $0x1df8] sm:$0xff]
        %v1275 = vld [vmem:[%s240 + $0x1e00] sm:$0xff]
        %v1276 = vld [vmem:[%s240 + $0x1e08] sm:$0xff]
        %v1277 = vld [vmem:[%s240 + $0x1e10] sm:$0xff]
        %v1278 = vld [vmem:[%s240 + $0x1e18] sm:$0xff]
        %v1279 = vld [vmem:[%s240 + $0x1e20] sm:$0xff]
        %v1280 = vld [vmem:[%s240 + $0x1e28] sm:$0xff]
        %v1281 = vld [vmem:[%s240 + $0x1e30] sm:$0xff]
        %v1282 = vld [vmem:[%s240 + $0x1e38] sm:$0xff]
        %v1283 = vld [vmem:[%s240 + $0x1e40] sm:$0xff]
        %v1284 = vld [vmem:[%s240 + $0x1e48] sm:$0xff]
        %v1285 = vld [vmem:[%s240 + $0x1e50] sm:$0xff]
        %v1286 = vld [vmem:[%s240 + $0x1e58] sm:$0xff]
        %v1287 = vld [vmem:[%s240 + $0x1e60] sm:$0xff]
        %v1288 = vld [vmem:[%s240 + $0x1e68] sm:$0xff]
        %v1289 = vld [vmem:[%s240 + $0x1e70] sm:$0xff]
        %v1290 = vld [vmem:[%s240 + $0x1e78] sm:$0xff]
        %v1291 = vld [vmem:[%s240 + $0x1e80] sm:$0xff]
        %v1292 = vld [vmem:[%s240 + $0x1e88] sm:$0xff]
        %v1293 = vld [vmem:[%s240 + $0x1e90] sm:$0xff]
        %v1294 = vld [vmem:[%s240 + $0x1e98] sm:$0xff]
        %v1295 = vld [vmem:[%s240 + $0x1ea0] sm:$0xff]
        %v1296 = vld [vmem:[%s240 + $0x1ea8] sm:$0xff]
        %v1297 = vld [vmem:[%s240 + $0x1eb0] sm:$0xff]
        %v1298 = vld [vmem:[%s240 + $0x1eb8] sm:$0xff]
        %v1299 = vld [vmem:[%s240 + $0x1ec0] sm:$0xff]
        %v1300 = vld [vmem:[%s240 + $0x1ec8] sm:$0xff]
        %v1301 = vld [vmem:[%s240 + $0x1ed0] sm:$0xff]
        %v1302 = vld [vmem:[%s240 + $0x1ed8] sm:$0xff]
        %v1303 = vld [vmem:[%s240 + $0x1ee0] sm:$0xff]
        %v1304 = vld [vmem:[%s240 + $0x1ee8] sm:$0xff]
        %v1305 = vld [vmem:[%s240 + $0x1ef0] sm:$0xff]
        %v1306 = vld [vmem:[%s240 + $0x1ef8] sm:$0xff]
        %v1307 = vld [vmem:[%s240 + $0x1f00] sm:$0xff]
        %v1308 = vld [vmem:[%s240 + $0x1f08] sm:$0xff]
        %v1309 = vld [vmem:[%s240 + $0x1f10] sm:$0xff]
        %v1310 = vld [vmem:[%s240 + $0x1f18] sm:$0xff]
        %v1311 = vld [vmem:[%s240 + $0x1f20] sm:$0xff]
        %v1312 = vld [vmem:[%s240 + $0x1f28] sm:$0xff]
        %v1313 = vld [vmem:[%s240 + $0x1f30] sm:$0xff]
        %v1314 = vld [vmem:[%s240 + $0x1f38] sm:$0xff]
        %v1315 = vld [vmem:[%s240 + $0x1f40] sm:$0xff]
        %v1316 = vld [vmem:[%s240 + $0x1f48] sm:$0xff]
        %v1317 = vld [vmem:[%s240 + $0x1f50] sm:$0xff]
        %v1318 = vld [vmem:[%s240 + $0x1f58] sm:$0xff]
        %v1319 = vld [vmem:[%s240 + $0x1f60] sm:$0xff]
        %v1320 = vld [vmem:[%s240 + $0x1f68] sm:$0xff]
        %v1321 = vld [vmem:[%s240 + $0x1f70] sm:$0xff]
        %v1322 = vld [vmem:[%s240 + $0x1f78] sm:$0xff]
        %v1323 = vld [vmem:[%s240 + $0x1f80] sm:$0xff]
        %v1324 = vld [vmem:[%s240 + $0x1f88] sm:$0xff]
        %v1325 = vld [vmem:[%s240 + $0x1f90] sm:$0xff]
        %v1326 = vld [vmem:[%s240 + $0x1f98] sm:$0xff]
        %v1327 = vld [vmem:[%s240 + $0x1fa0] sm:$0xff]
        %v1328 = vld [vmem:[%s240 + $0x1fa8] sm:$0xff]
        %v1329 = vld [vmem:[%s240 + $0x1fb0] sm:$0xff]
        %v1330 = vld [vmem:[%s240 + $0x1fb8] sm:$0xff]
        %v1331 = vld [vmem:[%s240 + $0x1fc0] sm:$0xff]
        %v1332 = vld [vmem:[%s240 + $0x1fc8] sm:$0xff]
        %v1333 = vld [vmem:[%s240 + $0x1fd0] sm:$0xff]
        %v1334 = vld [vmem:[%s240 + $0x1fd8] sm:$0xff]
        %v1335 = vld [vmem:[%s240 + $0x1fe0] sm:$0xff]
        %v1336 = vld [vmem:[%s240 + $0x1fe8] sm:$0xff]
        %v1337 = vld [vmem:[%s240 + $0x1ff0] sm:$0xff]
        %v1338 = vld [vmem:[%s240 + $0x1ff8] sm:$0xff]
        %v1339 = vld [vmem:[%s240 + $0x2000] sm:$0xff]
        %v1340 = vld [vmem:[%s240 + $0x2008] sm:$0xff]
        %v1341 = vld [vmem:[%s240 + $0x2010] sm:$0xff]
        %v1342 = vld [vmem:[%s240 + $0x2018] sm:$0xff]
        %v1343 = vld [vmem:[%s240 + $0x2020] sm:$0xff]
        %v1344 = vld [vmem:[%s240 + $0x2028] sm:$0xff]
        %v1345 = vld [vmem:[%s240 + $0x2030] sm:$0xff]
        %v1346 = vld [vmem:[%s240 + $0x2038] sm:$0xff]
        %v1347 = vld [vmem:[%s240 + $0x2040] sm:$0xff]
        %v1348 = vld [vmem:[%s240 + $0x2048] sm:$0xff]
        %v1349 = vld [vmem:[%s240 + $0x2050] sm:$0xff]
        %v1350 = vld [vmem:[%s240 + $0x2058] sm:$0xff]
        %v1351 = vld [vmem:[%s240 + $0x2060] sm:$0xff]
        %v1352 = vld [vmem:[%s240 + $0x2068] sm:$0xff]
        %v1353 = vld [vmem:[%s240 + $0x2070] sm:$0xff]
        %v1354 = vld [vmem:[%s240 + $0x2078] sm:$0xff]
        %v1355 = vld [vmem:[%s240 + $0x2080] sm:$0xff]
        %v1356 = vld [vmem:[%s240 + $0x2088] sm:$0xff]
        %v1357 = vld [vmem:[%s240 + $0x2090] sm:$0xff]
        %v1358 = vld [vmem:[%s240 + $0x2098] sm:$0xff]
        %v1359 = vld [vmem:[%s240 + $0x20a0] sm:$0xff]
        %v1360 = vld [vmem:[%s240 + $0x20a8] sm:$0xff]
        %v1361 = vld [vmem:[%s240 + $0x20b0] sm:$0xff]
        %v1362 = vld [vmem:[%s240 + $0x20b8] sm:$0xff]
        %v1363 = vld [vmem:[%s240 + $0x20c0] sm:$0xff]
        %v1364 = vld [vmem:[%s240 + $0x20c8] sm:$0xff]
        %v1365 = vld [vmem:[%s240 + $0x20d0] sm:$0xff]
        %v1366 = vld [vmem:[%s240 + $0x20d8] sm:$0xff]
        %v1367 = vld [vmem:[%s240 + $0x20e0] sm:$0xff]
        %v1368 = vld [vmem:[%s240 + $0x20e8] sm:$0xff]
        %v1369 = vld [vmem:[%s240 + $0x20f0] sm:$0xff]
        %v1370 = vld [vmem:[%s240 + $0x20f8] sm:$0xff]
        %v1371 = vld [vmem:[%s240 + $0x2100] sm:$0xff]
        %v1372 = vld [vmem:[%s240 + $0x2108] sm:$0xff]
        %v1373 = vld [vmem:[%s240 + $0x2110] sm:$0xff]
        %v1374 = vld [vmem:[%s240 + $0x2118] sm:$0xff]
        %v1375 = vld [vmem:[%s240 + $0x2120] sm:$0xff]
        %v1376 = vld [vmem:[%s240 + $0x2128] sm:$0xff]
        %v1377 = vld [vmem:[%s240 + $0x2130] sm:$0xff]
        %v1378 = vld [vmem:[%s240 + $0x2138] sm:$0xff]
        %v1379 = vld [vmem:[%s240 + $0x2140] sm:$0xff]
        %v1380 = vld [vmem:[%s240 + $0x2148] sm:$0xff]
        %v1381 = vld [vmem:[%s240 + $0x2150] sm:$0xff]
        %v1382 = vld [vmem:[%s240 + $0x2158] sm:$0xff]
        %v1383 = vld [vmem:[%s240 + $0x2160] sm:$0xff]
        %v1384 = vld [vmem:[%s240 + $0x2168] sm:$0xff]
        %v1385 = vld [vmem:[%s240 + $0x2170] sm:$0xff]
        %v1386 = vld [vmem:[%s240 + $0x2178] sm:$0xff]
        %v1387 = vld [vmem:[%s240 + $0x2180] sm:$0xff]
        %v1388 = vld [vmem:[%s240 + $0x2188] sm:$0xff]
        %v1389 = vld [vmem:[%s240 + $0x2190] sm:$0xff]
        %v1390 = vld [vmem:[%s240 + $0x2198] sm:$0xff]
        %v1391 = vld [vmem:[%s240 + $0x21a0] sm:$0xff]
        %v1392 = vld [vmem:[%s240 + $0x21a8] sm:$0xff]
        %v1393 = vld [vmem:[%s240 + $0x21b0] sm:$0xff]
        %v1394 = vld [vmem:[%s240 + $0x21b8] sm:$0xff]
        %v1395 = vld [vmem:[%s240 + $0x21c0] sm:$0xff]
        %v1396 = vld [vmem:[%s240 + $0x21c8] sm:$0xff]
        %v1397 = vld [vmem:[%s240 + $0x21d0] sm:$0xff]
        %v1398 = vld [vmem:[%s240 + $0x21d8] sm:$0xff]
        %v1399 = vld [vmem:[%s240 + $0x21e0] sm:$0xff]
        %v1400 = vld [vmem:[%s240 + $0x21e8] sm:$0xff]
        %v1401 = vld [vmem:[%s240 + $0x21f0] sm:$0xff]
        %v1402 = vld [vmem:[%s240 + $0x21f8] sm:$0xff]
        %v1403 = vld [vmem:[%s240 + $0x2200] sm:$0xff]
        %v1404 = vld [vmem:[%s240 + $0x2208] sm:$0xff]
        %v1405 = vld [vmem:[%s240 + $0x2210] sm:$0xff]
        %v1406 = vld [vmem:[%s240 + $0x2218] sm:$0xff]
        %v1407 = vld [vmem:[%s240 + $0x2220] sm:$0xff]
        %v1408 = vld [vmem:[%s240 + $0x2228] sm:$0xff]
        %v1409 = vld [vmem:[%s240 + $0x2230] sm:$0xff]
        %v1410 = vld [vmem:[%s240 + $0x2238] sm:$0xff]
        %v1411 = vld [vmem:[%s240 + $0x2240] sm:$0xff]
        %v1412 = vld [vmem:[%s240 + $0x2248] sm:$0xff]
        %v1413 = vld [vmem:[%s240 + $0x2250] sm:$0xff]
        %v1414 = vld [vmem:[%s240 + $0x2258] sm:$0xff]
        %v1415 = vld [vmem:[%s240 + $0x2260] sm:$0xff]
        %v1416 = vld [vmem:[%s240 + $0x2268] sm:$0xff]
        %v1417 = vld [vmem:[%s240 + $0x2270] sm:$0xff]
        %v1418 = vld [vmem:[%s240 + $0x2278] sm:$0xff]
        %v1419 = vld [vmem:[%s240 + $0x2280] sm:$0xff]
        %v1420 = vld [vmem:[%s240 + $0x2288] sm:$0xff]
        %v1421 = vld [vmem:[%s240 + $0x2290] sm:$0xff]
        %v1422 = vld [vmem:[%s240 + $0x2298] sm:$0xff]
        %v1423 = vld [vmem:[%s240 + $0x22a0] sm:$0xff]
        %v1424 = vld [vmem:[%s240 + $0x22a8] sm:$0xff]
        %v1425 = vld [vmem:[%s240 + $0x22b0] sm:$0xff]
        %v1426 = vld [vmem:[%s240 + $0x22b8] sm:$0xff]
        %v1427 = vld [vmem:[%s240 + $0x22c0] sm:$0xff]
        %v1428 = vld [vmem:[%s240 + $0x22c8] sm:$0xff]
        %v1429 = vld [vmem:[%s240 + $0x22d0] sm:$0xff]
        %v1430 = vld [vmem:[%s240 + $0x22d8] sm:$0xff]
        %v1431 = vld [vmem:[%s240 + $0x22e0] sm:$0xff]
        %v1432 = vld [vmem:[%s240 + $0x22e8] sm:$0xff]
        %v1433 = vld [vmem:[%s240 + $0x22f0] sm:$0xff]
        %v1434 = vld [vmem:[%s240 + $0x22f8] sm:$0xff]
        %v1453 = vunpack.c.l.b16 %v297
        %v1454 = vunpack.c.h.b16 %v297
        %v1455 = vunpack.c.l.b16 %v298
        %v1456 = vunpack.c.h.b16 %v298
        %v1457 = vunpack.c.l.b16 %v299
        %v1458 = vunpack.c.h.b16 %v299
        %v1459 = vunpack.c.l.b16 %v300
        %v1460 = vunpack.c.h.b16 %v300
        %v1461 = vunpack.c.l.b16 %v301
        %v1462 = vunpack.c.h.b16 %v301
        %v1463 = vunpack.c.l.b16 %v302
        %v1464 = vunpack.c.h.b16 %v302
        %v1465 = vunpack.c.l.b16 %v303
        %v1466 = vunpack.c.h.b16 %v303
        %v1467 = vunpack.c.l.b16 %v304
        %v1468 = vunpack.c.h.b16 %v304
        %v1469 = vunpack.c.l.b16 %v305
        %v1470 = vunpack.c.h.b16 %v305
        %v1471 = vunpack.c.l.b16 %v306
        %v1472 = vunpack.c.h.b16 %v306
        %v1473 = vunpack.c.l.b16 %v307
        %v1474 = vunpack.c.h.b16 %v307
        %v1475 = vunpack.c.l.b16 %v308
        %v1476 = vunpack.c.h.b16 %v308
        %v1477 = vunpack.c.l.b16 %v309
        %v1478 = vunpack.c.h.b16 %v309
        %v1479 = vunpack.c.l.b16 %v310
        %v1480 = vunpack.c.h.b16 %v310
        %v1481 = vunpack.c.l.b16 %v311
        %v1482 = vunpack.c.h.b16 %v311
        %v1483 = vunpack.c.l.b16 %v312
        %v1484 = vunpack.c.h.b16 %v312
        %v1485 = vunpack.c.l.b16 %v313
        %v1486 = vunpack.c.h.b16 %v313
        %v1487 = vunpack.c.l.b16 %v314
        %v1488 = vpack.c.b16 %v1453, %v1453
        %v1489 = vpack.c.b16 %v1454, %v1454
        %v1490 = vpack.c.b16 %v1455, %v1455
        %v1491 = vpack.c.b16 %v1456, %v1456
        %v1492 = vpack.c.b16 %v1457, %v1457
        %v1493 = vpack.c.b16 %v1458, %v1458
        %v1494 = vpack.c.b16 %v1459, %v1459
        %v1495 = vpack.c.b16 %v1460, %v1460
        %v1496 = vpack.c.b16 %v1461, %v1461
        %v1497 = vpack.c.b16 %v1462, %v1462
        %v1498 = vpack.c.b16 %v1463, %v1463
        %v1499 = vpack.c.b16 %v1464, %v1464
        %v1500 = vpack.c.b16 %v1465, %v1465
        %v1501 = vpack.c.b16 %v1466, %v1466
        %v1502 = vpack.c.b16 %v1467, %v1467
        %v1503 = vpack.c.b16 %v1468, %v1468
        %v1504 = vpack.c.b16 %v1469, %v1469
        %v1505 = vpack.c.b16 %v1470, %v1470
        %v1506 = vpack.c.b16 %v1471, %v1471
        %v1507 = vpack.c.b16 %v1472, %v1472
        %v1508 = vpack.c.b16 %v1473, %v1473
        %v1509 = vpack.c.b16 %v1474, %v1474
        %v1510 = vpack.c.b16 %v1475, %v1475
        %v1511 = vpack.c.b16 %v1476, %v1476
        %v1512 = vpack.c.b16 %v1477, %v1477
        %v1513 = vpack.c.b16 %v1478, %v1478
        %v1514 = vpack.c.b16 %v1479, %v1479
        %v1515 = vpack.c.b16 %v1480, %v1480
        %v1516 = vpack.c.b16 %v1481, %v1481
        %v1517 = vpack.c.b16 %v1482, %v1482
        %v1518 = vpack.c.b16 %v1483, %v1483
        %v1519 = vpack.c.b16 %v1484, %v1484
        %v1520 = vpack.c.b16 %v1485, %v1485
        %v1521 = vpack.c.b16 %v1486, %v1486
        %v1522 = vpack.c.b16 %v1487, %v1487
        %v2678 = vunpack.c.l.b16 %v315
        %v2679 = vunpack.c.h.b16 %v315
        %v2680 = vunpack.c.l.b16 %v316
        %v2681 = vunpack.c.h.b16 %v316
        %v2682 = vunpack.c.l.b16 %v317
        %v2683 = vunpack.c.h.b16 %v317
        %v2684 = vunpack.c.l.b16 %v318
        %v2685 = vunpack.c.h.b16 %v318
        %v2686 = vunpack.c.l.b16 %v319
        %v2687 = vunpack.c.h.b16 %v319
        %v2688 = vunpack.c.l.b16 %v320
        %v2689 = vunpack.c.h.b16 %v320
        %v2690 = vunpack.c.l.b16 %v321
        %v2691 = vunpack.c.h.b16 %v321
        %v2692 = vunpack.c.l.b16 %v322
        %v2693 = vunpack.c.h.b16 %v322
        %v2694 = vunpack.c.l.b16 %v323
        %v2695 = vunpack.c.h.b16 %v323
        %v2696 = vunpack.c.l.b16 %v324
        %v2697 = vunpack.c.h.b16 %v324
        %v2698 = vunpack.c.l.b16 %v325
        %v2699 = vunpack.c.h.b16 %v325
        %v2700 = vunpack.c.l.b16 %v326
        %v2701 = vunpack.c.h.b16 %v326
        %v2702 = vunpack.c.l.b16 %v327
        %v2703 = vunpack.c.h.b16 %v327
        %v2704 = vunpack.c.l.b16 %v328
        %v2705 = vunpack.c.h.b16 %v328
        %v2706 = vunpack.c.l.b16 %v329
        %v2707 = vunpack.c.h.b16 %v329
        %v2708 = vunpack.c.l.b16 %v330
        %v2709 = vunpack.c.h.b16 %v330
        %v2710 = vunpack.c.l.b16 %v331
        %v2711 = vunpack.c.h.b16 %v331
        %v2712 = vunpack.c.l.b16 %v332
        %v2713 = vunpack.c.h.b16 %v332
        %v2714 = vunpack.c.l.b16 %v333
        %v2715 = vunpack.c.h.b16 %v333
        %v2716 = vunpack.c.l.b16 %v334
        %v2717 = vunpack.c.h.b16 %v334
        %v2718 = vunpack.c.l.b16 %v335
        %v2719 = vunpack.c.h.b16 %v335
        %v2720 = vunpack.c.l.b16 %v336
        %v2721 = vunpack.c.h.b16 %v336
        %v2722 = vunpack.c.l.b16 %v337
        %v2723 = vunpack.c.h.b16 %v337
        %v2724 = vunpack.c.l.b16 %v338
        %v2725 = vunpack.c.h.b16 %v338
        %v2726 = vunpack.c.l.b16 %v339
        %v2727 = vunpack.c.h.b16 %v339
        %v2728 = vunpack.c.l.b16 %v340
        %v2729 = vunpack.c.h.b16 %v340
        %v2730 = vunpack.c.l.b16 %v341
        %v2731 = vunpack.c.h.b16 %v341
        %v2732 = vunpack.c.l.b16 %v342
        %v2733 = vunpack.c.h.b16 %v342
        %v2734 = vunpack.c.l.b16 %v343
        %v2735 = vunpack.c.h.b16 %v343
        %v2736 = vunpack.c.l.b16 %v344
        %v2737 = vunpack.c.h.b16 %v344
        %v2738 = vunpack.c.l.b16 %v345
        %v2739 = vunpack.c.h.b16 %v345
        %v2740 = vunpack.c.l.b16 %v346
        %v2741 = vunpack.c.h.b16 %v346
        %v2742 = vunpack.c.l.b16 %v347
        %v2743 = vunpack.c.h.b16 %v347
        %v2744 = vunpack.c.l.b16 %v348
        %v2745 = vunpack.c.h.b16 %v348
        %v2746 = vunpack.c.l.b16 %v349
        %v2747 = vunpack.c.h.b16 %v349
        %v2748 = vunpack.c.l.b16 %v350
        %v2749 = vunpack.c.h.b16 %v350
        %v2750 = vunpack.c.l.b16 %v351
        %v2751 = vunpack.c.h.b16 %v351
        %v2752 = vunpack.c.l.b16 %v352
        %v2753 = vunpack.c.h.b16 %v352
        %v2754 = vunpack.c.l.b16 %v353
        %v2755 = vunpack.c.h.b16 %v353
        %v2756 = vunpack.c.l.b16 %v354
        %v2757 = vunpack.c.h.b16 %v354
        %v2758 = vunpack.c.l.b16 %v355
        %v2759 = vunpack.c.h.b16 %v355
        %v2760 = vunpack.c.l.b16 %v356
        %v2761 = vunpack.c.h.b16 %v356
        %v2762 = vunpack.c.l.b16 %v357
        %v2763 = vunpack.c.h.b16 %v357
        %v2764 = vunpack.c.l.b16 %v358
        %v2765 = vunpack.c.h.b16 %v358
        %v2766 = vunpack.c.l.b16 %v359
        %v2767 = vunpack.c.h.b16 %v359
        %v2768 = vunpack.c.l.b16 %v360
        %v2769 = vunpack.c.h.b16 %v360
        %v2770 = vunpack.c.l.b16 %v361
        %v2771 = vunpack.c.h.b16 %v361
        %v2772 = vunpack.c.l.b16 %v362
        %v2773 = vunpack.c.h.b16 %v362
        %v2774 = vunpack.c.l.b16 %v363
        %v2775 = vunpack.c.h.b16 %v363
        %v2776 = vunpack.c.l.b16 %v364
        %v2777 = vunpack.c.h.b16 %v364
        %v2778 = vunpack.c.l.b16 %v365
        %v2779 = vunpack.c.h.b16 %v365
        %v2780 = vunpack.c.l.b16 %v366
        %v2781 = vunpack.c.h.b16 %v366
        %v2782 = vunpack.c.l.b16 %v367
        %v2783 = vunpack.c.h.b16 %v367
        %v2784 = vunpack.c.l.b16 %v368
        %v2785 = vunpack.c.h.b16 %v368
        %v2786 = vunpack.c.l.b16 %v369
        %v2787 = vunpack.c.h.b16 %v369
        %v2788 = vunpack.c.l.b16 %v370
        %v2789 = vunpack.c.h.b16 %v370
        %v2790 = vunpack.c.l.b16 %v371
        %v2791 = vunpack.c.h.b16 %v371
        %v2792 = vunpack.c.l.b16 %v372
        %v2793 = vunpack.c.h.b16 %v372
        %v2794 = vunpack.c.l.b16 %v373
        %v2795 = vunpack.c.h.b16 %v373
        %v2796 = vunpack.c.l.b16 %v374
        %v2797 = vunpack.c.h.b16 %v374
        %v2798 = vunpack.c.l.b16 %v375
        %v2799 = vunpack.c.h.b16 %v375
        %v2800 = vunpack.c.l.b16 %v376
        %v2801 = vunpack.c.h.b16 %v376
        %v2802 = vunpack.c.l.b16 %v377
        %v2803 = vunpack.c.h.b16 %v377
        %v2804 = vunpack.c.l.b16 %v378
        %v2805 = vunpack.c.h.b16 %v378
        %v2806 = vunpack.c.l.b16 %v379
        %v2807 = vunpack.c.h.b16 %v379
        %v2808 = vunpack.c.l.b16 %v380
        %v2809 = vunpack.c.h.b16 %v380
        %v2810 = vunpack.c.l.b16 %v381
        %v2811 = vunpack.c.h.b16 %v381
        %v2812 = vunpack.c.l.b16 %v382
        %v2813 = vunpack.c.h.b16 %v382
        %v2814 = vunpack.c.l.b16 %v383
        %v2815 = vunpack.c.h.b16 %v383
        %v2816 = vunpack.c.l.b16 %v384
        %v2817 = vunpack.c.h.b16 %v384
        %v2818 = vunpack.c.l.b16 %v385
        %v2819 = vunpack.c.h.b16 %v385
        %v2820 = vunpack.c.l.b16 %v386
        %v2821 = vunpack.c.h.b16 %v386
        %v2822 = vunpack.c.l.b16 %v387
        %v2823 = vunpack.c.h.b16 %v387
        %v2824 = vunpack.c.l.b16 %v388
        %v2825 = vunpack.c.h.b16 %v388
        %v2826 = vunpack.c.l.b16 %v389
        %v2827 = vunpack.c.h.b16 %v389
        %v2828 = vunpack.c.l.b16 %v390
        %v2829 = vunpack.c.h.b16 %v390
        %v2830 = vunpack.c.l.b16 %v391
        %v2831 = vunpack.c.h.b16 %v391
        %v2832 = vunpack.c.l.b16 %v392
        %v2833 = vunpack.c.h.b16 %v392
        %v2834 = vunpack.c.l.b16 %v393
        %v2835 = vunpack.c.h.b16 %v393
        %v2836 = vunpack.c.l.b16 %v394
        %v2837 = vunpack.c.h.b16 %v394
        %v2838 = vunpack.c.l.b16 %v395
        %v2839 = vunpack.c.h.b16 %v395
        %v2840 = vunpack.c.l.b16 %v396
        %v2841 = vunpack.c.h.b16 %v396
        %v2842 = vunpack.c.l.b16 %v397
        %v2843 = vunpack.c.h.b16 %v397
        %v2844 = vunpack.c.l.b16 %v398
        %v2845 = vunpack.c.h.b16 %v398
        %v2846 = vunpack.c.l.b16 %v399
        %v2847 = vunpack.c.h.b16 %v399
        %v2848 = vunpack.c.l.b16 %v400
        %v2849 = vunpack.c.h.b16 %v400
        %v2850 = vunpack.c.l.b16 %v401
        %v2851 = vunpack.c.h.b16 %v401
        %v2852 = vunpack.c.l.b16 %v402
        %v2853 = vunpack.c.h.b16 %v402
        %v2854 = vunpack.c.l.b16 %v403
        %v2855 = vunpack.c.h.b16 %v403
        %v2856 = vunpack.c.l.b16 %v404
        %v2857 = vunpack.c.h.b16 %v404
        %v2858 = vunpack.c.l.b16 %v405
        %v2859 = vunpack.c.h.b16 %v405
        %v2860 = vunpack.c.l.b16 %v406
        %v2861 = vunpack.c.h.b16 %v406
        %v2862 = vunpack.c.l.b16 %v407
        %v2863 = vunpack.c.h.b16 %v407
        %v2864 = vunpack.c.l.b16 %v408
        %v2865 = vunpack.c.h.b16 %v408
        %v2866 = vunpack.c.l.b16 %v409
        %v2867 = vunpack.c.h.b16 %v409
        %v2868 = vunpack.c.l.b16 %v410
        %v2869 = vunpack.c.h.b16 %v410
        %v2870 = vunpack.c.l.b16 %v411
        %v2871 = vunpack.c.h.b16 %v411
        %v2872 = vunpack.c.l.b16 %v412
        %v2873 = vunpack.c.h.b16 %v412
        %v2874 = vunpack.c.l.b16 %v413
        %v2875 = vunpack.c.h.b16 %v413
        %v2876 = vunpack.c.l.b16 %v414
        %v2877 = vunpack.c.h.b16 %v414
        %v2878 = vunpack.c.l.b16 %v415
        %v2879 = vunpack.c.h.b16 %v415
        %v2880 = vunpack.c.l.b16 %v416
        %v2881 = vunpack.c.h.b16 %v416
        %v2882 = vunpack.c.l.b16 %v417
        %v2883 = vunpack.c.h.b16 %v417
        %v2884 = vunpack.c.l.b16 %v418
        %v2885 = vunpack.c.h.b16 %v418
        %v2886 = vunpack.c.l.b16 %v419
        %v2887 = vunpack.c.h.b16 %v419
        %v2888 = vunpack.c.l.b16 %v420
        %v2889 = vunpack.c.h.b16 %v420
        %v2890 = vunpack.c.l.b16 %v421
        %v2891 = vunpack.c.h.b16 %v421
        %v2892 = vunpack.c.l.b16 %v422
        %v2893 = vunpack.c.h.b16 %v422
        %v2894 = vunpack.c.l.b16 %v423
        %v2895 = vunpack.c.h.b16 %v423
        %v2896 = vunpack.c.l.b16 %v424
        %v2897 = vunpack.c.h.b16 %v424
        %v2898 = vunpack.c.l.b16 %v425
        %v2899 = vunpack.c.h.b16 %v425
        %v2900 = vunpack.c.l.b16 %v426
        %v2901 = vunpack.c.h.b16 %v426
        %v2902 = vunpack.c.l.b16 %v427
        %v2903 = vunpack.c.h.b16 %v427
        %v2904 = vunpack.c.l.b16 %v428
        %v2905 = vunpack.c.h.b16 %v428
        %v2906 = vunpack.c.l.b16 %v429
        %v2907 = vunpack.c.h.b16 %v429
        %v2908 = vunpack.c.l.b16 %v430
        %v2909 = vunpack.c.h.b16 %v430
        %v2910 = vunpack.c.l.b16 %v431
        %v2911 = vunpack.c.h.b16 %v431
        %v2912 = vunpack.c.l.b16 %v432
        %v2913 = vunpack.c.h.b16 %v432
        %v2914 = vunpack.c.l.b16 %v433
        %v2915 = vunpack.c.h.b16 %v433
        %v2916 = vunpack.c.l.b16 %v434
        %v2917 = vunpack.c.h.b16 %v434
        %v2918 = vunpack.c.l.b16 %v435
        %v2919 = vunpack.c.h.b16 %v435
        %v2920 = vunpack.c.l.b16 %v436
        %v2921 = vunpack.c.h.b16 %v436
        %v2922 = vunpack.c.l.b16 %v437
        %v2923 = vunpack.c.h.b16 %v437
        %v2924 = vunpack.c.l.b16 %v438
        %v2925 = vunpack.c.h.b16 %v438
        %v2926 = vunpack.c.l.b16 %v439
        %v2927 = vunpack.c.h.b16 %v439
        %v2928 = vunpack.c.l.b16 %v440
        %v2929 = vunpack.c.h.b16 %v440
        %v2930 = vunpack.c.l.b16 %v441
        %v2931 = vunpack.c.h.b16 %v441
        %v2932 = vunpack.c.l.b16 %v442
        %v2933 = vunpack.c.h.b16 %v442
        %v2934 = vunpack.c.l.b16 %v443
        %v2935 = vunpack.c.h.b16 %v443
        %v2936 = vunpack.c.l.b16 %v444
        %v2937 = vunpack.c.h.b16 %v444
        %v2938 = vunpack.c.l.b16 %v445
        %v2939 = vunpack.c.h.b16 %v445
        %v2940 = vunpack.c.l.b16 %v446
        %v2941 = vunpack.c.h.b16 %v446
        %v2942 = vunpack.c.l.b16 %v447
        %v2943 = vunpack.c.h.b16 %v447
        %v2944 = vunpack.c.l.b16 %v448
        %v2945 = vunpack.c.h.b16 %v448
        %v2946 = vunpack.c.l.b16 %v449
        %v2947 = vunpack.c.h.b16 %v449
        %v2948 = vunpack.c.l.b16 %v450
        %v2949 = vunpack.c.h.b16 %v450
        %v2950 = vunpack.c.l.b16 %v451
        %v2951 = vunpack.c.h.b16 %v451
        %v2952 = vunpack.c.l.b16 %v452
        %v2953 = vunpack.c.h.b16 %v452
        %v2954 = vunpack.c.l.b16 %v453
        %v2955 = vunpack.c.h.b16 %v453
        %v2956 = vunpack.c.l.b16 %v454
        %v2957 = vunpack.c.h.b16 %v454
        %v2958 = vunpack.c.l.b16 %v455
        %v2959 = vunpack.c.h.b16 %v455
        %v2960 = vunpack.c.l.b16 %v456
        %v2961 = vunpack.c.h.b16 %v456
        %v2962 = vunpack.c.l.b16 %v457
        %v2963 = vunpack.c.h.b16 %v457
        %v2964 = vunpack.c.l.b16 %v458
        %v2965 = vunpack.c.h.b16 %v458
        %v2966 = vunpack.c.l.b16 %v459
        %v2967 = vunpack.c.h.b16 %v459
        %v2968 = vunpack.c.l.b16 %v460
        %v2969 = vunpack.c.h.b16 %v460
        %v2970 = vunpack.c.l.b16 %v461
        %v2971 = vunpack.c.h.b16 %v461
        %v2972 = vunpack.c.l.b16 %v462
        %v2973 = vunpack.c.h.b16 %v462
        %v2974 = vunpack.c.l.b16 %v463
        %v2975 = vunpack.c.h.b16 %v463
        %v2976 = vunpack.c.l.b16 %v464
        %v2977 = vunpack.c.h.b16 %v464
        %v2978 = vunpack.c.l.b16 %v465
        %v2979 = vunpack.c.h.b16 %v465
        %v2980 = vunpack.c.l.b16 %v466
        %v2981 = vunpack.c.h.b16 %v466
        %v2982 = vunpack.c.l.b16 %v467
        %v2983 = vunpack.c.h.b16 %v467
        %v2984 = vunpack.c.l.b16 %v468
        %v2985 = vunpack.c.h.b16 %v468
        %v2986 = vunpack.c.l.b16 %v469
        %v2987 = vunpack.c.h.b16 %v469
        %v2988 = vunpack.c.l.b16 %v470
        %v2989 = vunpack.c.h.b16 %v470
        %v2990 = vunpack.c.l.b16 %v471
        %v2991 = vunpack.c.h.b16 %v471
        %v2992 = vunpack.c.l.b16 %v472
        %v2993 = vunpack.c.h.b16 %v472
        %v2994 = vunpack.c.l.b16 %v473
        %v2995 = vunpack.c.h.b16 %v473
        %v2996 = vunpack.c.l.b16 %v474
        %v2997 = vunpack.c.h.b16 %v474
        %v2998 = vunpack.c.l.b16 %v475
        %v2999 = vunpack.c.h.b16 %v475
        %v3000 = vunpack.c.l.b16 %v476
        %v3001 = vunpack.c.h.b16 %v476
        %v3002 = vunpack.c.l.b16 %v477
        %v3003 = vunpack.c.h.b16 %v477
        %v3004 = vunpack.c.l.b16 %v478
        %v3005 = vunpack.c.h.b16 %v478
        %v3006 = vunpack.c.l.b16 %v479
        %v3007 = vunpack.c.h.b16 %v479
        %v3008 = vunpack.c.l.b16 %v480
        %v3009 = vunpack.c.h.b16 %v480
        %v3010 = vunpack.c.l.b16 %v481
        %v3011 = vunpack.c.h.b16 %v481
        %v3012 = vunpack.c.l.b16 %v482
        %v3013 = vunpack.c.h.b16 %v482
        %v3014 = vunpack.c.l.b16 %v483
        %v3015 = vunpack.c.h.b16 %v483
        %v3016 = vunpack.c.l.b16 %v484
        %v3017 = vunpack.c.h.b16 %v484
        %v3018 = vunpack.c.l.b16 %v485
        %v3019 = vunpack.c.h.b16 %v485
        %v3020 = vunpack.c.l.b16 %v486
        %v3021 = vunpack.c.h.b16 %v486
        %v3022 = vunpack.c.l.b16 %v487
        %v3023 = vunpack.c.h.b16 %v487
        %v3024 = vunpack.c.l.b16 %v488
        %v3025 = vunpack.c.h.b16 %v488
        %v3026 = vunpack.c.l.b16 %v489
        %v3027 = vunpack.c.h.b16 %v489
        %v3028 = vunpack.c.l.b16 %v490
        %v3029 = vunpack.c.h.b16 %v490
        %v3030 = vunpack.c.l.b16 %v491
        %v3031 = vunpack.c.h.b16 %v491
        %v3032 = vunpack.c.l.b16 %v492
        %v3033 = vunpack.c.h.b16 %v492
        %v3034 = vunpack.c.l.b16 %v493
        %v3035 = vunpack.c.h.b16 %v493
        %v3036 = vunpack.c.l.b16 %v494
        %v3037 = vunpack.c.h.b16 %v494
        %v3038 = vunpack.c.l.b16 %v495
        %v3039 = vunpack.c.h.b16 %v495
        %v3040 = vunpack.c.l.b16 %v496
        %v3041 = vunpack.c.h.b16 %v496
        %v3042 = vunpack.c.l.b16 %v497
        %v3043 = vunpack.c.h.b16 %v497
        %v3044 = vunpack.c.l.b16 %v498
        %v3045 = vunpack.c.h.b16 %v498
        %v3046 = vunpack.c.l.b16 %v499
        %v3047 = vunpack.c.h.b16 %v499
        %v3048 = vunpack.c.l.b16 %v500
        %v3049 = vunpack.c.h.b16 %v500
        %v3050 = vunpack.c.l.b16 %v501
        %v3051 = vunpack.c.h.b16 %v501
        %v3052 = vunpack.c.l.b16 %v502
        %v3053 = vunpack.c.h.b16 %v502
        %v3054 = vunpack.c.l.b16 %v503
        %v3055 = vunpack.c.h.b16 %v503
        %v3056 = vunpack.c.l.b16 %v504
        %v3057 = vunpack.c.h.b16 %v504
        %v3058 = vunpack.c.l.b16 %v505
        %v3059 = vunpack.c.h.b16 %v505
        %v3060 = vunpack.c.l.b16 %v506
        %v3061 = vunpack.c.h.b16 %v506
        %v3062 = vunpack.c.l.b16 %v507
        %v3063 = vunpack.c.h.b16 %v507
        %v3064 = vunpack.c.l.b16 %v508
        %v3065 = vunpack.c.h.b16 %v508
        %v3066 = vunpack.c.l.b16 %v509
        %v3067 = vunpack.c.h.b16 %v509
        %v3068 = vunpack.c.l.b16 %v510
        %v3069 = vunpack.c.h.b16 %v510
        %v3070 = vunpack.c.l.b16 %v511
        %v3071 = vunpack.c.h.b16 %v511
        %v3072 = vunpack.c.l.b16 %v512
        %v3073 = vunpack.c.h.b16 %v512
        %v3074 = vunpack.c.l.b16 %v513
        %v3075 = vunpack.c.h.b16 %v513
        %v3076 = vunpack.c.l.b16 %v514
        %v3077 = vunpack.c.h.b16 %v514
        %v3078 = vunpack.c.l.b16 %v515
        %v3079 = vunpack.c.h.b16 %v515
        %v3080 = vunpack.c.l.b16 %v516
        %v3081 = vunpack.c.h.b16 %v516
        %v3082 = vunpack.c.l.b16 %v517
        %v3083 = vunpack.c.h.b16 %v517
        %v3084 = vunpack.c.l.b16 %v518
        %v3085 = vunpack.c.h.b16 %v518
        %v3086 = vunpack.c.l.b16 %v519
        %v3087 = vunpack.c.h.b16 %v519
        %v3088 = vunpack.c.l.b16 %v520
        %v3089 = vunpack.c.h.b16 %v520
        %v3090 = vunpack.c.l.b16 %v521
        %v3091 = vunpack.c.h.b16 %v521
        %v3092 = vunpack.c.l.b16 %v522
        %v3093 = vunpack.c.h.b16 %v522
        %v3094 = vunpack.c.l.b16 %v523
        %v3095 = vunpack.c.h.b16 %v523
        %v3096 = vunpack.c.l.b16 %v524
        %v3097 = vunpack.c.h.b16 %v524
        %v3098 = vunpack.c.l.b16 %v525
        %v3099 = vunpack.c.h.b16 %v525
        %v3100 = vunpack.c.l.b16 %v526
        %v3101 = vunpack.c.h.b16 %v526
        %v3102 = vunpack.c.l.b16 %v527
        %v3103 = vunpack.c.h.b16 %v527
        %v3104 = vunpack.c.l.b16 %v528
        %v3105 = vunpack.c.h.b16 %v528
        %v3106 = vunpack.c.l.b16 %v529
        %v3107 = vunpack.c.h.b16 %v529
        %v3108 = vunpack.c.l.b16 %v530
        %v3109 = vunpack.c.h.b16 %v530
        %v3110 = vunpack.c.l.b16 %v531
        %v3111 = vunpack.c.h.b16 %v531
        %v3112 = vunpack.c.l.b16 %v532
        %v3113 = vunpack.c.h.b16 %v532
        %v3114 = vunpack.c.l.b16 %v533
        %v3115 = vunpack.c.h.b16 %v533
        %v3116 = vunpack.c.l.b16 %v534
        %v3117 = vunpack.c.h.b16 %v534
        %v3118 = vunpack.c.l.b16 %v535
        %v3119 = vunpack.c.h.b16 %v535
        %v3120 = vunpack.c.l.b16 %v536
        %v3121 = vunpack.c.h.b16 %v536
        %v3122 = vunpack.c.l.b16 %v537
        %v3123 = vunpack.c.h.b16 %v537
        %v3124 = vunpack.c.l.b16 %v538
        %v3125 = vunpack.c.h.b16 %v538
        %v3126 = vunpack.c.l.b16 %v539
        %v3127 = vunpack.c.h.b16 %v539
        %v3128 = vunpack.c.l.b16 %v540
        %v3129 = vunpack.c.h.b16 %v540
        %v3130 = vunpack.c.l.b16 %v541
        %v3131 = vunpack.c.h.b16 %v541
        %v3132 = vunpack.c.l.b16 %v542
        %v3133 = vunpack.c.h.b16 %v542
        %v3134 = vunpack.c.l.b16 %v543
        %v3135 = vunpack.c.h.b16 %v543
        %v3136 = vunpack.c.l.b16 %v544
        %v3137 = vunpack.c.h.b16 %v544
        %v3138 = vunpack.c.l.b16 %v545
        %v3139 = vunpack.c.h.b16 %v545
        %v3140 = vunpack.c.l.b16 %v546
        %v3141 = vunpack.c.h.b16 %v546
        %v3142 = vunpack.c.l.b16 %v547
        %v3143 = vunpack.c.h.b16 %v547
        %v3144 = vunpack.c.l.b16 %v548
        %v3145 = vunpack.c.h.b16 %v548
        %v3146 = vunpack.c.l.b16 %v549
        %v3147 = vunpack.c.h.b16 %v549
        %v3148 = vunpack.c.l.b16 %v550
        %v3149 = vunpack.c.h.b16 %v550
        %v3150 = vunpack.c.l.b16 %v551
        %v3151 = vunpack.c.h.b16 %v551
        %v3152 = vunpack.c.l.b16 %v552
        %v3153 = vunpack.c.h.b16 %v552
        %v3154 = vunpack.c.l.b16 %v553
        %v3155 = vunpack.c.h.b16 %v553
        %v3156 = vunpack.c.l.b16 %v554
        %v3157 = vunpack.c.h.b16 %v554
        %v3158 = vunpack.c.l.b16 %v555
        %v3159 = vunpack.c.h.b16 %v555
        %v3160 = vunpack.c.l.b16 %v556
        %v3161 = vunpack.c.h.b16 %v556
        %v3162 = vunpack.c.l.b16 %v557
        %v3163 = vunpack.c.h.b16 %v557
        %v3164 = vunpack.c.l.b16 %v558
        %v3165 = vunpack.c.h.b16 %v558
        %v3166 = vunpack.c.l.b16 %v559
        %v3167 = vunpack.c.h.b16 %v559
        %v3168 = vunpack.c.l.b16 %v560
        %v3169 = vunpack.c.h.b16 %v560
        %v3170 = vunpack.c.l.b16 %v561
        %v3171 = vunpack.c.h.b16 %v561
        %v3172 = vunpack.c.l.b16 %v562
        %v3173 = vunpack.c.h.b16 %v562
        %v3174 = vunpack.c.l.b16 %v563
        %v3175 = vunpack.c.h.b16 %v563
        %v3176 = vunpack.c.l.b16 %v564
        %v3177 = vunpack.c.h.b16 %v564
        %v3178 = vunpack.c.l.b16 %v565
        %v3179 = vunpack.c.h.b16 %v565
        %v3180 = vunpack.c.l.b16 %v566
        %v3181 = vunpack.c.h.b16 %v566
        %v3182 = vunpack.c.l.b16 %v567
        %v3183 = vunpack.c.h.b16 %v567
        %v3184 = vunpack.c.l.b16 %v568
        %v3185 = vunpack.c.h.b16 %v568
        %v3186 = vunpack.c.l.b16 %v569
        %v3187 = vunpack.c.h.b16 %v569
        %v3188 = vunpack.c.l.b16 %v570
        %v3189 = vunpack.c.h.b16 %v570
        %v3190 = vunpack.c.l.b16 %v571
        %v3191 = vunpack.c.h.b16 %v571
        %v3192 = vunpack.c.l.b16 %v572
        %v3193 = vunpack.c.h.b16 %v572
        %v3194 = vunpack.c.l.b16 %v573
        %v3195 = vunpack.c.h.b16 %v573
        %v3196 = vunpack.c.l.b16 %v574
        %v3197 = vunpack.c.h.b16 %v574
        %v3198 = vunpack.c.l.b16 %v575
        %v3199 = vunpack.c.h.b16 %v575
        %v3200 = vunpack.c.l.b16 %v576
        %v3201 = vunpack.c.h.b16 %v576
        %v3202 = vunpack.c.l.b16 %v577
        %v3203 = vunpack.c.h.b16 %v577
        %v3204 = vunpack.c.l.b16 %v578
        %v3205 = vunpack.c.h.b16 %v578
        %v3206 = vunpack.c.l.b16 %v579
        %v3207 = vunpack.c.h.b16 %v579
        %v3208 = vunpack.c.l.b16 %v580
        %v3209 = vunpack.c.h.b16 %v580
        %v3210 = vunpack.c.l.b16 %v581
        %v3211 = vunpack.c.h.b16 %v581
        %v3212 = vunpack.c.l.b16 %v582
        %v3213 = vunpack.c.h.b16 %v582
        %v3214 = vunpack.c.l.b16 %v583
        %v3215 = vunpack.c.h.b16 %v583
        %v3216 = vunpack.c.l.b16 %v584
        %v3217 = vunpack.c.h.b16 %v584
        %v3218 = vunpack.c.l.b16 %v585
        %v3219 = vunpack.c.h.b16 %v585
        %v3220 = vunpack.c.l.b16 %v586
        %v3221 = vunpack.c.h.b16 %v586
        %v3222 = vunpack.c.l.b16 %v587
        %v3223 = vunpack.c.h.b16 %v587
        %v3224 = vunpack.c.l.b16 %v588
        %v3225 = vunpack.c.h.b16 %v588
        %v3226 = vunpack.c.l.b16 %v589
        %v3227 = vunpack.c.h.b16 %v589
        %v3228 = vunpack.c.l.b16 %v590
        %v3229 = vunpack.c.h.b16 %v590
        %v3230 = vunpack.c.l.b16 %v591
        %v3231 = vunpack.c.h.b16 %v591
        %v3232 = vunpack.c.l.b16 %v592
        %v3233 = vunpack.c.h.b16 %v592
        %v3234 = vunpack.c.l.b16 %v593
        %v3235 = vunpack.c.h.b16 %v593
        %v3236 = vunpack.c.l.b16 %v594
        %v3237 = vunpack.c.h.b16 %v594
        %v3238 = vunpack.c.l.b16 %v595
        %v3239 = vunpack.c.h.b16 %v595
        %v3240 = vunpack.c.l.b16 %v596
        %v3241 = vunpack.c.h.b16 %v596
        %v3242 = vunpack.c.l.b16 %v597
        %v3243 = vunpack.c.h.b16 %v597
        %v3244 = vunpack.c.l.b16 %v598
        %v3245 = vunpack.c.h.b16 %v598
        %v3246 = vunpack.c.l.b16 %v599
        %v3247 = vunpack.c.h.b16 %v599
        %v3248 = vunpack.c.l.b16 %v600
        %v3249 = vunpack.c.h.b16 %v600
        %v3250 = vunpack.c.l.b16 %v601
        %v3251 = vunpack.c.h.b16 %v601
        %v3252 = vunpack.c.l.b16 %v602
        %v3253 = vunpack.c.h.b16 %v602
        %v3254 = vunpack.c.l.b16 %v603
        %v3255 = vunpack.c.h.b16 %v603
        %v3256 = vunpack.c.l.b16 %v604
        %v3257 = vunpack.c.h.b16 %v604
        %v3258 = vunpack.c.l.b16 %v605
        %v3259 = vunpack.c.h.b16 %v605
        %v3260 = vunpack.c.l.b16 %v606
        %v3261 = vunpack.c.h.b16 %v606
        %v3262 = vunpack.c.l.b16 %v607
        %v3263 = vunpack.c.h.b16 %v607
        %v3264 = vunpack.c.l.b16 %v608
        %v3265 = vunpack.c.h.b16 %v608
        %v3266 = vunpack.c.l.b16 %v609
        %v3267 = vunpack.c.h.b16 %v609
        %v3268 = vunpack.c.l.b16 %v610
        %v3269 = vunpack.c.h.b16 %v610
        %v3270 = vunpack.c.l.b16 %v611
        %v3271 = vunpack.c.h.b16 %v611
        %v3272 = vunpack.c.l.b16 %v612
        %v3273 = vunpack.c.h.b16 %v612
        %v3274 = vunpack.c.l.b16 %v613
        %v3275 = vunpack.c.h.b16 %v613
        %v3276 = vunpack.c.l.b16 %v614
        %v3277 = vunpack.c.h.b16 %v614
        %v3278 = vunpack.c.l.b16 %v615
        %v3279 = vunpack.c.h.b16 %v615
        %v3280 = vunpack.c.l.b16 %v616
        %v3281 = vunpack.c.h.b16 %v616
        %v3282 = vunpack.c.l.b16 %v617
        %v3283 = vunpack.c.h.b16 %v617
        %v3284 = vunpack.c.l.b16 %v618
        %v3285 = vunpack.c.h.b16 %v618
        %v3286 = vunpack.c.l.b16 %v619
        %v3287 = vunpack.c.h.b16 %v619
        %v3288 = vunpack.c.l.b16 %v620
        %v3289 = vunpack.c.h.b16 %v620
        %v3290 = vunpack.c.l.b16 %v621
        %v3291 = vunpack.c.h.b16 %v621
        %v3292 = vunpack.c.l.b16 %v622
        %v3293 = vunpack.c.h.b16 %v622
        %v3294 = vunpack.c.l.b16 %v623
        %v3295 = vunpack.c.h.b16 %v623
        %v3296 = vunpack.c.l.b16 %v624
        %v3297 = vunpack.c.h.b16 %v624
        %v3298 = vunpack.c.l.b16 %v625
        %v3299 = vunpack.c.h.b16 %v625
        %v3300 = vunpack.c.l.b16 %v626
        %v3301 = vunpack.c.h.b16 %v626
        %v3302 = vunpack.c.l.b16 %v627
        %v3303 = vunpack.c.h.b16 %v627
        %v3304 = vunpack.c.l.b16 %v628
        %v3305 = vunpack.c.h.b16 %v628
        %v3306 = vunpack.c.l.b16 %v629
        %v3307 = vunpack.c.h.b16 %v629
        %v3308 = vunpack.c.l.b16 %v630
        %v3309 = vunpack.c.h.b16 %v630
        %v3310 = vunpack.c.l.b16 %v631
        %v3311 = vunpack.c.h.b16 %v631
        %v3312 = vunpack.c.l.b16 %v632
        %v3313 = vunpack.c.h.b16 %v632
        %v3314 = vunpack.c.l.b16 %v633
        %v3315 = vunpack.c.h.b16 %v633
        %v3316 = vunpack.c.l.b16 %v634
        %v3317 = vunpack.c.h.b16 %v634
        %v3318 = vunpack.c.l.b16 %v635
        %v3319 = vunpack.c.h.b16 %v635
        %v3320 = vunpack.c.l.b16 %v636
        %v3321 = vunpack.c.h.b16 %v636
        %v3322 = vunpack.c.l.b16 %v637
        %v3323 = vunpack.c.h.b16 %v637
        %v3324 = vunpack.c.l.b16 %v638
        %v3325 = vunpack.c.h.b16 %v638
        %v3326 = vunpack.c.l.b16 %v639
        %v3327 = vunpack.c.h.b16 %v639
        %v3328 = vunpack.c.l.b16 %v640
        %v3329 = vunpack.c.h.b16 %v640
        %v3330 = vunpack.c.l.b16 %v641
        %v3331 = vunpack.c.h.b16 %v641
        %v3332 = vunpack.c.l.b16 %v642
        %v3333 = vunpack.c.h.b16 %v642
        %v3334 = vunpack.c.l.b16 %v643
        %v3335 = vunpack.c.h.b16 %v643
        %v3336 = vunpack.c.l.b16 %v644
        %v3337 = vunpack.c.h.b16 %v644
        %v3338 = vunpack.c.l.b16 %v645
        %v3339 = vunpack.c.h.b16 %v645
        %v3340 = vunpack.c.l.b16 %v646
        %v3341 = vunpack.c.h.b16 %v646
        %v3342 = vunpack.c.l.b16 %v647
        %v3343 = vunpack.c.h.b16 %v647
        %v3344 = vunpack.c.l.b16 %v648
        %v3345 = vunpack.c.h.b16 %v648
        %v3346 = vunpack.c.l.b16 %v649
        %v3347 = vunpack.c.h.b16 %v649
        %v3348 = vunpack.c.l.b16 %v650
        %v3349 = vunpack.c.h.b16 %v650
        %v3350 = vunpack.c.l.b16 %v651
        %v3351 = vunpack.c.h.b16 %v651
        %v3352 = vunpack.c.l.b16 %v652
        %v3353 = vunpack.c.h.b16 %v652
        %v3354 = vunpack.c.l.b16 %v653
        %v3355 = vunpack.c.h.b16 %v653
        %v3356 = vunpack.c.l.b16 %v654
        %v3357 = vunpack.c.h.b16 %v654
        %v3358 = vunpack.c.l.b16 %v655
        %v3359 = vunpack.c.h.b16 %v655
        %v3360 = vunpack.c.l.b16 %v656
        %v3361 = vunpack.c.h.b16 %v656
        %v3362 = vunpack.c.l.b16 %v657
        %v3363 = vunpack.c.h.b16 %v657
        %v3364 = vunpack.c.l.b16 %v658
        %v3365 = vunpack.c.h.b16 %v658
        %v3366 = vunpack.c.l.b16 %v659
        %v3367 = vunpack.c.h.b16 %v659
        %v3368 = vunpack.c.l.b16 %v660
        %v3369 = vunpack.c.h.b16 %v660
        %v3370 = vunpack.c.l.b16 %v661
        %v3371 = vunpack.c.h.b16 %v661
        %v3372 = vunpack.c.l.b16 %v662
        %v3373 = vunpack.c.h.b16 %v662
        %v3374 = vunpack.c.l.b16 %v663
        %v3375 = vunpack.c.h.b16 %v663
        %v3376 = vunpack.c.l.b16 %v664
        %v3377 = vunpack.c.h.b16 %v664
        %v3378 = vunpack.c.l.b16 %v665
        %v3379 = vunpack.c.h.b16 %v665
        %v3380 = vunpack.c.l.b16 %v666
        %v3381 = vunpack.c.h.b16 %v666
        %v3382 = vunpack.c.l.b16 %v667
        %v3383 = vunpack.c.h.b16 %v667
        %v3384 = vunpack.c.l.b16 %v668
        %v3385 = vunpack.c.h.b16 %v668
        %v3386 = vunpack.c.l.b16 %v669
        %v3387 = vunpack.c.h.b16 %v669
        %v3388 = vunpack.c.l.b16 %v670
        %v3389 = vunpack.c.h.b16 %v670
        %v3390 = vunpack.c.l.b16 %v671
        %v3391 = vunpack.c.h.b16 %v671
        %v3392 = vunpack.c.l.b16 %v672
        %v3393 = vunpack.c.h.b16 %v672
        %v3394 = vunpack.c.l.b16 %v673
        %v3395 = vunpack.c.h.b16 %v673
        %v3396 = vunpack.c.l.b16 %v674
        %v3397 = vunpack.c.h.b16 %v674
        %v3398 = vunpack.c.l.b16 %v675
        %v3399 = vunpack.c.h.b16 %v675
        %v3400 = vunpack.c.l.b16 %v676
        %v3401 = vunpack.c.h.b16 %v676
        %v3402 = vunpack.c.l.b16 %v677
        %v3403 = vunpack.c.h.b16 %v677
        %v3404 = vunpack.c.l.b16 %v678
        %v3405 = vunpack.c.h.b16 %v678
        %v3406 = vunpack.c.l.b16 %v679
        %v3407 = vunpack.c.h.b16 %v679
        %v3408 = vunpack.c.l.b16 %v680
        %v3409 = vunpack.c.h.b16 %v680
        %v3410 = vunpack.c.l.b16 %v681
        %v3411 = vunpack.c.h.b16 %v681
        %v3412 = vunpack.c.l.b16 %v682
        %v3413 = vunpack.c.h.b16 %v682
        %v3414 = vunpack.c.l.b16 %v683
        %v3415 = vunpack.c.h.b16 %v683
        %v3416 = vunpack.c.l.b16 %v684
        %v3417 = vunpack.c.h.b16 %v684
        %v3418 = vunpack.c.l.b16 %v685
        %v3419 = vunpack.c.h.b16 %v685
        %v3420 = vunpack.c.l.b16 %v686
        %v3421 = vunpack.c.h.b16 %v686
        %v3422 = vunpack.c.l.b16 %v687
        %v3423 = vunpack.c.h.b16 %v687
        %v3424 = vunpack.c.l.b16 %v688
        %v3425 = vunpack.c.h.b16 %v688
        %v3426 = vunpack.c.l.b16 %v689
        %v3427 = vunpack.c.h.b16 %v689
        %v3428 = vunpack.c.l.b16 %v690
        %v3429 = vunpack.c.h.b16 %v690
        %v3430 = vunpack.c.l.b16 %v691
        %v3431 = vunpack.c.h.b16 %v691
        %v3432 = vunpack.c.l.b16 %v692
        %v3433 = vunpack.c.h.b16 %v692
        %v3434 = vunpack.c.l.b16 %v693
        %v3435 = vunpack.c.h.b16 %v693
        %v3436 = vunpack.c.l.b16 %v694
        %v3437 = vunpack.c.h.b16 %v694
        %v3438 = vunpack.c.l.b16 %v695
        %v3439 = vunpack.c.h.b16 %v695
        %v3440 = vunpack.c.l.b16 %v696
        %v3441 = vunpack.c.h.b16 %v696
        %v3442 = vunpack.c.l.b16 %v697
        %v3443 = vunpack.c.h.b16 %v697
        %v3444 = vunpack.c.l.b16 %v698
        %v3445 = vunpack.c.h.b16 %v698
        %v3446 = vunpack.c.l.b16 %v699
        %v3447 = vunpack.c.h.b16 %v699
        %v3448 = vunpack.c.l.b16 %v700
        %v3449 = vunpack.c.h.b16 %v700
        %v3450 = vunpack.c.l.b16 %v701
        %v3451 = vunpack.c.h.b16 %v701
        %v3452 = vunpack.c.l.b16 %v702
        %v3453 = vunpack.c.h.b16 %v702
        %v3454 = vunpack.c.l.b16 %v703
        %v3455 = vunpack.c.h.b16 %v703
        %v3456 = vunpack.c.l.b16 %v704
        %v3457 = vunpack.c.h.b16 %v704
        %v3458 = vunpack.c.l.b16 %v705
        %v3459 = vunpack.c.h.b16 %v705
        %v3460 = vunpack.c.l.b16 %v706
        %v3461 = vunpack.c.h.b16 %v706
        %v3462 = vunpack.c.l.b16 %v707
        %v3463 = vunpack.c.h.b16 %v707
        %v3464 = vunpack.c.l.b16 %v708
        %v3465 = vunpack.c.h.b16 %v708
        %v3466 = vunpack.c.l.b16 %v709
        %v3467 = vunpack.c.h.b16 %v709
        %v3468 = vunpack.c.l.b16 %v710
        %v3469 = vunpack.c.h.b16 %v710
        %v3470 = vunpack.c.l.b16 %v711
        %v3471 = vunpack.c.h.b16 %v711
        %v3472 = vunpack.c.l.b16 %v712
        %v3473 = vunpack.c.h.b16 %v712
        %v3474 = vunpack.c.l.b16 %v713
        %v3475 = vunpack.c.h.b16 %v713
        %v3476 = vunpack.c.l.b16 %v714
        %v3477 = vunpack.c.h.b16 %v714
        %v3478 = vunpack.c.l.b16 %v715
        %v3479 = vunpack.c.h.b16 %v715
        %v3480 = vunpack.c.l.b16 %v716
        %v3481 = vunpack.c.h.b16 %v716
        %v3482 = vunpack.c.l.b16 %v717
        %v3483 = vunpack.c.h.b16 %v717
        %v3484 = vunpack.c.l.b16 %v718
        %v3485 = vunpack.c.h.b16 %v718
        %v3486 = vunpack.c.l.b16 %v719
        %v3487 = vunpack.c.h.b16 %v719
        %v3488 = vunpack.c.l.b16 %v720
        %v3489 = vunpack.c.h.b16 %v720
        %v3490 = vunpack.c.l.b16 %v721
        %v3491 = vunpack.c.h.b16 %v721
        %v3492 = vunpack.c.l.b16 %v722
        %v3493 = vunpack.c.h.b16 %v722
        %v3494 = vunpack.c.l.b16 %v723
        %v3495 = vunpack.c.h.b16 %v723
        %v3496 = vunpack.c.l.b16 %v724
        %v3497 = vunpack.c.h.b16 %v724
        %v3498 = vunpack.c.l.b16 %v725
        %v3499 = vunpack.c.h.b16 %v725
        %v3500 = vunpack.c.l.b16 %v726
        %v3501 = vunpack.c.h.b16 %v726
        %v3502 = vunpack.c.l.b16 %v727
        %v3503 = vunpack.c.h.b16 %v727
        %v3504 = vunpack.c.l.b16 %v728
        %v3505 = vunpack.c.h.b16 %v728
        %v3506 = vunpack.c.l.b16 %v729
        %v3507 = vunpack.c.h.b16 %v729
        %v3508 = vunpack.c.l.b16 %v730
        %v3509 = vunpack.c.h.b16 %v730
        %v3510 = vunpack.c.l.b16 %v731
        %v3511 = vunpack.c.h.b16 %v731
        %v3512 = vunpack.c.l.b16 %v732
        %v3513 = vunpack.c.h.b16 %v732
        %v3514 = vunpack.c.l.b16 %v733
        %v3515 = vunpack.c.h.b16 %v733
        %v3516 = vunpack.c.l.b16 %v734
        %v3517 = vunpack.c.h.b16 %v734
        %v3518 = vunpack.c.l.b16 %v735
        %v3519 = vunpack.c.h.b16 %v735
        %v3520 = vunpack.c.l.b16 %v736
        %v3521 = vunpack.c.h.b16 %v736
        %v3522 = vunpack.c.l.b16 %v737
        %v3523 = vunpack.c.h.b16 %v737
        %v3524 = vunpack.c.l.b16 %v738
        %v3525 = vunpack.c.h.b16 %v738
        %v3526 = vunpack.c.l.b16 %v739
        %v3527 = vunpack.c.h.b16 %v739
        %v3528 = vunpack.c.l.b16 %v740
        %v3529 = vunpack.c.h.b16 %v740
        %v3530 = vunpack.c.l.b16 %v741
        %v3531 = vunpack.c.h.b16 %v741
        %v3532 = vunpack.c.l.b16 %v742
        %v3533 = vunpack.c.h.b16 %v742
        %v3534 = vunpack.c.l.b16 %v743
        %v3535 = vunpack.c.h.b16 %v743
        %v3536 = vunpack.c.l.b16 %v744
        %v3537 = vunpack.c.h.b16 %v744
        %v3538 = vunpack.c.l.b16 %v745
        %v3539 = vunpack.c.h.b16 %v745
        %v3540 = vunpack.c.l.b16 %v746
        %v3541 = vunpack.c.h.b16 %v746
        %v3542 = vunpack.c.l.b16 %v747
        %v3543 = vunpack.c.h.b16 %v747
        %v3544 = vunpack.c.l.b16 %v748
        %v3545 = vunpack.c.h.b16 %v748
        %v3546 = vunpack.c.l.b16 %v749
        %v3547 = vunpack.c.h.b16 %v749
        %v3548 = vunpack.c.l.b16 %v750
        %v3549 = vunpack.c.h.b16 %v750
        %v3550 = vunpack.c.l.b16 %v751
        %v3551 = vunpack.c.h.b16 %v751
        %v3552 = vunpack.c.l.b16 %v752
        %v3553 = vunpack.c.h.b16 %v752
        %v3554 = vunpack.c.l.b16 %v753
        %v3555 = vunpack.c.h.b16 %v753
        %v3556 = vunpack.c.l.b16 %v754
        %v3557 = vunpack.c.h.b16 %v754
        %v3558 = vunpack.c.l.b16 %v755
        %v3559 = vunpack.c.h.b16 %v755
        %v3560 = vunpack.c.l.b16 %v756
        %v3561 = vunpack.c.h.b16 %v756
        %v3562 = vunpack.c.l.b16 %v757
        %v3563 = vunpack.c.h.b16 %v757
        %v3564 = vunpack.c.l.b16 %v758
        %v3565 = vunpack.c.h.b16 %v758
        %v3566 = vunpack.c.l.b16 %v759
        %v3567 = vunpack.c.h.b16 %v759
        %v3568 = vunpack.c.l.b16 %v760
        %v3569 = vunpack.c.h.b16 %v760
        %v3570 = vunpack.c.l.b16 %v761
        %v3571 = vunpack.c.h.b16 %v761
        %v3572 = vunpack.c.l.b16 %v762
        %v3573 = vunpack.c.h.b16 %v762
        %v3574 = vunpack.c.l.b16 %v763
        %v3575 = vunpack.c.h.b16 %v763
        %v3576 = vunpack.c.l.b16 %v764
        %v3577 = vunpack.c.h.b16 %v764
        %v3578 = vunpack.c.l.b16 %v765
        %v3579 = vunpack.c.h.b16 %v765
        %v3580 = vunpack.c.l.b16 %v766
        %v3581 = vunpack.c.h.b16 %v766
        %v3582 = vunpack.c.l.b16 %v767
        %v3583 = vunpack.c.h.b16 %v767
        %v3584 = vunpack.c.l.b16 %v768
        %v3585 = vunpack.c.h.b16 %v768
        %v3586 = vunpack.c.l.b16 %v769
        %v3587 = vunpack.c.h.b16 %v769
        %v3588 = vunpack.c.l.b16 %v770
        %v3589 = vunpack.c.h.b16 %v770
        %v3590 = vunpack.c.l.b16 %v771
        %v3591 = vunpack.c.h.b16 %v771
        %v3592 = vunpack.c.l.b16 %v772
        %v3593 = vunpack.c.h.b16 %v772
        %v3594 = vunpack.c.l.b16 %v773
        %v3595 = vunpack.c.h.b16 %v773
        %v3596 = vunpack.c.l.b16 %v774
        %v3597 = vunpack.c.h.b16 %v774
        %v3598 = vunpack.c.l.b16 %v775
        %v3599 = vunpack.c.h.b16 %v775
        %v3600 = vunpack.c.l.b16 %v776
        %v3601 = vunpack.c.h.b16 %v776
        %v3602 = vunpack.c.l.b16 %v777
        %v3603 = vunpack.c.h.b16 %v777
        %v3604 = vunpack.c.l.b16 %v778
        %v3605 = vunpack.c.h.b16 %v778
        %v3606 = vunpack.c.l.b16 %v779
        %v3607 = vunpack.c.h.b16 %v779
        %v3608 = vunpack.c.l.b16 %v780
        %v3609 = vunpack.c.h.b16 %v780
        %v3610 = vunpack.c.l.b16 %v781
        %v3611 = vunpack.c.h.b16 %v781
        %v3612 = vunpack.c.l.b16 %v782
        %v3613 = vunpack.c.h.b16 %v782
        %v3614 = vunpack.c.l.b16 %v783
        %v3615 = vunpack.c.h.b16 %v783
        %v3616 = vunpack.c.l.b16 %v784
        %v3617 = vunpack.c.h.b16 %v784
        %v3618 = vunpack.c.l.b16 %v785
        %v3619 = vunpack.c.h.b16 %v785
        %v3620 = vunpack.c.l.b16 %v786
        %v3621 = vunpack.c.h.b16 %v786
        %v3622 = vunpack.c.l.b16 %v787
        %v3623 = vunpack.c.h.b16 %v787
        %v3624 = vunpack.c.l.b16 %v788
        %v3625 = vunpack.c.h.b16 %v788
        %v3626 = vunpack.c.l.b16 %v789
        %v3627 = vunpack.c.h.b16 %v789
        %v3628 = vunpack.c.l.b16 %v790
        %v3629 = vunpack.c.h.b16 %v790
        %v3630 = vunpack.c.l.b16 %v791
        %v3631 = vunpack.c.h.b16 %v791
        %v3632 = vunpack.c.l.b16 %v792
        %v3633 = vunpack.c.h.b16 %v792
        %v3634 = vunpack.c.l.b16 %v793
        %v3635 = vunpack.c.h.b16 %v793
        %v3636 = vunpack.c.l.b16 %v794
        %v3637 = vunpack.c.h.b16 %v794
        %v3638 = vunpack.c.l.b16 %v795
        %v3639 = vunpack.c.h.b16 %v795
        %v3640 = vunpack.c.l.b16 %v796
        %v3641 = vunpack.c.h.b16 %v796
        %v3642 = vunpack.c.l.b16 %v797
        %v3643 = vunpack.c.h.b16 %v797
        %v3644 = vunpack.c.l.b16 %v798
        %v3645 = vunpack.c.h.b16 %v798
        %v3646 = vunpack.c.l.b16 %v799
        %v3647 = vunpack.c.h.b16 %v799
        %v3648 = vunpack.c.l.b16 %v800
        %v3649 = vunpack.c.h.b16 %v800
        %v3650 = vunpack.c.l.b16 %v801
        %v3651 = vunpack.c.h.b16 %v801
        %v3652 = vunpack.c.l.b16 %v802
        %v3653 = vunpack.c.h.b16 %v802
        %v3654 = vunpack.c.l.b16 %v803
        %v3655 = vunpack.c.h.b16 %v803
        %v3656 = vunpack.c.l.b16 %v804
        %v3657 = vunpack.c.h.b16 %v804
        %v3658 = vunpack.c.l.b16 %v805
        %v3659 = vunpack.c.h.b16 %v805
        %v3660 = vunpack.c.l.b16 %v806
        %v3661 = vunpack.c.h.b16 %v806
        %v3662 = vunpack.c.l.b16 %v807
        %v3663 = vunpack.c.h.b16 %v807
        %v3664 = vunpack.c.l.b16 %v808
        %v3665 = vunpack.c.h.b16 %v808
        %v3666 = vunpack.c.l.b16 %v809
        %v3667 = vunpack.c.h.b16 %v809
        %v3668 = vunpack.c.l.b16 %v810
        %v3669 = vunpack.c.h.b16 %v810
        %v3670 = vunpack.c.l.b16 %v811
        %v3671 = vunpack.c.h.b16 %v811
        %v3672 = vunpack.c.l.b16 %v812
        %v3673 = vunpack.c.h.b16 %v812
        %v3674 = vunpack.c.l.b16 %v813
        %v3675 = vunpack.c.h.b16 %v813
        %v3676 = vunpack.c.l.b16 %v814
        %v3677 = vunpack.c.h.b16 %v814
        %v3678 = vunpack.c.l.b16 %v815
        %v3679 = vunpack.c.h.b16 %v815
        %v3680 = vunpack.c.l.b16 %v816
        %v3681 = vunpack.c.h.b16 %v816
        %v3682 = vunpack.c.l.b16 %v817
        %v3683 = vunpack.c.h.b16 %v817
        %v3684 = vunpack.c.l.b16 %v818
        %v3685 = vunpack.c.h.b16 %v818
        %v3686 = vunpack.c.l.b16 %v819
        %v3687 = vunpack.c.h.b16 %v819
        %v3688 = vunpack.c.l.b16 %v820
        %v3689 = vunpack.c.h.b16 %v820
        %v3690 = vunpack.c.l.b16 %v821
        %v3691 = vunpack.c.h.b16 %v821
        %v3692 = vunpack.c.l.b16 %v822
        %v3693 = vunpack.c.h.b16 %v822
        %v3694 = vunpack.c.l.b16 %v823
        %v3695 = vunpack.c.h.b16 %v823
        %v3696 = vunpack.c.l.b16 %v824
        %v3697 = vunpack.c.h.b16 %v824
        %v3698 = vunpack.c.l.b16 %v825
        %v3699 = vunpack.c.h.b16 %v825
        %v3700 = vunpack.c.l.b16 %v826
        %v3701 = vunpack.c.h.b16 %v826
        %v3702 = vunpack.c.l.b16 %v827
        %v3703 = vunpack.c.h.b16 %v827
        %v3704 = vunpack.c.l.b16 %v828
        %v3705 = vunpack.c.h.b16 %v828
        %v3706 = vunpack.c.l.b16 %v829
        %v3707 = vunpack.c.h.b16 %v829
        %v3708 = vunpack.c.l.b16 %v830
        %v3709 = vunpack.c.h.b16 %v830
        %v3710 = vunpack.c.l.b16 %v831
        %v3711 = vunpack.c.h.b16 %v831
        %v3712 = vunpack.c.l.b16 %v832
        %v3713 = vunpack.c.h.b16 %v832
        %v3714 = vunpack.c.l.b16 %v833
        %v3715 = vunpack.c.h.b16 %v833
        %v3716 = vunpack.c.l.b16 %v834
        %v3717 = vunpack.c.h.b16 %v834
        %v3718 = vunpack.c.l.b16 %v835
        %v3719 = vunpack.c.h.b16 %v835
        %v3720 = vunpack.c.l.b16 %v836
        %v3721 = vunpack.c.h.b16 %v836
        %v3722 = vunpack.c.l.b16 %v837
        %v3723 = vunpack.c.h.b16 %v837
        %v3724 = vunpack.c.l.b16 %v838
        %v3725 = vunpack.c.h.b16 %v838
        %v3726 = vunpack.c.l.b16 %v839
        %v3727 = vunpack.c.h.b16 %v839
        %v3728 = vunpack.c.l.b16 %v840
        %v3729 = vunpack.c.h.b16 %v840
        %v3730 = vunpack.c.l.b16 %v841
        %v3731 = vunpack.c.h.b16 %v841
        %v3732 = vunpack.c.l.b16 %v842
        %v3733 = vunpack.c.h.b16 %v842
        %v3734 = vunpack.c.l.b16 %v843
        %v3735 = vunpack.c.h.b16 %v843
        %v3736 = vunpack.c.l.b16 %v844
        %v3737 = vunpack.c.h.b16 %v844
        %v3738 = vunpack.c.l.b16 %v845
        %v3739 = vunpack.c.h.b16 %v845
        %v3740 = vunpack.c.l.b16 %v846
        %v3741 = vunpack.c.h.b16 %v846
        %v3742 = vunpack.c.l.b16 %v847
        %v3743 = vunpack.c.h.b16 %v847
        %v3744 = vunpack.c.l.b16 %v848
        %v3745 = vunpack.c.h.b16 %v848
        %v3746 = vunpack.c.l.b16 %v849
        %v3747 = vunpack.c.h.b16 %v849
        %v3748 = vunpack.c.l.b16 %v850
        %v3749 = vunpack.c.h.b16 %v850
        %v3750 = vunpack.c.l.b16 %v851
        %v3751 = vunpack.c.h.b16 %v851
        %v3752 = vunpack.c.l.b16 %v852
        %v3753 = vunpack.c.h.b16 %v852
        %v3754 = vunpack.c.l.b16 %v853
        %v3755 = vunpack.c.h.b16 %v853
        %v3756 = vunpack.c.l.b16 %v854
        %v3757 = vunpack.c.h.b16 %v854
        %v3758 = vunpack.c.l.b16 %v855
        %v3759 = vunpack.c.h.b16 %v855
        %v3760 = vunpack.c.l.b16 %v856
        %v3761 = vunpack.c.h.b16 %v856
        %v3762 = vunpack.c.l.b16 %v857
        %v3763 = vunpack.c.h.b16 %v857
        %v3764 = vunpack.c.l.b16 %v858
        %v3765 = vunpack.c.h.b16 %v858
        %v3766 = vunpack.c.l.b16 %v859
        %v3767 = vunpack.c.h.b16 %v859
        %v3768 = vunpack.c.l.b16 %v860
        %v3769 = vunpack.c.h.b16 %v860
        %v3770 = vunpack.c.l.b16 %v861
        %v3771 = vunpack.c.h.b16 %v861
        %v3772 = vunpack.c.l.b16 %v862
        %v3773 = vunpack.c.h.b16 %v862
        %v3774 = vunpack.c.l.b16 %v863
        %v3775 = vunpack.c.h.b16 %v863
        %v3776 = vunpack.c.l.b16 %v864
        %v3777 = vunpack.c.h.b16 %v864
        %v3778 = vunpack.c.l.b16 %v865
        %v3779 = vunpack.c.h.b16 %v865
        %v3780 = vunpack.c.l.b16 %v866
        %v3781 = vunpack.c.h.b16 %v866
        %v3782 = vunpack.c.l.b16 %v867
        %v3783 = vunpack.c.h.b16 %v867
        %v3784 = vunpack.c.l.b16 %v868
        %v3785 = vunpack.c.h.b16 %v868
        %v3786 = vunpack.c.l.b16 %v869
        %v3787 = vunpack.c.h.b16 %v869
        %v3788 = vunpack.c.l.b16 %v870
        %v3789 = vunpack.c.h.b16 %v870
        %v3790 = vunpack.c.l.b16 %v871
        %v3791 = vunpack.c.h.b16 %v871
        %v3792 = vunpack.c.l.b16 %v872
        %v3793 = vunpack.c.h.b16 %v872
        %v3794 = vunpack.c.l.b16 %v873
        %v3795 = vunpack.c.h.b16 %v873
        %v3796 = vunpack.c.l.b16 %v874
        %v3797 = vunpack.c.h.b16 %v874
        %v3798 = vunpack.c.l.b16 %v875
        %v3799 = vunpack.c.h.b16 %v875
        %v3800 = vunpack.c.l.b16 %v876
        %v3801 = vunpack.c.h.b16 %v876
        %v3802 = vunpack.c.l.b16 %v877
        %v3803 = vunpack.c.h.b16 %v877
        %v3804 = vunpack.c.l.b16 %v878
        %v3805 = vunpack.c.h.b16 %v878
        %v3806 = vunpack.c.l.b16 %v879
        %v3807 = vunpack.c.h.b16 %v879
        %v3808 = vunpack.c.l.b16 %v880
        %v3809 = vunpack.c.h.b16 %v880
        %v3810 = vunpack.c.l.b16 %v881
        %v3811 = vunpack.c.h.b16 %v881
        %v3812 = vunpack.c.l.b16 %v882
        %v3813 = vunpack.c.h.b16 %v882
        %v3814 = vunpack.c.l.b16 %v883
        %v3815 = vunpack.c.h.b16 %v883
        %v3816 = vunpack.c.l.b16 %v884
        %v3817 = vunpack.c.h.b16 %v884
        %v3818 = vunpack.c.l.b16 %v885
        %v3819 = vunpack.c.h.b16 %v885
        %v3820 = vunpack.c.l.b16 %v886
        %v3821 = vunpack.c.h.b16 %v886
        %v3822 = vunpack.c.l.b16 %v887
        %v3823 = vunpack.c.h.b16 %v887
        %v3824 = vunpack.c.l.b16 %v888
        %v3825 = vunpack.c.h.b16 %v888
        %v3826 = vunpack.c.l.b16 %v889
        %v3827 = vunpack.c.h.b16 %v889
        %v3828 = vunpack.c.l.b16 %v890
        %v3829 = vunpack.c.h.b16 %v890
        %v3830 = vunpack.c.l.b16 %v891
        %v3831 = vunpack.c.h.b16 %v891
        %v3832 = vunpack.c.l.b16 %v892
        %v3833 = vunpack.c.h.b16 %v892
        %v3834 = vunpack.c.l.b16 %v893
        %v3835 = vunpack.c.h.b16 %v893
        %v3836 = vunpack.c.l.b16 %v894
        %v3837 = vunpack.c.h.b16 %v894
        %v3838 = vunpack.c.l.b16 %v895
        %v3839 = vunpack.c.h.b16 %v895
        %v3840 = vunpack.c.l.b16 %v896
        %v3841 = vunpack.c.h.b16 %v896
        %v3842 = vunpack.c.l.b16 %v897
        %v3843 = vunpack.c.h.b16 %v897
        %v3844 = vunpack.c.l.b16 %v898
        %v3845 = vunpack.c.h.b16 %v898
        %v3846 = vunpack.c.l.b16 %v899
        %v3847 = vunpack.c.h.b16 %v899
        %v3848 = vunpack.c.l.b16 %v900
        %v3849 = vunpack.c.h.b16 %v900
        %v3850 = vunpack.c.l.b16 %v901
        %v3851 = vunpack.c.h.b16 %v901
        %v3852 = vunpack.c.l.b16 %v902
        %v3853 = vunpack.c.h.b16 %v902
        %v3854 = vunpack.c.l.b16 %v903
        %v3855 = vunpack.c.h.b16 %v903
        %v3856 = vunpack.c.l.b16 %v904
        %v3857 = vunpack.c.h.b16 %v904
        %v3858 = vunpack.c.l.b16 %v905
        %v3859 = vunpack.c.h.b16 %v905
        %v3860 = vunpack.c.l.b16 %v906
        %v3861 = vunpack.c.h.b16 %v906
        %v3862 = vunpack.c.l.b16 %v907
        %v3863 = vunpack.c.h.b16 %v907
        %v3864 = vunpack.c.l.b16 %v908
        %v3865 = vunpack.c.h.b16 %v908
        %v3866 = vunpack.c.l.b16 %v909
        %v3867 = vunpack.c.h.b16 %v909
        %v3868 = vunpack.c.l.b16 %v910
        %v3869 = vunpack.c.h.b16 %v910
        %v3870 = vunpack.c.l.b16 %v911
        %v3871 = vunpack.c.h.b16 %v911
        %v3872 = vunpack.c.l.b16 %v912
        %v3873 = vunpack.c.h.b16 %v912
        %v3874 = vunpack.c.l.b16 %v913
        %v3875 = vunpack.c.h.b16 %v913
        %v3876 = vunpack.c.l.b16 %v914
        %v3877 = vunpack.c.h.b16 %v914
        %v3878 = vunpack.c.l.b16 %v915
        %v3879 = vunpack.c.h.b16 %v915
        %v3880 = vunpack.c.l.b16 %v916
        %v3881 = vunpack.c.h.b16 %v916
        %v3882 = vunpack.c.l.b16 %v917
        %v3883 = vunpack.c.h.b16 %v917
        %v3884 = vunpack.c.l.b16 %v918
        %v3885 = vunpack.c.h.b16 %v918
        %v3886 = vunpack.c.l.b16 %v919
        %v3887 = vunpack.c.h.b16 %v919
        %v3888 = vunpack.c.l.b16 %v920
        %v3889 = vunpack.c.h.b16 %v920
        %v3890 = vunpack.c.l.b16 %v921
        %v3891 = vunpack.c.h.b16 %v921
        %v3892 = vunpack.c.l.b16 %v922
        %v3893 = vunpack.c.h.b16 %v922
        %v3894 = vunpack.c.l.b16 %v923
        %v3895 = vunpack.c.h.b16 %v923
        %v3896 = vunpack.c.l.b16 %v924
        %v3897 = vunpack.c.h.b16 %v924
        %v3898 = vunpack.c.l.b16 %v925
        %v3899 = vunpack.c.h.b16 %v925
        %v3900 = vunpack.c.l.b16 %v926
        %v3901 = vunpack.c.h.b16 %v926
        %v3902 = vunpack.c.l.b16 %v927
        %v3903 = vunpack.c.h.b16 %v927
        %v3904 = vunpack.c.l.b16 %v928
        %v3905 = vunpack.c.h.b16 %v928
        %v3906 = vunpack.c.l.b16 %v929
        %v3907 = vunpack.c.h.b16 %v929
        %v3908 = vunpack.c.l.b16 %v930
        %v3909 = vunpack.c.h.b16 %v930
        %v3910 = vunpack.c.l.b16 %v931
        %v3911 = vunpack.c.h.b16 %v931
        %v3912 = vunpack.c.l.b16 %v932
        %v3913 = vunpack.c.h.b16 %v932
        %v3914 = vunpack.c.l.b16 %v933
        %v3915 = vunpack.c.h.b16 %v933
        %v3916 = vunpack.c.l.b16 %v934
        %v3917 = vunpack.c.h.b16 %v934
        %v3918 = vunpack.c.l.b16 %v935
        %v3919 = vunpack.c.h.b16 %v935
        %v3920 = vunpack.c.l.b16 %v936
        %v3921 = vunpack.c.h.b16 %v936
        %v3922 = vunpack.c.l.b16 %v937
        %v3923 = vunpack.c.h.b16 %v937
        %v3924 = vunpack.c.l.b16 %v938
        %v3925 = vunpack.c.h.b16 %v938
        %v3926 = vunpack.c.l.b16 %v939
        %v3927 = vunpack.c.h.b16 %v939
        %v3928 = vunpack.c.l.b16 %v940
        %v3929 = vunpack.c.h.b16 %v940
        %v3930 = vunpack.c.l.b16 %v941
        %v3931 = vunpack.c.h.b16 %v941
        %v3932 = vunpack.c.l.b16 %v942
        %v3933 = vunpack.c.h.b16 %v942
        %v3934 = vunpack.c.l.b16 %v943
        %v3935 = vunpack.c.h.b16 %v943
        %v3936 = vunpack.c.l.b16 %v944
        %v3937 = vunpack.c.h.b16 %v944
        %v3938 = vunpack.c.l.b16 %v945
        %v3939 = vunpack.c.h.b16 %v945
        %v3940 = vunpack.c.l.b16 %v946
        %v3941 = vunpack.c.h.b16 %v946
        %v3942 = vunpack.c.l.b16 %v947
        %v3943 = vunpack.c.h.b16 %v947
        %v3944 = vunpack.c.l.b16 %v948
        %v3945 = vunpack.c.h.b16 %v948
        %v3946 = vunpack.c.l.b16 %v949
        %v3947 = vunpack.c.h.b16 %v949
        %v3948 = vunpack.c.l.b16 %v950
        %v3949 = vunpack.c.h.b16 %v950
        %v3950 = vunpack.c.l.b16 %v951
        %v3951 = vunpack.c.h.b16 %v951
        %v3952 = vunpack.c.l.b16 %v952
        %v3953 = vunpack.c.h.b16 %v952
        %v3954 = vunpack.c.l.b16 %v953
        %v3955 = vunpack.c.h.b16 %v953
        %v3956 = vunpack.c.l.b16 %v954
        %v3957 = vunpack.c.h.b16 %v954
        %v3958 = vunpack.c.l.b16 %v955
        %v3959 = vunpack.c.h.b16 %v955
        %v3960 = vunpack.c.l.b16 %v956
        %v3961 = vunpack.c.h.b16 %v956
        %v3962 = vunpack.c.l.b16 %v957
        %v3963 = vunpack.c.h.b16 %v957
        %v3964 = vunpack.c.l.b16 %v958
        %v3965 = vunpack.c.h.b16 %v958
        %v3966 = vunpack.c.l.b16 %v959
        %v3967 = vunpack.c.h.b16 %v959
        %v3968 = vunpack.c.l.b16 %v960
        %v3969 = vunpack.c.h.b16 %v960
        %v3970 = vunpack.c.l.b16 %v961
        %v3971 = vunpack.c.h.b16 %v961
        %v3972 = vunpack.c.l.b16 %v962
        %v3973 = vunpack.c.h.b16 %v962
        %v3974 = vunpack.c.l.b16 %v963
        %v3975 = vunpack.c.h.b16 %v963
        %v3976 = vunpack.c.l.b16 %v964
        %v3977 = vunpack.c.h.b16 %v964
        %v3978 = vunpack.c.l.b16 %v965
        %v3979 = vunpack.c.h.b16 %v965
        %v3980 = vunpack.c.l.b16 %v966
        %v3981 = vunpack.c.h.b16 %v966
        %v3982 = vunpack.c.l.b16 %v967
        %v3983 = vunpack.c.h.b16 %v967
        %v3984 = vunpack.c.l.b16 %v968
        %v3985 = vunpack.c.h.b16 %v968
        %v3986 = vunpack.c.l.b16 %v969
        %v3987 = vunpack.c.h.b16 %v969
        %v3988 = vunpack.c.l.b16 %v970
        %v3989 = vunpack.c.h.b16 %v970
        %v3990 = vunpack.c.l.b16 %v971
        %v3991 = vunpack.c.h.b16 %v971
        %v3992 = vunpack.c.l.b16 %v972
        %v3993 = vunpack.c.h.b16 %v972
        %v3994 = vunpack.c.l.b16 %v973
        %v3995 = vunpack.c.h.b16 %v973
        %v3996 = vunpack.c.l.b16 %v974
        %v3997 = vunpack.c.h.b16 %v974
        %v3998 = vunpack.c.l.b16 %v975
        %v3999 = vunpack.c.h.b16 %v975
        %v4000 = vunpack.c.l.b16 %v976
        %v4001 = vunpack.c.h.b16 %v976
        %v4002 = vunpack.c.l.b16 %v977
        %v4003 = vunpack.c.h.b16 %v977
        %v4004 = vunpack.c.l.b16 %v978
        %v4005 = vunpack.c.h.b16 %v978
        %v4006 = vunpack.c.l.b16 %v979
        %v4007 = vunpack.c.h.b16 %v979
        %v4008 = vunpack.c.l.b16 %v980
        %v4009 = vunpack.c.h.b16 %v980
        %v4010 = vunpack.c.l.b16 %v981
        %v4011 = vunpack.c.h.b16 %v981
        %v4012 = vunpack.c.l.b16 %v982
        %v4013 = vunpack.c.h.b16 %v982
        %v4014 = vunpack.c.l.b16 %v983
        %v4015 = vunpack.c.h.b16 %v983
        %v4016 = vunpack.c.l.b16 %v984
        %v4017 = vunpack.c.h.b16 %v984
        %v4018 = vunpack.c.l.b16 %v985
        %v4019 = vunpack.c.h.b16 %v985
        %v4020 = vunpack.c.l.b16 %v986
        %v4021 = vunpack.c.h.b16 %v986
        %v4022 = vunpack.c.l.b16 %v987
        %v4023 = vunpack.c.h.b16 %v987
        %v4024 = vunpack.c.l.b16 %v988
        %v4025 = vunpack.c.h.b16 %v988
        %v4026 = vunpack.c.l.b16 %v989
        %v4027 = vunpack.c.h.b16 %v989
        %v4028 = vunpack.c.l.b16 %v990
        %v4029 = vunpack.c.h.b16 %v990
        %v4030 = vunpack.c.l.b16 %v991
        %v4031 = vunpack.c.h.b16 %v991
        %v4032 = vunpack.c.l.b16 %v992
        %v4033 = vunpack.c.h.b16 %v992
        %v4034 = vunpack.c.l.b16 %v993
        %v4035 = vunpack.c.h.b16 %v993
        %v4036 = vunpack.c.l.b16 %v994
        %v4037 = vunpack.c.h.b16 %v994
        %v4038 = vunpack.c.l.b16 %v995
        %v4039 = vunpack.c.h.b16 %v995
        %v4040 = vunpack.c.l.b16 %v996
        %v4041 = vunpack.c.h.b16 %v996
        %v4042 = vunpack.c.l.b16 %v997
        %v4043 = vunpack.c.h.b16 %v997
        %v4044 = vunpack.c.l.b16 %v998
        %v4045 = vunpack.c.h.b16 %v998
        %v4046 = vunpack.c.l.b16 %v999
        %v4047 = vunpack.c.h.b16 %v999
        %v4048 = vunpack.c.l.b16 %v1000
        %v4049 = vunpack.c.h.b16 %v1000
        %v4050 = vunpack.c.l.b16 %v1001
        %v4051 = vunpack.c.h.b16 %v1001
        %v4052 = vunpack.c.l.b16 %v1002
        %v4053 = vunpack.c.h.b16 %v1002
        %v4054 = vunpack.c.l.b16 %v1003
        %v4055 = vunpack.c.h.b16 %v1003
        %v4056 = vunpack.c.l.b16 %v1004
        %v4057 = vunpack.c.h.b16 %v1004
        %v4058 = vunpack.c.l.b16 %v1005
        %v4059 = vunpack.c.h.b16 %v1005
        %v4060 = vunpack.c.l.b16 %v1006
        %v4061 = vunpack.c.h.b16 %v1006
        %v4062 = vunpack.c.l.b16 %v1007
        %v4063 = vunpack.c.h.b16 %v1007
        %v4064 = vunpack.c.l.b16 %v1008
        %v4065 = vunpack.c.h.b16 %v1008
        %v4066 = vunpack.c.l.b16 %v1009
        %v4067 = vunpack.c.h.b16 %v1009
        %v4068 = vunpack.c.l.b16 %v1010
        %v4069 = vunpack.c.h.b16 %v1010
        %v4070 = vunpack.c.l.b16 %v1011
        %v4071 = vunpack.c.h.b16 %v1011
        %v4072 = vunpack.c.l.b16 %v1012
        %v4073 = vunpack.c.h.b16 %v1012
        %v4074 = vunpack.c.l.b16 %v1013
        %v4075 = vunpack.c.h.b16 %v1013
        %v4076 = vunpack.c.l.b16 %v1014
        %v4077 = vunpack.c.h.b16 %v1014
        %v4078 = vunpack.c.l.b16 %v1015
        %v4079 = vunpack.c.h.b16 %v1015
        %v4080 = vunpack.c.l.b16 %v1016
        %v4081 = vunpack.c.h.b16 %v1016
        %v4082 = vunpack.c.l.b16 %v1017
        %v4083 = vunpack.c.h.b16 %v1017
        %v4084 = vunpack.c.l.b16 %v1018
        %v4085 = vunpack.c.h.b16 %v1018
        %v4086 = vunpack.c.l.b16 %v1019
        %v4087 = vunpack.c.h.b16 %v1019
        %v4088 = vunpack.c.l.b16 %v1020
        %v4089 = vunpack.c.h.b16 %v1020
        %v4090 = vunpack.c.l.b16 %v1021
        %v4091 = vunpack.c.h.b16 %v1021
        %v4092 = vunpack.c.l.b16 %v1022
        %v4093 = vunpack.c.h.b16 %v1022
        %v4094 = vunpack.c.l.b16 %v1023
        %v4095 = vunpack.c.h.b16 %v1023
        %v4096 = vunpack.c.l.b16 %v1024
        %v4097 = vunpack.c.h.b16 %v1024
        %v4098 = vunpack.c.l.b16 %v1025
        %v4099 = vunpack.c.h.b16 %v1025
        %v4100 = vunpack.c.l.b16 %v1026
        %v4101 = vunpack.c.h.b16 %v1026
        %v4102 = vunpack.c.l.b16 %v1027
        %v4103 = vunpack.c.h.b16 %v1027
        %v4104 = vunpack.c.l.b16 %v1028
        %v4105 = vunpack.c.h.b16 %v1028
        %v4106 = vunpack.c.l.b16 %v1029
        %v4107 = vunpack.c.h.b16 %v1029
        %v4108 = vunpack.c.l.b16 %v1030
        %v4109 = vunpack.c.h.b16 %v1030
        %v4110 = vunpack.c.l.b16 %v1031
        %v4111 = vunpack.c.h.b16 %v1031
        %v4112 = vunpack.c.l.b16 %v1032
        %v4113 = vunpack.c.h.b16 %v1032
        %v4114 = vunpack.c.l.b16 %v1033
        %v4115 = vunpack.c.h.b16 %v1033
        %v4116 = vunpack.c.l.b16 %v1034
        %v4117 = vunpack.c.h.b16 %v1034
        %v4118 = vunpack.c.l.b16 %v1035
        %v4119 = vunpack.c.h.b16 %v1035
        %v4120 = vunpack.c.l.b16 %v1036
        %v4121 = vunpack.c.h.b16 %v1036
        %v4122 = vunpack.c.l.b16 %v1037
        %v4123 = vunpack.c.h.b16 %v1037
        %v4124 = vunpack.c.l.b16 %v1038
        %v4125 = vunpack.c.h.b16 %v1038
        %v4126 = vunpack.c.l.b16 %v1039
        %v4127 = vunpack.c.h.b16 %v1039
        %v4128 = vunpack.c.l.b16 %v1040
        %v4129 = vunpack.c.h.b16 %v1040
        %v4130 = vunpack.c.l.b16 %v1041
        %v4131 = vunpack.c.h.b16 %v1041
        %v4132 = vunpack.c.l.b16 %v1042
        %v4133 = vunpack.c.h.b16 %v1042
        %v4134 = vunpack.c.l.b16 %v1043
        %v4135 = vunpack.c.h.b16 %v1043
        %v4136 = vunpack.c.l.b16 %v1044
        %v4137 = vunpack.c.h.b16 %v1044
        %v4138 = vunpack.c.l.b16 %v1045
        %v4139 = vunpack.c.h.b16 %v1045
        %v4140 = vunpack.c.l.b16 %v1046
        %v4141 = vunpack.c.h.b16 %v1046
        %v4142 = vunpack.c.l.b16 %v1047
        %v4143 = vunpack.c.h.b16 %v1047
        %v4144 = vunpack.c.l.b16 %v1048
        %v4145 = vunpack.c.h.b16 %v1048
        %v4146 = vunpack.c.l.b16 %v1049
        %v4147 = vunpack.c.h.b16 %v1049
        %v4148 = vunpack.c.l.b16 %v1050
        %v4149 = vunpack.c.h.b16 %v1050
        %v4150 = vunpack.c.l.b16 %v1051
        %v4151 = vunpack.c.h.b16 %v1051
        %v4152 = vunpack.c.l.b16 %v1052
        %v4153 = vunpack.c.h.b16 %v1052
        %v4154 = vunpack.c.l.b16 %v1053
        %v4155 = vunpack.c.h.b16 %v1053
        %v4156 = vunpack.c.l.b16 %v1054
        %v4157 = vunpack.c.h.b16 %v1054
        %v4158 = vunpack.c.l.b16 %v1055
        %v4159 = vunpack.c.h.b16 %v1055
        %v4160 = vunpack.c.l.b16 %v1056
        %v4161 = vunpack.c.h.b16 %v1056
        %v4162 = vunpack.c.l.b16 %v1057
        %v4163 = vunpack.c.h.b16 %v1057
        %v4164 = vunpack.c.l.b16 %v1058
        %v4165 = vunpack.c.h.b16 %v1058
        %v4166 = vunpack.c.l.b16 %v1059
        %v4167 = vunpack.c.h.b16 %v1059
        %v4168 = vunpack.c.l.b16 %v1060
        %v4169 = vunpack.c.h.b16 %v1060
        %v4170 = vunpack.c.l.b16 %v1061
        %v4171 = vunpack.c.h.b16 %v1061
        %v4172 = vunpack.c.l.b16 %v1062
        %v4173 = vunpack.c.h.b16 %v1062
        %v4174 = vunpack.c.l.b16 %v1063
        %v4175 = vunpack.c.h.b16 %v1063
        %v4176 = vunpack.c.l.b16 %v1064
        %v4177 = vunpack.c.h.b16 %v1064
        %v4178 = vunpack.c.l.b16 %v1065
        %v4179 = vunpack.c.h.b16 %v1065
        %v4180 = vunpack.c.l.b16 %v1066
        %v4181 = vunpack.c.h.b16 %v1066
        %v4182 = vunpack.c.l.b16 %v1067
        %v4183 = vunpack.c.h.b16 %v1067
        %v4184 = vunpack.c.l.b16 %v1068
        %v4185 = vunpack.c.h.b16 %v1068
        %v4186 = vunpack.c.l.b16 %v1069
        %v4187 = vunpack.c.h.b16 %v1069
        %v4188 = vunpack.c.l.b16 %v1070
        %v4189 = vunpack.c.h.b16 %v1070
        %v4190 = vunpack.c.l.b16 %v1071
        %v4191 = vunpack.c.h.b16 %v1071
        %v4192 = vunpack.c.l.b16 %v1072
        %v4193 = vunpack.c.h.b16 %v1072
        %v4194 = vunpack.c.l.b16 %v1073
        %v4195 = vunpack.c.h.b16 %v1073
        %v4196 = vunpack.c.l.b16 %v1074
        %v4197 = vunpack.c.h.b16 %v1074
        %v4198 = vunpack.c.l.b16 %v1075
        %v4199 = vunpack.c.h.b16 %v1075
        %v4200 = vunpack.c.l.b16 %v1076
        %v4201 = vunpack.c.h.b16 %v1076
        %v4202 = vunpack.c.l.b16 %v1077
        %v4203 = vunpack.c.h.b16 %v1077
        %v4204 = vunpack.c.l.b16 %v1078
        %v4205 = vunpack.c.h.b16 %v1078
        %v4206 = vunpack.c.l.b16 %v1079
        %v4207 = vunpack.c.h.b16 %v1079
        %v4208 = vunpack.c.l.b16 %v1080
        %v4209 = vunpack.c.h.b16 %v1080
        %v4210 = vunpack.c.l.b16 %v1081
        %v4211 = vunpack.c.h.b16 %v1081
        %v4212 = vunpack.c.l.b16 %v1082
        %v4213 = vunpack.c.h.b16 %v1082
        %v4214 = vunpack.c.l.b16 %v1083
        %v4215 = vunpack.c.h.b16 %v1083
        %v4216 = vunpack.c.l.b16 %v1084
        %v4217 = vunpack.c.h.b16 %v1084
        %v4218 = vunpack.c.l.b16 %v1085
        %v4219 = vunpack.c.h.b16 %v1085
        %v4220 = vunpack.c.l.b16 %v1086
        %v4221 = vunpack.c.h.b16 %v1086
        %v4222 = vunpack.c.l.b16 %v1087
        %v4223 = vunpack.c.h.b16 %v1087
        %v4224 = vunpack.c.l.b16 %v1088
        %v4225 = vunpack.c.h.b16 %v1088
        %v4226 = vunpack.c.l.b16 %v1089
        %v4227 = vunpack.c.h.b16 %v1089
        %v4228 = vunpack.c.l.b16 %v1090
        %v4229 = vunpack.c.h.b16 %v1090
        %v4230 = vunpack.c.l.b16 %v1091
        %v4231 = vunpack.c.h.b16 %v1091
        %v4232 = vunpack.c.l.b16 %v1092
        %v4233 = vunpack.c.h.b16 %v1092
        %v4234 = vunpack.c.l.b16 %v1093
        %v4235 = vunpack.c.h.b16 %v1093
        %v4236 = vunpack.c.l.b16 %v1094
        %v4237 = vunpack.c.h.b16 %v1094
        %v4238 = vunpack.c.l.b16 %v1095
        %v4239 = vunpack.c.h.b16 %v1095
        %v4240 = vunpack.c.l.b16 %v1096
        %v4241 = vunpack.c.h.b16 %v1096
        %v4242 = vunpack.c.l.b16 %v1097
        %v4243 = vunpack.c.h.b16 %v1097
        %v4244 = vunpack.c.l.b16 %v1098
        %v4245 = vunpack.c.h.b16 %v1098
        %v4246 = vunpack.c.l.b16 %v1099
        %v4247 = vunpack.c.h.b16 %v1099
        %v4248 = vunpack.c.l.b16 %v1100
        %v4249 = vunpack.c.h.b16 %v1100
        %v4250 = vunpack.c.l.b16 %v1101
        %v4251 = vunpack.c.h.b16 %v1101
        %v4252 = vunpack.c.l.b16 %v1102
        %v4253 = vunpack.c.h.b16 %v1102
        %v4254 = vunpack.c.l.b16 %v1103
        %v4255 = vunpack.c.h.b16 %v1103
        %v4256 = vunpack.c.l.b16 %v1104
        %v4257 = vunpack.c.h.b16 %v1104
        %v4258 = vunpack.c.l.b16 %v1105
        %v4259 = vunpack.c.h.b16 %v1105
        %v4260 = vunpack.c.l.b16 %v1106
        %v4261 = vunpack.c.h.b16 %v1106
        %v4262 = vunpack.c.l.b16 %v1107
        %v4263 = vunpack.c.h.b16 %v1107
        %v4264 = vunpack.c.l.b16 %v1108
        %v4265 = vunpack.c.h.b16 %v1108
        %v4266 = vunpack.c.l.b16 %v1109
        %v4267 = vunpack.c.h.b16 %v1109
        %v4268 = vunpack.c.l.b16 %v1110
        %v4269 = vunpack.c.h.b16 %v1110
        %v4270 = vunpack.c.l.b16 %v1111
        %v4271 = vunpack.c.h.b16 %v1111
        %v4272 = vunpack.c.l.b16 %v1112
        %v4273 = vunpack.c.h.b16 %v1112
        %v4274 = vunpack.c.l.b16 %v1113
        %v4275 = vunpack.c.h.b16 %v1113
        %v4276 = vunpack.c.l.b16 %v1114
        %v4277 = vunpack.c.h.b16 %v1114
        %v4278 = vunpack.c.l.b16 %v1115
        %v4279 = vunpack.c.h.b16 %v1115
        %v4280 = vunpack.c.l.b16 %v1116
        %v4281 = vunpack.c.h.b16 %v1116
        %v4282 = vunpack.c.l.b16 %v1117
        %v4283 = vunpack.c.h.b16 %v1117
        %v4284 = vunpack.c.l.b16 %v1118
        %v4285 = vunpack.c.h.b16 %v1118
        %v4286 = vunpack.c.l.b16 %v1119
        %v4287 = vunpack.c.h.b16 %v1119
        %v4288 = vunpack.c.l.b16 %v1120
        %v4289 = vunpack.c.h.b16 %v1120
        %v4290 = vunpack.c.l.b16 %v1121
        %v4291 = vunpack.c.h.b16 %v1121
        %v4292 = vunpack.c.l.b16 %v1122
        %v4293 = vunpack.c.h.b16 %v1122
        %v4294 = vunpack.c.l.b16 %v1123
        %v4295 = vunpack.c.h.b16 %v1123
        %v4296 = vunpack.c.l.b16 %v1124
        %v4297 = vunpack.c.h.b16 %v1124
        %v4298 = vunpack.c.l.b16 %v1125
        %v4299 = vunpack.c.h.b16 %v1125
        %v4300 = vunpack.c.l.b16 %v1126
        %v4301 = vunpack.c.h.b16 %v1126
        %v4302 = vunpack.c.l.b16 %v1127
        %v4303 = vunpack.c.h.b16 %v1127
        %v4304 = vunpack.c.l.b16 %v1128
        %v4305 = vunpack.c.h.b16 %v1128
        %v4306 = vunpack.c.l.b16 %v1129
        %v4307 = vunpack.c.h.b16 %v1129
        %v4308 = vunpack.c.l.b16 %v1130
        %v4309 = vunpack.c.h.b16 %v1130
        %v4310 = vunpack.c.l.b16 %v1131
        %v4311 = vunpack.c.h.b16 %v1131
        %v4312 = vunpack.c.l.b16 %v1132
        %v4313 = vunpack.c.h.b16 %v1132
        %v4314 = vunpack.c.l.b16 %v1133
        %v4315 = vunpack.c.h.b16 %v1133
        %v4316 = vunpack.c.l.b16 %v1134
        %v4317 = vunpack.c.h.b16 %v1134
        %v4318 = vunpack.c.l.b16 %v1135
        %v4319 = vunpack.c.h.b16 %v1135
        %v4320 = vunpack.c.l.b16 %v1136
        %v4321 = vunpack.c.h.b16 %v1136
        %v4322 = vunpack.c.l.b16 %v1137
        %v4323 = vunpack.c.h.b16 %v1137
        %v4324 = vunpack.c.l.b16 %v1138
        %v4325 = vunpack.c.h.b16 %v1138
        %v4326 = vunpack.c.l.b16 %v1139
        %v4327 = vunpack.c.h.b16 %v1139
        %v4328 = vunpack.c.l.b16 %v1140
        %v4329 = vunpack.c.h.b16 %v1140
        %v4330 = vunpack.c.l.b16 %v1141
        %v4331 = vunpack.c.h.b16 %v1141
        %v4332 = vunpack.c.l.b16 %v1142
        %v4333 = vunpack.c.h.b16 %v1142
        %v4334 = vunpack.c.l.b16 %v1143
        %v4335 = vunpack.c.h.b16 %v1143
        %v4336 = vunpack.c.l.b16 %v1144
        %v4337 = vunpack.c.h.b16 %v1144
        %v4338 = vunpack.c.l.b16 %v1145
        %v4339 = vunpack.c.h.b16 %v1145
        %v4340 = vunpack.c.l.b16 %v1146
        %v4341 = vunpack.c.h.b16 %v1146
        %v4342 = vunpack.c.l.b16 %v1147
        %v4343 = vunpack.c.h.b16 %v1147
        %v4344 = vunpack.c.l.b16 %v1148
        %v4345 = vunpack.c.h.b16 %v1148
        %v4346 = vunpack.c.l.b16 %v1149
        %v4347 = vunpack.c.h.b16 %v1149
        %v4348 = vunpack.c.l.b16 %v1150
        %v4349 = vunpack.c.h.b16 %v1150
        %v4350 = vunpack.c.l.b16 %v1151
        %v4351 = vunpack.c.h.b16 %v1151
        %v4352 = vunpack.c.l.b16 %v1152
        %v4353 = vunpack.c.h.b16 %v1152
        %v4354 = vunpack.c.l.b16 %v1153
        %v4355 = vunpack.c.h.b16 %v1153
        %v4356 = vunpack.c.l.b16 %v1154
        %v4357 = vunpack.c.h.b16 %v1154
        %v4358 = vunpack.c.l.b16 %v1155
        %v4359 = vunpack.c.h.b16 %v1155
        %v4360 = vunpack.c.l.b16 %v1156
        %v4361 = vunpack.c.h.b16 %v1156
        %v4362 = vunpack.c.l.b16 %v1157
        %v4363 = vunpack.c.h.b16 %v1157
        %v4364 = vunpack.c.l.b16 %v1158
        %v4365 = vunpack.c.h.b16 %v1158
        %v4366 = vunpack.c.l.b16 %v1159
        %v4367 = vunpack.c.h.b16 %v1159
        %v4368 = vunpack.c.l.b16 %v1160
        %v4369 = vunpack.c.h.b16 %v1160
        %v4370 = vunpack.c.l.b16 %v1161
        %v4371 = vunpack.c.h.b16 %v1161
        %v4372 = vunpack.c.l.b16 %v1162
        %v4373 = vunpack.c.h.b16 %v1162
        %v4374 = vunpack.c.l.b16 %v1163
        %v4375 = vunpack.c.h.b16 %v1163
        %v4376 = vunpack.c.l.b16 %v1164
        %v4377 = vunpack.c.h.b16 %v1164
        %v4378 = vunpack.c.l.b16 %v1165
        %v4379 = vunpack.c.h.b16 %v1165
        %v4380 = vunpack.c.l.b16 %v1166
        %v4381 = vunpack.c.h.b16 %v1166
        %v4382 = vunpack.c.l.b16 %v1167
        %v4383 = vunpack.c.h.b16 %v1167
        %v4384 = vunpack.c.l.b16 %v1168
        %v4385 = vunpack.c.h.b16 %v1168
        %v4386 = vunpack.c.l.b16 %v1169
        %v4387 = vunpack.c.h.b16 %v1169
        %v4388 = vunpack.c.l.b16 %v1170
        %v4389 = vunpack.c.h.b16 %v1170
        %v4390 = vunpack.c.l.b16 %v1171
        %v4391 = vunpack.c.h.b16 %v1171
        %v4392 = vunpack.c.l.b16 %v1172
        %v4393 = vunpack.c.h.b16 %v1172
        %v4394 = vunpack.c.l.b16 %v1173
        %v4395 = vunpack.c.h.b16 %v1173
        %v4396 = vunpack.c.l.b16 %v1174
        %v4397 = vunpack.c.h.b16 %v1174
        %v4398 = vunpack.c.l.b16 %v1175
        %v4399 = vunpack.c.h.b16 %v1175
        %v4400 = vunpack.c.l.b16 %v1176
        %v4401 = vunpack.c.h.b16 %v1176
        %v4402 = vunpack.c.l.b16 %v1177
        %v4403 = vunpack.c.h.b16 %v1177
        %v4404 = vunpack.c.l.b16 %v1178
        %v4405 = vunpack.c.h.b16 %v1178
        %v4406 = vunpack.c.l.b16 %v1179
        %v4407 = vunpack.c.h.b16 %v1179
        %v4408 = vunpack.c.l.b16 %v1180
        %v4409 = vunpack.c.h.b16 %v1180
        %v4410 = vunpack.c.l.b16 %v1181
        %v4411 = vunpack.c.h.b16 %v1181
        %v4412 = vunpack.c.l.b16 %v1182
        %v4413 = vunpack.c.h.b16 %v1182
        %v4414 = vunpack.c.l.b16 %v1183
        %v4415 = vunpack.c.h.b16 %v1183
        %v4416 = vunpack.c.l.b16 %v1184
        %v4417 = vunpack.c.h.b16 %v1184
        %v4418 = vunpack.c.l.b16 %v1185
        %v4419 = vunpack.c.h.b16 %v1185
        %v4420 = vunpack.c.l.b16 %v1186
        %v4421 = vunpack.c.h.b16 %v1186
        %v4422 = vunpack.c.l.b16 %v1187
        %v4423 = vunpack.c.h.b16 %v1187
        %v4424 = vunpack.c.l.b16 %v1188
        %v4425 = vunpack.c.h.b16 %v1188
        %v4426 = vunpack.c.l.b16 %v1189
        %v4427 = vunpack.c.h.b16 %v1189
        %v4428 = vunpack.c.l.b16 %v1190
        %v4429 = vunpack.c.h.b16 %v1190
        %v4430 = vunpack.c.l.b16 %v1191
        %v4431 = vunpack.c.h.b16 %v1191
        %v4432 = vunpack.c.l.b16 %v1192
        %v4433 = vunpack.c.h.b16 %v1192
        %v4434 = vunpack.c.l.b16 %v1193
        %v4435 = vunpack.c.h.b16 %v1193
        %v4436 = vunpack.c.l.b16 %v1194
        %v4437 = vunpack.c.h.b16 %v1194
        %v4438 = vunpack.c.l.b16 %v1195
        %v4439 = vunpack.c.h.b16 %v1195
        %v4440 = vunpack.c.l.b16 %v1196
        %v4441 = vunpack.c.h.b16 %v1196
        %v4442 = vunpack.c.l.b16 %v1197
        %v4443 = vunpack.c.h.b16 %v1197
        %v4444 = vunpack.c.l.b16 %v1198
        %v4445 = vunpack.c.h.b16 %v1198
        %v4446 = vunpack.c.l.b16 %v1199
        %v4447 = vunpack.c.h.b16 %v1199
        %v4448 = vunpack.c.l.b16 %v1200
        %v4449 = vunpack.c.h.b16 %v1200
        %v4450 = vunpack.c.l.b16 %v1201
        %v4451 = vunpack.c.h.b16 %v1201
        %v4452 = vunpack.c.l.b16 %v1202
        %v4453 = vunpack.c.h.b16 %v1202
        %v4454 = vunpack.c.l.b16 %v1203
        %v4455 = vunpack.c.h.b16 %v1203
        %v4456 = vunpack.c.l.b16 %v1204
        %v4457 = vunpack.c.h.b16 %v1204
        %v4458 = vunpack.c.l.b16 %v1205
        %v4459 = vunpack.c.h.b16 %v1205
        %v4460 = vunpack.c.l.b16 %v1206
        %v4461 = vunpack.c.h.b16 %v1206
        %v4462 = vunpack.c.l.b16 %v1207
        %v4463 = vunpack.c.h.b16 %v1207
        %v4464 = vunpack.c.l.b16 %v1208
        %v4465 = vunpack.c.h.b16 %v1208
        %v4466 = vunpack.c.l.b16 %v1209
        %v4467 = vunpack.c.h.b16 %v1209
        %v4468 = vunpack.c.l.b16 %v1210
        %v4469 = vunpack.c.h.b16 %v1210
        %v4470 = vunpack.c.l.b16 %v1211
        %v4471 = vunpack.c.h.b16 %v1211
        %v4472 = vunpack.c.l.b16 %v1212
        %v4473 = vunpack.c.h.b16 %v1212
        %v4474 = vunpack.c.l.b16 %v1213
        %v4475 = vunpack.c.h.b16 %v1213
        %v4476 = vunpack.c.l.b16 %v1214
        %v4477 = vunpack.c.h.b16 %v1214
        %v4478 = vunpack.c.l.b16 %v1215
        %v4479 = vunpack.c.h.b16 %v1215
        %v4480 = vunpack.c.l.b16 %v1216
        %v4481 = vunpack.c.h.b16 %v1216
        %v4482 = vunpack.c.l.b16 %v1217
        %v4483 = vunpack.c.h.b16 %v1217
        %v4484 = vunpack.c.l.b16 %v1218
        %v4485 = vunpack.c.h.b16 %v1218
        %v4486 = vunpack.c.l.b16 %v1219
        %v4487 = vunpack.c.h.b16 %v1219
        %v4488 = vunpack.c.l.b16 %v1220
        %v4489 = vunpack.c.h.b16 %v1220
        %v4490 = vunpack.c.l.b16 %v1221
        %v4491 = vunpack.c.h.b16 %v1221
        %v4492 = vunpack.c.l.b16 %v1222
        %v4493 = vunpack.c.h.b16 %v1222
        %v4494 = vunpack.c.l.b16 %v1223
        %v4495 = vunpack.c.h.b16 %v1223
        %v4496 = vunpack.c.l.b16 %v1224
        %v4497 = vunpack.c.h.b16 %v1224
        %v4498 = vunpack.c.l.b16 %v1225
        %v4499 = vunpack.c.h.b16 %v1225
        %v4500 = vunpack.c.l.b16 %v1226
        %v4501 = vunpack.c.h.b16 %v1226
        %v4502 = vunpack.c.l.b16 %v1227
        %v4503 = vunpack.c.h.b16 %v1227
        %v4504 = vunpack.c.l.b16 %v1228
        %v4505 = vunpack.c.h.b16 %v1228
        %v4506 = vunpack.c.l.b16 %v1229
        %v4507 = vunpack.c.h.b16 %v1229
        %v4508 = vunpack.c.l.b16 %v1230
        %v4509 = vunpack.c.h.b16 %v1230
        %v4510 = vunpack.c.l.b16 %v1231
        %v4511 = vunpack.c.h.b16 %v1231
        %v4512 = vunpack.c.l.b16 %v1232
        %v4513 = vunpack.c.h.b16 %v1232
        %v4514 = vunpack.c.l.b16 %v1233
        %v4515 = vunpack.c.h.b16 %v1233
        %v4516 = vunpack.c.l.b16 %v1234
        %v4517 = vunpack.c.h.b16 %v1234
        %v4518 = vunpack.c.l.b16 %v1235
        %v4519 = vunpack.c.h.b16 %v1235
        %v4520 = vunpack.c.l.b16 %v1236
        %v4521 = vunpack.c.h.b16 %v1236
        %v4522 = vunpack.c.l.b16 %v1237
        %v4523 = vunpack.c.h.b16 %v1237
        %v4524 = vunpack.c.l.b16 %v1238
        %v4525 = vunpack.c.h.b16 %v1238
        %v4526 = vunpack.c.l.b16 %v1239
        %v4527 = vunpack.c.h.b16 %v1239
        %v4528 = vunpack.c.l.b16 %v1240
        %v4529 = vunpack.c.h.b16 %v1240
        %v4530 = vunpack.c.l.b16 %v1241
        %v4531 = vunpack.c.h.b16 %v1241
        %v4532 = vunpack.c.l.b16 %v1242
        %v4533 = vunpack.c.h.b16 %v1242
        %v4534 = vunpack.c.l.b16 %v1243
        %v4535 = vunpack.c.h.b16 %v1243
        %v4536 = vunpack.c.l.b16 %v1244
        %v4537 = vunpack.c.h.b16 %v1244
        %v4538 = vunpack.c.l.b16 %v1245
        %v4539 = vunpack.c.h.b16 %v1245
        %v4540 = vunpack.c.l.b16 %v1246
        %v4541 = vunpack.c.h.b16 %v1246
        %v4542 = vunpack.c.l.b16 %v1247
        %v4543 = vunpack.c.h.b16 %v1247
        %v4544 = vunpack.c.l.b16 %v1248
        %v4545 = vunpack.c.h.b16 %v1248
        %v4546 = vunpack.c.l.b16 %v1249
        %v4547 = vunpack.c.h.b16 %v1249
        %v4548 = vunpack.c.l.b16 %v1250
        %v4549 = vunpack.c.h.b16 %v1250
        %v4550 = vunpack.c.l.b16 %v1251
        %v4551 = vunpack.c.h.b16 %v1251
        %v4552 = vunpack.c.l.b16 %v1252
        %v4553 = vunpack.c.h.b16 %v1252
        %v4554 = vunpack.c.l.b16 %v1253
        %v4555 = vunpack.c.h.b16 %v1253
        %v4556 = vunpack.c.l.b16 %v1254
        %v4557 = vunpack.c.h.b16 %v1254
        %v4558 = vunpack.c.l.b16 %v1255
        %v4559 = vunpack.c.h.b16 %v1255
        %v4560 = vunpack.c.l.b16 %v1256
        %v4561 = vunpack.c.h.b16 %v1256
        %v4562 = vunpack.c.l.b16 %v1257
        %v4563 = vunpack.c.h.b16 %v1257
        %v4564 = vunpack.c.l.b16 %v1258
        %v4565 = vunpack.c.h.b16 %v1258
        %v4566 = vunpack.c.l.b16 %v1259
        %v4567 = vunpack.c.h.b16 %v1259
        %v4568 = vunpack.c.l.b16 %v1260
        %v4569 = vunpack.c.h.b16 %v1260
        %v4570 = vunpack.c.l.b16 %v1261
        %v4571 = vunpack.c.h.b16 %v1261
        %v4572 = vunpack.c.l.b16 %v1262
        %v4573 = vunpack.c.h.b16 %v1262
        %v4574 = vunpack.c.l.b16 %v1263
        %v4575 = vunpack.c.h.b16 %v1263
        %v4576 = vunpack.c.l.b16 %v1264
        %v4577 = vunpack.c.h.b16 %v1264
        %v4578 = vunpack.c.l.b16 %v1265
        %v4579 = vunpack.c.h.b16 %v1265
        %v4580 = vunpack.c.l.b16 %v1266
        %v4581 = vunpack.c.h.b16 %v1266
        %v4582 = vunpack.c.l.b16 %v1267
        %v4583 = vunpack.c.h.b16 %v1267
        %v4584 = vunpack.c.l.b16 %v1268
        %v4585 = vunpack.c.h.b16 %v1268
        %v4586 = vunpack.c.l.b16 %v1269
        %v4587 = vunpack.c.h.b16 %v1269
        %v4588 = vunpack.c.l.b16 %v1270
        %v4589 = vunpack.c.h.b16 %v1270
        %v4590 = vunpack.c.l.b16 %v1271
        %v4591 = vunpack.c.h.b16 %v1271
        %v4592 = vunpack.c.l.b16 %v1272
        %v4593 = vunpack.c.h.b16 %v1272
        %v4594 = vunpack.c.l.b16 %v1273
        %v4595 = vunpack.c.h.b16 %v1273
        %v4596 = vunpack.c.l.b16 %v1274
        %v4597 = vunpack.c.h.b16 %v1274
        %v4598 = vunpack.c.l.b16 %v1275
        %v4599 = vunpack.c.h.b16 %v1275
        %v4600 = vunpack.c.l.b16 %v1276
        %v4601 = vunpack.c.h.b16 %v1276
        %v4602 = vunpack.c.l.b16 %v1277
        %v4603 = vunpack.c.h.b16 %v1277
        %v4604 = vunpack.c.l.b16 %v1278
        %v4605 = vunpack.c.h.b16 %v1278
        %v4606 = vunpack.c.l.b16 %v1279
        %v4607 = vunpack.c.h.b16 %v1279
        %v4608 = vunpack.c.l.b16 %v1280
        %v4609 = vunpack.c.h.b16 %v1280
        %v4610 = vunpack.c.l.b16 %v1281
        %v4611 = vunpack.c.h.b16 %v1281
        %v4612 = vunpack.c.l.b16 %v1282
        %v4613 = vunpack.c.h.b16 %v1282
        %v4614 = vunpack.c.l.b16 %v1283
        %v4615 = vunpack.c.h.b16 %v1283
        %v4616 = vunpack.c.l.b16 %v1284
        %v4617 = vunpack.c.h.b16 %v1284
        %v4618 = vunpack.c.l.b16 %v1285
        %v4619 = vunpack.c.h.b16 %v1285
        %v4620 = vunpack.c.l.b16 %v1286
        %v4621 = vunpack.c.h.b16 %v1286
        %v4622 = vunpack.c.l.b16 %v1287
        %v4623 = vunpack.c.h.b16 %v1287
        %v4624 = vunpack.c.l.b16 %v1288
        %v4625 = vunpack.c.h.b16 %v1288
        %v4626 = vunpack.c.l.b16 %v1289
        %v4627 = vunpack.c.h.b16 %v1289
        %v4628 = vunpack.c.l.b16 %v1290
        %v4629 = vunpack.c.h.b16 %v1290
        %v4630 = vunpack.c.l.b16 %v1291
        %v4631 = vunpack.c.h.b16 %v1291
        %v4632 = vunpack.c.l.b16 %v1292
        %v4633 = vunpack.c.h.b16 %v1292
        %v4634 = vunpack.c.l.b16 %v1293
        %v4635 = vunpack.c.h.b16 %v1293
        %v4636 = vunpack.c.l.b16 %v1294
        %v4637 = vunpack.c.h.b16 %v1294
        %v4638 = vunpack.c.l.b16 %v1295
        %v4639 = vunpack.c.h.b16 %v1295
        %v4640 = vunpack.c.l.b16 %v1296
        %v4641 = vunpack.c.h.b16 %v1296
        %v4642 = vunpack.c.l.b16 %v1297
        %v4643 = vunpack.c.h.b16 %v1297
        %v4644 = vunpack.c.l.b16 %v1298
        %v4645 = vunpack.c.h.b16 %v1298
        %v4646 = vunpack.c.l.b16 %v1299
        %v4647 = vunpack.c.h.b16 %v1299
        %v4648 = vunpack.c.l.b16 %v1300
        %v4649 = vunpack.c.h.b16 %v1300
        %v4650 = vunpack.c.l.b16 %v1301
        %v4651 = vunpack.c.h.b16 %v1301
        %v4652 = vunpack.c.l.b16 %v1302
        %v4653 = vunpack.c.h.b16 %v1302
        %v4654 = vunpack.c.l.b16 %v1303
        %v4655 = vunpack.c.h.b16 %v1303
        %v4656 = vunpack.c.l.b16 %v1304
        %v4657 = vunpack.c.h.b16 %v1304
        %v4658 = vunpack.c.l.b16 %v1305
        %v4659 = vunpack.c.h.b16 %v1305
        %v4660 = vunpack.c.l.b16 %v1306
        %v4661 = vunpack.c.h.b16 %v1306
        %v4662 = vunpack.c.l.b16 %v1307
        %v4663 = vunpack.c.h.b16 %v1307
        %v4664 = vunpack.c.l.b16 %v1308
        %v4665 = vunpack.c.h.b16 %v1308
        %v4666 = vunpack.c.l.b16 %v1309
        %v4667 = vunpack.c.h.b16 %v1309
        %v4668 = vunpack.c.l.b16 %v1310
        %v4669 = vunpack.c.h.b16 %v1310
        %v4670 = vunpack.c.l.b16 %v1311
        %v4671 = vunpack.c.h.b16 %v1311
        %v4672 = vunpack.c.l.b16 %v1312
        %v4673 = vunpack.c.h.b16 %v1312
        %v4674 = vunpack.c.l.b16 %v1313
        %v4675 = vunpack.c.h.b16 %v1313
        %v4676 = vunpack.c.l.b16 %v1314
        %v4677 = vunpack.c.h.b16 %v1314
        %v4678 = vunpack.c.l.b16 %v1315
        %v4679 = vunpack.c.h.b16 %v1315
        %v4680 = vunpack.c.l.b16 %v1316
        %v4681 = vunpack.c.h.b16 %v1316
        %v4682 = vunpack.c.l.b16 %v1317
        %v4683 = vunpack.c.h.b16 %v1317
        %v4684 = vunpack.c.l.b16 %v1318
        %v4685 = vunpack.c.h.b16 %v1318
        %v4686 = vunpack.c.l.b16 %v1319
        %v4687 = vunpack.c.h.b16 %v1319
        %v4688 = vunpack.c.l.b16 %v1320
        %v4689 = vunpack.c.h.b16 %v1320
        %v4690 = vunpack.c.l.b16 %v1321
        %v4691 = vunpack.c.h.b16 %v1321
        %v4692 = vunpack.c.l.b16 %v1322
        %v4693 = vunpack.c.h.b16 %v1322
        %v4694 = vunpack.c.l.b16 %v1323
        %v4695 = vunpack.c.h.b16 %v1323
        %v4696 = vunpack.c.l.b16 %v1324
        %v4697 = vunpack.c.h.b16 %v1324
        %v4698 = vunpack.c.l.b16 %v1325
        %v4699 = vunpack.c.h.b16 %v1325
        %v4700 = vunpack.c.l.b16 %v1326
        %v4701 = vunpack.c.h.b16 %v1326
        %v4702 = vunpack.c.l.b16 %v1327
        %v4703 = vunpack.c.h.b16 %v1327
        %v4704 = vunpack.c.l.b16 %v1328
        %v4705 = vunpack.c.h.b16 %v1328
        %v4706 = vunpack.c.l.b16 %v1329
        %v4707 = vunpack.c.h.b16 %v1329
        %v4708 = vunpack.c.l.b16 %v1330
        %v4709 = vunpack.c.h.b16 %v1330
        %v4710 = vunpack.c.l.b16 %v1331
        %v4711 = vunpack.c.h.b16 %v1331
        %v4712 = vunpack.c.l.b16 %v1332
        %v4713 = vunpack.c.h.b16 %v1332
        %v4714 = vunpack.c.l.b16 %v1333
        %v4715 = vunpack.c.h.b16 %v1333
        %v4716 = vunpack.c.l.b16 %v1334
        %v4717 = vunpack.c.h.b16 %v1334
        %v4718 = vunpack.c.l.b16 %v1335
        %v4719 = vunpack.c.h.b16 %v1335
        %v4720 = vunpack.c.l.b16 %v1336
        %v4721 = vunpack.c.h.b16 %v1336
        %v4722 = vunpack.c.l.b16 %v1337
        %v4723 = vunpack.c.h.b16 %v1337
        %v4724 = vunpack.c.l.b16 %v1338
        %v4725 = vunpack.c.h.b16 %v1338
        %v4726 = vunpack.c.l.b16 %v1339
        %v4727 = vunpack.c.h.b16 %v1339
        %v4728 = vunpack.c.l.b16 %v1340
        %v4729 = vunpack.c.h.b16 %v1340
        %v4730 = vunpack.c.l.b16 %v1341
        %v4731 = vunpack.c.h.b16 %v1341
        %v4732 = vunpack.c.l.b16 %v1342
        %v4733 = vunpack.c.h.b16 %v1342
        %v4734 = vunpack.c.l.b16 %v1343
        %v4735 = vunpack.c.h.b16 %v1343
        %v4736 = vunpack.c.l.b16 %v1344
        %v4737 = vunpack.c.h.b16 %v1344
        %v4738 = vunpack.c.l.b16 %v1345
        %v4739 = vunpack.c.h.b16 %v1345
        %v4740 = vunpack.c.l.b16 %v1346
        %v4741 = vunpack.c.h.b16 %v1346
        %v4742 = vunpack.c.l.b16 %v1347
        %v4743 = vunpack.c.h.b16 %v1347
        %v4744 = vunpack.c.l.b16 %v1348
        %v4745 = vunpack.c.h.b16 %v1348
        %v4746 = vunpack.c.l.b16 %v1349
        %v4747 = vunpack.c.h.b16 %v1349
        %v4748 = vunpack.c.l.b16 %v1350
        %v4749 = vunpack.c.h.b16 %v1350
        %v4750 = vunpack.c.l.b16 %v1351
        %v4751 = vunpack.c.h.b16 %v1351
        %v4752 = vunpack.c.l.b16 %v1352
        %v4753 = vunpack.c.h.b16 %v1352
        %v4754 = vunpack.c.l.b16 %v1353
        %v4755 = vunpack.c.h.b16 %v1353
        %v4756 = vunpack.c.l.b16 %v1354
        %v4757 = vunpack.c.h.b16 %v1354
        %v4758 = vunpack.c.l.b16 %v1355
        %v4759 = vunpack.c.h.b16 %v1355
        %v4760 = vunpack.c.l.b16 %v1356
        %v4761 = vunpack.c.h.b16 %v1356
        %v4762 = vunpack.c.l.b16 %v1357
        %v4763 = vunpack.c.h.b16 %v1357
        %v4764 = vunpack.c.l.b16 %v1358
        %v4765 = vunpack.c.h.b16 %v1358
        %v4766 = vunpack.c.l.b16 %v1359
        %v4767 = vunpack.c.h.b16 %v1359
        %v4768 = vunpack.c.l.b16 %v1360
        %v4769 = vunpack.c.h.b16 %v1360
        %v4770 = vunpack.c.l.b16 %v1361
        %v4771 = vunpack.c.h.b16 %v1361
        %v4772 = vunpack.c.l.b16 %v1362
        %v4773 = vunpack.c.h.b16 %v1362
        %v4774 = vunpack.c.l.b16 %v1363
        %v4775 = vunpack.c.h.b16 %v1363
        %v4776 = vunpack.c.l.b16 %v1364
        %v4777 = vunpack.c.h.b16 %v1364
        %v4778 = vunpack.c.l.b16 %v1365
        %v4779 = vunpack.c.h.b16 %v1365
        %v4780 = vunpack.c.l.b16 %v1366
        %v4781 = vunpack.c.h.b16 %v1366
        %v4782 = vunpack.c.l.b16 %v1367
        %v4783 = vunpack.c.h.b16 %v1367
        %v4784 = vunpack.c.l.b16 %v1368
        %v4785 = vunpack.c.h.b16 %v1368
        %v4786 = vunpack.c.l.b16 %v1369
        %v4787 = vunpack.c.h.b16 %v1369
        %v4788 = vunpack.c.l.b16 %v1370
        %v4789 = vunpack.c.h.b16 %v1370
        %v4790 = vunpack.c.l.b16 %v1371
        %v4791 = vunpack.c.h.b16 %v1371
        %v4792 = vunpack.c.l.b16 %v1372
        %v4793 = vunpack.c.h.b16 %v1372
        %v4794 = vunpack.c.l.b16 %v1373
        %v4795 = vunpack.c.h.b16 %v1373
        %v4796 = vunpack.c.l.b16 %v1374
        %v4797 = vunpack.c.h.b16 %v1374
        %v4798 = vunpack.c.l.b16 %v1375
        %v4799 = vunpack.c.h.b16 %v1375
        %v4800 = vunpack.c.l.b16 %v1376
        %v4801 = vunpack.c.h.b16 %v1376
        %v4802 = vunpack.c.l.b16 %v1377
        %v4803 = vunpack.c.h.b16 %v1377
        %v4804 = vunpack.c.l.b16 %v1378
        %v4805 = vunpack.c.h.b16 %v1378
        %v4806 = vunpack.c.l.b16 %v1379
        %v4807 = vunpack.c.h.b16 %v1379
        %v4808 = vunpack.c.l.b16 %v1380
        %v4809 = vunpack.c.h.b16 %v1380
        %v4810 = vunpack.c.l.b16 %v1381
        %v4811 = vunpack.c.h.b16 %v1381
        %v4812 = vunpack.c.l.b16 %v1382
        %v4813 = vunpack.c.h.b16 %v1382
        %v4814 = vunpack.c.l.b16 %v1383
        %v4815 = vunpack.c.h.b16 %v1383
        %v4816 = vunpack.c.l.b16 %v1384
        %v4817 = vunpack.c.h.b16 %v1384
        %v4818 = vunpack.c.l.b16 %v1385
        %v4819 = vunpack.c.h.b16 %v1385
        %v4820 = vunpack.c.l.b16 %v1386
        %v4821 = vunpack.c.h.b16 %v1386
        %v4822 = vunpack.c.l.b16 %v1387
        %v4823 = vunpack.c.h.b16 %v1387
        %v4824 = vunpack.c.l.b16 %v1388
        %v4825 = vunpack.c.h.b16 %v1388
        %v4826 = vunpack.c.l.b16 %v1389
        %v4827 = vunpack.c.h.b16 %v1389
        %v4828 = vunpack.c.l.b16 %v1390
        %v4829 = vunpack.c.h.b16 %v1390
        %v4830 = vunpack.c.l.b16 %v1391
        %v4831 = vunpack.c.h.b16 %v1391
        %v4832 = vunpack.c.l.b16 %v1392
        %v4833 = vunpack.c.h.b16 %v1392
        %v4834 = vunpack.c.l.b16 %v1393
        %v4835 = vunpack.c.h.b16 %v1393
        %v4836 = vunpack.c.l.b16 %v1394
        %v4837 = vunpack.c.h.b16 %v1394
        %v4838 = vunpack.c.l.b16 %v1395
        %v4839 = vunpack.c.h.b16 %v1395
        %v4840 = vunpack.c.l.b16 %v1396
        %v4841 = vunpack.c.h.b16 %v1396
        %v4842 = vunpack.c.l.b16 %v1397
        %v4843 = vunpack.c.h.b16 %v1397
        %v4844 = vunpack.c.l.b16 %v1398
        %v4845 = vunpack.c.h.b16 %v1398
        %v4846 = vunpack.c.l.b16 %v1399
        %v4847 = vunpack.c.h.b16 %v1399
        %v4848 = vunpack.c.l.b16 %v1400
        %v4849 = vunpack.c.h.b16 %v1400
        %v4850 = vunpack.c.l.b16 %v1401
        %v4851 = vunpack.c.h.b16 %v1401
        %v4852 = vunpack.c.l.b16 %v1402
        %v4853 = vunpack.c.h.b16 %v1402
        %v4854 = vunpack.c.l.b16 %v1403
        %v4855 = vunpack.c.h.b16 %v1403
        %v4856 = vunpack.c.l.b16 %v1404
        %v4857 = vunpack.c.h.b16 %v1404
        %v4858 = vunpack.c.l.b16 %v1405
        %v4859 = vunpack.c.h.b16 %v1405
        %v4860 = vunpack.c.l.b16 %v1406
        %v4861 = vunpack.c.h.b16 %v1406
        %v4862 = vunpack.c.l.b16 %v1407
        %v4863 = vunpack.c.h.b16 %v1407
        %v4864 = vunpack.c.l.b16 %v1408
        %v4865 = vunpack.c.h.b16 %v1408
        %v4866 = vunpack.c.l.b16 %v1409
        %v4867 = vunpack.c.h.b16 %v1409
        %v4868 = vunpack.c.l.b16 %v1410
        %v4869 = vunpack.c.h.b16 %v1410
        %v4870 = vunpack.c.l.b16 %v1411
        %v4871 = vunpack.c.h.b16 %v1411
        %v4872 = vunpack.c.l.b16 %v1412
        %v4873 = vunpack.c.h.b16 %v1412
        %v4874 = vunpack.c.l.b16 %v1413
        %v4875 = vunpack.c.h.b16 %v1413
        %v4876 = vunpack.c.l.b16 %v1414
        %v4877 = vunpack.c.h.b16 %v1414
        %v4878 = vunpack.c.l.b16 %v1415
        %v4879 = vunpack.c.h.b16 %v1415
        %v4880 = vunpack.c.l.b16 %v1416
        %v4881 = vunpack.c.h.b16 %v1416
        %v4882 = vunpack.c.l.b16 %v1417
        %v4883 = vunpack.c.h.b16 %v1417
        %v4884 = vunpack.c.l.b16 %v1418
        %v4885 = vunpack.c.h.b16 %v1418
        %v4886 = vunpack.c.l.b16 %v1419
        %v4887 = vunpack.c.h.b16 %v1419
        %v4888 = vunpack.c.l.b16 %v1420
        %v4889 = vunpack.c.h.b16 %v1420
        %v4890 = vunpack.c.l.b16 %v1421
        %v4891 = vunpack.c.h.b16 %v1421
        %v4892 = vunpack.c.l.b16 %v1422
        %v4893 = vunpack.c.h.b16 %v1422
        %v4894 = vunpack.c.l.b16 %v1423
        %v4895 = vunpack.c.h.b16 %v1423
        %v4896 = vunpack.c.l.b16 %v1424
        %v4897 = vunpack.c.h.b16 %v1424
        %v4898 = vunpack.c.l.b16 %v1425
        %v4899 = vunpack.c.h.b16 %v1425
        %v4900 = vunpack.c.l.b16 %v1426
        %v4901 = vunpack.c.h.b16 %v1426
        %v4902 = vunpack.c.l.b16 %v1427
        %v4903 = vunpack.c.h.b16 %v1427
        %v4904 = vunpack.c.l.b16 %v1428
        %v4905 = vunpack.c.h.b16 %v1428
        %v4906 = vunpack.c.l.b16 %v1429
        %v4907 = vunpack.c.h.b16 %v1429
        %v4908 = vunpack.c.l.b16 %v1430
        %v4909 = vunpack.c.h.b16 %v1430
        %v4910 = vunpack.c.l.b16 %v1431
        %v4911 = vunpack.c.h.b16 %v1431
        %v4912 = vunpack.c.l.b16 %v1432
        %v4913 = vunpack.c.h.b16 %v1432
        %v4914 = vunpack.c.l.b16 %v1433
        %v4915 = vunpack.c.h.b16 %v1433
        %v4916 = vunpack.c.l.b16 %v1434
        %v4917 = vunpack.c.h.b16 %v1434
        %v4918 = vpack.c.b16 %v2682, %v2678
        %v4919 = vpack.c.b16 %v2683, %v2679
        %v4920 = vpack.c.b16 %v2684, %v2680
        %v4921 = vpack.c.b16 %v2685, %v2681
        %v4922 = vpack.c.b16 %v2690, %v2686
        %v4923 = vpack.c.b16 %v2691, %v2687
        %v4924 = vpack.c.b16 %v2692, %v2688
        %v4925 = vpack.c.b16 %v2693, %v2689
        %v4926 = vpack.c.b16 %v2698, %v2694
        %v4927 = vpack.c.b16 %v2699, %v2695
        %v4928 = vpack.c.b16 %v2700, %v2696
        %v4929 = vpack.c.b16 %v2701, %v2697
        %v4930 = vpack.c.b16 %v2706, %v2702
        %v4931 = vpack.c.b16 %v2707, %v2703
        %v4932 = vpack.c.b16 %v2708, %v2704
        %v4933 = vpack.c.b16 %v2709, %v2705
        %v4934 = vpack.c.b16 %v2714, %v2710
        %v4935 = vpack.c.b16 %v2715, %v2711
        %v4936 = vpack.c.b16 %v2716, %v2712
        %v4937 = vpack.c.b16 %v2717, %v2713
        %v4938 = vpack.c.b16 %v2722, %v2718
        %v4939 = vpack.c.b16 %v2723, %v2719
        %v4940 = vpack.c.b16 %v2724, %v2720
        %v4941 = vpack.c.b16 %v2725, %v2721
        %v4942 = vpack.c.b16 %v2730, %v2726
        %v4943 = vpack.c.b16 %v2731, %v2727
        %v4944 = vpack.c.b16 %v2732, %v2728
        %v4945 = vpack.c.b16 %v2733, %v2729
        %v4946 = vpack.c.b16 %v2738, %v2734
        %v4947 = vpack.c.b16 %v2739, %v2735
        %v4948 = vpack.c.b16 %v2740, %v2736
        %v4949 = vpack.c.b16 %v2741, %v2737
        %v4950 = vpack.c.b16 %v2746, %v2742
        %v4951 = vpack.c.b16 %v2747, %v2743
        %v4952 = vpack.c.b16 %v2748, %v2744
        %v4953 = vpack.c.b16 %v2749, %v2745
        %v4954 = vpack.c.b16 %v2754, %v2750
        %v4955 = vpack.c.b16 %v2755, %v2751
        %v4956 = vpack.c.b16 %v2756, %v2752
        %v4957 = vpack.c.b16 %v2757, %v2753
        %v4958 = vpack.c.b16 %v2762, %v2758
        %v4959 = vpack.c.b16 %v2763, %v2759
        %v4960 = vpack.c.b16 %v2764, %v2760
        %v4961 = vpack.c.b16 %v2765, %v2761
        %v4962 = vpack.c.b16 %v2770, %v2766
        %v4963 = vpack.c.b16 %v2771, %v2767
        %v4964 = vpack.c.b16 %v2772, %v2768
        %v4965 = vpack.c.b16 %v2773, %v2769
        %v4966 = vpack.c.b16 %v2778, %v2774
        %v4967 = vpack.c.b16 %v2779, %v2775
        %v4968 = vpack.c.b16 %v2780, %v2776
        %v4969 = vpack.c.b16 %v2781, %v2777
        %v4970 = vpack.c.b16 %v2786, %v2782
        %v4971 = vpack.c.b16 %v2787, %v2783
        %v4972 = vpack.c.b16 %v2788, %v2784
        %v4973 = vpack.c.b16 %v2789, %v2785
        %v4974 = vpack.c.b16 %v2794, %v2790
        %v4975 = vpack.c.b16 %v2795, %v2791
        %v4976 = vpack.c.b16 %v2796, %v2792
        %v4977 = vpack.c.b16 %v2797, %v2793
        %v4978 = vpack.c.b16 %v2802, %v2798
        %v4979 = vpack.c.b16 %v2803, %v2799
        %v4980 = vpack.c.b16 %v2804, %v2800
        %v4981 = vpack.c.b16 %v2805, %v2801
        %v4982 = vpack.c.b16 %v2810, %v2806
        %v4983 = vpack.c.b16 %v2811, %v2807
        %v4984 = vpack.c.b16 %v2812, %v2808
        %v4985 = vpack.c.b16 %v2813, %v2809
        %v4986 = vpack.c.b16 %v2818, %v2814
        %v4987 = vpack.c.b16 %v2819, %v2815
        %v4988 = vpack.c.b16 %v2820, %v2816
        %v4989 = vpack.c.b16 %v2821, %v2817
        %v4990 = vpack.c.b16 %v2826, %v2822
        %v4991 = vpack.c.b16 %v2827, %v2823
        %v4992 = vpack.c.b16 %v2828, %v2824
        %v4993 = vpack.c.b16 %v2829, %v2825
        %v4994 = vpack.c.b16 %v2834, %v2830
        %v4995 = vpack.c.b16 %v2835, %v2831
        %v4996 = vpack.c.b16 %v2836, %v2832
        %v4997 = vpack.c.b16 %v2837, %v2833
        %v4998 = vpack.c.b16 %v2842, %v2838
        %v4999 = vpack.c.b16 %v2843, %v2839
        %v5000 = vpack.c.b16 %v2844, %v2840
        %v5001 = vpack.c.b16 %v2845, %v2841
        %v5002 = vpack.c.b16 %v2850, %v2846
        %v5003 = vpack.c.b16 %v2851, %v2847
        %v5004 = vpack.c.b16 %v2852, %v2848
        %v5005 = vpack.c.b16 %v2853, %v2849
        %v5006 = vpack.c.b16 %v2858, %v2854
        %v5007 = vpack.c.b16 %v2859, %v2855
        %v5008 = vpack.c.b16 %v2860, %v2856
        %v5009 = vpack.c.b16 %v2861, %v2857
        %v5010 = vpack.c.b16 %v2866, %v2862
        %v5011 = vpack.c.b16 %v2867, %v2863
        %v5012 = vpack.c.b16 %v2868, %v2864
        %v5013 = vpack.c.b16 %v2869, %v2865
        %v5014 = vpack.c.b16 %v2874, %v2870
        %v5015 = vpack.c.b16 %v2875, %v2871
        %v5016 = vpack.c.b16 %v2876, %v2872
        %v5017 = vpack.c.b16 %v2877, %v2873
        %v5018 = vpack.c.b16 %v2882, %v2878
        %v5019 = vpack.c.b16 %v2883, %v2879
        %v5020 = vpack.c.b16 %v2884, %v2880
        %v5021 = vpack.c.b16 %v2885, %v2881
        %v5022 = vpack.c.b16 %v2890, %v2886
        %v5023 = vpack.c.b16 %v2891, %v2887
        %v5024 = vpack.c.b16 %v2892, %v2888
        %v5025 = vpack.c.b16 %v2893, %v2889
        %v5026 = vpack.c.b16 %v2898, %v2894
        %v5027 = vpack.c.b16 %v2899, %v2895
        %v5028 = vpack.c.b16 %v2900, %v2896
        %v5029 = vpack.c.b16 %v2901, %v2897
        %v5030 = vpack.c.b16 %v2906, %v2902
        %v5031 = vpack.c.b16 %v2907, %v2903
        %v5032 = vpack.c.b16 %v2908, %v2904
        %v5033 = vpack.c.b16 %v2909, %v2905
        %v5034 = vpack.c.b16 %v2914, %v2910
        %v5035 = vpack.c.b16 %v2915, %v2911
        %v5036 = vpack.c.b16 %v2916, %v2912
        %v5037 = vpack.c.b16 %v2917, %v2913
        %v5038 = vpack.c.b16 %v2922, %v2918
        %v5039 = vpack.c.b16 %v2923, %v2919
        %v5040 = vpack.c.b16 %v2924, %v2920
        %v5041 = vpack.c.b16 %v2925, %v2921
        %v5042 = vpack.c.b16 %v2930, %v2926
        %v5043 = vpack.c.b16 %v2931, %v2927
        %v5044 = vpack.c.b16 %v2932, %v2928
        %v5045 = vpack.c.b16 %v2933, %v2929
        %v5046 = vpack.c.b16 %v2938, %v2934
        %v5047 = vpack.c.b16 %v2939, %v2935
        %v5048 = vpack.c.b16 %v2940, %v2936
        %v5049 = vpack.c.b16 %v2941, %v2937
        %v5050 = vpack.c.b16 %v2946, %v2942
        %v5051 = vpack.c.b16 %v2947, %v2943
        %v5052 = vpack.c.b16 %v2948, %v2944
        %v5053 = vpack.c.b16 %v2949, %v2945
        %v5054 = vpack.c.b16 %v2954, %v2950
        %v5055 = vpack.c.b16 %v2955, %v2951
        %v5056 = vpack.c.b16 %v2956, %v2952
        %v5057 = vpack.c.b16 %v2957, %v2953
        %v5058 = vpack.c.b16 %v2962, %v2958
        %v5059 = vpack.c.b16 %v2963, %v2959
        %v5060 = vpack.c.b16 %v2964, %v2960
        %v5061 = vpack.c.b16 %v2965, %v2961
        %v5062 = vpack.c.b16 %v2970, %v2966
        %v5063 = vpack.c.b16 %v2971, %v2967
        %v5064 = vpack.c.b16 %v2972, %v2968
        %v5065 = vpack.c.b16 %v2973, %v2969
        %v5066 = vpack.c.b16 %v2978, %v2974
        %v5067 = vpack.c.b16 %v2979, %v2975
        %v5068 = vpack.c.b16 %v2980, %v2976
        %v5069 = vpack.c.b16 %v2981, %v2977
        %v5070 = vpack.c.b16 %v2986, %v2982
        %v5071 = vpack.c.b16 %v2987, %v2983
        %v5072 = vpack.c.b16 %v2988, %v2984
        %v5073 = vpack.c.b16 %v2989, %v2985
        %v5074 = vpack.c.b16 %v2994, %v2990
        %v5075 = vpack.c.b16 %v2995, %v2991
        %v5076 = vpack.c.b16 %v2996, %v2992
        %v5077 = vpack.c.b16 %v2997, %v2993
        %v5078 = vpack.c.b16 %v3002, %v2998
        %v5079 = vpack.c.b16 %v3003, %v2999
        %v5080 = vpack.c.b16 %v3004, %v3000
        %v5081 = vpack.c.b16 %v3005, %v3001
        %v5082 = vpack.c.b16 %v3010, %v3006
        %v5083 = vpack.c.b16 %v3011, %v3007
        %v5084 = vpack.c.b16 %v3012, %v3008
        %v5085 = vpack.c.b16 %v3013, %v3009
        %v5086 = vpack.c.b16 %v3018, %v3014
        %v5087 = vpack.c.b16 %v3019, %v3015
        %v5088 = vpack.c.b16 %v3020, %v3016
        %v5089 = vpack.c.b16 %v3021, %v3017
        %v5090 = vpack.c.b16 %v3026, %v3022
        %v5091 = vpack.c.b16 %v3027, %v3023
        %v5092 = vpack.c.b16 %v3028, %v3024
        %v5093 = vpack.c.b16 %v3029, %v3025
        %v5094 = vpack.c.b16 %v3034, %v3030
        %v5095 = vpack.c.b16 %v3035, %v3031
        %v5096 = vpack.c.b16 %v3036, %v3032
        %v5097 = vpack.c.b16 %v3037, %v3033
        %v5098 = vpack.c.b16 %v3042, %v3038
        %v5099 = vpack.c.b16 %v3043, %v3039
        %v5100 = vpack.c.b16 %v3044, %v3040
        %v5101 = vpack.c.b16 %v3045, %v3041
        %v5102 = vpack.c.b16 %v3050, %v3046
        %v5103 = vpack.c.b16 %v3051, %v3047
        %v5104 = vpack.c.b16 %v3052, %v3048
        %v5105 = vpack.c.b16 %v3053, %v3049
        %v5106 = vpack.c.b16 %v3058, %v3054
        %v5107 = vpack.c.b16 %v3059, %v3055
        %v5108 = vpack.c.b16 %v3060, %v3056
        %v5109 = vpack.c.b16 %v3061, %v3057
        %v5110 = vpack.c.b16 %v3066, %v3062
        %v5111 = vpack.c.b16 %v3067, %v3063
        %v5112 = vpack.c.b16 %v3068, %v3064
        %v5113 = vpack.c.b16 %v3069, %v3065
        %v5114 = vpack.c.b16 %v3074, %v3070
        %v5115 = vpack.c.b16 %v3075, %v3071
        %v5116 = vpack.c.b16 %v3076, %v3072
        %v5117 = vpack.c.b16 %v3077, %v3073
        %v5118 = vpack.c.b16 %v3082, %v3078
        %v5119 = vpack.c.b16 %v3083, %v3079
        %v5120 = vpack.c.b16 %v3084, %v3080
        %v5121 = vpack.c.b16 %v3085, %v3081
        %v5122 = vpack.c.b16 %v3090, %v3086
        %v5123 = vpack.c.b16 %v3091, %v3087
        %v5124 = vpack.c.b16 %v3092, %v3088
        %v5125 = vpack.c.b16 %v3093, %v3089
        %v5126 = vpack.c.b16 %v3098, %v3094
        %v5127 = vpack.c.b16 %v3099, %v3095
        %v5128 = vpack.c.b16 %v3100, %v3096
        %v5129 = vpack.c.b16 %v3101, %v3097
        %v5130 = vpack.c.b16 %v3106, %v3102
        %v5131 = vpack.c.b16 %v3107, %v3103
        %v5132 = vpack.c.b16 %v3108, %v3104
        %v5133 = vpack.c.b16 %v3109, %v3105
        %v5134 = vpack.c.b16 %v3114, %v3110
        %v5135 = vpack.c.b16 %v3115, %v3111
        %v5136 = vpack.c.b16 %v3116, %v3112
        %v5137 = vpack.c.b16 %v3117, %v3113
        %v5138 = vpack.c.b16 %v3122, %v3118
        %v5139 = vpack.c.b16 %v3123, %v3119
        %v5140 = vpack.c.b16 %v3124, %v3120
        %v5141 = vpack.c.b16 %v3125, %v3121
        %v5142 = vpack.c.b16 %v3130, %v3126
        %v5143 = vpack.c.b16 %v3131, %v3127
        %v5144 = vpack.c.b16 %v3132, %v3128
        %v5145 = vpack.c.b16 %v3133, %v3129
        %v5146 = vpack.c.b16 %v3138, %v3134
        %v5147 = vpack.c.b16 %v3139, %v3135
        %v5148 = vpack.c.b16 %v3140, %v3136
        %v5149 = vpack.c.b16 %v3141, %v3137
        %v5150 = vpack.c.b16 %v3146, %v3142
        %v5151 = vpack.c.b16 %v3147, %v3143
        %v5152 = vpack.c.b16 %v3148, %v3144
        %v5153 = vpack.c.b16 %v3149, %v3145
        %v5154 = vpack.c.b16 %v3154, %v3150
        %v5155 = vpack.c.b16 %v3155, %v3151
        %v5156 = vpack.c.b16 %v3156, %v3152
        %v5157 = vpack.c.b16 %v3157, %v3153
        %v5158 = vpack.c.b16 %v3162, %v3158
        %v5159 = vpack.c.b16 %v3163, %v3159
        %v5160 = vpack.c.b16 %v3164, %v3160
        %v5161 = vpack.c.b16 %v3165, %v3161
        %v5162 = vpack.c.b16 %v3170, %v3166
        %v5163 = vpack.c.b16 %v3171, %v3167
        %v5164 = vpack.c.b16 %v3172, %v3168
        %v5165 = vpack.c.b16 %v3173, %v3169
        %v5166 = vpack.c.b16 %v3178, %v3174
        %v5167 = vpack.c.b16 %v3179, %v3175
        %v5168 = vpack.c.b16 %v3180, %v3176
        %v5169 = vpack.c.b16 %v3181, %v3177
        %v5170 = vpack.c.b16 %v3186, %v3182
        %v5171 = vpack.c.b16 %v3187, %v3183
        %v5172 = vpack.c.b16 %v3188, %v3184
        %v5173 = vpack.c.b16 %v3189, %v3185
        %v5174 = vpack.c.b16 %v3194, %v3190
        %v5175 = vpack.c.b16 %v3195, %v3191
        %v5176 = vpack.c.b16 %v3196, %v3192
        %v5177 = vpack.c.b16 %v3197, %v3193
        %v5178 = vpack.c.b16 %v3202, %v3198
        %v5179 = vpack.c.b16 %v3203, %v3199
        %v5180 = vpack.c.b16 %v3204, %v3200
        %v5181 = vpack.c.b16 %v3205, %v3201
        %v5182 = vpack.c.b16 %v3210, %v3206
        %v5183 = vpack.c.b16 %v3211, %v3207
        %v5184 = vpack.c.b16 %v3212, %v3208
        %v5185 = vpack.c.b16 %v3213, %v3209
        %v5186 = vpack.c.b16 %v3218, %v3214
        %v5187 = vpack.c.b16 %v3219, %v3215
        %v5188 = vpack.c.b16 %v3220, %v3216
        %v5189 = vpack.c.b16 %v3221, %v3217
        %v5190 = vpack.c.b16 %v3226, %v3222
        %v5191 = vpack.c.b16 %v3227, %v3223
        %v5192 = vpack.c.b16 %v3228, %v3224
        %v5193 = vpack.c.b16 %v3229, %v3225
        %v5194 = vpack.c.b16 %v3234, %v3230
        %v5195 = vpack.c.b16 %v3235, %v3231
        %v5196 = vpack.c.b16 %v3236, %v3232
        %v5197 = vpack.c.b16 %v3237, %v3233
        %v5198 = vpack.c.b16 %v3242, %v3238
        %v5199 = vpack.c.b16 %v3243, %v3239
        %v5200 = vpack.c.b16 %v3244, %v3240
        %v5201 = vpack.c.b16 %v3245, %v3241
        %v5202 = vpack.c.b16 %v3250, %v3246
        %v5203 = vpack.c.b16 %v3251, %v3247
        %v5204 = vpack.c.b16 %v3252, %v3248
        %v5205 = vpack.c.b16 %v3253, %v3249
        %v5206 = vpack.c.b16 %v3258, %v3254
        %v5207 = vpack.c.b16 %v3259, %v3255
        %v5208 = vpack.c.b16 %v3260, %v3256
        %v5209 = vpack.c.b16 %v3261, %v3257
        %v5210 = vpack.c.b16 %v3266, %v3262
        %v5211 = vpack.c.b16 %v3267, %v3263
        %v5212 = vpack.c.b16 %v3268, %v3264
        %v5213 = vpack.c.b16 %v3269, %v3265
        %v5214 = vpack.c.b16 %v3274, %v3270
        %v5215 = vpack.c.b16 %v3275, %v3271
        %v5216 = vpack.c.b16 %v3276, %v3272
        %v5217 = vpack.c.b16 %v3277, %v3273
        %v5218 = vpack.c.b16 %v3282, %v3278
        %v5219 = vpack.c.b16 %v3283, %v3279
        %v5220 = vpack.c.b16 %v3284, %v3280
        %v5221 = vpack.c.b16 %v3285, %v3281
        %v5222 = vpack.c.b16 %v3290, %v3286
        %v5223 = vpack.c.b16 %v3291, %v3287
        %v5224 = vpack.c.b16 %v3292, %v3288
        %v5225 = vpack.c.b16 %v3293, %v3289
        %v5226 = vpack.c.b16 %v3298, %v3294
        %v5227 = vpack.c.b16 %v3299, %v3295
        %v5228 = vpack.c.b16 %v3300, %v3296
        %v5229 = vpack.c.b16 %v3301, %v3297
        %v5230 = vpack.c.b16 %v3306, %v3302
        %v5231 = vpack.c.b16 %v3307, %v3303
        %v5232 = vpack.c.b16 %v3308, %v3304
        %v5233 = vpack.c.b16 %v3309, %v3305
        %v5234 = vpack.c.b16 %v3314, %v3310
        %v5235 = vpack.c.b16 %v3315, %v3311
        %v5236 = vpack.c.b16 %v3316, %v3312
        %v5237 = vpack.c.b16 %v3317, %v3313
        %v5238 = vpack.c.b16 %v3322, %v3318
        %v5239 = vpack.c.b16 %v3323, %v3319
        %v5240 = vpack.c.b16 %v3324, %v3320
        %v5241 = vpack.c.b16 %v3325, %v3321
        %v5242 = vpack.c.b16 %v3330, %v3326
        %v5243 = vpack.c.b16 %v3331, %v3327
        %v5244 = vpack.c.b16 %v3332, %v3328
        %v5245 = vpack.c.b16 %v3333, %v3329
        %v5246 = vpack.c.b16 %v3338, %v3334
        %v5247 = vpack.c.b16 %v3339, %v3335
        %v5248 = vpack.c.b16 %v3340, %v3336
        %v5249 = vpack.c.b16 %v3341, %v3337
        %v5250 = vpack.c.b16 %v3346, %v3342
        %v5251 = vpack.c.b16 %v3347, %v3343
        %v5252 = vpack.c.b16 %v3348, %v3344
        %v5253 = vpack.c.b16 %v3349, %v3345
        %v5254 = vpack.c.b16 %v3354, %v3350
        %v5255 = vpack.c.b16 %v3355, %v3351
        %v5256 = vpack.c.b16 %v3356, %v3352
        %v5257 = vpack.c.b16 %v3357, %v3353
        %v5258 = vpack.c.b16 %v3362, %v3358
        %v5259 = vpack.c.b16 %v3363, %v3359
        %v5260 = vpack.c.b16 %v3364, %v3360
        %v5261 = vpack.c.b16 %v3365, %v3361
        %v5262 = vpack.c.b16 %v3370, %v3366
        %v5263 = vpack.c.b16 %v3371, %v3367
        %v5264 = vpack.c.b16 %v3372, %v3368
        %v5265 = vpack.c.b16 %v3373, %v3369
        %v5266 = vpack.c.b16 %v3378, %v3374
        %v5267 = vpack.c.b16 %v3379, %v3375
        %v5268 = vpack.c.b16 %v3380, %v3376
        %v5269 = vpack.c.b16 %v3381, %v3377
        %v5270 = vpack.c.b16 %v3386, %v3382
        %v5271 = vpack.c.b16 %v3387, %v3383
        %v5272 = vpack.c.b16 %v3388, %v3384
        %v5273 = vpack.c.b16 %v3389, %v3385
        %v5274 = vpack.c.b16 %v3394, %v3390
        %v5275 = vpack.c.b16 %v3395, %v3391
        %v5276 = vpack.c.b16 %v3396, %v3392
        %v5277 = vpack.c.b16 %v3397, %v3393
        %v5278 = vpack.c.b16 %v3402, %v3398
        %v5279 = vpack.c.b16 %v3403, %v3399
        %v5280 = vpack.c.b16 %v3404, %v3400
        %v5281 = vpack.c.b16 %v3405, %v3401
        %v5282 = vpack.c.b16 %v3410, %v3406
        %v5283 = vpack.c.b16 %v3411, %v3407
        %v5284 = vpack.c.b16 %v3412, %v3408
        %v5285 = vpack.c.b16 %v3413, %v3409
        %v5286 = vpack.c.b16 %v3418, %v3414
        %v5287 = vpack.c.b16 %v3419, %v3415
        %v5288 = vpack.c.b16 %v3420, %v3416
        %v5289 = vpack.c.b16 %v3421, %v3417
        %v5290 = vpack.c.b16 %v3426, %v3422
        %v5291 = vpack.c.b16 %v3427, %v3423
        %v5292 = vpack.c.b16 %v3428, %v3424
        %v5293 = vpack.c.b16 %v3429, %v3425
        %v5294 = vpack.c.b16 %v3434, %v3430
        %v5295 = vpack.c.b16 %v3435, %v3431
        %v5296 = vpack.c.b16 %v3436, %v3432
        %v5297 = vpack.c.b16 %v3437, %v3433
        %v5298 = vpack.c.b16 %v3442, %v3438
        %v5299 = vpack.c.b16 %v3443, %v3439
        %v5300 = vpack.c.b16 %v3444, %v3440
        %v5301 = vpack.c.b16 %v3445, %v3441
        %v5302 = vpack.c.b16 %v3450, %v3446
        %v5303 = vpack.c.b16 %v3451, %v3447
        %v5304 = vpack.c.b16 %v3452, %v3448
        %v5305 = vpack.c.b16 %v3453, %v3449
        %v5306 = vpack.c.b16 %v3458, %v3454
        %v5307 = vpack.c.b16 %v3459, %v3455
        %v5308 = vpack.c.b16 %v3460, %v3456
        %v5309 = vpack.c.b16 %v3461, %v3457
        %v5310 = vpack.c.b16 %v3466, %v3462
        %v5311 = vpack.c.b16 %v3467, %v3463
        %v5312 = vpack.c.b16 %v3468, %v3464
        %v5313 = vpack.c.b16 %v3469, %v3465
        %v5314 = vpack.c.b16 %v3474, %v3470
        %v5315 = vpack.c.b16 %v3475, %v3471
        %v5316 = vpack.c.b16 %v3476, %v3472
        %v5317 = vpack.c.b16 %v3477, %v3473
        %v5318 = vpack.c.b16 %v3482, %v3478
        %v5319 = vpack.c.b16 %v3483, %v3479
        %v5320 = vpack.c.b16 %v3484, %v3480
        %v5321 = vpack.c.b16 %v3485, %v3481
        %v5322 = vpack.c.b16 %v3490, %v3486
        %v5323 = vpack.c.b16 %v3491, %v3487
        %v5324 = vpack.c.b16 %v3492, %v3488
        %v5325 = vpack.c.b16 %v3493, %v3489
        %v5326 = vpack.c.b16 %v3498, %v3494
        %v5327 = vpack.c.b16 %v3499, %v3495
        %v5328 = vpack.c.b16 %v3500, %v3496
        %v5329 = vpack.c.b16 %v3501, %v3497
        %v5330 = vpack.c.b16 %v3506, %v3502
        %v5331 = vpack.c.b16 %v3507, %v3503
        %v5332 = vpack.c.b16 %v3508, %v3504
        %v5333 = vpack.c.b16 %v3509, %v3505
        %v5334 = vpack.c.b16 %v3514, %v3510
        %v5335 = vpack.c.b16 %v3515, %v3511
        %v5336 = vpack.c.b16 %v3516, %v3512
        %v5337 = vpack.c.b16 %v3517, %v3513
        %v5338 = vpack.c.b16 %v3522, %v3518
        %v5339 = vpack.c.b16 %v3523, %v3519
        %v5340 = vpack.c.b16 %v3524, %v3520
        %v5341 = vpack.c.b16 %v3525, %v3521
        %v5342 = vpack.c.b16 %v3530, %v3526
        %v5343 = vpack.c.b16 %v3531, %v3527
        %v5344 = vpack.c.b16 %v3532, %v3528
        %v5345 = vpack.c.b16 %v3533, %v3529
        %v5346 = vpack.c.b16 %v3538, %v3534
        %v5347 = vpack.c.b16 %v3539, %v3535
        %v5348 = vpack.c.b16 %v3540, %v3536
        %v5349 = vpack.c.b16 %v3541, %v3537
        %v5350 = vpack.c.b16 %v3546, %v3542
        %v5351 = vpack.c.b16 %v3547, %v3543
        %v5352 = vpack.c.b16 %v3548, %v3544
        %v5353 = vpack.c.b16 %v3549, %v3545
        %v5354 = vpack.c.b16 %v3554, %v3550
        %v5355 = vpack.c.b16 %v3555, %v3551
        %v5356 = vpack.c.b16 %v3556, %v3552
        %v5357 = vpack.c.b16 %v3557, %v3553
        %v5358 = vpack.c.b16 %v3562, %v3558
        %v5359 = vpack.c.b16 %v3563, %v3559
        %v5360 = vpack.c.b16 %v3564, %v3560
        %v5361 = vpack.c.b16 %v3565, %v3561
        %v5362 = vpack.c.b16 %v3570, %v3566
        %v5363 = vpack.c.b16 %v3571, %v3567
        %v5364 = vpack.c.b16 %v3572, %v3568
        %v5365 = vpack.c.b16 %v3573, %v3569
        %v5366 = vpack.c.b16 %v3578, %v3574
        %v5367 = vpack.c.b16 %v3579, %v3575
        %v5368 = vpack.c.b16 %v3580, %v3576
        %v5369 = vpack.c.b16 %v3581, %v3577
        %v5370 = vpack.c.b16 %v3586, %v3582
        %v5371 = vpack.c.b16 %v3587, %v3583
        %v5372 = vpack.c.b16 %v3588, %v3584
        %v5373 = vpack.c.b16 %v3589, %v3585
        %v5374 = vpack.c.b16 %v3594, %v3590
        %v5375 = vpack.c.b16 %v3595, %v3591
        %v5376 = vpack.c.b16 %v3596, %v3592
        %v5377 = vpack.c.b16 %v3597, %v3593
        %v5378 = vpack.c.b16 %v3602, %v3598
        %v5379 = vpack.c.b16 %v3603, %v3599
        %v5380 = vpack.c.b16 %v3604, %v3600
        %v5381 = vpack.c.b16 %v3605, %v3601
        %v5382 = vpack.c.b16 %v3610, %v3606
        %v5383 = vpack.c.b16 %v3611, %v3607
        %v5384 = vpack.c.b16 %v3612, %v3608
        %v5385 = vpack.c.b16 %v3613, %v3609
        %v5386 = vpack.c.b16 %v3618, %v3614
        %v5387 = vpack.c.b16 %v3619, %v3615
        %v5388 = vpack.c.b16 %v3620, %v3616
        %v5389 = vpack.c.b16 %v3621, %v3617
        %v5390 = vpack.c.b16 %v3626, %v3622
        %v5391 = vpack.c.b16 %v3627, %v3623
        %v5392 = vpack.c.b16 %v3628, %v3624
        %v5393 = vpack.c.b16 %v3629, %v3625
        %v5394 = vpack.c.b16 %v3634, %v3630
        %v5395 = vpack.c.b16 %v3635, %v3631
        %v5396 = vpack.c.b16 %v3636, %v3632
        %v5397 = vpack.c.b16 %v3637, %v3633
        %v5398 = vpack.c.b16 %v3642, %v3638
        %v5399 = vpack.c.b16 %v3643, %v3639
        %v5400 = vpack.c.b16 %v3644, %v3640
        %v5401 = vpack.c.b16 %v3645, %v3641
        %v5402 = vpack.c.b16 %v3650, %v3646
        %v5403 = vpack.c.b16 %v3651, %v3647
        %v5404 = vpack.c.b16 %v3652, %v3648
        %v5405 = vpack.c.b16 %v3653, %v3649
        %v5406 = vpack.c.b16 %v3658, %v3654
        %v5407 = vpack.c.b16 %v3659, %v3655
        %v5408 = vpack.c.b16 %v3660, %v3656
        %v5409 = vpack.c.b16 %v3661, %v3657
        %v5410 = vpack.c.b16 %v3666, %v3662
        %v5411 = vpack.c.b16 %v3667, %v3663
        %v5412 = vpack.c.b16 %v3668, %v3664
        %v5413 = vpack.c.b16 %v3669, %v3665
        %v5414 = vpack.c.b16 %v3674, %v3670
        %v5415 = vpack.c.b16 %v3675, %v3671
        %v5416 = vpack.c.b16 %v3676, %v3672
        %v5417 = vpack.c.b16 %v3677, %v3673
        %v5418 = vpack.c.b16 %v3682, %v3678
        %v5419 = vpack.c.b16 %v3683, %v3679
        %v5420 = vpack.c.b16 %v3684, %v3680
        %v5421 = vpack.c.b16 %v3685, %v3681
        %v5422 = vpack.c.b16 %v3690, %v3686
        %v5423 = vpack.c.b16 %v3691, %v3687
        %v5424 = vpack.c.b16 %v3692, %v3688
        %v5425 = vpack.c.b16 %v3693, %v3689
        %v5426 = vpack.c.b16 %v3698, %v3694
        %v5427 = vpack.c.b16 %v3699, %v3695
        %v5428 = vpack.c.b16 %v3700, %v3696
        %v5429 = vpack.c.b16 %v3701, %v3697
        %v5430 = vpack.c.b16 %v3706, %v3702
        %v5431 = vpack.c.b16 %v3707, %v3703
        %v5432 = vpack.c.b16 %v3708, %v3704
        %v5433 = vpack.c.b16 %v3709, %v3705
        %v5434 = vpack.c.b16 %v3714, %v3710
        %v5435 = vpack.c.b16 %v3715, %v3711
        %v5436 = vpack.c.b16 %v3716, %v3712
        %v5437 = vpack.c.b16 %v3717, %v3713
        %v5438 = vpack.c.b16 %v3722, %v3718
        %v5439 = vpack.c.b16 %v3723, %v3719
        %v5440 = vpack.c.b16 %v3724, %v3720
        %v5441 = vpack.c.b16 %v3725, %v3721
        %v5442 = vpack.c.b16 %v3730, %v3726
        %v5443 = vpack.c.b16 %v3731, %v3727
        %v5444 = vpack.c.b16 %v3732, %v3728
        %v5445 = vpack.c.b16 %v3733, %v3729
        %v5446 = vpack.c.b16 %v3738, %v3734
        %v5447 = vpack.c.b16 %v3739, %v3735
        %v5448 = vpack.c.b16 %v3740, %v3736
        %v5449 = vpack.c.b16 %v3741, %v3737
        %v5450 = vpack.c.b16 %v3746, %v3742
        %v5451 = vpack.c.b16 %v3747, %v3743
        %v5452 = vpack.c.b16 %v3748, %v3744
        %v5453 = vpack.c.b16 %v3749, %v3745
        %v5454 = vpack.c.b16 %v3754, %v3750
        %v5455 = vpack.c.b16 %v3755, %v3751
        %v5456 = vpack.c.b16 %v3756, %v3752
        %v5457 = vpack.c.b16 %v3757, %v3753
        %v5458 = vpack.c.b16 %v3762, %v3758
        %v5459 = vpack.c.b16 %v3763, %v3759
        %v5460 = vpack.c.b16 %v3764, %v3760
        %v5461 = vpack.c.b16 %v3765, %v3761
        %v5462 = vpack.c.b16 %v3770, %v3766
        %v5463 = vpack.c.b16 %v3771, %v3767
        %v5464 = vpack.c.b16 %v3772, %v3768
        %v5465 = vpack.c.b16 %v3773, %v3769
        %v5466 = vpack.c.b16 %v3778, %v3774
        %v5467 = vpack.c.b16 %v3779, %v3775
        %v5468 = vpack.c.b16 %v3780, %v3776
        %v5469 = vpack.c.b16 %v3781, %v3777
        %v5470 = vpack.c.b16 %v3786, %v3782
        %v5471 = vpack.c.b16 %v3787, %v3783
        %v5472 = vpack.c.b16 %v3788, %v3784
        %v5473 = vpack.c.b16 %v3789, %v3785
        %v5474 = vpack.c.b16 %v3794, %v3790
        %v5475 = vpack.c.b16 %v3795, %v3791
        %v5476 = vpack.c.b16 %v3796, %v3792
        %v5477 = vpack.c.b16 %v3797, %v3793
        %v5478 = vpack.c.b16 %v3802, %v3798
        %v5479 = vpack.c.b16 %v3803, %v3799
        %v5480 = vpack.c.b16 %v3804, %v3800
        %v5481 = vpack.c.b16 %v3805, %v3801
        %v5482 = vpack.c.b16 %v3810, %v3806
        %v5483 = vpack.c.b16 %v3811, %v3807
        %v5484 = vpack.c.b16 %v3812, %v3808
        %v5485 = vpack.c.b16 %v3813, %v3809
        %v5486 = vpack.c.b16 %v3818, %v3814
        %v5487 = vpack.c.b16 %v3819, %v3815
        %v5488 = vpack.c.b16 %v3820, %v3816
        %v5489 = vpack.c.b16 %v3821, %v3817
        %v5490 = vpack.c.b16 %v3826, %v3822
        %v5491 = vpack.c.b16 %v3827, %v3823
        %v5492 = vpack.c.b16 %v3828, %v3824
        %v5493 = vpack.c.b16 %v3829, %v3825
        %v5494 = vpack.c.b16 %v3834, %v3830
        %v5495 = vpack.c.b16 %v3835, %v3831
        %v5496 = vpack.c.b16 %v3836, %v3832
        %v5497 = vpack.c.b16 %v3837, %v3833
        %v5498 = vpack.c.b16 %v3842, %v3838
        %v5499 = vpack.c.b16 %v3843, %v3839
        %v5500 = vpack.c.b16 %v3844, %v3840
        %v5501 = vpack.c.b16 %v3845, %v3841
        %v5502 = vpack.c.b16 %v3850, %v3846
        %v5503 = vpack.c.b16 %v3851, %v3847
        %v5504 = vpack.c.b16 %v3852, %v3848
        %v5505 = vpack.c.b16 %v3853, %v3849
        %v5506 = vpack.c.b16 %v3858, %v3854
        %v5507 = vpack.c.b16 %v3859, %v3855
        %v5508 = vpack.c.b16 %v3860, %v3856
        %v5509 = vpack.c.b16 %v3861, %v3857
        %v5510 = vpack.c.b16 %v3866, %v3862
        %v5511 = vpack.c.b16 %v3867, %v3863
        %v5512 = vpack.c.b16 %v3868, %v3864
        %v5513 = vpack.c.b16 %v3869, %v3865
        %v5514 = vpack.c.b16 %v3874, %v3870
        %v5515 = vpack.c.b16 %v3875, %v3871
        %v5516 = vpack.c.b16 %v3876, %v3872
        %v5517 = vpack.c.b16 %v3877, %v3873
        %v5518 = vpack.c.b16 %v3882, %v3878
        %v5519 = vpack.c.b16 %v3883, %v3879
        %v5520 = vpack.c.b16 %v3884, %v3880
        %v5521 = vpack.c.b16 %v3885, %v3881
        %v5522 = vpack.c.b16 %v3890, %v3886
        %v5523 = vpack.c.b16 %v3891, %v3887
        %v5524 = vpack.c.b16 %v3892, %v3888
        %v5525 = vpack.c.b16 %v3893, %v3889
        %v5526 = vpack.c.b16 %v3898, %v3894
        %v5527 = vpack.c.b16 %v3899, %v3895
        %v5528 = vpack.c.b16 %v3900, %v3896
        %v5529 = vpack.c.b16 %v3901, %v3897
        %v5530 = vpack.c.b16 %v3906, %v3902
        %v5531 = vpack.c.b16 %v3907, %v3903
        %v5532 = vpack.c.b16 %v3908, %v3904
        %v5533 = vpack.c.b16 %v3909, %v3905
        %v5534 = vpack.c.b16 %v3914, %v3910
        %v5535 = vpack.c.b16 %v3915, %v3911
        %v5536 = vpack.c.b16 %v3916, %v3912
        %v5537 = vpack.c.b16 %v3917, %v3913
        %v5538 = vpack.c.b16 %v3922, %v3918
        %v5539 = vpack.c.b16 %v3923, %v3919
        %v5540 = vpack.c.b16 %v3924, %v3920
        %v5541 = vpack.c.b16 %v3925, %v3921
        %v5542 = vpack.c.b16 %v3930, %v3926
        %v5543 = vpack.c.b16 %v3931, %v3927
        %v5544 = vpack.c.b16 %v3932, %v3928
        %v5545 = vpack.c.b16 %v3933, %v3929
        %v5546 = vpack.c.b16 %v3938, %v3934
        %v5547 = vpack.c.b16 %v3939, %v3935
        %v5548 = vpack.c.b16 %v3940, %v3936
        %v5549 = vpack.c.b16 %v3941, %v3937
        %v5550 = vpack.c.b16 %v3946, %v3942
        %v5551 = vpack.c.b16 %v3947, %v3943
        %v5552 = vpack.c.b16 %v3948, %v3944
        %v5553 = vpack.c.b16 %v3949, %v3945
        %v5554 = vpack.c.b16 %v3954, %v3950
        %v5555 = vpack.c.b16 %v3955, %v3951
        %v5556 = vpack.c.b16 %v3956, %v3952
        %v5557 = vpack.c.b16 %v3957, %v3953
        %v5558 = vpack.c.b16 %v3962, %v3958
        %v5559 = vpack.c.b16 %v3963, %v3959
        %v5560 = vpack.c.b16 %v3964, %v3960
        %v5561 = vpack.c.b16 %v3965, %v3961
        %v5562 = vpack.c.b16 %v3970, %v3966
        %v5563 = vpack.c.b16 %v3971, %v3967
        %v5564 = vpack.c.b16 %v3972, %v3968
        %v5565 = vpack.c.b16 %v3973, %v3969
        %v5566 = vpack.c.b16 %v3978, %v3974
        %v5567 = vpack.c.b16 %v3979, %v3975
        %v5568 = vpack.c.b16 %v3980, %v3976
        %v5569 = vpack.c.b16 %v3981, %v3977
        %v5570 = vpack.c.b16 %v3986, %v3982
        %v5571 = vpack.c.b16 %v3987, %v3983
        %v5572 = vpack.c.b16 %v3988, %v3984
        %v5573 = vpack.c.b16 %v3989, %v3985
        %v5574 = vpack.c.b16 %v3994, %v3990
        %v5575 = vpack.c.b16 %v3995, %v3991
        %v5576 = vpack.c.b16 %v3996, %v3992
        %v5577 = vpack.c.b16 %v3997, %v3993
        %v5578 = vpack.c.b16 %v4002, %v3998
        %v5579 = vpack.c.b16 %v4003, %v3999
        %v5580 = vpack.c.b16 %v4004, %v4000
        %v5581 = vpack.c.b16 %v4005, %v4001
        %v5582 = vpack.c.b16 %v4010, %v4006
        %v5583 = vpack.c.b16 %v4011, %v4007
        %v5584 = vpack.c.b16 %v4012, %v4008
        %v5585 = vpack.c.b16 %v4013, %v4009
        %v5586 = vpack.c.b16 %v4018, %v4014
        %v5587 = vpack.c.b16 %v4019, %v4015
        %v5588 = vpack.c.b16 %v4020, %v4016
        %v5589 = vpack.c.b16 %v4021, %v4017
        %v5590 = vpack.c.b16 %v4026, %v4022
        %v5591 = vpack.c.b16 %v4027, %v4023
        %v5592 = vpack.c.b16 %v4028, %v4024
        %v5593 = vpack.c.b16 %v4029, %v4025
        %v5594 = vpack.c.b16 %v4034, %v4030
        %v5595 = vpack.c.b16 %v4035, %v4031
        %v5596 = vpack.c.b16 %v4036, %v4032
        %v5597 = vpack.c.b16 %v4037, %v4033
        %v5598 = vpack.c.b16 %v4042, %v4038
        %v5599 = vpack.c.b16 %v4043, %v4039
        %v5600 = vpack.c.b16 %v4044, %v4040
        %v5601 = vpack.c.b16 %v4045, %v4041
        %v5602 = vpack.c.b16 %v4050, %v4046
        %v5603 = vpack.c.b16 %v4051, %v4047
        %v5604 = vpack.c.b16 %v4052, %v4048
        %v5605 = vpack.c.b16 %v4053, %v4049
        %v5606 = vpack.c.b16 %v4058, %v4054
        %v5607 = vpack.c.b16 %v4059, %v4055
        %v5608 = vpack.c.b16 %v4060, %v4056
        %v5609 = vpack.c.b16 %v4061, %v4057
        %v5610 = vpack.c.b16 %v4066, %v4062
        %v5611 = vpack.c.b16 %v4067, %v4063
        %v5612 = vpack.c.b16 %v4068, %v4064
        %v5613 = vpack.c.b16 %v4069, %v4065
        %v5614 = vpack.c.b16 %v4074, %v4070
        %v5615 = vpack.c.b16 %v4075, %v4071
        %v5616 = vpack.c.b16 %v4076, %v4072
        %v5617 = vpack.c.b16 %v4077, %v4073
        %v5618 = vpack.c.b16 %v4082, %v4078
        %v5619 = vpack.c.b16 %v4083, %v4079
        %v5620 = vpack.c.b16 %v4084, %v4080
        %v5621 = vpack.c.b16 %v4085, %v4081
        %v5622 = vpack.c.b16 %v4090, %v4086
        %v5623 = vpack.c.b16 %v4091, %v4087
        %v5624 = vpack.c.b16 %v4092, %v4088
        %v5625 = vpack.c.b16 %v4093, %v4089
        %v5626 = vpack.c.b16 %v4098, %v4094
        %v5627 = vpack.c.b16 %v4099, %v4095
        %v5628 = vpack.c.b16 %v4100, %v4096
        %v5629 = vpack.c.b16 %v4101, %v4097
        %v5630 = vpack.c.b16 %v4106, %v4102
        %v5631 = vpack.c.b16 %v4107, %v4103
        %v5632 = vpack.c.b16 %v4108, %v4104
        %v5633 = vpack.c.b16 %v4109, %v4105
        %v5634 = vpack.c.b16 %v4114, %v4110
        %v5635 = vpack.c.b16 %v4115, %v4111
        %v5636 = vpack.c.b16 %v4116, %v4112
        %v5637 = vpack.c.b16 %v4117, %v4113
        %v5638 = vpack.c.b16 %v4122, %v4118
        %v5639 = vpack.c.b16 %v4123, %v4119
        %v5640 = vpack.c.b16 %v4124, %v4120
        %v5641 = vpack.c.b16 %v4125, %v4121
        %v5642 = vpack.c.b16 %v4130, %v4126
        %v5643 = vpack.c.b16 %v4131, %v4127
        %v5644 = vpack.c.b16 %v4132, %v4128
        %v5645 = vpack.c.b16 %v4133, %v4129
        %v5646 = vpack.c.b16 %v4138, %v4134
        %v5647 = vpack.c.b16 %v4139, %v4135
        %v5648 = vpack.c.b16 %v4140, %v4136
        %v5649 = vpack.c.b16 %v4141, %v4137
        %v5650 = vpack.c.b16 %v4146, %v4142
        %v5651 = vpack.c.b16 %v4147, %v4143
        %v5652 = vpack.c.b16 %v4148, %v4144
        %v5653 = vpack.c.b16 %v4149, %v4145
        %v5654 = vpack.c.b16 %v4154, %v4150
        %v5655 = vpack.c.b16 %v4155, %v4151
        %v5656 = vpack.c.b16 %v4156, %v4152
        %v5657 = vpack.c.b16 %v4157, %v4153
        %v5658 = vpack.c.b16 %v4162, %v4158
        %v5659 = vpack.c.b16 %v4163, %v4159
        %v5660 = vpack.c.b16 %v4164, %v4160
        %v5661 = vpack.c.b16 %v4165, %v4161
        %v5662 = vpack.c.b16 %v4170, %v4166
        %v5663 = vpack.c.b16 %v4171, %v4167
        %v5664 = vpack.c.b16 %v4172, %v4168
        %v5665 = vpack.c.b16 %v4173, %v4169
        %v5666 = vpack.c.b16 %v4178, %v4174
        %v5667 = vpack.c.b16 %v4179, %v4175
        %v5668 = vpack.c.b16 %v4180, %v4176
        %v5669 = vpack.c.b16 %v4181, %v4177
        %v5670 = vpack.c.b16 %v4186, %v4182
        %v5671 = vpack.c.b16 %v4187, %v4183
        %v5672 = vpack.c.b16 %v4188, %v4184
        %v5673 = vpack.c.b16 %v4189, %v4185
        %v5674 = vpack.c.b16 %v4194, %v4190
        %v5675 = vpack.c.b16 %v4195, %v4191
        %v5676 = vpack.c.b16 %v4196, %v4192
        %v5677 = vpack.c.b16 %v4197, %v4193
        %v5678 = vpack.c.b16 %v4202, %v4198
        %v5679 = vpack.c.b16 %v4203, %v4199
        %v5680 = vpack.c.b16 %v4204, %v4200
        %v5681 = vpack.c.b16 %v4205, %v4201
        %v5682 = vpack.c.b16 %v4210, %v4206
        %v5683 = vpack.c.b16 %v4211, %v4207
        %v5684 = vpack.c.b16 %v4212, %v4208
        %v5685 = vpack.c.b16 %v4213, %v4209
        %v5686 = vpack.c.b16 %v4218, %v4214
        %v5687 = vpack.c.b16 %v4219, %v4215
        %v5688 = vpack.c.b16 %v4220, %v4216
        %v5689 = vpack.c.b16 %v4221, %v4217
        %v5690 = vpack.c.b16 %v4226, %v4222
        %v5691 = vpack.c.b16 %v4227, %v4223
        %v5692 = vpack.c.b16 %v4228, %v4224
        %v5693 = vpack.c.b16 %v4229, %v4225
        %v5694 = vpack.c.b16 %v4234, %v4230
        %v5695 = vpack.c.b16 %v4235, %v4231
        %v5696 = vpack.c.b16 %v4236, %v4232
        %v5697 = vpack.c.b16 %v4237, %v4233
        %v5698 = vpack.c.b16 %v4242, %v4238
        %v5699 = vpack.c.b16 %v4243, %v4239
        %v5700 = vpack.c.b16 %v4244, %v4240
        %v5701 = vpack.c.b16 %v4245, %v4241
        %v5702 = vpack.c.b16 %v4250, %v4246
        %v5703 = vpack.c.b16 %v4251, %v4247
        %v5704 = vpack.c.b16 %v4252, %v4248
        %v5705 = vpack.c.b16 %v4253, %v4249
        %v5706 = vpack.c.b16 %v4258, %v4254
        %v5707 = vpack.c.b16 %v4259, %v4255
        %v5708 = vpack.c.b16 %v4260, %v4256
        %v5709 = vpack.c.b16 %v4261, %v4257
        %v5710 = vpack.c.b16 %v4266, %v4262
        %v5711 = vpack.c.b16 %v4267, %v4263
        %v5712 = vpack.c.b16 %v4268, %v4264
        %v5713 = vpack.c.b16 %v4269, %v4265
        %v5714 = vpack.c.b16 %v4274, %v4270
        %v5715 = vpack.c.b16 %v4275, %v4271
        %v5716 = vpack.c.b16 %v4276, %v4272
        %v5717 = vpack.c.b16 %v4277, %v4273
        %v5718 = vpack.c.b16 %v4282, %v4278
        %v5719 = vpack.c.b16 %v4283, %v4279
        %v5720 = vpack.c.b16 %v4284, %v4280
        %v5721 = vpack.c.b16 %v4285, %v4281
        %v5722 = vpack.c.b16 %v4290, %v4286
        %v5723 = vpack.c.b16 %v4291, %v4287
        %v5724 = vpack.c.b16 %v4292, %v4288
        %v5725 = vpack.c.b16 %v4293, %v4289
        %v5726 = vpack.c.b16 %v4298, %v4294
        %v5727 = vpack.c.b16 %v4299, %v4295
        %v5728 = vpack.c.b16 %v4300, %v4296
        %v5729 = vpack.c.b16 %v4301, %v4297
        %v5730 = vpack.c.b16 %v4306, %v4302
        %v5731 = vpack.c.b16 %v4307, %v4303
        %v5732 = vpack.c.b16 %v4308, %v4304
        %v5733 = vpack.c.b16 %v4309, %v4305
        %v5734 = vpack.c.b16 %v4314, %v4310
        %v5735 = vpack.c.b16 %v4315, %v4311
        %v5736 = vpack.c.b16 %v4316, %v4312
        %v5737 = vpack.c.b16 %v4317, %v4313
        %v5738 = vpack.c.b16 %v4322, %v4318
        %v5739 = vpack.c.b16 %v4323, %v4319
        %v5740 = vpack.c.b16 %v4324, %v4320
        %v5741 = vpack.c.b16 %v4325, %v4321
        %v5742 = vpack.c.b16 %v4330, %v4326
        %v5743 = vpack.c.b16 %v4331, %v4327
        %v5744 = vpack.c.b16 %v4332, %v4328
        %v5745 = vpack.c.b16 %v4333, %v4329
        %v5746 = vpack.c.b16 %v4338, %v4334
        %v5747 = vpack.c.b16 %v4339, %v4335
        %v5748 = vpack.c.b16 %v4340, %v4336
        %v5749 = vpack.c.b16 %v4341, %v4337
        %v5750 = vpack.c.b16 %v4346, %v4342
        %v5751 = vpack.c.b16 %v4347, %v4343
        %v5752 = vpack.c.b16 %v4348, %v4344
        %v5753 = vpack.c.b16 %v4349, %v4345
        %v5754 = vpack.c.b16 %v4354, %v4350
        %v5755 = vpack.c.b16 %v4355, %v4351
        %v5756 = vpack.c.b16 %v4356, %v4352
        %v5757 = vpack.c.b16 %v4357, %v4353
        %v5758 = vpack.c.b16 %v4362, %v4358
        %v5759 = vpack.c.b16 %v4363, %v4359
        %v5760 = vpack.c.b16 %v4364, %v4360
        %v5761 = vpack.c.b16 %v4365, %v4361
        %v5762 = vpack.c.b16 %v4370, %v4366
        %v5763 = vpack.c.b16 %v4371, %v4367
        %v5764 = vpack.c.b16 %v4372, %v4368
        %v5765 = vpack.c.b16 %v4373, %v4369
        %v5766 = vpack.c.b16 %v4378, %v4374
        %v5767 = vpack.c.b16 %v4379, %v4375
        %v5768 = vpack.c.b16 %v4380, %v4376
        %v5769 = vpack.c.b16 %v4381, %v4377
        %v5770 = vpack.c.b16 %v4386, %v4382
        %v5771 = vpack.c.b16 %v4387, %v4383
        %v5772 = vpack.c.b16 %v4388, %v4384
        %v5773 = vpack.c.b16 %v4389, %v4385
        %v5774 = vpack.c.b16 %v4394, %v4390
        %v5775 = vpack.c.b16 %v4395, %v4391
        %v5776 = vpack.c.b16 %v4396, %v4392
        %v5777 = vpack.c.b16 %v4397, %v4393
        %v5778 = vpack.c.b16 %v4402, %v4398
        %v5779 = vpack.c.b16 %v4403, %v4399
        %v5780 = vpack.c.b16 %v4404, %v4400
        %v5781 = vpack.c.b16 %v4405, %v4401
        %v5782 = vpack.c.b16 %v4410, %v4406
        %v5783 = vpack.c.b16 %v4411, %v4407
        %v5784 = vpack.c.b16 %v4412, %v4408
        %v5785 = vpack.c.b16 %v4413, %v4409
        %v5786 = vpack.c.b16 %v4418, %v4414
        %v5787 = vpack.c.b16 %v4419, %v4415
        %v5788 = vpack.c.b16 %v4420, %v4416
        %v5789 = vpack.c.b16 %v4421, %v4417
        %v5790 = vpack.c.b16 %v4426, %v4422
        %v5791 = vpack.c.b16 %v4427, %v4423
        %v5792 = vpack.c.b16 %v4428, %v4424
        %v5793 = vpack.c.b16 %v4429, %v4425
        %v5794 = vpack.c.b16 %v4434, %v4430
        %v5795 = vpack.c.b16 %v4435, %v4431
        %v5796 = vpack.c.b16 %v4436, %v4432
        %v5797 = vpack.c.b16 %v4437, %v4433
        %v5798 = vpack.c.b16 %v4442, %v4438
        %v5799 = vpack.c.b16 %v4443, %v4439
        %v5800 = vpack.c.b16 %v4444, %v4440
        %v5801 = vpack.c.b16 %v4445, %v4441
        %v5802 = vpack.c.b16 %v4450, %v4446
        %v5803 = vpack.c.b16 %v4451, %v4447
        %v5804 = vpack.c.b16 %v4452, %v4448
        %v5805 = vpack.c.b16 %v4453, %v4449
        %v5806 = vpack.c.b16 %v4458, %v4454
        %v5807 = vpack.c.b16 %v4459, %v4455
        %v5808 = vpack.c.b16 %v4460, %v4456
        %v5809 = vpack.c.b16 %v4461, %v4457
        %v5810 = vpack.c.b16 %v4466, %v4462
        %v5811 = vpack.c.b16 %v4467, %v4463
        %v5812 = vpack.c.b16 %v4468, %v4464
        %v5813 = vpack.c.b16 %v4469, %v4465
        %v5814 = vpack.c.b16 %v4474, %v4470
        %v5815 = vpack.c.b16 %v4475, %v4471
        %v5816 = vpack.c.b16 %v4476, %v4472
        %v5817 = vpack.c.b16 %v4477, %v4473
        %v5818 = vpack.c.b16 %v4482, %v4478
        %v5819 = vpack.c.b16 %v4483, %v4479
        %v5820 = vpack.c.b16 %v4484, %v4480
        %v5821 = vpack.c.b16 %v4485, %v4481
        %v5822 = vpack.c.b16 %v4490, %v4486
        %v5823 = vpack.c.b16 %v4491, %v4487
        %v5824 = vpack.c.b16 %v4492, %v4488
        %v5825 = vpack.c.b16 %v4493, %v4489
        %v5826 = vpack.c.b16 %v4498, %v4494
        %v5827 = vpack.c.b16 %v4499, %v4495
        %v5828 = vpack.c.b16 %v4500, %v4496
        %v5829 = vpack.c.b16 %v4501, %v4497
        %v5830 = vpack.c.b16 %v4506, %v4502
        %v5831 = vpack.c.b16 %v4507, %v4503
        %v5832 = vpack.c.b16 %v4508, %v4504
        %v5833 = vpack.c.b16 %v4509, %v4505
        %v5834 = vpack.c.b16 %v4514, %v4510
        %v5835 = vpack.c.b16 %v4515, %v4511
        %v5836 = vpack.c.b16 %v4516, %v4512
        %v5837 = vpack.c.b16 %v4517, %v4513
        %v5838 = vpack.c.b16 %v4522, %v4518
        %v5839 = vpack.c.b16 %v4523, %v4519
        %v5840 = vpack.c.b16 %v4524, %v4520
        %v5841 = vpack.c.b16 %v4525, %v4521
        %v5842 = vpack.c.b16 %v4530, %v4526
        %v5843 = vpack.c.b16 %v4531, %v4527
        %v5844 = vpack.c.b16 %v4532, %v4528
        %v5845 = vpack.c.b16 %v4533, %v4529
        %v5846 = vpack.c.b16 %v4538, %v4534
        %v5847 = vpack.c.b16 %v4539, %v4535
        %v5848 = vpack.c.b16 %v4540, %v4536
        %v5849 = vpack.c.b16 %v4541, %v4537
        %v5850 = vpack.c.b16 %v4546, %v4542
        %v5851 = vpack.c.b16 %v4547, %v4543
        %v5852 = vpack.c.b16 %v4548, %v4544
        %v5853 = vpack.c.b16 %v4549, %v4545
        %v5854 = vpack.c.b16 %v4554, %v4550
        %v5855 = vpack.c.b16 %v4555, %v4551
        %v5856 = vpack.c.b16 %v4556, %v4552
        %v5857 = vpack.c.b16 %v4557, %v4553
        %v5858 = vpack.c.b16 %v4562, %v4558
        %v5859 = vpack.c.b16 %v4563, %v4559
        %v5860 = vpack.c.b16 %v4564, %v4560
        %v5861 = vpack.c.b16 %v4565, %v4561
        %v5862 = vpack.c.b16 %v4570, %v4566
        %v5863 = vpack.c.b16 %v4571, %v4567
        %v5864 = vpack.c.b16 %v4572, %v4568
        %v5865 = vpack.c.b16 %v4573, %v4569
        %v5866 = vpack.c.b16 %v4578, %v4574
        %v5867 = vpack.c.b16 %v4579, %v4575
        %v5868 = vpack.c.b16 %v4580, %v4576
        %v5869 = vpack.c.b16 %v4581, %v4577
        %v5870 = vpack.c.b16 %v4586, %v4582
        %v5871 = vpack.c.b16 %v4587, %v4583
        %v5872 = vpack.c.b16 %v4588, %v4584
        %v5873 = vpack.c.b16 %v4589, %v4585
        %v5874 = vpack.c.b16 %v4594, %v4590
        %v5875 = vpack.c.b16 %v4595, %v4591
        %v5876 = vpack.c.b16 %v4596, %v4592
        %v5877 = vpack.c.b16 %v4597, %v4593
        %v5878 = vpack.c.b16 %v4602, %v4598
        %v5879 = vpack.c.b16 %v4603, %v4599
        %v5880 = vpack.c.b16 %v4604, %v4600
        %v5881 = vpack.c.b16 %v4605, %v4601
        %v5882 = vpack.c.b16 %v4610, %v4606
        %v5883 = vpack.c.b16 %v4611, %v4607
        %v5884 = vpack.c.b16 %v4612, %v4608
        %v5885 = vpack.c.b16 %v4613, %v4609
        %v5886 = vpack.c.b16 %v4618, %v4614
        %v5887 = vpack.c.b16 %v4619, %v4615
        %v5888 = vpack.c.b16 %v4620, %v4616
        %v5889 = vpack.c.b16 %v4621, %v4617
        %v5890 = vpack.c.b16 %v4626, %v4622
        %v5891 = vpack.c.b16 %v4627, %v4623
        %v5892 = vpack.c.b16 %v4628, %v4624
        %v5893 = vpack.c.b16 %v4629, %v4625
        %v5894 = vpack.c.b16 %v4634, %v4630
        %v5895 = vpack.c.b16 %v4635, %v4631
        %v5896 = vpack.c.b16 %v4636, %v4632
        %v5897 = vpack.c.b16 %v4637, %v4633
        %v5898 = vpack.c.b16 %v4642, %v4638
        %v5899 = vpack.c.b16 %v4643, %v4639
        %v5900 = vpack.c.b16 %v4644, %v4640
        %v5901 = vpack.c.b16 %v4645, %v4641
        %v5902 = vpack.c.b16 %v4650, %v4646
        %v5903 = vpack.c.b16 %v4651, %v4647
        %v5904 = vpack.c.b16 %v4652, %v4648
        %v5905 = vpack.c.b16 %v4653, %v4649
        %v5906 = vpack.c.b16 %v4658, %v4654
        %v5907 = vpack.c.b16 %v4659, %v4655
        %v5908 = vpack.c.b16 %v4660, %v4656
        %v5909 = vpack.c.b16 %v4661, %v4657
        %v5910 = vpack.c.b16 %v4666, %v4662
        %v5911 = vpack.c.b16 %v4667, %v4663
        %v5912 = vpack.c.b16 %v4668, %v4664
        %v5913 = vpack.c.b16 %v4669, %v4665
        %v5914 = vpack.c.b16 %v4674, %v4670
        %v5915 = vpack.c.b16 %v4675, %v4671
        %v5916 = vpack.c.b16 %v4676, %v4672
        %v5917 = vpack.c.b16 %v4677, %v4673
        %v5918 = vpack.c.b16 %v4682, %v4678
        %v5919 = vpack.c.b16 %v4683, %v4679
        %v5920 = vpack.c.b16 %v4684, %v4680
        %v5921 = vpack.c.b16 %v4685, %v4681
        %v5922 = vpack.c.b16 %v4690, %v4686
        %v5923 = vpack.c.b16 %v4691, %v4687
        %v5924 = vpack.c.b16 %v4692, %v4688
        %v5925 = vpack.c.b16 %v4693, %v4689
        %v5926 = vpack.c.b16 %v4698, %v4694
        %v5927 = vpack.c.b16 %v4699, %v4695
        %v5928 = vpack.c.b16 %v4700, %v4696
        %v5929 = vpack.c.b16 %v4701, %v4697
        %v5930 = vpack.c.b16 %v4706, %v4702
        %v5931 = vpack.c.b16 %v4707, %v4703
        %v5932 = vpack.c.b16 %v4708, %v4704
        %v5933 = vpack.c.b16 %v4709, %v4705
        %v5934 = vpack.c.b16 %v4714, %v4710
        %v5935 = vpack.c.b16 %v4715, %v4711
        %v5936 = vpack.c.b16 %v4716, %v4712
        %v5937 = vpack.c.b16 %v4717, %v4713
        %v5938 = vpack.c.b16 %v4722, %v4718
        %v5939 = vpack.c.b16 %v4723, %v4719
        %v5940 = vpack.c.b16 %v4724, %v4720
        %v5941 = vpack.c.b16 %v4725, %v4721
        %v5942 = vpack.c.b16 %v4730, %v4726
        %v5943 = vpack.c.b16 %v4731, %v4727
        %v5944 = vpack.c.b16 %v4732, %v4728
        %v5945 = vpack.c.b16 %v4733, %v4729
        %v5946 = vpack.c.b16 %v4738, %v4734
        %v5947 = vpack.c.b16 %v4739, %v4735
        %v5948 = vpack.c.b16 %v4740, %v4736
        %v5949 = vpack.c.b16 %v4741, %v4737
        %v5950 = vpack.c.b16 %v4746, %v4742
        %v5951 = vpack.c.b16 %v4747, %v4743
        %v5952 = vpack.c.b16 %v4748, %v4744
        %v5953 = vpack.c.b16 %v4749, %v4745
        %v5954 = vpack.c.b16 %v4754, %v4750
        %v5955 = vpack.c.b16 %v4755, %v4751
        %v5956 = vpack.c.b16 %v4756, %v4752
        %v5957 = vpack.c.b16 %v4757, %v4753
        %v5958 = vpack.c.b16 %v4762, %v4758
        %v5959 = vpack.c.b16 %v4763, %v4759
        %v5960 = vpack.c.b16 %v4764, %v4760
        %v5961 = vpack.c.b16 %v4765, %v4761
        %v5962 = vpack.c.b16 %v4770, %v4766
        %v5963 = vpack.c.b16 %v4771, %v4767
        %v5964 = vpack.c.b16 %v4772, %v4768
        %v5965 = vpack.c.b16 %v4773, %v4769
        %v5966 = vpack.c.b16 %v4778, %v4774
        %v5967 = vpack.c.b16 %v4779, %v4775
        %v5968 = vpack.c.b16 %v4780, %v4776
        %v5969 = vpack.c.b16 %v4781, %v4777
        %v5970 = vpack.c.b16 %v4786, %v4782
        %v5971 = vpack.c.b16 %v4787, %v4783
        %v5972 = vpack.c.b16 %v4788, %v4784
        %v5973 = vpack.c.b16 %v4789, %v4785
        %v5974 = vpack.c.b16 %v4794, %v4790
        %v5975 = vpack.c.b16 %v4795, %v4791
        %v5976 = vpack.c.b16 %v4796, %v4792
        %v5977 = vpack.c.b16 %v4797, %v4793
        %v5978 = vpack.c.b16 %v4802, %v4798
        %v5979 = vpack.c.b16 %v4803, %v4799
        %v5980 = vpack.c.b16 %v4804, %v4800
        %v5981 = vpack.c.b16 %v4805, %v4801
        %v5982 = vpack.c.b16 %v4810, %v4806
        %v5983 = vpack.c.b16 %v4811, %v4807
        %v5984 = vpack.c.b16 %v4812, %v4808
        %v5985 = vpack.c.b16 %v4813, %v4809
        %v5986 = vpack.c.b16 %v4818, %v4814
        %v5987 = vpack.c.b16 %v4819, %v4815
        %v5988 = vpack.c.b16 %v4820, %v4816
        %v5989 = vpack.c.b16 %v4821, %v4817
        %v5990 = vpack.c.b16 %v4826, %v4822
        %v5991 = vpack.c.b16 %v4827, %v4823
        %v5992 = vpack.c.b16 %v4828, %v4824
        %v5993 = vpack.c.b16 %v4829, %v4825
        %v5994 = vpack.c.b16 %v4834, %v4830
        %v5995 = vpack.c.b16 %v4835, %v4831
        %v5996 = vpack.c.b16 %v4836, %v4832
        %v5997 = vpack.c.b16 %v4837, %v4833
        %v5998 = vpack.c.b16 %v4842, %v4838
        %v5999 = vpack.c.b16 %v4843, %v4839
        %v6000 = vpack.c.b16 %v4844, %v4840
        %v6001 = vpack.c.b16 %v4845, %v4841
        %v6002 = vpack.c.b16 %v4850, %v4846
        %v6003 = vpack.c.b16 %v4851, %v4847
        %v6004 = vpack.c.b16 %v4852, %v4848
        %v6005 = vpack.c.b16 %v4853, %v4849
        %v6006 = vpack.c.b16 %v4858, %v4854
        %v6007 = vpack.c.b16 %v4859, %v4855
        %v6008 = vpack.c.b16 %v4860, %v4856
        %v6009 = vpack.c.b16 %v4861, %v4857
        %v6010 = vpack.c.b16 %v4866, %v4862
        %v6011 = vpack.c.b16 %v4867, %v4863
        %v6012 = vpack.c.b16 %v4868, %v4864
        %v6013 = vpack.c.b16 %v4869, %v4865
        %v6014 = vpack.c.b16 %v4874, %v4870
        %v6015 = vpack.c.b16 %v4875, %v4871
        %v6016 = vpack.c.b16 %v4876, %v4872
        %v6017 = vpack.c.b16 %v4877, %v4873
        %v6018 = vpack.c.b16 %v4882, %v4878
        %v6019 = vpack.c.b16 %v4883, %v4879
        %v6020 = vpack.c.b16 %v4884, %v4880
        %v6021 = vpack.c.b16 %v4885, %v4881
        %v6022 = vpack.c.b16 %v4890, %v4886
        %v6023 = vpack.c.b16 %v4891, %v4887
        %v6024 = vpack.c.b16 %v4892, %v4888
        %v6025 = vpack.c.b16 %v4893, %v4889
        %v6026 = vpack.c.b16 %v4898, %v4894
        %v6027 = vpack.c.b16 %v4899, %v4895
        %v6028 = vpack.c.b16 %v4900, %v4896
        %v6029 = vpack.c.b16 %v4901, %v4897
        %v6030 = vpack.c.b16 %v4906, %v4902
        %v6031 = vpack.c.b16 %v4907, %v4903
        %v6032 = vpack.c.b16 %v4908, %v4904
        %v6033 = vpack.c.b16 %v4909, %v4905
        %v6034 = vpack.c.b16 %v4914, %v4910
        %v6035 = vpack.c.b16 %v4915, %v4911
        %v6036 = vpack.c.b16 %v4916, %v4912
        %v6037 = vpack.c.b16 %v4917, %v4913
        %7158 = vmatpush.bf16.msra.mxu0 %v4946
        %7159 = vmatpush.bf16.msra.mxu0 %v4942
        %7160 = vmatpush.bf16.msra.mxu0 %v4938
        %7161 = vmatpush.bf16.msra.mxu0 %v4934
        %7162 = vmatpush.bf16.msra.mxu0 %v4930
        %7163 = vmatpush.bf16.msra.mxu0 %v4926
        %7164 = vmatpush.bf16.msra.mxu0 %v4922
        %7165 = vmatpush.bf16.msra.mxu0 %v4918
        %7166 = vmatmul.bf16.gmra.mxu0 %v1488
        %v7167 = vpop.f32.mrf.mxu0
        %v7168 = vadd.f32 0.0, %v7167
        %v7169 = vpop.f32.mrf.mxu0
        %7170 = vdwg.mxu0
        %7171 = vmatpush.bf16.msra.mxu0 %v4978
        %7172 = vmatpush.bf16.msra.mxu0 %v4974
        %7173 = vmatpush.bf16.msra.mxu0 %v4970
        %7174 = vmatpush.bf16.msra.mxu0 %v4966
        %7175 = vmatpush.bf16.msra.mxu0 %v4962
        %7176 = vmatpush.bf16.msra.mxu0 %v4958
        %7177 = vmatpush.bf16.msra.mxu0 %v4954
        %7178 = vmatpush.bf16.msra.mxu0 %v4950
        %7179 = vmatmul.bf16.gmra.mxu0 %v1489
        %v7180 = vpop.f32.mrf.mxu0
        %v7181 = vadd.f32 %v7168, %v7180
        %v7182 = vpop.f32.mrf.mxu0
        %7183 = vdwg.mxu0
        %7184 = vmatpush.bf16.msra.mxu0 %v5010
        %7185 = vmatpush.bf16.msra.mxu0 %v5006
        %7186 = vmatpush.bf16.msra.mxu0 %v5002
        %7187 = vmatpush.bf16.msra.mxu0 %v4998
        %7188 = vmatpush.bf16.msra.mxu0 %v4994
        %7189 = vmatpush.bf16.msra.mxu0 %v4990
        %7190 = vmatpush.bf16.msra.mxu0 %v4986
        %7191 = vmatpush.bf16.msra.mxu0 %v4982
        %7192 = vmatmul.bf16.gmra.mxu0 %v1490
        %v7193 = vpop.f32.mrf.mxu0
        %v7194 = vadd.f32 %v7181, %v7193
        %v7195 = vpop.f32.mrf.mxu0
        %7196 = vdwg.mxu0
        %7197 = vmatpush.bf16.msra.mxu0 %v5042
        %7198 = vmatpush.bf16.msra.mxu0 %v5038
        %7199 = vmatpush.bf16.msra.mxu0 %v5034
        %7200 = vmatpush.bf16.msra.mxu0 %v5030
        %7201 = vmatpush.bf16.msra.mxu0 %v5026
        %7202 = vmatpush.bf16.msra.mxu0 %v5022
        %7203 = vmatpush.bf16.msra.mxu0 %v5018
        %7204 = vmatpush.bf16.msra.mxu0 %v5014
        %7205 = vmatmul.bf16.gmra.mxu0 %v1491
        %v7206 = vpop.f32.mrf.mxu0
        %v7207 = vadd.f32 %v7194, %v7206
        %v7208 = vpop.f32.mrf.mxu0
        %7209 = vdwg.mxu0
        %7210 = vmatpush.bf16.msra.mxu0 %v5074
        %7211 = vmatpush.bf16.msra.mxu0 %v5070
        %7212 = vmatpush.bf16.msra.mxu0 %v5066
        %7213 = vmatpush.bf16.msra.mxu0 %v5062
        %7214 = vmatpush.bf16.msra.mxu0 %v5058
        %7215 = vmatpush.bf16.msra.mxu0 %v5054
        %7216 = vmatpush.bf16.msra.mxu0 %v5050
        %7217 = vmatpush.bf16.msra.mxu0 %v5046
        %7218 = vmatmul.bf16.gmra.mxu0 %v1492
        %v7219 = vpop.f32.mrf.mxu0
        %v7220 = vadd.f32 %v7207, %v7219
        %v7221 = vpop.f32.mrf.mxu0
        %7222 = vdwg.mxu0
        %7223 = vmatpush.bf16.msra.mxu0 %v5106
        %7224 = vmatpush.bf16.msra.mxu0 %v5102
        %7225 = vmatpush.bf16.msra.mxu0 %v5098
        %7226 = vmatpush.bf16.msra.mxu0 %v5094
        %7227 = vmatpush.bf16.msra.mxu0 %v5090
        %7228 = vmatpush.bf16.msra.mxu0 %v5086
        %7229 = vmatpush.bf16.msra.mxu0 %v5082
        %7230 = vmatpush.bf16.msra.mxu0 %v5078
        %7231 = vmatmul.bf16.gmra.mxu0 %v1493
        %v7232 = vpop.f32.mrf.mxu0
        %v7233 = vadd.f32 %v7220, %v7232
        %v7234 = vpop.f32.mrf.mxu0
        %7235 = vdwg.mxu0
        %7236 = vmatpush.bf16.msra.mxu0 %v5138
        %7237 = vmatpush.bf16.msra.mxu0 %v5134
        %7238 = vmatpush.bf16.msra.mxu0 %v5130
        %7239 = vmatpush.bf16.msra.mxu0 %v5126
        %7240 = vmatpush.bf16.msra.mxu0 %v5122
        %7241 = vmatpush.bf16.msra.mxu0 %v5118
        %7242 = vmatpush.bf16.msra.mxu0 %v5114
        %7243 = vmatpush.bf16.msra.mxu0 %v5110
        %7244 = vmatmul.bf16.gmra.mxu0 %v1494
        %v7245 = vpop.f32.mrf.mxu0
        %v7246 = vadd.f32 %v7233, %v7245
        %v7247 = vpop.f32.mrf.mxu0
        %7248 = vdwg.mxu0
        %7249 = vmatpush.bf16.msra.mxu0 %v5170
        %7250 = vmatpush.bf16.msra.mxu0 %v5166
        %7251 = vmatpush.bf16.msra.mxu0 %v5162
        %7252 = vmatpush.bf16.msra.mxu0 %v5158
        %7253 = vmatpush.bf16.msra.mxu0 %v5154
        %7254 = vmatpush.bf16.msra.mxu0 %v5150
        %7255 = vmatpush.bf16.msra.mxu0 %v5146
        %7256 = vmatpush.bf16.msra.mxu0 %v5142
        %7257 = vmatmul.bf16.gmra.mxu0 %v1495
        %v7258 = vpop.f32.mrf.mxu0
        %v7259 = vadd.f32 %v7246, %v7258
        %v7260 = vpop.f32.mrf.mxu0
        %7261 = vdwg.mxu0
        %7262 = vmatpush.bf16.msra.mxu0 %v5202
        %7263 = vmatpush.bf16.msra.mxu0 %v5198
        %7264 = vmatpush.bf16.msra.mxu0 %v5194
        %7265 = vmatpush.bf16.msra.mxu0 %v5190
        %7266 = vmatpush.bf16.msra.mxu0 %v5186
        %7267 = vmatpush.bf16.msra.mxu0 %v5182
        %7268 = vmatpush.bf16.msra.mxu0 %v5178
        %7269 = vmatpush.bf16.msra.mxu0 %v5174
        %7270 = vmatmul.bf16.gmra.mxu0 %v1496
        %v7271 = vpop.f32.mrf.mxu0
        %v7272 = vadd.f32 %v7259, %v7271
        %v7273 = vpop.f32.mrf.mxu0
        %7274 = vdwg.mxu0
        %7275 = vmatpush.bf16.msra.mxu0 %v5234
        %7276 = vmatpush.bf16.msra.mxu0 %v5230
        %7277 = vmatpush.bf16.msra.mxu0 %v5226
        %7278 = vmatpush.bf16.msra.mxu0 %v5222
        %7279 = vmatpush.bf16.msra.mxu0 %v5218
        %7280 = vmatpush.bf16.msra.mxu0 %v5214
        %7281 = vmatpush.bf16.msra.mxu0 %v5210
        %7282 = vmatpush.bf16.msra.mxu0 %v5206
        %7283 = vmatmul.bf16.gmra.mxu0 %v1497
        %v7284 = vpop.f32.mrf.mxu0
        %v7285 = vadd.f32 %v7272, %v7284
        %v7286 = vpop.f32.mrf.mxu0
        %7287 = vdwg.mxu0
        %7288 = vmatpush.bf16.msra.mxu0 %v5266
        %7289 = vmatpush.bf16.msra.mxu0 %v5262
        %7290 = vmatpush.bf16.msra.mxu0 %v5258
        %7291 = vmatpush.bf16.msra.mxu0 %v5254
        %7292 = vmatpush.bf16.msra.mxu0 %v5250
        %7293 = vmatpush.bf16.msra.mxu0 %v5246
        %7294 = vmatpush.bf16.msra.mxu0 %v5242
        %7295 = vmatpush.bf16.msra.mxu0 %v5238
        %7296 = vmatmul.bf16.gmra.mxu0 %v1498
        %v7297 = vpop.f32.mrf.mxu0
        %v7298 = vadd.f32 %v7285, %v7297
        %v7299 = vpop.f32.mrf.mxu0
        %7300 = vdwg.mxu0
        %7301 = vmatpush.bf16.msra.mxu0 %v5298
        %7302 = vmatpush.bf16.msra.mxu0 %v5294
        %7303 = vmatpush.bf16.msra.mxu0 %v5290
        %7304 = vmatpush.bf16.msra.mxu0 %v5286
        %7305 = vmatpush.bf16.msra.mxu0 %v5282
        %7306 = vmatpush.bf16.msra.mxu0 %v5278
        %7307 = vmatpush.bf16.msra.mxu0 %v5274
        %7308 = vmatpush.bf16.msra.mxu0 %v5270
        %7309 = vmatmul.bf16.gmra.mxu0 %v1499
        %v7310 = vpop.f32.mrf.mxu0
        %v7311 = vadd.f32 %v7298, %v7310
        %v7312 = vpop.f32.mrf.mxu0
        %7313 = vdwg.mxu0
        %7314 = vmatpush.bf16.msra.mxu0 %v5330
        %7315 = vmatpush.bf16.msra.mxu0 %v5326
        %7316 = vmatpush.bf16.msra.mxu0 %v5322
        %7317 = vmatpush.bf16.msra.mxu0 %v5318
        %7318 = vmatpush.bf16.msra.mxu0 %v5314
        %7319 = vmatpush.bf16.msra.mxu0 %v5310
        %7320 = vmatpush.bf16.msra.mxu0 %v5306
        %7321 = vmatpush.bf16.msra.mxu0 %v5302
        %7322 = vmatmul.bf16.gmra.mxu0 %v1500
        %v7323 = vpop.f32.mrf.mxu0
        %v7324 = vadd.f32 %v7311, %v7323
        %v7325 = vpop.f32.mrf.mxu0
        %7326 = vdwg.mxu0
        %7327 = vmatpush.bf16.msra.mxu0 %v5362
        %7328 = vmatpush.bf16.msra.mxu0 %v5358
        %7329 = vmatpush.bf16.msra.mxu0 %v5354
        %7330 = vmatpush.bf16.msra.mxu0 %v5350
        %7331 = vmatpush.bf16.msra.mxu0 %v5346
        %7332 = vmatpush.bf16.msra.mxu0 %v5342
        %7333 = vmatpush.bf16.msra.mxu0 %v5338
        %7334 = vmatpush.bf16.msra.mxu0 %v5334
        %7335 = vmatmul.bf16.gmra.mxu0 %v1501
        %v7336 = vpop.f32.mrf.mxu0
        %v7337 = vadd.f32 %v7324, %v7336
        %v7338 = vpop.f32.mrf.mxu0
        %7339 = vdwg.mxu0
        %7340 = vmatpush.bf16.msra.mxu0 %v5394
        %7341 = vmatpush.bf16.msra.mxu0 %v5390
        %7342 = vmatpush.bf16.msra.mxu0 %v5386
        %7343 = vmatpush.bf16.msra.mxu0 %v5382
        %7344 = vmatpush.bf16.msra.mxu0 %v5378
        %7345 = vmatpush.bf16.msra.mxu0 %v5374
        %7346 = vmatpush.bf16.msra.mxu0 %v5370
        %7347 = vmatpush.bf16.msra.mxu0 %v5366
        %7348 = vmatmul.bf16.gmra.mxu0 %v1502
        %v7349 = vpop.f32.mrf.mxu0
        %v7350 = vadd.f32 %v7337, %v7349
        %v7351 = vpop.f32.mrf.mxu0
        %7352 = vdwg.mxu0
        %7353 = vmatpush.bf16.msra.mxu0 %v5426
        %7354 = vmatpush.bf16.msra.mxu0 %v5422
        %7355 = vmatpush.bf16.msra.mxu0 %v5418
        %7356 = vmatpush.bf16.msra.mxu0 %v5414
        %7357 = vmatpush.bf16.msra.mxu0 %v5410
        %7358 = vmatpush.bf16.msra.mxu0 %v5406
        %7359 = vmatpush.bf16.msra.mxu0 %v5402
        %7360 = vmatpush.bf16.msra.mxu0 %v5398
        %7361 = vmatmul.bf16.gmra.mxu0 %v1503
        %v7362 = vpop.f32.mrf.mxu0
        %v7363 = vadd.f32 %v7350, %v7362
        %v7364 = vpop.f32.mrf.mxu0
        %7365 = vdwg.mxu0
        %7366 = vmatpush.bf16.msra.mxu0 %v5458
        %7367 = vmatpush.bf16.msra.mxu0 %v5454
        %7368 = vmatpush.bf16.msra.mxu0 %v5450
        %7369 = vmatpush.bf16.msra.mxu0 %v5446
        %7370 = vmatpush.bf16.msra.mxu0 %v5442
        %7371 = vmatpush.bf16.msra.mxu0 %v5438
        %7372 = vmatpush.bf16.msra.mxu0 %v5434
        %7373 = vmatpush.bf16.msra.mxu0 %v5430
        %7374 = vmatmul.bf16.gmra.mxu0 %v1504
        %v7375 = vpop.f32.mrf.mxu0
        %v7376 = vadd.f32 %v7363, %v7375
        %v7377 = vpop.f32.mrf.mxu0
        %7378 = vdwg.mxu0
        %7379 = vmatpush.bf16.msra.mxu0 %v5490
        %7380 = vmatpush.bf16.msra.mxu0 %v5486
        %7381 = vmatpush.bf16.msra.mxu0 %v5482
        %7382 = vmatpush.bf16.msra.mxu0 %v5478
        %7383 = vmatpush.bf16.msra.mxu0 %v5474
        %7384 = vmatpush.bf16.msra.mxu0 %v5470
        %7385 = vmatpush.bf16.msra.mxu0 %v5466
        %7386 = vmatpush.bf16.msra.mxu0 %v5462
        %7387 = vmatmul.bf16.gmra.mxu0 %v1505
        %v7388 = vpop.f32.mrf.mxu0
        %v7389 = vadd.f32 %v7376, %v7388
        %v7390 = vpop.f32.mrf.mxu0
        %7391 = vdwg.mxu0
        %7392 = vmatpush.bf16.msra.mxu0 %v5522
        %7393 = vmatpush.bf16.msra.mxu0 %v5518
        %7394 = vmatpush.bf16.msra.mxu0 %v5514
        %7395 = vmatpush.bf16.msra.mxu0 %v5510
        %7396 = vmatpush.bf16.msra.mxu0 %v5506
        %7397 = vmatpush.bf16.msra.mxu0 %v5502
        %7398 = vmatpush.bf16.msra.mxu0 %v5498
        %7399 = vmatpush.bf16.msra.mxu0 %v5494
        %7400 = vmatmul.bf16.gmra.mxu0 %v1506
        %v7401 = vpop.f32.mrf.mxu0
        %v7402 = vadd.f32 %v7389, %v7401
        %v7403 = vpop.f32.mrf.mxu0
        %7404 = vdwg.mxu0
        %7405 = vmatpush.bf16.msra.mxu0 %v5554
        %7406 = vmatpush.bf16.msra.mxu0 %v5550
        %7407 = vmatpush.bf16.msra.mxu0 %v5546
        %7408 = vmatpush.bf16.msra.mxu0 %v5542
        %7409 = vmatpush.bf16.msra.mxu0 %v5538
        %7410 = vmatpush.bf16.msra.mxu0 %v5534
        %7411 = vmatpush.bf16.msra.mxu0 %v5530
        %7412 = vmatpush.bf16.msra.mxu0 %v5526
        %7413 = vmatmul.bf16.gmra.mxu0 %v1507
        %v7414 = vpop.f32.mrf.mxu0
        %v7415 = vadd.f32 %v7402, %v7414
        %v7416 = vpop.f32.mrf.mxu0
        %7417 = vdwg.mxu0
        %7418 = vmatpush.bf16.msra.mxu0 %v5586
        %7419 = vmatpush.bf16.msra.mxu0 %v5582
        %7420 = vmatpush.bf16.msra.mxu0 %v5578
        %7421 = vmatpush.bf16.msra.mxu0 %v5574
        %7422 = vmatpush.bf16.msra.mxu0 %v5570
        %7423 = vmatpush.bf16.msra.mxu0 %v5566
        %7424 = vmatpush.bf16.msra.mxu0 %v5562
        %7425 = vmatpush.bf16.msra.mxu0 %v5558
        %7426 = vmatmul.bf16.gmra.mxu0 %v1508
        %v7427 = vpop.f32.mrf.mxu0
        %v7428 = vadd.f32 %v7415, %v7427
        %v7429 = vpop.f32.mrf.mxu0
        %7430 = vdwg.mxu0
        %7431 = vmatpush.bf16.msra.mxu0 %v5618
        %7432 = vmatpush.bf16.msra.mxu0 %v5614
        %7433 = vmatpush.bf16.msra.mxu0 %v5610
        %7434 = vmatpush.bf16.msra.mxu0 %v5606
        %7435 = vmatpush.bf16.msra.mxu0 %v5602
        %7436 = vmatpush.bf16.msra.mxu0 %v5598
        %7437 = vmatpush.bf16.msra.mxu0 %v5594
        %7438 = vmatpush.bf16.msra.mxu0 %v5590
        %7439 = vmatmul.bf16.gmra.mxu0 %v1509
        %v7440 = vpop.f32.mrf.mxu0
        %v7441 = vadd.f32 %v7428, %v7440
        %v7442 = vpop.f32.mrf.mxu0
        %7443 = vdwg.mxu0
        %7444 = vmatpush.bf16.msra.mxu0 %v5650
        %7445 = vmatpush.bf16.msra.mxu0 %v5646
        %7446 = vmatpush.bf16.msra.mxu0 %v5642
        %7447 = vmatpush.bf16.msra.mxu0 %v5638
        %7448 = vmatpush.bf16.msra.mxu0 %v5634
        %7449 = vmatpush.bf16.msra.mxu0 %v5630
        %7450 = vmatpush.bf16.msra.mxu0 %v5626
        %7451 = vmatpush.bf16.msra.mxu0 %v5622
        %7452 = vmatmul.bf16.gmra.mxu0 %v1510
        %v7453 = vpop.f32.mrf.mxu0
        %v7454 = vadd.f32 %v7441, %v7453
        %v7455 = vpop.f32.mrf.mxu0
        %7456 = vdwg.mxu0
        %7457 = vmatpush.bf16.msra.mxu0 %v5682
        %7458 = vmatpush.bf16.msra.mxu0 %v5678
        %7459 = vmatpush.bf16.msra.mxu0 %v5674
        %7460 = vmatpush.bf16.msra.mxu0 %v5670
        %7461 = vmatpush.bf16.msra.mxu0 %v5666
        %7462 = vmatpush.bf16.msra.mxu0 %v5662
        %7463 = vmatpush.bf16.msra.mxu0 %v5658
        %7464 = vmatpush.bf16.msra.mxu0 %v5654
        %7465 = vmatmul.bf16.gmra.mxu0 %v1511
        %v7466 = vpop.f32.mrf.mxu0
        %v7467 = vadd.f32 %v7454, %v7466
        %v7468 = vpop.f32.mrf.mxu0
        %7469 = vdwg.mxu0
        %7470 = vmatpush.bf16.msra.mxu0 %v5714
        %7471 = vmatpush.bf16.msra.mxu0 %v5710
        %7472 = vmatpush.bf16.msra.mxu0 %v5706
        %7473 = vmatpush.bf16.msra.mxu0 %v5702
        %7474 = vmatpush.bf16.msra.mxu0 %v5698
        %7475 = vmatpush.bf16.msra.mxu0 %v5694
        %7476 = vmatpush.bf16.msra.mxu0 %v5690
        %7477 = vmatpush.bf16.msra.mxu0 %v5686
        %7478 = vmatmul.bf16.gmra.mxu0 %v1512
        %v7479 = vpop.f32.mrf.mxu0
        %v7480 = vadd.f32 %v7467, %v7479
        %v7481 = vpop.f32.mrf.mxu0
        %7482 = vdwg.mxu0
        %7483 = vmatpush.bf16.msra.mxu0 %v5746
        %7484 = vmatpush.bf16.msra.mxu0 %v5742
        %7485 = vmatpush.bf16.msra.mxu0 %v5738
        %7486 = vmatpush.bf16.msra.mxu0 %v5734
        %7487 = vmatpush.bf16.msra.mxu0 %v5730
        %7488 = vmatpush.bf16.msra.mxu0 %v5726
        %7489 = vmatpush.bf16.msra.mxu0 %v5722
        %7490 = vmatpush.bf16.msra.mxu0 %v5718
        %7491 = vmatmul.bf16.gmra.mxu0 %v1513
        %v7492 = vpop.f32.mrf.mxu0
        %v7493 = vadd.f32 %v7480, %v7492
        %v7494 = vpop.f32.mrf.mxu0
        %7495 = vdwg.mxu0
        %7496 = vmatpush.bf16.msra.mxu0 %v5778
        %7497 = vmatpush.bf16.msra.mxu0 %v5774
        %7498 = vmatpush.bf16.msra.mxu0 %v5770
        %7499 = vmatpush.bf16.msra.mxu0 %v5766
        %7500 = vmatpush.bf16.msra.mxu0 %v5762
        %7501 = vmatpush.bf16.msra.mxu0 %v5758
        %7502 = vmatpush.bf16.msra.mxu0 %v5754
        %7503 = vmatpush.bf16.msra.mxu0 %v5750
        %7504 = vmatmul.bf16.gmra.mxu0 %v1514
        %v7505 = vpop.f32.mrf.mxu0
        %v7506 = vadd.f32 %v7493, %v7505
        %v7507 = vpop.f32.mrf.mxu0
        %7508 = vdwg.mxu0
        %7509 = vmatpush.bf16.msra.mxu0 %v5810
        %7510 = vmatpush.bf16.msra.mxu0 %v5806
        %7511 = vmatpush.bf16.msra.mxu0 %v5802
        %7512 = vmatpush.bf16.msra.mxu0 %v5798
        %7513 = vmatpush.bf16.msra.mxu0 %v5794
        %7514 = vmatpush.bf16.msra.mxu0 %v5790
        %7515 = vmatpush.bf16.msra.mxu0 %v5786
        %7516 = vmatpush.bf16.msra.mxu0 %v5782
        %7517 = vmatmul.bf16.gmra.mxu0 %v1515
        %v7518 = vpop.f32.mrf.mxu0
        %v7519 = vadd.f32 %v7506, %v7518
        %v7520 = vpop.f32.mrf.mxu0
        %7521 = vdwg.mxu0
        %7522 = vmatpush.bf16.msra.mxu0 %v5842
        %7523 = vmatpush.bf16.msra.mxu0 %v5838
        %7524 = vmatpush.bf16.msra.mxu0 %v5834
        %7525 = vmatpush.bf16.msra.mxu0 %v5830
        %7526 = vmatpush.bf16.msra.mxu0 %v5826
        %7527 = vmatpush.bf16.msra.mxu0 %v5822
        %7528 = vmatpush.bf16.msra.mxu0 %v5818
        %7529 = vmatpush.bf16.msra.mxu0 %v5814
        %7530 = vmatmul.bf16.gmra.mxu0 %v1516
        %v7531 = vpop.f32.mrf.mxu0
        %v7532 = vadd.f32 %v7519, %v7531
        %v7533 = vpop.f32.mrf.mxu0
        %7534 = vdwg.mxu0
        %7535 = vmatpush.bf16.msra.mxu0 %v5874
        %7536 = vmatpush.bf16.msra.mxu0 %v5870
        %7537 = vmatpush.bf16.msra.mxu0 %v5866
        %7538 = vmatpush.bf16.msra.mxu0 %v5862
        %7539 = vmatpush.bf16.msra.mxu0 %v5858
        %7540 = vmatpush.bf16.msra.mxu0 %v5854
        %7541 = vmatpush.bf16.msra.mxu0 %v5850
        %7542 = vmatpush.bf16.msra.mxu0 %v5846
        %7543 = vmatmul.bf16.gmra.mxu0 %v1517
        %v7544 = vpop.f32.mrf.mxu0
        %v7545 = vadd.f32 %v7532, %v7544
        %v7546 = vpop.f32.mrf.mxu0
        %7547 = vdwg.mxu0
        %7548 = vmatpush.bf16.msra.mxu0 %v5906
        %7549 = vmatpush.bf16.msra.mxu0 %v5902
        %7550 = vmatpush.bf16.msra.mxu0 %v5898
        %7551 = vmatpush.bf16.msra.mxu0 %v5894
        %7552 = vmatpush.bf16.msra.mxu0 %v5890
        %7553 = vmatpush.bf16.msra.mxu0 %v5886
        %7554 = vmatpush.bf16.msra.mxu0 %v5882
        %7555 = vmatpush.bf16.msra.mxu0 %v5878
        %7556 = vmatmul.bf16.gmra.mxu0 %v1518
        %v7557 = vpop.f32.mrf.mxu0
        %v7558 = vadd.f32 %v7545, %v7557
        %v7559 = vpop.f32.mrf.mxu0
        %7560 = vdwg.mxu0
        %7561 = vmatpush.bf16.msra.mxu0 %v5938
        %7562 = vmatpush.bf16.msra.mxu0 %v5934
        %7563 = vmatpush.bf16.msra.mxu0 %v5930
        %7564 = vmatpush.bf16.msra.mxu0 %v5926
        %7565 = vmatpush.bf16.msra.mxu0 %v5922
        %7566 = vmatpush.bf16.msra.mxu0 %v5918
        %7567 = vmatpush.bf16.msra.mxu0 %v5914
        %7568 = vmatpush.bf16.msra.mxu0 %v5910
        %7569 = vmatmul.bf16.gmra.mxu0 %v1519
        %v7570 = vpop.f32.mrf.mxu0
        %v7571 = vadd.f32 %v7558, %v7570
        %v7572 = vpop.f32.mrf.mxu0
        %7573 = vdwg.mxu0
        %7574 = vmatpush.bf16.msra.mxu0 %v5970
        %7575 = vmatpush.bf16.msra.mxu0 %v5966
        %7576 = vmatpush.bf16.msra.mxu0 %v5962
        %7577 = vmatpush.bf16.msra.mxu0 %v5958
        %7578 = vmatpush.bf16.msra.mxu0 %v5954
        %7579 = vmatpush.bf16.msra.mxu0 %v5950
        %7580 = vmatpush.bf16.msra.mxu0 %v5946
        %7581 = vmatpush.bf16.msra.mxu0 %v5942
        %7582 = vmatmul.bf16.gmra.mxu0 %v1520
        %v7583 = vpop.f32.mrf.mxu0
        %v7584 = vadd.f32 %v7571, %v7583
        %v7585 = vpop.f32.mrf.mxu0
        %7586 = vdwg.mxu0
        %7587 = vmatpush.bf16.msra.mxu0 %v6002
        %7588 = vmatpush.bf16.msra.mxu0 %v5998
        %7589 = vmatpush.bf16.msra.mxu0 %v5994
        %7590 = vmatpush.bf16.msra.mxu0 %v5990
        %7591 = vmatpush.bf16.msra.mxu0 %v5986
        %7592 = vmatpush.bf16.msra.mxu0 %v5982
        %7593 = vmatpush.bf16.msra.mxu0 %v5978
        %7594 = vmatpush.bf16.msra.mxu0 %v5974
        %7595 = vmatmul.bf16.gmra.mxu0 %v1521
        %v7596 = vpop.f32.mrf.mxu0
        %v7597 = vadd.f32 %v7584, %v7596
        %v7598 = vpop.f32.mrf.mxu0
        %7599 = vdwg.mxu0
        %7600 = vmatpush.bf16.msra.mxu0 %v6034
        %7601 = vmatpush.bf16.msra.mxu0 %v6030
        %7602 = vmatpush.bf16.msra.mxu0 %v6026
        %7603 = vmatpush.bf16.msra.mxu0 %v6022
        %7604 = vmatpush.bf16.msra.mxu0 %v6018
        %7605 = vmatpush.bf16.msra.mxu0 %v6014
        %7606 = vmatpush.bf16.msra.mxu0 %v6010
        %7607 = vmatpush.bf16.msra.mxu0 %v6006
        %7608 = vmatmul.bf16.gmra.mxu0 %v1522
        %v7609 = vpop.f32.mrf.mxu0
        %v7610 = vadd.f32 %v7597, %v7609
        %v7611 = vpop.f32.mrf.mxu0
        %7612 = vdwg.mxu0
        %7613 = vmatpush.bf16.msra.mxu0 %v4947
        %7614 = vmatpush.bf16.msra.mxu0 %v4943
        %7615 = vmatpush.bf16.msra.mxu0 %v4939
        %7616 = vmatpush.bf16.msra.mxu0 %v4935
        %7617 = vmatpush.bf16.msra.mxu0 %v4931
        %7618 = vmatpush.bf16.msra.mxu0 %v4927
        %7619 = vmatpush.bf16.msra.mxu0 %v4923
        %7620 = vmatpush.bf16.msra.mxu0 %v4919
        %7621 = vmatmul.bf16.gmra.mxu0 %v1488
        %v7622 = vpop.f32.mrf.mxu0
        %v7623 = vadd.f32 0.0, %v7622
        %v7624 = vpop.f32.mrf.mxu0
        %7625 = vdwg.mxu0
        %7626 = vmatpush.bf16.msra.mxu0 %v4979
        %7627 = vmatpush.bf16.msra.mxu0 %v4975
        %7628 = vmatpush.bf16.msra.mxu0 %v4971
        %7629 = vmatpush.bf16.msra.mxu0 %v4967
        %7630 = vmatpush.bf16.msra.mxu0 %v4963
        %7631 = vmatpush.bf16.msra.mxu0 %v4959
        %7632 = vmatpush.bf16.msra.mxu0 %v4955
        %7633 = vmatpush.bf16.msra.mxu0 %v4951
        %7634 = vmatmul.bf16.gmra.mxu0 %v1489
        %v7635 = vpop.f32.mrf.mxu0
        %v7636 = vadd.f32 %v7623, %v7635
        %v7637 = vpop.f32.mrf.mxu0
        %7638 = vdwg.mxu0
        %7639 = vmatpush.bf16.msra.mxu0 %v5011
        %7640 = vmatpush.bf16.msra.mxu0 %v5007
        %7641 = vmatpush.bf16.msra.mxu0 %v5003
        %7642 = vmatpush.bf16.msra.mxu0 %v4999
        %7643 = vmatpush.bf16.msra.mxu0 %v4995
        %7644 = vmatpush.bf16.msra.mxu0 %v4991
        %7645 = vmatpush.bf16.msra.mxu0 %v4987
        %7646 = vmatpush.bf16.msra.mxu0 %v4983
        %7647 = vmatmul.bf16.gmra.mxu0 %v1490
        %v7648 = vpop.f32.mrf.mxu0
        %v7649 = vadd.f32 %v7636, %v7648
        %v7650 = vpop.f32.mrf.mxu0
        %7651 = vdwg.mxu0
        %7652 = vmatpush.bf16.msra.mxu0 %v5043
        %7653 = vmatpush.bf16.msra.mxu0 %v5039
        %7654 = vmatpush.bf16.msra.mxu0 %v5035
        %7655 = vmatpush.bf16.msra.mxu0 %v5031
        %7656 = vmatpush.bf16.msra.mxu0 %v5027
        %7657 = vmatpush.bf16.msra.mxu0 %v5023
        %7658 = vmatpush.bf16.msra.mxu0 %v5019
        %7659 = vmatpush.bf16.msra.mxu0 %v5015
        %7660 = vmatmul.bf16.gmra.mxu0 %v1491
        %v7661 = vpop.f32.mrf.mxu0
        %v7662 = vadd.f32 %v7649, %v7661
        %v7663 = vpop.f32.mrf.mxu0
        %7664 = vdwg.mxu0
        %7665 = vmatpush.bf16.msra.mxu0 %v5075
        %7666 = vmatpush.bf16.msra.mxu0 %v5071
        %7667 = vmatpush.bf16.msra.mxu0 %v5067
        %7668 = vmatpush.bf16.msra.mxu0 %v5063
        %7669 = vmatpush.bf16.msra.mxu0 %v5059
        %7670 = vmatpush.bf16.msra.mxu0 %v5055
        %7671 = vmatpush.bf16.msra.mxu0 %v5051
        %7672 = vmatpush.bf16.msra.mxu0 %v5047
        %7673 = vmatmul.bf16.gmra.mxu0 %v1492
        %v7674 = vpop.f32.mrf.mxu0
        %v7675 = vadd.f32 %v7662, %v7674
        %v7676 = vpop.f32.mrf.mxu0
        %7677 = vdwg.mxu0
        %7678 = vmatpush.bf16.msra.mxu0 %v5107
        %7679 = vmatpush.bf16.msra.mxu0 %v5103
        %7680 = vmatpush.bf16.msra.mxu0 %v5099
        %7681 = vmatpush.bf16.msra.mxu0 %v5095
        %7682 = vmatpush.bf16.msra.mxu0 %v5091
        %7683 = vmatpush.bf16.msra.mxu0 %v5087
        %7684 = vmatpush.bf16.msra.mxu0 %v5083
        %7685 = vmatpush.bf16.msra.mxu0 %v5079
        %7686 = vmatmul.bf16.gmra.mxu0 %v1493
        %v7687 = vpop.f32.mrf.mxu0
        %v7688 = vadd.f32 %v7675, %v7687
        %v7689 = vpop.f32.mrf.mxu0
        %7690 = vdwg.mxu0
        %7691 = vmatpush.bf16.msra.mxu0 %v5139
        %7692 = vmatpush.bf16.msra.mxu0 %v5135
        %7693 = vmatpush.bf16.msra.mxu0 %v5131
        %7694 = vmatpush.bf16.msra.mxu0 %v5127
        %7695 = vmatpush.bf16.msra.mxu0 %v5123
        %7696 = vmatpush.bf16.msra.mxu0 %v5119
        %7697 = vmatpush.bf16.msra.mxu0 %v5115
        %7698 = vmatpush.bf16.msra.mxu0 %v5111
        %7699 = vmatmul.bf16.gmra.mxu0 %v1494
        %v7700 = vpop.f32.mrf.mxu0
        %v7701 = vadd.f32 %v7688, %v7700
        %v7702 = vpop.f32.mrf.mxu0
        %7703 = vdwg.mxu0
        %7704 = vmatpush.bf16.msra.mxu0 %v5171
        %7705 = vmatpush.bf16.msra.mxu0 %v5167
        %7706 = vmatpush.bf16.msra.mxu0 %v5163
        %7707 = vmatpush.bf16.msra.mxu0 %v5159
        %7708 = vmatpush.bf16.msra.mxu0 %v5155
        %7709 = vmatpush.bf16.msra.mxu0 %v5151
        %7710 = vmatpush.bf16.msra.mxu0 %v5147
        %7711 = vmatpush.bf16.msra.mxu0 %v5143
        %7712 = vmatmul.bf16.gmra.mxu0 %v1495
        %v7713 = vpop.f32.mrf.mxu0
        %v7714 = vadd.f32 %v7701, %v7713
        %v7715 = vpop.f32.mrf.mxu0
        %7716 = vdwg.mxu0
        %7717 = vmatpush.bf16.msra.mxu0 %v5203
        %7718 = vmatpush.bf16.msra.mxu0 %v5199
        %7719 = vmatpush.bf16.msra.mxu0 %v5195
        %7720 = vmatpush.bf16.msra.mxu0 %v5191
        %7721 = vmatpush.bf16.msra.mxu0 %v5187
        %7722 = vmatpush.bf16.msra.mxu0 %v5183
        %7723 = vmatpush.bf16.msra.mxu0 %v5179
        %7724 = vmatpush.bf16.msra.mxu0 %v5175
        %7725 = vmatmul.bf16.gmra.mxu0 %v1496
        %v7726 = vpop.f32.mrf.mxu0
        %v7727 = vadd.f32 %v7714, %v7726
        %v7728 = vpop.f32.mrf.mxu0
        %7729 = vdwg.mxu0
        %7730 = vmatpush.bf16.msra.mxu0 %v5235
        %7731 = vmatpush.bf16.msra.mxu0 %v5231
        %7732 = vmatpush.bf16.msra.mxu0 %v5227
        %7733 = vmatpush.bf16.msra.mxu0 %v5223
        %7734 = vmatpush.bf16.msra.mxu0 %v5219
        %7735 = vmatpush.bf16.msra.mxu0 %v5215
        %7736 = vmatpush.bf16.msra.mxu0 %v5211
        %7737 = vmatpush.bf16.msra.mxu0 %v5207
        %7738 = vmatmul.bf16.gmra.mxu0 %v1497
        %v7739 = vpop.f32.mrf.mxu0
        %v7740 = vadd.f32 %v7727, %v7739
        %v7741 = vpop.f32.mrf.mxu0
        %7742 = vdwg.mxu0
        %7743 = vmatpush.bf16.msra.mxu0 %v5267
        %7744 = vmatpush.bf16.msra.mxu0 %v5263
        %7745 = vmatpush.bf16.msra.mxu0 %v5259
        %7746 = vmatpush.bf16.msra.mxu0 %v5255
        %7747 = vmatpush.bf16.msra.mxu0 %v5251
        %7748 = vmatpush.bf16.msra.mxu0 %v5247
        %7749 = vmatpush.bf16.msra.mxu0 %v5243
        %7750 = vmatpush.bf16.msra.mxu0 %v5239
        %7751 = vmatmul.bf16.gmra.mxu0 %v1498
        %v7752 = vpop.f32.mrf.mxu0
        %v7753 = vadd.f32 %v7740, %v7752
        %v7754 = vpop.f32.mrf.mxu0
        %7755 = vdwg.mxu0
        %7756 = vmatpush.bf16.msra.mxu0 %v5299
        %7757 = vmatpush.bf16.msra.mxu0 %v5295
        %7758 = vmatpush.bf16.msra.mxu0 %v5291
        %7759 = vmatpush.bf16.msra.mxu0 %v5287
        %7760 = vmatpush.bf16.msra.mxu0 %v5283
        %7761 = vmatpush.bf16.msra.mxu0 %v5279
        %7762 = vmatpush.bf16.msra.mxu0 %v5275
        %7763 = vmatpush.bf16.msra.mxu0 %v5271
        %7764 = vmatmul.bf16.gmra.mxu0 %v1499
        %v7765 = vpop.f32.mrf.mxu0
        %v7766 = vadd.f32 %v7753, %v7765
        %v7767 = vpop.f32.mrf.mxu0
        %7768 = vdwg.mxu0
        %7769 = vmatpush.bf16.msra.mxu0 %v5331
        %7770 = vmatpush.bf16.msra.mxu0 %v5327
        %7771 = vmatpush.bf16.msra.mxu0 %v5323
        %7772 = vmatpush.bf16.msra.mxu0 %v5319
        %7773 = vmatpush.bf16.msra.mxu0 %v5315
        %7774 = vmatpush.bf16.msra.mxu0 %v5311
        %7775 = vmatpush.bf16.msra.mxu0 %v5307
        %7776 = vmatpush.bf16.msra.mxu0 %v5303
        %7777 = vmatmul.bf16.gmra.mxu0 %v1500
        %v7778 = vpop.f32.mrf.mxu0
        %v7779 = vadd.f32 %v7766, %v7778
        %v7780 = vpop.f32.mrf.mxu0
        %7781 = vdwg.mxu0
        %7782 = vmatpush.bf16.msra.mxu0 %v5363
        %7783 = vmatpush.bf16.msra.mxu0 %v5359
        %7784 = vmatpush.bf16.msra.mxu0 %v5355
        %7785 = vmatpush.bf16.msra.mxu0 %v5351
        %7786 = vmatpush.bf16.msra.mxu0 %v5347
        %7787 = vmatpush.bf16.msra.mxu0 %v5343
        %7788 = vmatpush.bf16.msra.mxu0 %v5339
        %7789 = vmatpush.bf16.msra.mxu0 %v5335
        %7790 = vmatmul.bf16.gmra.mxu0 %v1501
        %v7791 = vpop.f32.mrf.mxu0
        %v7792 = vadd.f32 %v7779, %v7791
        %v7793 = vpop.f32.mrf.mxu0
        %7794 = vdwg.mxu0
        %7795 = vmatpush.bf16.msra.mxu0 %v5395
        %7796 = vmatpush.bf16.msra.mxu0 %v5391
        %7797 = vmatpush.bf16.msra.mxu0 %v5387
        %7798 = vmatpush.bf16.msra.mxu0 %v5383
        %7799 = vmatpush.bf16.msra.mxu0 %v5379
        %7800 = vmatpush.bf16.msra.mxu0 %v5375
        %7801 = vmatpush.bf16.msra.mxu0 %v5371
        %7802 = vmatpush.bf16.msra.mxu0 %v5367
        %7803 = vmatmul.bf16.gmra.mxu0 %v1502
        %v7804 = vpop.f32.mrf.mxu0
        %v7805 = vadd.f32 %v7792, %v7804
        %v7806 = vpop.f32.mrf.mxu0
        %7807 = vdwg.mxu0
        %7808 = vmatpush.bf16.msra.mxu0 %v5427
        %7809 = vmatpush.bf16.msra.mxu0 %v5423
        %7810 = vmatpush.bf16.msra.mxu0 %v5419
        %7811 = vmatpush.bf16.msra.mxu0 %v5415
        %7812 = vmatpush.bf16.msra.mxu0 %v5411
        %7813 = vmatpush.bf16.msra.mxu0 %v5407
        %7814 = vmatpush.bf16.msra.mxu0 %v5403
        %7815 = vmatpush.bf16.msra.mxu0 %v5399
        %7816 = vmatmul.bf16.gmra.mxu0 %v1503
        %v7817 = vpop.f32.mrf.mxu0
        %v7818 = vadd.f32 %v7805, %v7817
        %v7819 = vpop.f32.mrf.mxu0
        %7820 = vdwg.mxu0
        %7821 = vmatpush.bf16.msra.mxu0 %v5459
        %7822 = vmatpush.bf16.msra.mxu0 %v5455
        %7823 = vmatpush.bf16.msra.mxu0 %v5451
        %7824 = vmatpush.bf16.msra.mxu0 %v5447
        %7825 = vmatpush.bf16.msra.mxu0 %v5443
        %7826 = vmatpush.bf16.msra.mxu0 %v5439
        %7827 = vmatpush.bf16.msra.mxu0 %v5435
        %7828 = vmatpush.bf16.msra.mxu0 %v5431
        %7829 = vmatmul.bf16.gmra.mxu0 %v1504
        %v7830 = vpop.f32.mrf.mxu0
        %v7831 = vadd.f32 %v7818, %v7830
        %v7832 = vpop.f32.mrf.mxu0
        %7833 = vdwg.mxu0
        %7834 = vmatpush.bf16.msra.mxu0 %v5491
        %7835 = vmatpush.bf16.msra.mxu0 %v5487
        %7836 = vmatpush.bf16.msra.mxu0 %v5483
        %7837 = vmatpush.bf16.msra.mxu0 %v5479
        %7838 = vmatpush.bf16.msra.mxu0 %v5475
        %7839 = vmatpush.bf16.msra.mxu0 %v5471
        %7840 = vmatpush.bf16.msra.mxu0 %v5467
        %7841 = vmatpush.bf16.msra.mxu0 %v5463
        %7842 = vmatmul.bf16.gmra.mxu0 %v1505
        %v7843 = vpop.f32.mrf.mxu0
        %v7844 = vadd.f32 %v7831, %v7843
        %v7845 = vpop.f32.mrf.mxu0
        %7846 = vdwg.mxu0
        %7847 = vmatpush.bf16.msra.mxu0 %v5523
        %7848 = vmatpush.bf16.msra.mxu0 %v5519
        %7849 = vmatpush.bf16.msra.mxu0 %v5515
        %7850 = vmatpush.bf16.msra.mxu0 %v5511
        %7851 = vmatpush.bf16.msra.mxu0 %v5507
        %7852 = vmatpush.bf16.msra.mxu0 %v5503
        %7853 = vmatpush.bf16.msra.mxu0 %v5499
        %7854 = vmatpush.bf16.msra.mxu0 %v5495
        %7855 = vmatmul.bf16.gmra.mxu0 %v1506
        %v7856 = vpop.f32.mrf.mxu0
        %v7857 = vadd.f32 %v7844, %v7856
        %v7858 = vpop.f32.mrf.mxu0
        %7859 = vdwg.mxu0
        %7860 = vmatpush.bf16.msra.mxu0 %v5555
        %7861 = vmatpush.bf16.msra.mxu0 %v5551
        %7862 = vmatpush.bf16.msra.mxu0 %v5547
        %7863 = vmatpush.bf16.msra.mxu0 %v5543
        %7864 = vmatpush.bf16.msra.mxu0 %v5539
        %7865 = vmatpush.bf16.msra.mxu0 %v5535
        %7866 = vmatpush.bf16.msra.mxu0 %v5531
        %7867 = vmatpush.bf16.msra.mxu0 %v5527
        %7868 = vmatmul.bf16.gmra.mxu0 %v1507
        %v7869 = vpop.f32.mrf.mxu0
        %v7870 = vadd.f32 %v7857, %v7869
        %v7871 = vpop.f32.mrf.mxu0
        %7872 = vdwg.mxu0
        %7873 = vmatpush.bf16.msra.mxu0 %v5587
        %7874 = vmatpush.bf16.msra.mxu0 %v5583
        %7875 = vmatpush.bf16.msra.mxu0 %v5579
        %7876 = vmatpush.bf16.msra.mxu0 %v5575
        %7877 = vmatpush.bf16.msra.mxu0 %v5571
        %7878 = vmatpush.bf16.msra.mxu0 %v5567
        %7879 = vmatpush.bf16.msra.mxu0 %v5563
        %7880 = vmatpush.bf16.msra.mxu0 %v5559
        %7881 = vmatmul.bf16.gmra.mxu0 %v1508
        %v7882 = vpop.f32.mrf.mxu0
        %v7883 = vadd.f32 %v7870, %v7882
        %v7884 = vpop.f32.mrf.mxu0
        %7885 = vdwg.mxu0
        %7886 = vmatpush.bf16.msra.mxu0 %v5619
        %7887 = vmatpush.bf16.msra.mxu0 %v5615
        %7888 = vmatpush.bf16.msra.mxu0 %v5611
        %7889 = vmatpush.bf16.msra.mxu0 %v5607
        %7890 = vmatpush.bf16.msra.mxu0 %v5603
        %7891 = vmatpush.bf16.msra.mxu0 %v5599
        %7892 = vmatpush.bf16.msra.mxu0 %v5595
        %7893 = vmatpush.bf16.msra.mxu0 %v5591
        %7894 = vmatmul.bf16.gmra.mxu0 %v1509
        %v7895 = vpop.f32.mrf.mxu0
        %v7896 = vadd.f32 %v7883, %v7895
        %v7897 = vpop.f32.mrf.mxu0
        %7898 = vdwg.mxu0
        %7899 = vmatpush.bf16.msra.mxu0 %v5651
        %7900 = vmatpush.bf16.msra.mxu0 %v5647
        %7901 = vmatpush.bf16.msra.mxu0 %v5643
        %7902 = vmatpush.bf16.msra.mxu0 %v5639
        %7903 = vmatpush.bf16.msra.mxu0 %v5635
        %7904 = vmatpush.bf16.msra.mxu0 %v5631
        %7905 = vmatpush.bf16.msra.mxu0 %v5627
        %7906 = vmatpush.bf16.msra.mxu0 %v5623
        %7907 = vmatmul.bf16.gmra.mxu0 %v1510
        %v7908 = vpop.f32.mrf.mxu0
        %v7909 = vadd.f32 %v7896, %v7908
        %v7910 = vpop.f32.mrf.mxu0
        %7911 = vdwg.mxu0
        %7912 = vmatpush.bf16.msra.mxu0 %v5683
        %7913 = vmatpush.bf16.msra.mxu0 %v5679
        %7914 = vmatpush.bf16.msra.mxu0 %v5675
        %7915 = vmatpush.bf16.msra.mxu0 %v5671
        %7916 = vmatpush.bf16.msra.mxu0 %v5667
        %7917 = vmatpush.bf16.msra.mxu0 %v5663
        %7918 = vmatpush.bf16.msra.mxu0 %v5659
        %7919 = vmatpush.bf16.msra.mxu0 %v5655
        %7920 = vmatmul.bf16.gmra.mxu0 %v1511
        %v7921 = vpop.f32.mrf.mxu0
        %v7922 = vadd.f32 %v7909, %v7921
        %v7923 = vpop.f32.mrf.mxu0
        %7924 = vdwg.mxu0
        %7925 = vmatpush.bf16.msra.mxu0 %v5715
        %7926 = vmatpush.bf16.msra.mxu0 %v5711
        %7927 = vmatpush.bf16.msra.mxu0 %v5707
        %7928 = vmatpush.bf16.msra.mxu0 %v5703
        %7929 = vmatpush.bf16.msra.mxu0 %v5699
        %7930 = vmatpush.bf16.msra.mxu0 %v5695
        %7931 = vmatpush.bf16.msra.mxu0 %v5691
        %7932 = vmatpush.bf16.msra.mxu0 %v5687
        %7933 = vmatmul.bf16.gmra.mxu0 %v1512
        %v7934 = vpop.f32.mrf.mxu0
        %v7935 = vadd.f32 %v7922, %v7934
        %v7936 = vpop.f32.mrf.mxu0
        %7937 = vdwg.mxu0
        %7938 = vmatpush.bf16.msra.mxu0 %v5747
        %7939 = vmatpush.bf16.msra.mxu0 %v5743
        %7940 = vmatpush.bf16.msra.mxu0 %v5739
        %7941 = vmatpush.bf16.msra.mxu0 %v5735
        %7942 = vmatpush.bf16.msra.mxu0 %v5731
        %7943 = vmatpush.bf16.msra.mxu0 %v5727
        %7944 = vmatpush.bf16.msra.mxu0 %v5723
        %7945 = vmatpush.bf16.msra.mxu0 %v5719
        %7946 = vmatmul.bf16.gmra.mxu0 %v1513
        %v7947 = vpop.f32.mrf.mxu0
        %v7948 = vadd.f32 %v7935, %v7947
        %v7949 = vpop.f32.mrf.mxu0
        %7950 = vdwg.mxu0
        %7951 = vmatpush.bf16.msra.mxu0 %v5779
        %7952 = vmatpush.bf16.msra.mxu0 %v5775
        %7953 = vmatpush.bf16.msra.mxu0 %v5771
        %7954 = vmatpush.bf16.msra.mxu0 %v5767
        %7955 = vmatpush.bf16.msra.mxu0 %v5763
        %7956 = vmatpush.bf16.msra.mxu0 %v5759
        %7957 = vmatpush.bf16.msra.mxu0 %v5755
        %7958 = vmatpush.bf16.msra.mxu0 %v5751
        %7959 = vmatmul.bf16.gmra.mxu0 %v1514
        %v7960 = vpop.f32.mrf.mxu0
        %v7961 = vadd.f32 %v7948, %v7960
        %v7962 = vpop.f32.mrf.mxu0
        %7963 = vdwg.mxu0
        %7964 = vmatpush.bf16.msra.mxu0 %v5811
        %7965 = vmatpush.bf16.msra.mxu0 %v5807
        %7966 = vmatpush.bf16.msra.mxu0 %v5803
        %7967 = vmatpush.bf16.msra.mxu0 %v5799
        %7968 = vmatpush.bf16.msra.mxu0 %v5795
        %7969 = vmatpush.bf16.msra.mxu0 %v5791
        %7970 = vmatpush.bf16.msra.mxu0 %v5787
        %7971 = vmatpush.bf16.msra.mxu0 %v5783
        %7972 = vmatmul.bf16.gmra.mxu0 %v1515
        %v7973 = vpop.f32.mrf.mxu0
        %v7974 = vadd.f32 %v7961, %v7973
        %v7975 = vpop.f32.mrf.mxu0
        %7976 = vdwg.mxu0
        %7977 = vmatpush.bf16.msra.mxu0 %v5843
        %7978 = vmatpush.bf16.msra.mxu0 %v5839
        %7979 = vmatpush.bf16.msra.mxu0 %v5835
        %7980 = vmatpush.bf16.msra.mxu0 %v5831
        %7981 = vmatpush.bf16.msra.mxu0 %v5827
        %7982 = vmatpush.bf16.msra.mxu0 %v5823
        %7983 = vmatpush.bf16.msra.mxu0 %v5819
        %7984 = vmatpush.bf16.msra.mxu0 %v5815
        %7985 = vmatmul.bf16.gmra.mxu0 %v1516
        %v7986 = vpop.f32.mrf.mxu0
        %v7987 = vadd.f32 %v7974, %v7986
        %v7988 = vpop.f32.mrf.mxu0
        %7989 = vdwg.mxu0
        %7990 = vmatpush.bf16.msra.mxu0 %v5875
        %7991 = vmatpush.bf16.msra.mxu0 %v5871
        %7992 = vmatpush.bf16.msra.mxu0 %v5867
        %7993 = vmatpush.bf16.msra.mxu0 %v5863
        %7994 = vmatpush.bf16.msra.mxu0 %v5859
        %7995 = vmatpush.bf16.msra.mxu0 %v5855
        %7996 = vmatpush.bf16.msra.mxu0 %v5851
        %7997 = vmatpush.bf16.msra.mxu0 %v5847
        %7998 = vmatmul.bf16.gmra.mxu0 %v1517
        %v7999 = vpop.f32.mrf.mxu0
        %v8000 = vadd.f32 %v7987, %v7999
        %v8001 = vpop.f32.mrf.mxu0
        %8002 = vdwg.mxu0
        %8003 = vmatpush.bf16.msra.mxu0 %v5907
        %8004 = vmatpush.bf16.msra.mxu0 %v5903
        %8005 = vmatpush.bf16.msra.mxu0 %v5899
        %8006 = vmatpush.bf16.msra.mxu0 %v5895
        %8007 = vmatpush.bf16.msra.mxu0 %v5891
        %8008 = vmatpush.bf16.msra.mxu0 %v5887
        %8009 = vmatpush.bf16.msra.mxu0 %v5883
        %8010 = vmatpush.bf16.msra.mxu0 %v5879
        %8011 = vmatmul.bf16.gmra.mxu0 %v1518
        %v8012 = vpop.f32.mrf.mxu0
        %v8013 = vadd.f32 %v8000, %v8012
        %v8014 = vpop.f32.mrf.mxu0
        %8015 = vdwg.mxu0
        %8016 = vmatpush.bf16.msra.mxu0 %v5939
        %8017 = vmatpush.bf16.msra.mxu0 %v5935
        %8018 = vmatpush.bf16.msra.mxu0 %v5931
        %8019 = vmatpush.bf16.msra.mxu0 %v5927
        %8020 = vmatpush.bf16.msra.mxu0 %v5923
        %8021 = vmatpush.bf16.msra.mxu0 %v5919
        %8022 = vmatpush.bf16.msra.mxu0 %v5915
        %8023 = vmatpush.bf16.msra.mxu0 %v5911
        %8024 = vmatmul.bf16.gmra.mxu0 %v1519
        %v8025 = vpop.f32.mrf.mxu0
        %v8026 = vadd.f32 %v8013, %v8025
        %v8027 = vpop.f32.mrf.mxu0
        %8028 = vdwg.mxu0
        %8029 = vmatpush.bf16.msra.mxu0 %v5971
        %8030 = vmatpush.bf16.msra.mxu0 %v5967
        %8031 = vmatpush.bf16.msra.mxu0 %v5963
        %8032 = vmatpush.bf16.msra.mxu0 %v5959
        %8033 = vmatpush.bf16.msra.mxu0 %v5955
        %8034 = vmatpush.bf16.msra.mxu0 %v5951
        %8035 = vmatpush.bf16.msra.mxu0 %v5947
        %8036 = vmatpush.bf16.msra.mxu0 %v5943
        %8037 = vmatmul.bf16.gmra.mxu0 %v1520
        %v8038 = vpop.f32.mrf.mxu0
        %v8039 = vadd.f32 %v8026, %v8038
        %v8040 = vpop.f32.mrf.mxu0
        %8041 = vdwg.mxu0
        %8042 = vmatpush.bf16.msra.mxu0 %v6003
        %8043 = vmatpush.bf16.msra.mxu0 %v5999
        %8044 = vmatpush.bf16.msra.mxu0 %v5995
        %8045 = vmatpush.bf16.msra.mxu0 %v5991
        %8046 = vmatpush.bf16.msra.mxu0 %v5987
        %8047 = vmatpush.bf16.msra.mxu0 %v5983
        %8048 = vmatpush.bf16.msra.mxu0 %v5979
        %8049 = vmatpush.bf16.msra.mxu0 %v5975
        %8050 = vmatmul.bf16.gmra.mxu0 %v1521
        %v8051 = vpop.f32.mrf.mxu0
        %v8052 = vadd.f32 %v8039, %v8051
        %v8053 = vpop.f32.mrf.mxu0
        %8054 = vdwg.mxu0
        %8055 = vmatpush.bf16.msra.mxu0 %v6035
        %8056 = vmatpush.bf16.msra.mxu0 %v6031
        %8057 = vmatpush.bf16.msra.mxu0 %v6027
        %8058 = vmatpush.bf16.msra.mxu0 %v6023
        %8059 = vmatpush.bf16.msra.mxu0 %v6019
        %8060 = vmatpush.bf16.msra.mxu0 %v6015
        %8061 = vmatpush.bf16.msra.mxu0 %v6011
        %8062 = vmatpush.bf16.msra.mxu0 %v6007
        %8063 = vmatmul.bf16.gmra.mxu0 %v1522
        %v8064 = vpop.f32.mrf.mxu0
        %v8065 = vadd.f32 %v8052, %v8064
        %v8066 = vpop.f32.mrf.mxu0
        %8067 = vdwg.mxu0
        %8068 = vmatpush.bf16.msra.mxu0 %v4948
        %8069 = vmatpush.bf16.msra.mxu0 %v4944
        %8070 = vmatpush.bf16.msra.mxu0 %v4940
        %8071 = vmatpush.bf16.msra.mxu0 %v4936
        %8072 = vmatpush.bf16.msra.mxu0 %v4932
        %8073 = vmatpush.bf16.msra.mxu0 %v4928
        %8074 = vmatpush.bf16.msra.mxu0 %v4924
        %8075 = vmatpush.bf16.msra.mxu0 %v4920
        %8076 = vmatmul.bf16.gmra.mxu0 %v1488
        %v8077 = vpop.f32.mrf.mxu0
        %v8078 = vadd.f32 0.0, %v8077
        %v8079 = vpop.f32.mrf.mxu0
        %8080 = vdwg.mxu0
        %8081 = vmatpush.bf16.msra.mxu0 %v4980
        %8082 = vmatpush.bf16.msra.mxu0 %v4976
        %8083 = vmatpush.bf16.msra.mxu0 %v4972
        %8084 = vmatpush.bf16.msra.mxu0 %v4968
        %8085 = vmatpush.bf16.msra.mxu0 %v4964
        %8086 = vmatpush.bf16.msra.mxu0 %v4960
        %8087 = vmatpush.bf16.msra.mxu0 %v4956
        %8088 = vmatpush.bf16.msra.mxu0 %v4952
        %8089 = vmatmul.bf16.gmra.mxu0 %v1489
        %v8090 = vpop.f32.mrf.mxu0
        %v8091 = vadd.f32 %v8078, %v8090
        %v8092 = vpop.f32.mrf.mxu0
        %8093 = vdwg.mxu0
        %8094 = vmatpush.bf16.msra.mxu0 %v5012
        %8095 = vmatpush.bf16.msra.mxu0 %v5008
        %8096 = vmatpush.bf16.msra.mxu0 %v5004
        %8097 = vmatpush.bf16.msra.mxu0 %v5000
        %8098 = vmatpush.bf16.msra.mxu0 %v4996
        %8099 = vmatpush.bf16.msra.mxu0 %v4992
        %8100 = vmatpush.bf16.msra.mxu0 %v4988
        %8101 = vmatpush.bf16.msra.mxu0 %v4984
        %8102 = vmatmul.bf16.gmra.mxu0 %v1490
        %v8103 = vpop.f32.mrf.mxu0
        %v8104 = vadd.f32 %v8091, %v8103
        %v8105 = vpop.f32.mrf.mxu0
        %8106 = vdwg.mxu0
        %8107 = vmatpush.bf16.msra.mxu0 %v5044
        %8108 = vmatpush.bf16.msra.mxu0 %v5040
        %8109 = vmatpush.bf16.msra.mxu0 %v5036
        %8110 = vmatpush.bf16.msra.mxu0 %v5032
        %8111 = vmatpush.bf16.msra.mxu0 %v5028
        %8112 = vmatpush.bf16.msra.mxu0 %v5024
        %8113 = vmatpush.bf16.msra.mxu0 %v5020
        %8114 = vmatpush.bf16.msra.mxu0 %v5016
        %8115 = vmatmul.bf16.gmra.mxu0 %v1491
        %v8116 = vpop.f32.mrf.mxu0
        %v8117 = vadd.f32 %v8104, %v8116
        %v8118 = vpop.f32.mrf.mxu0
        %8119 = vdwg.mxu0
        %8120 = vmatpush.bf16.msra.mxu0 %v5076
        %8121 = vmatpush.bf16.msra.mxu0 %v5072
        %8122 = vmatpush.bf16.msra.mxu0 %v5068
        %8123 = vmatpush.bf16.msra.mxu0 %v5064
        %8124 = vmatpush.bf16.msra.mxu0 %v5060
        %8125 = vmatpush.bf16.msra.mxu0 %v5056
        %8126 = vmatpush.bf16.msra.mxu0 %v5052
        %8127 = vmatpush.bf16.msra.mxu0 %v5048
        %8128 = vmatmul.bf16.gmra.mxu0 %v1492
        %v8129 = vpop.f32.mrf.mxu0
        %v8130 = vadd.f32 %v8117, %v8129
        %v8131 = vpop.f32.mrf.mxu0
        %8132 = vdwg.mxu0
        %8133 = vmatpush.bf16.msra.mxu0 %v5108
        %8134 = vmatpush.bf16.msra.mxu0 %v5104
        %8135 = vmatpush.bf16.msra.mxu0 %v5100
        %8136 = vmatpush.bf16.msra.mxu0 %v5096
        %8137 = vmatpush.bf16.msra.mxu0 %v5092
        %8138 = vmatpush.bf16.msra.mxu0 %v5088
        %8139 = vmatpush.bf16.msra.mxu0 %v5084
        %8140 = vmatpush.bf16.msra.mxu0 %v5080
        %8141 = vmatmul.bf16.gmra.mxu0 %v1493
        %v8142 = vpop.f32.mrf.mxu0
        %v8143 = vadd.f32 %v8130, %v8142
        %v8144 = vpop.f32.mrf.mxu0
        %8145 = vdwg.mxu0
        %8146 = vmatpush.bf16.msra.mxu0 %v5140
        %8147 = vmatpush.bf16.msra.mxu0 %v5136
        %8148 = vmatpush.bf16.msra.mxu0 %v5132
        %8149 = vmatpush.bf16.msra.mxu0 %v5128
        %8150 = vmatpush.bf16.msra.mxu0 %v5124
        %8151 = vmatpush.bf16.msra.mxu0 %v5120
        %8152 = vmatpush.bf16.msra.mxu0 %v5116
        %8153 = vmatpush.bf16.msra.mxu0 %v5112
        %8154 = vmatmul.bf16.gmra.mxu0 %v1494
        %v8155 = vpop.f32.mrf.mxu0
        %v8156 = vadd.f32 %v8143, %v8155
        %v8157 = vpop.f32.mrf.mxu0
        %8158 = vdwg.mxu0
        %8159 = vmatpush.bf16.msra.mxu0 %v5172
        %8160 = vmatpush.bf16.msra.mxu0 %v5168
        %8161 = vmatpush.bf16.msra.mxu0 %v5164
        %8162 = vmatpush.bf16.msra.mxu0 %v5160
        %8163 = vmatpush.bf16.msra.mxu0 %v5156
        %8164 = vmatpush.bf16.msra.mxu0 %v5152
        %8165 = vmatpush.bf16.msra.mxu0 %v5148
        %8166 = vmatpush.bf16.msra.mxu0 %v5144
        %8167 = vmatmul.bf16.gmra.mxu0 %v1495
        %v8168 = vpop.f32.mrf.mxu0
        %v8169 = vadd.f32 %v8156, %v8168
        %v8170 = vpop.f32.mrf.mxu0
        %8171 = vdwg.mxu0
        %8172 = vmatpush.bf16.msra.mxu0 %v5204
        %8173 = vmatpush.bf16.msra.mxu0 %v5200
        %8174 = vmatpush.bf16.msra.mxu0 %v5196
        %8175 = vmatpush.bf16.msra.mxu0 %v5192
        %8176 = vmatpush.bf16.msra.mxu0 %v5188
        %8177 = vmatpush.bf16.msra.mxu0 %v5184
        %8178 = vmatpush.bf16.msra.mxu0 %v5180
        %8179 = vmatpush.bf16.msra.mxu0 %v5176
        %8180 = vmatmul.bf16.gmra.mxu0 %v1496
        %v8181 = vpop.f32.mrf.mxu0
        %v8182 = vadd.f32 %v8169, %v8181
        %v8183 = vpop.f32.mrf.mxu0
        %8184 = vdwg.mxu0
        %8185 = vmatpush.bf16.msra.mxu0 %v5236
        %8186 = vmatpush.bf16.msra.mxu0 %v5232
        %8187 = vmatpush.bf16.msra.mxu0 %v5228
        %8188 = vmatpush.bf16.msra.mxu0 %v5224
        %8189 = vmatpush.bf16.msra.mxu0 %v5220
        %8190 = vmatpush.bf16.msra.mxu0 %v5216
        %8191 = vmatpush.bf16.msra.mxu0 %v5212
        %8192 = vmatpush.bf16.msra.mxu0 %v5208
        %8193 = vmatmul.bf16.gmra.mxu0 %v1497
        %v8194 = vpop.f32.mrf.mxu0
        %v8195 = vadd.f32 %v8182, %v8194
        %v8196 = vpop.f32.mrf.mxu0
        %8197 = vdwg.mxu0
        %8198 = vmatpush.bf16.msra.mxu0 %v5268
        %8199 = vmatpush.bf16.msra.mxu0 %v5264
        %8200 = vmatpush.bf16.msra.mxu0 %v5260
        %8201 = vmatpush.bf16.msra.mxu0 %v5256
        %8202 = vmatpush.bf16.msra.mxu0 %v5252
        %8203 = vmatpush.bf16.msra.mxu0 %v5248
        %8204 = vmatpush.bf16.msra.mxu0 %v5244
        %8205 = vmatpush.bf16.msra.mxu0 %v5240
        %8206 = vmatmul.bf16.gmra.mxu0 %v1498
        %v8207 = vpop.f32.mrf.mxu0
        %v8208 = vadd.f32 %v8195, %v8207
        %v8209 = vpop.f32.mrf.mxu0
        %8210 = vdwg.mxu0
        %8211 = vmatpush.bf16.msra.mxu0 %v5300
        %8212 = vmatpush.bf16.msra.mxu0 %v5296
        %8213 = vmatpush.bf16.msra.mxu0 %v5292
        %8214 = vmatpush.bf16.msra.mxu0 %v5288
        %8215 = vmatpush.bf16.msra.mxu0 %v5284
        %8216 = vmatpush.bf16.msra.mxu0 %v5280
        %8217 = vmatpush.bf16.msra.mxu0 %v5276
        %8218 = vmatpush.bf16.msra.mxu0 %v5272
        %8219 = vmatmul.bf16.gmra.mxu0 %v1499
        %v8220 = vpop.f32.mrf.mxu0
        %v8221 = vadd.f32 %v8208, %v8220
        %v8222 = vpop.f32.mrf.mxu0
        %8223 = vdwg.mxu0
        %8224 = vmatpush.bf16.msra.mxu0 %v5332
        %8225 = vmatpush.bf16.msra.mxu0 %v5328
        %8226 = vmatpush.bf16.msra.mxu0 %v5324
        %8227 = vmatpush.bf16.msra.mxu0 %v5320
        %8228 = vmatpush.bf16.msra.mxu0 %v5316
        %8229 = vmatpush.bf16.msra.mxu0 %v5312
        %8230 = vmatpush.bf16.msra.mxu0 %v5308
        %8231 = vmatpush.bf16.msra.mxu0 %v5304
        %8232 = vmatmul.bf16.gmra.mxu0 %v1500
        %v8233 = vpop.f32.mrf.mxu0
        %v8234 = vadd.f32 %v8221, %v8233
        %v8235 = vpop.f32.mrf.mxu0
        %8236 = vdwg.mxu0
        %8237 = vmatpush.bf16.msra.mxu0 %v5364
        %8238 = vmatpush.bf16.msra.mxu0 %v5360
        %8239 = vmatpush.bf16.msra.mxu0 %v5356
        %8240 = vmatpush.bf16.msra.mxu0 %v5352
        %8241 = vmatpush.bf16.msra.mxu0 %v5348
        %8242 = vmatpush.bf16.msra.mxu0 %v5344
        %8243 = vmatpush.bf16.msra.mxu0 %v5340
        %8244 = vmatpush.bf16.msra.mxu0 %v5336
        %8245 = vmatmul.bf16.gmra.mxu0 %v1501
        %v8246 = vpop.f32.mrf.mxu0
        %v8247 = vadd.f32 %v8234, %v8246
        %v8248 = vpop.f32.mrf.mxu0
        %8249 = vdwg.mxu0
        %8250 = vmatpush.bf16.msra.mxu0 %v5396
        %8251 = vmatpush.bf16.msra.mxu0 %v5392
        %8252 = vmatpush.bf16.msra.mxu0 %v5388
        %8253 = vmatpush.bf16.msra.mxu0 %v5384
        %8254 = vmatpush.bf16.msra.mxu0 %v5380
        %8255 = vmatpush.bf16.msra.mxu0 %v5376
        %8256 = vmatpush.bf16.msra.mxu0 %v5372
        %8257 = vmatpush.bf16.msra.mxu0 %v5368
        %8258 = vmatmul.bf16.gmra.mxu0 %v1502
        %v8259 = vpop.f32.mrf.mxu0
        %v8260 = vadd.f32 %v8247, %v8259
        %v8261 = vpop.f32.mrf.mxu0
        %8262 = vdwg.mxu0
        %8263 = vmatpush.bf16.msra.mxu0 %v5428
        %8264 = vmatpush.bf16.msra.mxu0 %v5424
        %8265 = vmatpush.bf16.msra.mxu0 %v5420
        %8266 = vmatpush.bf16.msra.mxu0 %v5416
        %8267 = vmatpush.bf16.msra.mxu0 %v5412
        %8268 = vmatpush.bf16.msra.mxu0 %v5408
        %8269 = vmatpush.bf16.msra.mxu0 %v5404
        %8270 = vmatpush.bf16.msra.mxu0 %v5400
        %8271 = vmatmul.bf16.gmra.mxu0 %v1503
        %v8272 = vpop.f32.mrf.mxu0
        %v8273 = vadd.f32 %v8260, %v8272
        %v8274 = vpop.f32.mrf.mxu0
        %8275 = vdwg.mxu0
        %8276 = vmatpush.bf16.msra.mxu0 %v5460
        %8277 = vmatpush.bf16.msra.mxu0 %v5456
        %8278 = vmatpush.bf16.msra.mxu0 %v5452
        %8279 = vmatpush.bf16.msra.mxu0 %v5448
        %8280 = vmatpush.bf16.msra.mxu0 %v5444
        %8281 = vmatpush.bf16.msra.mxu0 %v5440
        %8282 = vmatpush.bf16.msra.mxu0 %v5436
        %8283 = vmatpush.bf16.msra.mxu0 %v5432
        %8284 = vmatmul.bf16.gmra.mxu0 %v1504
        %v8285 = vpop.f32.mrf.mxu0
        %v8286 = vadd.f32 %v8273, %v8285
        %v8287 = vpop.f32.mrf.mxu0
        %8288 = vdwg.mxu0
        %8289 = vmatpush.bf16.msra.mxu0 %v5492
        %8290 = vmatpush.bf16.msra.mxu0 %v5488
        %8291 = vmatpush.bf16.msra.mxu0 %v5484
        %8292 = vmatpush.bf16.msra.mxu0 %v5480
        %8293 = vmatpush.bf16.msra.mxu0 %v5476
        %8294 = vmatpush.bf16.msra.mxu0 %v5472
        %8295 = vmatpush.bf16.msra.mxu0 %v5468
        %8296 = vmatpush.bf16.msra.mxu0 %v5464
        %8297 = vmatmul.bf16.gmra.mxu0 %v1505
        %v8298 = vpop.f32.mrf.mxu0
        %v8299 = vadd.f32 %v8286, %v8298
        %v8300 = vpop.f32.mrf.mxu0
        %8301 = vdwg.mxu0
        %8302 = vmatpush.bf16.msra.mxu0 %v5524
        %8303 = vmatpush.bf16.msra.mxu0 %v5520
        %8304 = vmatpush.bf16.msra.mxu0 %v5516
        %8305 = vmatpush.bf16.msra.mxu0 %v5512
        %8306 = vmatpush.bf16.msra.mxu0 %v5508
        %8307 = vmatpush.bf16.msra.mxu0 %v5504
        %8308 = vmatpush.bf16.msra.mxu0 %v5500
        %8309 = vmatpush.bf16.msra.mxu0 %v5496
        %8310 = vmatmul.bf16.gmra.mxu0 %v1506
        %v8311 = vpop.f32.mrf.mxu0
        %v8312 = vadd.f32 %v8299, %v8311
        %v8313 = vpop.f32.mrf.mxu0
        %8314 = vdwg.mxu0
        %8315 = vmatpush.bf16.msra.mxu0 %v5556
        %8316 = vmatpush.bf16.msra.mxu0 %v5552
        %8317 = vmatpush.bf16.msra.mxu0 %v5548
        %8318 = vmatpush.bf16.msra.mxu0 %v5544
        %8319 = vmatpush.bf16.msra.mxu0 %v5540
        %8320 = vmatpush.bf16.msra.mxu0 %v5536
        %8321 = vmatpush.bf16.msra.mxu0 %v5532
        %8322 = vmatpush.bf16.msra.mxu0 %v5528
        %8323 = vmatmul.bf16.gmra.mxu0 %v1507
        %v8324 = vpop.f32.mrf.mxu0
        %v8325 = vadd.f32 %v8312, %v8324
        %v8326 = vpop.f32.mrf.mxu0
        %8327 = vdwg.mxu0
        %8328 = vmatpush.bf16.msra.mxu0 %v5588
        %8329 = vmatpush.bf16.msra.mxu0 %v5584
        %8330 = vmatpush.bf16.msra.mxu0 %v5580
        %8331 = vmatpush.bf16.msra.mxu0 %v5576
        %8332 = vmatpush.bf16.msra.mxu0 %v5572
        %8333 = vmatpush.bf16.msra.mxu0 %v5568
        %8334 = vmatpush.bf16.msra.mxu0 %v5564
        %8335 = vmatpush.bf16.msra.mxu0 %v5560
        %8336 = vmatmul.bf16.gmra.mxu0 %v1508
        %v8337 = vpop.f32.mrf.mxu0
        %v8338 = vadd.f32 %v8325, %v8337
        %v8339 = vpop.f32.mrf.mxu0
        %8340 = vdwg.mxu0
        %8341 = vmatpush.bf16.msra.mxu0 %v5620
        %8342 = vmatpush.bf16.msra.mxu0 %v5616
        %8343 = vmatpush.bf16.msra.mxu0 %v5612
        %8344 = vmatpush.bf16.msra.mxu0 %v5608
        %8345 = vmatpush.bf16.msra.mxu0 %v5604
        %8346 = vmatpush.bf16.msra.mxu0 %v5600
        %8347 = vmatpush.bf16.msra.mxu0 %v5596
        %8348 = vmatpush.bf16.msra.mxu0 %v5592
        %8349 = vmatmul.bf16.gmra.mxu0 %v1509
        %v8350 = vpop.f32.mrf.mxu0
        %v8351 = vadd.f32 %v8338, %v8350
        %v8352 = vpop.f32.mrf.mxu0
        %8353 = vdwg.mxu0
        %8354 = vmatpush.bf16.msra.mxu0 %v5652
        %8355 = vmatpush.bf16.msra.mxu0 %v5648
        %8356 = vmatpush.bf16.msra.mxu0 %v5644
        %8357 = vmatpush.bf16.msra.mxu0 %v5640
        %8358 = vmatpush.bf16.msra.mxu0 %v5636
        %8359 = vmatpush.bf16.msra.mxu0 %v5632
        %8360 = vmatpush.bf16.msra.mxu0 %v5628
        %8361 = vmatpush.bf16.msra.mxu0 %v5624
        %8362 = vmatmul.bf16.gmra.mxu0 %v1510
        %v8363 = vpop.f32.mrf.mxu0
        %v8364 = vadd.f32 %v8351, %v8363
        %v8365 = vpop.f32.mrf.mxu0
        %8366 = vdwg.mxu0
        %8367 = vmatpush.bf16.msra.mxu0 %v5684
        %8368 = vmatpush.bf16.msra.mxu0 %v5680
        %8369 = vmatpush.bf16.msra.mxu0 %v5676
        %8370 = vmatpush.bf16.msra.mxu0 %v5672
        %8371 = vmatpush.bf16.msra.mxu0 %v5668
        %8372 = vmatpush.bf16.msra.mxu0 %v5664
        %8373 = vmatpush.bf16.msra.mxu0 %v5660
        %8374 = vmatpush.bf16.msra.mxu0 %v5656
        %8375 = vmatmul.bf16.gmra.mxu0 %v1511
        %v8376 = vpop.f32.mrf.mxu0
        %v8377 = vadd.f32 %v8364, %v8376
        %v8378 = vpop.f32.mrf.mxu0
        %8379 = vdwg.mxu0
        %8380 = vmatpush.bf16.msra.mxu0 %v5716
        %8381 = vmatpush.bf16.msra.mxu0 %v5712
        %8382 = vmatpush.bf16.msra.mxu0 %v5708
        %8383 = vmatpush.bf16.msra.mxu0 %v5704
        %8384 = vmatpush.bf16.msra.mxu0 %v5700
        %8385 = vmatpush.bf16.msra.mxu0 %v5696
        %8386 = vmatpush.bf16.msra.mxu0 %v5692
        %8387 = vmatpush.bf16.msra.mxu0 %v5688
        %8388 = vmatmul.bf16.gmra.mxu0 %v1512
        %v8389 = vpop.f32.mrf.mxu0
        %v8390 = vadd.f32 %v8377, %v8389
        %v8391 = vpop.f32.mrf.mxu0
        %8392 = vdwg.mxu0
        %8393 = vmatpush.bf16.msra.mxu0 %v5748
        %8394 = vmatpush.bf16.msra.mxu0 %v5744
        %8395 = vmatpush.bf16.msra.mxu0 %v5740
        %8396 = vmatpush.bf16.msra.mxu0 %v5736
        %8397 = vmatpush.bf16.msra.mxu0 %v5732
        %8398 = vmatpush.bf16.msra.mxu0 %v5728
        %8399 = vmatpush.bf16.msra.mxu0 %v5724
        %8400 = vmatpush.bf16.msra.mxu0 %v5720
        %8401 = vmatmul.bf16.gmra.mxu0 %v1513
        %v8402 = vpop.f32.mrf.mxu0
        %v8403 = vadd.f32 %v8390, %v8402
        %v8404 = vpop.f32.mrf.mxu0
        %8405 = vdwg.mxu0
        %8406 = vmatpush.bf16.msra.mxu0 %v5780
        %8407 = vmatpush.bf16.msra.mxu0 %v5776
        %8408 = vmatpush.bf16.msra.mxu0 %v5772
        %8409 = vmatpush.bf16.msra.mxu0 %v5768
        %8410 = vmatpush.bf16.msra.mxu0 %v5764
        %8411 = vmatpush.bf16.msra.mxu0 %v5760
        %8412 = vmatpush.bf16.msra.mxu0 %v5756
        %8413 = vmatpush.bf16.msra.mxu0 %v5752
        %8414 = vmatmul.bf16.gmra.mxu0 %v1514
        %v8415 = vpop.f32.mrf.mxu0
        %v8416 = vadd.f32 %v8403, %v8415
        %v8417 = vpop.f32.mrf.mxu0
        %8418 = vdwg.mxu0
        %8419 = vmatpush.bf16.msra.mxu0 %v5812
        %8420 = vmatpush.bf16.msra.mxu0 %v5808
        %8421 = vmatpush.bf16.msra.mxu0 %v5804
        %8422 = vmatpush.bf16.msra.mxu0 %v5800
        %8423 = vmatpush.bf16.msra.mxu0 %v5796
        %8424 = vmatpush.bf16.msra.mxu0 %v5792
        %8425 = vmatpush.bf16.msra.mxu0 %v5788
        %8426 = vmatpush.bf16.msra.mxu0 %v5784
        %8427 = vmatmul.bf16.gmra.mxu0 %v1515
        %v8428 = vpop.f32.mrf.mxu0
        %v8429 = vadd.f32 %v8416, %v8428
        %v8430 = vpop.f32.mrf.mxu0
        %8431 = vdwg.mxu0
        %8432 = vmatpush.bf16.msra.mxu0 %v5844
        %8433 = vmatpush.bf16.msra.mxu0 %v5840
        %8434 = vmatpush.bf16.msra.mxu0 %v5836
        %8435 = vmatpush.bf16.msra.mxu0 %v5832
        %8436 = vmatpush.bf16.msra.mxu0 %v5828
        %8437 = vmatpush.bf16.msra.mxu0 %v5824
        %8438 = vmatpush.bf16.msra.mxu0 %v5820
        %8439 = vmatpush.bf16.msra.mxu0 %v5816
        %8440 = vmatmul.bf16.gmra.mxu0 %v1516
        %v8441 = vpop.f32.mrf.mxu0
        %v8442 = vadd.f32 %v8429, %v8441
        %v8443 = vpop.f32.mrf.mxu0
        %8444 = vdwg.mxu0
        %8445 = vmatpush.bf16.msra.mxu0 %v5876
        %8446 = vmatpush.bf16.msra.mxu0 %v5872
        %8447 = vmatpush.bf16.msra.mxu0 %v5868
        %8448 = vmatpush.bf16.msra.mxu0 %v5864
        %8449 = vmatpush.bf16.msra.mxu0 %v5860
        %8450 = vmatpush.bf16.msra.mxu0 %v5856
        %8451 = vmatpush.bf16.msra.mxu0 %v5852
        %8452 = vmatpush.bf16.msra.mxu0 %v5848
        %8453 = vmatmul.bf16.gmra.mxu0 %v1517
        %v8454 = vpop.f32.mrf.mxu0
        %v8455 = vadd.f32 %v8442, %v8454
        %v8456 = vpop.f32.mrf.mxu0
        %8457 = vdwg.mxu0
        %8458 = vmatpush.bf16.msra.mxu0 %v5908
        %8459 = vmatpush.bf16.msra.mxu0 %v5904
        %8460 = vmatpush.bf16.msra.mxu0 %v5900
        %8461 = vmatpush.bf16.msra.mxu0 %v5896
        %8462 = vmatpush.bf16.msra.mxu0 %v5892
        %8463 = vmatpush.bf16.msra.mxu0 %v5888
        %8464 = vmatpush.bf16.msra.mxu0 %v5884
        %8465 = vmatpush.bf16.msra.mxu0 %v5880
        %8466 = vmatmul.bf16.gmra.mxu0 %v1518
        %v8467 = vpop.f32.mrf.mxu0
        %v8468 = vadd.f32 %v8455, %v8467
        %v8469 = vpop.f32.mrf.mxu0
        %8470 = vdwg.mxu0
        %8471 = vmatpush.bf16.msra.mxu0 %v5940
        %8472 = vmatpush.bf16.msra.mxu0 %v5936
        %8473 = vmatpush.bf16.msra.mxu0 %v5932
        %8474 = vmatpush.bf16.msra.mxu0 %v5928
        %8475 = vmatpush.bf16.msra.mxu0 %v5924
        %8476 = vmatpush.bf16.msra.mxu0 %v5920
        %8477 = vmatpush.bf16.msra.mxu0 %v5916
        %8478 = vmatpush.bf16.msra.mxu0 %v5912
        %8479 = vmatmul.bf16.gmra.mxu0 %v1519
        %v8480 = vpop.f32.mrf.mxu0
        %v8481 = vadd.f32 %v8468, %v8480
        %v8482 = vpop.f32.mrf.mxu0
        %8483 = vdwg.mxu0
        %8484 = vmatpush.bf16.msra.mxu0 %v5972
        %8485 = vmatpush.bf16.msra.mxu0 %v5968
        %8486 = vmatpush.bf16.msra.mxu0 %v5964
        %8487 = vmatpush.bf16.msra.mxu0 %v5960
        %8488 = vmatpush.bf16.msra.mxu0 %v5956
        %8489 = vmatpush.bf16.msra.mxu0 %v5952
        %8490 = vmatpush.bf16.msra.mxu0 %v5948
        %8491 = vmatpush.bf16.msra.mxu0 %v5944
        %8492 = vmatmul.bf16.gmra.mxu0 %v1520
        %v8493 = vpop.f32.mrf.mxu0
        %v8494 = vadd.f32 %v8481, %v8493
        %v8495 = vpop.f32.mrf.mxu0
        %8496 = vdwg.mxu0
        %8497 = vmatpush.bf16.msra.mxu0 %v6004
        %8498 = vmatpush.bf16.msra.mxu0 %v6000
        %8499 = vmatpush.bf16.msra.mxu0 %v5996
        %8500 = vmatpush.bf16.msra.mxu0 %v5992
        %8501 = vmatpush.bf16.msra.mxu0 %v5988
        %8502 = vmatpush.bf16.msra.mxu0 %v5984
        %8503 = vmatpush.bf16.msra.mxu0 %v5980
        %8504 = vmatpush.bf16.msra.mxu0 %v5976
        %8505 = vmatmul.bf16.gmra.mxu0 %v1521
        %v8506 = vpop.f32.mrf.mxu0
        %v8507 = vadd.f32 %v8494, %v8506
        %v8508 = vpop.f32.mrf.mxu0
        %8509 = vdwg.mxu0
        %8510 = vmatpush.bf16.msra.mxu0 %v6036
        %8511 = vmatpush.bf16.msra.mxu0 %v6032
        %8512 = vmatpush.bf16.msra.mxu0 %v6028
        %8513 = vmatpush.bf16.msra.mxu0 %v6024
        %8514 = vmatpush.bf16.msra.mxu0 %v6020
        %8515 = vmatpush.bf16.msra.mxu0 %v6016
        %8516 = vmatpush.bf16.msra.mxu0 %v6012
        %8517 = vmatpush.bf16.msra.mxu0 %v6008
        %8518 = vmatmul.bf16.gmra.mxu0 %v1522
        %v8519 = vpop.f32.mrf.mxu0
        %v8520 = vadd.f32 %v8507, %v8519
        %v8521 = vpop.f32.mrf.mxu0
        %8522 = vdwg.mxu0
        %8523 = vmatpush.bf16.msra.mxu0 %v4949
        %8524 = vmatpush.bf16.msra.mxu0 %v4945
        %8525 = vmatpush.bf16.msra.mxu0 %v4941
        %8526 = vmatpush.bf16.msra.mxu0 %v4937
        %8527 = vmatpush.bf16.msra.mxu0 %v4933
        %8528 = vmatpush.bf16.msra.mxu0 %v4929
        %8529 = vmatpush.bf16.msra.mxu0 %v4925
        %8530 = vmatpush.bf16.msra.mxu0 %v4921
        %8531 = vmatmul.bf16.gmra.mxu0 %v1488
        %v8532 = vpop.f32.mrf.mxu0
        %v8533 = vadd.f32 0.0, %v8532
        %v8534 = vpop.f32.mrf.mxu0
        %8535 = vdwg.mxu0
        %8536 = vmatpush.bf16.msra.mxu0 %v4981
        %8537 = vmatpush.bf16.msra.mxu0 %v4977
        %8538 = vmatpush.bf16.msra.mxu0 %v4973
        %8539 = vmatpush.bf16.msra.mxu0 %v4969
        %8540 = vmatpush.bf16.msra.mxu0 %v4965
        %8541 = vmatpush.bf16.msra.mxu0 %v4961
        %8542 = vmatpush.bf16.msra.mxu0 %v4957
        %8543 = vmatpush.bf16.msra.mxu0 %v4953
        %8544 = vmatmul.bf16.gmra.mxu0 %v1489
        %v8545 = vpop.f32.mrf.mxu0
        %v8546 = vadd.f32 %v8533, %v8545
        %v8547 = vpop.f32.mrf.mxu0
        %8548 = vdwg.mxu0
        %8549 = vmatpush.bf16.msra.mxu0 %v5013
        %8550 = vmatpush.bf16.msra.mxu0 %v5009
        %8551 = vmatpush.bf16.msra.mxu0 %v5005
        %8552 = vmatpush.bf16.msra.mxu0 %v5001
        %8553 = vmatpush.bf16.msra.mxu0 %v4997
        %8554 = vmatpush.bf16.msra.mxu0 %v4993
        %8555 = vmatpush.bf16.msra.mxu0 %v4989
        %8556 = vmatpush.bf16.msra.mxu0 %v4985
        %8557 = vmatmul.bf16.gmra.mxu0 %v1490
        %v8558 = vpop.f32.mrf.mxu0
        %v8559 = vadd.f32 %v8546, %v8558
        %v8560 = vpop.f32.mrf.mxu0
        %8561 = vdwg.mxu0
        %8562 = vmatpush.bf16.msra.mxu0 %v5045
        %8563 = vmatpush.bf16.msra.mxu0 %v5041
        %8564 = vmatpush.bf16.msra.mxu0 %v5037
        %8565 = vmatpush.bf16.msra.mxu0 %v5033
        %8566 = vmatpush.bf16.msra.mxu0 %v5029
        %8567 = vmatpush.bf16.msra.mxu0 %v5025
        %8568 = vmatpush.bf16.msra.mxu0 %v5021
        %8569 = vmatpush.bf16.msra.mxu0 %v5017
        %8570 = vmatmul.bf16.gmra.mxu0 %v1491
        %v8571 = vpop.f32.mrf.mxu0
        %v8572 = vadd.f32 %v8559, %v8571
        %v8573 = vpop.f32.mrf.mxu0
        %8574 = vdwg.mxu0
        %8575 = vmatpush.bf16.msra.mxu0 %v5077
        %8576 = vmatpush.bf16.msra.mxu0 %v5073
        %8577 = vmatpush.bf16.msra.mxu0 %v5069
        %8578 = vmatpush.bf16.msra.mxu0 %v5065
        %8579 = vmatpush.bf16.msra.mxu0 %v5061
        %8580 = vmatpush.bf16.msra.mxu0 %v5057
        %8581 = vmatpush.bf16.msra.mxu0 %v5053
        %8582 = vmatpush.bf16.msra.mxu0 %v5049
        %8583 = vmatmul.bf16.gmra.mxu0 %v1492
        %v8584 = vpop.f32.mrf.mxu0
        %v8585 = vadd.f32 %v8572, %v8584
        %v8586 = vpop.f32.mrf.mxu0
        %8587 = vdwg.mxu0
        %8588 = vmatpush.bf16.msra.mxu0 %v5109
        %8589 = vmatpush.bf16.msra.mxu0 %v5105
        %8590 = vmatpush.bf16.msra.mxu0 %v5101
        %8591 = vmatpush.bf16.msra.mxu0 %v5097
        %8592 = vmatpush.bf16.msra.mxu0 %v5093
        %8593 = vmatpush.bf16.msra.mxu0 %v5089
        %8594 = vmatpush.bf16.msra.mxu0 %v5085
        %8595 = vmatpush.bf16.msra.mxu0 %v5081
        %8596 = vmatmul.bf16.gmra.mxu0 %v1493
        %v8597 = vpop.f32.mrf.mxu0
        %v8598 = vadd.f32 %v8585, %v8597
        %v8599 = vpop.f32.mrf.mxu0
        %8600 = vdwg.mxu0
        %8601 = vmatpush.bf16.msra.mxu0 %v5141
        %8602 = vmatpush.bf16.msra.mxu0 %v5137
        %8603 = vmatpush.bf16.msra.mxu0 %v5133
        %8604 = vmatpush.bf16.msra.mxu0 %v5129
        %8605 = vmatpush.bf16.msra.mxu0 %v5125
        %8606 = vmatpush.bf16.msra.mxu0 %v5121
        %8607 = vmatpush.bf16.msra.mxu0 %v5117
        %8608 = vmatpush.bf16.msra.mxu0 %v5113
        %8609 = vmatmul.bf16.gmra.mxu0 %v1494
        %v8610 = vpop.f32.mrf.mxu0
        %v8611 = vadd.f32 %v8598, %v8610
        %v8612 = vpop.f32.mrf.mxu0
        %8613 = vdwg.mxu0
        %8614 = vmatpush.bf16.msra.mxu0 %v5173
        %8615 = vmatpush.bf16.msra.mxu0 %v5169
        %8616 = vmatpush.bf16.msra.mxu0 %v5165
        %8617 = vmatpush.bf16.msra.mxu0 %v5161
        %8618 = vmatpush.bf16.msra.mxu0 %v5157
        %8619 = vmatpush.bf16.msra.mxu0 %v5153
        %8620 = vmatpush.bf16.msra.mxu0 %v5149
        %8621 = vmatpush.bf16.msra.mxu0 %v5145
        %8622 = vmatmul.bf16.gmra.mxu0 %v1495
        %v8623 = vpop.f32.mrf.mxu0
        %v8624 = vadd.f32 %v8611, %v8623
        %v8625 = vpop.f32.mrf.mxu0
        %8626 = vdwg.mxu0
        %8627 = vmatpush.bf16.msra.mxu0 %v5205
        %8628 = vmatpush.bf16.msra.mxu0 %v5201
        %8629 = vmatpush.bf16.msra.mxu0 %v5197
        %8630 = vmatpush.bf16.msra.mxu0 %v5193
        %8631 = vmatpush.bf16.msra.mxu0 %v5189
        %8632 = vmatpush.bf16.msra.mxu0 %v5185
        %8633 = vmatpush.bf16.msra.mxu0 %v5181
        %8634 = vmatpush.bf16.msra.mxu0 %v5177
        %8635 = vmatmul.bf16.gmra.mxu0 %v1496
        %v8636 = vpop.f32.mrf.mxu0
        %v8637 = vadd.f32 %v8624, %v8636
        %v8638 = vpop.f32.mrf.mxu0
        %8639 = vdwg.mxu0
        %8640 = vmatpush.bf16.msra.mxu0 %v5237
        %8641 = vmatpush.bf16.msra.mxu0 %v5233
        %8642 = vmatpush.bf16.msra.mxu0 %v5229
        %8643 = vmatpush.bf16.msra.mxu0 %v5225
        %8644 = vmatpush.bf16.msra.mxu0 %v5221
        %8645 = vmatpush.bf16.msra.mxu0 %v5217
        %8646 = vmatpush.bf16.msra.mxu0 %v5213
        %8647 = vmatpush.bf16.msra.mxu0 %v5209
        %8648 = vmatmul.bf16.gmra.mxu0 %v1497
        %v8649 = vpop.f32.mrf.mxu0
        %v8650 = vadd.f32 %v8637, %v8649
        %v8651 = vpop.f32.mrf.mxu0
        %8652 = vdwg.mxu0
        %8653 = vmatpush.bf16.msra.mxu0 %v5269
        %8654 = vmatpush.bf16.msra.mxu0 %v5265
        %8655 = vmatpush.bf16.msra.mxu0 %v5261
        %8656 = vmatpush.bf16.msra.mxu0 %v5257
        %8657 = vmatpush.bf16.msra.mxu0 %v5253
        %8658 = vmatpush.bf16.msra.mxu0 %v5249
        %8659 = vmatpush.bf16.msra.mxu0 %v5245
        %8660 = vmatpush.bf16.msra.mxu0 %v5241
        %8661 = vmatmul.bf16.gmra.mxu0 %v1498
        %v8662 = vpop.f32.mrf.mxu0
        %v8663 = vadd.f32 %v8650, %v8662
        %v8664 = vpop.f32.mrf.mxu0
        %8665 = vdwg.mxu0
        %8666 = vmatpush.bf16.msra.mxu0 %v5301
        %8667 = vmatpush.bf16.msra.mxu0 %v5297
        %8668 = vmatpush.bf16.msra.mxu0 %v5293
        %8669 = vmatpush.bf16.msra.mxu0 %v5289
        %8670 = vmatpush.bf16.msra.mxu0 %v5285
        %8671 = vmatpush.bf16.msra.mxu0 %v5281
        %8672 = vmatpush.bf16.msra.mxu0 %v5277
        %8673 = vmatpush.bf16.msra.mxu0 %v5273
        %8674 = vmatmul.bf16.gmra.mxu0 %v1499
        %v8675 = vpop.f32.mrf.mxu0
        %v8676 = vadd.f32 %v8663, %v8675
        %v8677 = vpop.f32.mrf.mxu0
        %8678 = vdwg.mxu0
        %8679 = vmatpush.bf16.msra.mxu0 %v5333
        %8680 = vmatpush.bf16.msra.mxu0 %v5329
        %8681 = vmatpush.bf16.msra.mxu0 %v5325
        %8682 = vmatpush.bf16.msra.mxu0 %v5321
        %8683 = vmatpush.bf16.msra.mxu0 %v5317
        %8684 = vmatpush.bf16.msra.mxu0 %v5313
        %8685 = vmatpush.bf16.msra.mxu0 %v5309
        %8686 = vmatpush.bf16.msra.mxu0 %v5305
        %8687 = vmatmul.bf16.gmra.mxu0 %v1500
        %v8688 = vpop.f32.mrf.mxu0
        %v8689 = vadd.f32 %v8676, %v8688
        %v8690 = vpop.f32.mrf.mxu0
        %8691 = vdwg.mxu0
        %8692 = vmatpush.bf16.msra.mxu0 %v5365
        %8693 = vmatpush.bf16.msra.mxu0 %v5361
        %8694 = vmatpush.bf16.msra.mxu0 %v5357
        %8695 = vmatpush.bf16.msra.mxu0 %v5353
        %8696 = vmatpush.bf16.msra.mxu0 %v5349
        %8697 = vmatpush.bf16.msra.mxu0 %v5345
        %8698 = vmatpush.bf16.msra.mxu0 %v5341
        %8699 = vmatpush.bf16.msra.mxu0 %v5337
        %8700 = vmatmul.bf16.gmra.mxu0 %v1501
        %v8701 = vpop.f32.mrf.mxu0
        %v8702 = vadd.f32 %v8689, %v8701
        %v8703 = vpop.f32.mrf.mxu0
        %8704 = vdwg.mxu0
        %8705 = vmatpush.bf16.msra.mxu0 %v5397
        %8706 = vmatpush.bf16.msra.mxu0 %v5393
        %8707 = vmatpush.bf16.msra.mxu0 %v5389
        %8708 = vmatpush.bf16.msra.mxu0 %v5385
        %8709 = vmatpush.bf16.msra.mxu0 %v5381
        %8710 = vmatpush.bf16.msra.mxu0 %v5377
        %8711 = vmatpush.bf16.msra.mxu0 %v5373
        %8712 = vmatpush.bf16.msra.mxu0 %v5369
        %8713 = vmatmul.bf16.gmra.mxu0 %v1502
        %v8714 = vpop.f32.mrf.mxu0
        %v8715 = vadd.f32 %v8702, %v8714
        %v8716 = vpop.f32.mrf.mxu0
        %8717 = vdwg.mxu0
        %8718 = vmatpush.bf16.msra.mxu0 %v5429
        %8719 = vmatpush.bf16.msra.mxu0 %v5425
        %8720 = vmatpush.bf16.msra.mxu0 %v5421
        %8721 = vmatpush.bf16.msra.mxu0 %v5417
        %8722 = vmatpush.bf16.msra.mxu0 %v5413
        %8723 = vmatpush.bf16.msra.mxu0 %v5409
        %8724 = vmatpush.bf16.msra.mxu0 %v5405
        %8725 = vmatpush.bf16.msra.mxu0 %v5401
        %8726 = vmatmul.bf16.gmra.mxu0 %v1503
        %v8727 = vpop.f32.mrf.mxu0
        %v8728 = vadd.f32 %v8715, %v8727
        %v8729 = vpop.f32.mrf.mxu0
        %8730 = vdwg.mxu0
        %8731 = vmatpush.bf16.msra.mxu0 %v5461
        %8732 = vmatpush.bf16.msra.mxu0 %v5457
        %8733 = vmatpush.bf16.msra.mxu0 %v5453
        %8734 = vmatpush.bf16.msra.mxu0 %v5449
        %8735 = vmatpush.bf16.msra.mxu0 %v5445
        %8736 = vmatpush.bf16.msra.mxu0 %v5441
        %8737 = vmatpush.bf16.msra.mxu0 %v5437
        %8738 = vmatpush.bf16.msra.mxu0 %v5433
        %8739 = vmatmul.bf16.gmra.mxu0 %v1504
        %v8740 = vpop.f32.mrf.mxu0
        %v8741 = vadd.f32 %v8728, %v8740
        %v8742 = vpop.f32.mrf.mxu0
        %8743 = vdwg.mxu0
        %8744 = vmatpush.bf16.msra.mxu0 %v5493
        %8745 = vmatpush.bf16.msra.mxu0 %v5489
        %8746 = vmatpush.bf16.msra.mxu0 %v5485
        %8747 = vmatpush.bf16.msra.mxu0 %v5481
        %8748 = vmatpush.bf16.msra.mxu0 %v5477
        %8749 = vmatpush.bf16.msra.mxu0 %v5473
        %8750 = vmatpush.bf16.msra.mxu0 %v5469
        %8751 = vmatpush.bf16.msra.mxu0 %v5465
        %8752 = vmatmul.bf16.gmra.mxu0 %v1505
        %v8753 = vpop.f32.mrf.mxu0
        %v8754 = vadd.f32 %v8741, %v8753
        %v8755 = vpop.f32.mrf.mxu0
        %8756 = vdwg.mxu0
        %8757 = vmatpush.bf16.msra.mxu0 %v5525
        %8758 = vmatpush.bf16.msra.mxu0 %v5521
        %8759 = vmatpush.bf16.msra.mxu0 %v5517
        %8760 = vmatpush.bf16.msra.mxu0 %v5513
        %8761 = vmatpush.bf16.msra.mxu0 %v5509
        %8762 = vmatpush.bf16.msra.mxu0 %v5505
        %8763 = vmatpush.bf16.msra.mxu0 %v5501
        %8764 = vmatpush.bf16.msra.mxu0 %v5497
        %8765 = vmatmul.bf16.gmra.mxu0 %v1506
        %v8766 = vpop.f32.mrf.mxu0
        %v8767 = vadd.f32 %v8754, %v8766
        %v8768 = vpop.f32.mrf.mxu0
        %8769 = vdwg.mxu0
        %8770 = vmatpush.bf16.msra.mxu0 %v5557
        %8771 = vmatpush.bf16.msra.mxu0 %v5553
        %8772 = vmatpush.bf16.msra.mxu0 %v5549
        %8773 = vmatpush.bf16.msra.mxu0 %v5545
        %8774 = vmatpush.bf16.msra.mxu0 %v5541
        %8775 = vmatpush.bf16.msra.mxu0 %v5537
        %8776 = vmatpush.bf16.msra.mxu0 %v5533
        %8777 = vmatpush.bf16.msra.mxu0 %v5529
        %8778 = vmatmul.bf16.gmra.mxu0 %v1507
        %v8779 = vpop.f32.mrf.mxu0
        %v8780 = vadd.f32 %v8767, %v8779
        %v8781 = vpop.f32.mrf.mxu0
        %8782 = vdwg.mxu0
        %8783 = vmatpush.bf16.msra.mxu0 %v5589
        %8784 = vmatpush.bf16.msra.mxu0 %v5585
        %8785 = vmatpush.bf16.msra.mxu0 %v5581
        %8786 = vmatpush.bf16.msra.mxu0 %v5577
        %8787 = vmatpush.bf16.msra.mxu0 %v5573
        %8788 = vmatpush.bf16.msra.mxu0 %v5569
        %8789 = vmatpush.bf16.msra.mxu0 %v5565
        %8790 = vmatpush.bf16.msra.mxu0 %v5561
        %8791 = vmatmul.bf16.gmra.mxu0 %v1508
        %v8792 = vpop.f32.mrf.mxu0
        %v8793 = vadd.f32 %v8780, %v8792
        %v8794 = vpop.f32.mrf.mxu0
        %8795 = vdwg.mxu0
        %8796 = vmatpush.bf16.msra.mxu0 %v5621
        %8797 = vmatpush.bf16.msra.mxu0 %v5617
        %8798 = vmatpush.bf16.msra.mxu0 %v5613
        %8799 = vmatpush.bf16.msra.mxu0 %v5609
        %8800 = vmatpush.bf16.msra.mxu0 %v5605
        %8801 = vmatpush.bf16.msra.mxu0 %v5601
        %8802 = vmatpush.bf16.msra.mxu0 %v5597
        %8803 = vmatpush.bf16.msra.mxu0 %v5593
        %8804 = vmatmul.bf16.gmra.mxu0 %v1509
        %v8805 = vpop.f32.mrf.mxu0
        %v8806 = vadd.f32 %v8793, %v8805
        %v8807 = vpop.f32.mrf.mxu0
        %8808 = vdwg.mxu0
        %8809 = vmatpush.bf16.msra.mxu0 %v5653
        %8810 = vmatpush.bf16.msra.mxu0 %v5649
        %8811 = vmatpush.bf16.msra.mxu0 %v5645
        %8812 = vmatpush.bf16.msra.mxu0 %v5641
        %8813 = vmatpush.bf16.msra.mxu0 %v5637
        %8814 = vmatpush.bf16.msra.mxu0 %v5633
        %8815 = vmatpush.bf16.msra.mxu0 %v5629
        %8816 = vmatpush.bf16.msra.mxu0 %v5625
        %8817 = vmatmul.bf16.gmra.mxu0 %v1510
        %v8818 = vpop.f32.mrf.mxu0
        %v8819 = vadd.f32 %v8806, %v8818
        %v8820 = vpop.f32.mrf.mxu0
        %8821 = vdwg.mxu0
        %8822 = vmatpush.bf16.msra.mxu0 %v5685
        %8823 = vmatpush.bf16.msra.mxu0 %v5681
        %8824 = vmatpush.bf16.msra.mxu0 %v5677
        %8825 = vmatpush.bf16.msra.mxu0 %v5673
        %8826 = vmatpush.bf16.msra.mxu0 %v5669
        %8827 = vmatpush.bf16.msra.mxu0 %v5665
        %8828 = vmatpush.bf16.msra.mxu0 %v5661
        %8829 = vmatpush.bf16.msra.mxu0 %v5657
        %8830 = vmatmul.bf16.gmra.mxu0 %v1511
        %v8831 = vpop.f32.mrf.mxu0
        %v8832 = vadd.f32 %v8819, %v8831
        %v8833 = vpop.f32.mrf.mxu0
        %8834 = vdwg.mxu0
        %8835 = vmatpush.bf16.msra.mxu0 %v5717
        %8836 = vmatpush.bf16.msra.mxu0 %v5713
        %8837 = vmatpush.bf16.msra.mxu0 %v5709
        %8838 = vmatpush.bf16.msra.mxu0 %v5705
        %8839 = vmatpush.bf16.msra.mxu0 %v5701
        %8840 = vmatpush.bf16.msra.mxu0 %v5697
        %8841 = vmatpush.bf16.msra.mxu0 %v5693
        %8842 = vmatpush.bf16.msra.mxu0 %v5689
        %8843 = vmatmul.bf16.gmra.mxu0 %v1512
        %v8844 = vpop.f32.mrf.mxu0
        %v8845 = vadd.f32 %v8832, %v8844
        %v8846 = vpop.f32.mrf.mxu0
        %8847 = vdwg.mxu0
        %8848 = vmatpush.bf16.msra.mxu0 %v5749
        %8849 = vmatpush.bf16.msra.mxu0 %v5745
        %8850 = vmatpush.bf16.msra.mxu0 %v5741
        %8851 = vmatpush.bf16.msra.mxu0 %v5737
        %8852 = vmatpush.bf16.msra.mxu0 %v5733
        %8853 = vmatpush.bf16.msra.mxu0 %v5729
        %8854 = vmatpush.bf16.msra.mxu0 %v5725
        %8855 = vmatpush.bf16.msra.mxu0 %v5721
        %8856 = vmatmul.bf16.gmra.mxu0 %v1513
        %v8857 = vpop.f32.mrf.mxu0
        %v8858 = vadd.f32 %v8845, %v8857
        %v8859 = vpop.f32.mrf.mxu0
        %8860 = vdwg.mxu0
        %8861 = vmatpush.bf16.msra.mxu0 %v5781
        %8862 = vmatpush.bf16.msra.mxu0 %v5777
        %8863 = vmatpush.bf16.msra.mxu0 %v5773
        %8864 = vmatpush.bf16.msra.mxu0 %v5769
        %8865 = vmatpush.bf16.msra.mxu0 %v5765
        %8866 = vmatpush.bf16.msra.mxu0 %v5761
        %8867 = vmatpush.bf16.msra.mxu0 %v5757
        %8868 = vmatpush.bf16.msra.mxu0 %v5753
        %8869 = vmatmul.bf16.gmra.mxu0 %v1514
        %v8870 = vpop.f32.mrf.mxu0
        %v8871 = vadd.f32 %v8858, %v8870
        %v8872 = vpop.f32.mrf.mxu0
        %8873 = vdwg.mxu0
        %8874 = vmatpush.bf16.msra.mxu0 %v5813
        %8875 = vmatpush.bf16.msra.mxu0 %v5809
        %8876 = vmatpush.bf16.msra.mxu0 %v5805
        %8877 = vmatpush.bf16.msra.mxu0 %v5801
        %8878 = vmatpush.bf16.msra.mxu0 %v5797
        %8879 = vmatpush.bf16.msra.mxu0 %v5793
        %8880 = vmatpush.bf16.msra.mxu0 %v5789
        %8881 = vmatpush.bf16.msra.mxu0 %v5785
        %8882 = vmatmul.bf16.gmra.mxu0 %v1515
        %v8883 = vpop.f32.mrf.mxu0
        %v8884 = vadd.f32 %v8871, %v8883
        %v8885 = vpop.f32.mrf.mxu0
        %8886 = vdwg.mxu0
        %8887 = vmatpush.bf16.msra.mxu0 %v5845
        %8888 = vmatpush.bf16.msra.mxu0 %v5841
        %8889 = vmatpush.bf16.msra.mxu0 %v5837
        %8890 = vmatpush.bf16.msra.mxu0 %v5833
        %8891 = vmatpush.bf16.msra.mxu0 %v5829
        %8892 = vmatpush.bf16.msra.mxu0 %v5825
        %8893 = vmatpush.bf16.msra.mxu0 %v5821
        %8894 = vmatpush.bf16.msra.mxu0 %v5817
        %8895 = vmatmul.bf16.gmra.mxu0 %v1516
        %v8896 = vpop.f32.mrf.mxu0
        %v8897 = vadd.f32 %v8884, %v8896
        %v8898 = vpop.f32.mrf.mxu0
        %8899 = vdwg.mxu0
        %8900 = vmatpush.bf16.msra.mxu0 %v5877
        %8901 = vmatpush.bf16.msra.mxu0 %v5873
        %8902 = vmatpush.bf16.msra.mxu0 %v5869
        %8903 = vmatpush.bf16.msra.mxu0 %v5865
        %8904 = vmatpush.bf16.msra.mxu0 %v5861
        %8905 = vmatpush.bf16.msra.mxu0 %v5857
        %8906 = vmatpush.bf16.msra.mxu0 %v5853
        %8907 = vmatpush.bf16.msra.mxu0 %v5849
        %8908 = vmatmul.bf16.gmra.mxu0 %v1517
        %v8909 = vpop.f32.mrf.mxu0
        %v8910 = vadd.f32 %v8897, %v8909
        %v8911 = vpop.f32.mrf.mxu0
        %8912 = vdwg.mxu0
        %8913 = vmatpush.bf16.msra.mxu0 %v5909
        %8914 = vmatpush.bf16.msra.mxu0 %v5905
        %8915 = vmatpush.bf16.msra.mxu0 %v5901
        %8916 = vmatpush.bf16.msra.mxu0 %v5897
        %8917 = vmatpush.bf16.msra.mxu0 %v5893
        %8918 = vmatpush.bf16.msra.mxu0 %v5889
        %8919 = vmatpush.bf16.msra.mxu0 %v5885
        %8920 = vmatpush.bf16.msra.mxu0 %v5881
        %8921 = vmatmul.bf16.gmra.mxu0 %v1518
        %v8922 = vpop.f32.mrf.mxu0
        %v8923 = vadd.f32 %v8910, %v8922
        %v8924 = vpop.f32.mrf.mxu0
        %8925 = vdwg.mxu0
        %8926 = vmatpush.bf16.msra.mxu0 %v5941
        %8927 = vmatpush.bf16.msra.mxu0 %v5937
        %8928 = vmatpush.bf16.msra.mxu0 %v5933
        %8929 = vmatpush.bf16.msra.mxu0 %v5929
        %8930 = vmatpush.bf16.msra.mxu0 %v5925
        %8931 = vmatpush.bf16.msra.mxu0 %v5921
        %8932 = vmatpush.bf16.msra.mxu0 %v5917
        %8933 = vmatpush.bf16.msra.mxu0 %v5913
        %8934 = vmatmul.bf16.gmra.mxu0 %v1519
        %v8935 = vpop.f32.mrf.mxu0
        %v8936 = vadd.f32 %v8923, %v8935
        %v8937 = vpop.f32.mrf.mxu0
        %8938 = vdwg.mxu0
        %8939 = vmatpush.bf16.msra.mxu0 %v5973
        %8940 = vmatpush.bf16.msra.mxu0 %v5969
        %8941 = vmatpush.bf16.msra.mxu0 %v5965
        %8942 = vmatpush.bf16.msra.mxu0 %v5961
        %8943 = vmatpush.bf16.msra.mxu0 %v5957
        %8944 = vmatpush.bf16.msra.mxu0 %v5953
        %8945 = vmatpush.bf16.msra.mxu0 %v5949
        %8946 = vmatpush.bf16.msra.mxu0 %v5945
        %8947 = vmatmul.bf16.gmra.mxu0 %v1520
        %v8948 = vpop.f32.mrf.mxu0
        %v8949 = vadd.f32 %v8936, %v8948
        %v8950 = vpop.f32.mrf.mxu0
        %8951 = vdwg.mxu0
        %8952 = vmatpush.bf16.msra.mxu0 %v6005
        %8953 = vmatpush.bf16.msra.mxu0 %v6001
        %8954 = vmatpush.bf16.msra.mxu0 %v5997
        %8955 = vmatpush.bf16.msra.mxu0 %v5993
        %8956 = vmatpush.bf16.msra.mxu0 %v5989
        %8957 = vmatpush.bf16.msra.mxu0 %v5985
        %8958 = vmatpush.bf16.msra.mxu0 %v5981
        %8959 = vmatpush.bf16.msra.mxu0 %v5977
        %8960 = vmatmul.bf16.gmra.mxu0 %v1521
        %v8961 = vpop.f32.mrf.mxu0
        %v8962 = vadd.f32 %v8949, %v8961
        %v8963 = vpop.f32.mrf.mxu0
        %8964 = vdwg.mxu0
        %8965 = vmatpush.bf16.msra.mxu0 %v6037
        %8966 = vmatpush.bf16.msra.mxu0 %v6033
        %8967 = vmatpush.bf16.msra.mxu0 %v6029
        %8968 = vmatpush.bf16.msra.mxu0 %v6025
        %8969 = vmatpush.bf16.msra.mxu0 %v6021
        %8970 = vmatpush.bf16.msra.mxu0 %v6017
        %8971 = vmatpush.bf16.msra.mxu0 %v6013
        %8972 = vmatpush.bf16.msra.mxu0 %v6009
        %8973 = vmatmul.bf16.gmra.mxu0 %v1522
        %v8974 = vpop.f32.mrf.mxu0
        %v8975 = vadd.f32 %v8962, %v8974
        %v8976 = vpop.f32.mrf.mxu0
        %8977 = vdwg.mxu0
        %v8978 = vadd.f32 %v293, %v7610
        %v8979 = vadd.f32 %v294, %v8065
        %v8980 = vadd.f32 %v295, %v8520
        %v8981 = vadd.f32 %v296, %v8975
        %8982 = vst [vmem:[#allocation2] sm:$0xff] %v8978
        %8983 = vst [vmem:[#allocation2 + $0x8] sm:$0xff] %v8979
        %8984 = vst [vmem:[#allocation2 + $0x10] sm:$0xff] %v8980
        %8985 = vst [vmem:[#allocation2 + $0x18] sm:$0xff] %v8981
        %p8986 = scmp.eq.s32.totalorder %s20, 1
        // Predicated region
        $region57: #{critic_heads.1} parent=39 // pred_check
          %p8987 = pneg %p8986
        $region58: #{critic_heads.1} parent=39 // pred_check_branch
          %8989 = sbr.rel (%p8987) target = $region60
        $region59: #{critic_heads.1} parent=39 // pred_region
          %v8990 = vld [vmem:[#allocation2] sm:$0xff]
          %v8991 = vld [vmem:[#allocation2 + $0x8] sm:$0xff]
          %v8992 = vld [vmem:[#allocation2 + $0x10] sm:$0xff]
          %v8993 = vld [vmem:[#allocation2 + $0x18] sm:$0xff]
          %v8994 = vld [vmem:[#allocation5] sm:$0xf]
          %v8996 = vperm.slane %v8994, 0
          %v8997 = vperm.slane %v8994, 1
          %v8998 = vperm.slane %v8994, 2
          %v8999 = vperm.slane %v8994, 3
          %v9004 = vadd.f32 %v8990, %v8996
          %v9005 = vadd.f32 %v8991, %v8997
          %v9006 = vadd.f32 %v8992, %v8998
          %v9007 = vadd.f32 %v8993, %v8999
          %v9008 = vmax.f32 %v9004, 0.0
          %v9009 = vmax.f32 %v9005, 0.0
          %v9010 = vmax.f32 %v9006, 0.0
          %v9011 = vmax.f32 %v9007, 0.0
          %v9012 = vld [vmem:[%s3] sm:$0xff]
          %v9013 = vld [vmem:[%s3 + $0x8] sm:$0xff]
          %v9014 = vld [vmem:[%s3 + $0x10] sm:$0xff]
          %v9015 = vld [vmem:[%s3 + $0x18] sm:$0xff]
          %v9016 = vld [vmem:[%s3 + $0x20] sm:$0xff]
          %v9017 = vld [vmem:[%s3 + $0x28] sm:$0xff]
          %v9018 = vld [vmem:[%s3 + $0x30] sm:$0xff]
          %v9019 = vld [vmem:[%s3 + $0x38] sm:$0xff]
          %v9020 = vld [vmem:[%s3 + $0x40] sm:$0xff]
          %v9021 = vld [vmem:[%s3 + $0x48] sm:$0xff]
          %v9022 = vld [vmem:[%s3 + $0x50] sm:$0xff]
          %v9023 = vld [vmem:[%s3 + $0x58] sm:$0xff]
          %v9024 = vld [vmem:[%s3 + $0x60] sm:$0xff]
          %v9025 = vld [vmem:[%s3 + $0x68] sm:$0xff]
          %v9026 = vld [vmem:[%s3 + $0x70] sm:$0xff]
          %v9027 = vld [vmem:[%s3 + $0x78] sm:$0xff]
          %v9028 = vld [vmem:[%s3 + $0x80] sm:$0xff]
          %v9029 = vld [vmem:[%s3 + $0x88] sm:$0xff]
          %v9030 = vld [vmem:[%s3 + $0x90] sm:$0xff]
          %v9031 = vld [vmem:[%s3 + $0x98] sm:$0xff]
          %v9032 = vld [vmem:[%s3 + $0xa0] sm:$0xff]
          %v9033 = vld [vmem:[%s3 + $0xa8] sm:$0xff]
          %v9034 = vld [vmem:[%s3 + $0xb0] sm:$0xff]
          %v9035 = vld [vmem:[%s3 + $0xb8] sm:$0xff]
          %v9036 = vld [vmem:[%s3 + $0xc0] sm:$0xff]
          %v9037 = vld [vmem:[%s3 + $0xc8] sm:$0xff]
          %v9038 = vld [vmem:[%s3 + $0xd0] sm:$0xff]
          %v9039 = vld [vmem:[%s3 + $0xd8] sm:$0xff]
          %v9040 = vld [vmem:[%s3 + $0xe0] sm:$0xff]
          %v9041 = vld [vmem:[%s3 + $0xe8] sm:$0xff]
          %v9042 = vld [vmem:[%s3 + $0xf0] sm:$0xff]
          %v9043 = vld [vmem:[%s3 + $0xf8] sm:$0xff]
          %v9044 = vld [vmem:[%s3 + $0x100] sm:$0xff]
          %v9045 = vld [vmem:[%s3 + $0x108] sm:$0xff]
          %v9046 = vld [vmem:[%s3 + $0x110] sm:$0xff]
          %v9047 = vld [vmem:[%s3 + $0x118] sm:$0xff]
          %v9048 = vld [vmem:[%s3 + $0x120] sm:$0xff]
          %v9049 = vld [vmem:[%s3 + $0x128] sm:$0xff]
          %v9050 = vld [vmem:[%s3 + $0x130] sm:$0xff]
          %v9051 = vld [vmem:[%s3 + $0x138] sm:$0xff]
          %v9052 = vld [vmem:[%s3 + $0x140] sm:$0xff]
          %v9053 = vld [vmem:[%s3 + $0x148] sm:$0xff]
          %v9054 = vld [vmem:[%s3 + $0x150] sm:$0xff]
          %v9055 = vld [vmem:[%s3 + $0x158] sm:$0xff]
          %v9056 = vld [vmem:[%s3 + $0x160] sm:$0xff]
          %v9057 = vld [vmem:[%s3 + $0x168] sm:$0xff]
          %v9058 = vld [vmem:[%s3 + $0x170] sm:$0xff]
          %v9059 = vld [vmem:[%s3 + $0x178] sm:$0xff]
          %v9060 = vld [vmem:[%s3 + $0x180] sm:$0xff]
          %v9061 = vld [vmem:[%s3 + $0x188] sm:$0xff]
          %v9062 = vld [vmem:[%s3 + $0x190] sm:$0xff]
          %v9063 = vld [vmem:[%s3 + $0x198] sm:$0xff]
          %v9064 = vld [vmem:[%s3 + $0x1a0] sm:$0xff]
          %v9065 = vld [vmem:[%s3 + $0x1a8] sm:$0xff]
          %v9066 = vld [vmem:[%s3 + $0x1b0] sm:$0xff]
          %v9067 = vld [vmem:[%s3 + $0x1b8] sm:$0xff]
          %v9068 = vld [vmem:[%s3 + $0x1c0] sm:$0xff]
          %v9069 = vld [vmem:[%s3 + $0x1c8] sm:$0xff]
          %v9070 = vld [vmem:[%s3 + $0x1d0] sm:$0xff]
          %v9071 = vld [vmem:[%s3 + $0x1d8] sm:$0xff]
          %v9072 = vld [vmem:[%s3 + $0x1e0] sm:$0xff]
          %v9073 = vld [vmem:[%s3 + $0x1e8] sm:$0xff]
          %v9074 = vld [vmem:[%s3 + $0x1f0] sm:$0xff]
          %v9075 = vld [vmem:[%s3 + $0x1f8] sm:$0xff]
          %v9076 = vld [vmem:[#allocation7] sm:$0x1]
          %v9078 = vperm.slane %v9076, 0
          %9080 = vmatpush.msra.mxu0 %v9027
          %9081 = vmatpush.msra.mxu0 %v9026
          %9082 = vmatpush.msra.mxu0 %v9025
          %9083 = vmatpush.msra.mxu0 %v9024
          %9084 = vmatpush.msra.mxu0 %v9023
          %9085 = vmatpush.msra.mxu0 %v9022
          %9086 = vmatpush.msra.mxu0 %v9021
          %9087 = vmatpush.msra.mxu0 %v9020
          %9088 = vmatpush.msra.mxu0 %v9019
          %9089 = vmatpush.msra.mxu0 %v9018
          %9090 = vmatpush.msra.mxu0 %v9017
          %9091 = vmatpush.msra.mxu0 %v9016
          %9092 = vmatpush.msra.mxu0 %v9015
          %9093 = vmatpush.msra.mxu0 %v9014
          %9094 = vmatpush.msra.mxu0 %v9013
          %9095 = vmatpush.msra.mxu0 %v9012
          %9096 = vmatmul.f32.gmra.mxu0 %v9008
          %v9097 = vpop.f32.mrf.mxu0
          %v9098 = vadd.f32 %v9078, %v9097
          %9099 = vdwg.mxu0
          %9100 = vmatpush.msra.mxu0 %v9043
          %9101 = vmatpush.msra.mxu0 %v9042
          %9102 = vmatpush.msra.mxu0 %v9041
          %9103 = vmatpush.msra.mxu0 %v9040
          %9104 = vmatpush.msra.mxu0 %v9039
          %9105 = vmatpush.msra.mxu0 %v9038
          %9106 = vmatpush.msra.mxu0 %v9037
          %9107 = vmatpush.msra.mxu0 %v9036
          %9108 = vmatpush.msra.mxu0 %v9035
          %9109 = vmatpush.msra.mxu0 %v9034
          %9110 = vmatpush.msra.mxu0 %v9033
          %9111 = vmatpush.msra.mxu0 %v9032
          %9112 = vmatpush.msra.mxu0 %v9031
          %9113 = vmatpush.msra.mxu0 %v9030
          %9114 = vmatpush.msra.mxu0 %v9029
          %9115 = vmatpush.msra.mxu0 %v9028
          %9116 = vmatmul.f32.gmra.mxu0 %v9009
          %v9117 = vpop.f32.mrf.mxu0
          %v9118 = vadd.f32 %v9098, %v9117
          %9119 = vdwg.mxu0
          %9120 = vmatpush.msra.mxu0 %v9059
          %9121 = vmatpush.msra.mxu0 %v9058
          %9122 = vmatpush.msra.mxu0 %v9057
          %9123 = vmatpush.msra.mxu0 %v9056
          %9124 = vmatpush.msra.mxu0 %v9055
          %9125 = vmatpush.msra.mxu0 %v9054
          %9126 = vmatpush.msra.mxu0 %v9053
          %9127 = vmatpush.msra.mxu0 %v9052
          %9128 = vmatpush.msra.mxu0 %v9051
          %9129 = vmatpush.msra.mxu0 %v9050
          %9130 = vmatpush.msra.mxu0 %v9049
          %9131 = vmatpush.msra.mxu0 %v9048
          %9132 = vmatpush.msra.mxu0 %v9047
          %9133 = vmatpush.msra.mxu0 %v9046
          %9134 = vmatpush.msra.mxu0 %v9045
          %9135 = vmatpush.msra.mxu0 %v9044
          %9136 = vmatmul.f32.gmra.mxu0 %v9010
          %v9137 = vpop.f32.mrf.mxu0
          %v9138 = vadd.f32 %v9118, %v9137
          %9139 = vdwg.mxu0
          %9140 = vmatpush.msra.mxu0 %v9075
          %9141 = vmatpush.msra.mxu0 %v9074
          %9142 = vmatpush.msra.mxu0 %v9073
          %9143 = vmatpush.msra.mxu0 %v9072
          %9144 = vmatpush.msra.mxu0 %v9071
          %9145 = vmatpush.msra.mxu0 %v9070
          %9146 = vmatpush.msra.mxu0 %v9069
          %9147 = vmatpush.msra.mxu0 %v9068
          %9148 = vmatpush.msra.mxu0 %v9067
          %9149 = vmatpush.msra.mxu0 %v9066
          %9150 = vmatpush.msra.mxu0 %v9065
          %9151 = vmatpush.msra.mxu0 %v9064
          %9152 = vmatpush.msra.mxu0 %v9063
          %9153 = vmatpush.msra.mxu0 %v9062
          %9154 = vmatpush.msra.mxu0 %v9061
          %9155 = vmatpush.msra.mxu0 %v9060
          %9156 = vmatmul.f32.gmra.mxu0 %v9011
          %v9157 = vpop.f32.mrf.mxu0
          %v9158 = vadd.f32 %v9138, %v9157
          %9159 = vdwg.mxu0
          %vm9160 = vcmask 15360
          %9161 = vst.msk [vmem:[%s5] sm:$0xff] %vm9160, %v9158
        $region60: #{critic_heads.1} parent=39 // pred_fallthru
          _
        // Predicated region
        $region61: #{critic_heads.1} parent=39 // pred_check
          %p9162 = pneg %p148
        $region62: #{critic_heads.1} parent=39 // pred_check_branch
          %9164 = sbr.rel (%p9162) target = $region64
        $region63: #{critic_heads.1} parent=39 // pred_region
          _
        $region64: #{critic_heads.1} parent=39 // pred_fallthru
          _
        // Predicated region
        $region65: #{critic_heads.1} parent=39 // pred_check
          %p9165 = pneg %p148
        $region66: #{critic_heads.1} parent=39 // pred_check_branch
          %9167 = sbr.rel (%p9165) target = $region68
        $region67: #{critic_heads.1} parent=39 // pred_region
          _
        $region68: #{critic_heads.1} parent=39 // pred_fallthru
          _
      $region40: #{critic_heads.1} parent=5 // pred_fallthru
        _
      %p9168 = scmp.le.s32.totalorder 2, %s15
      // Predicated region
      $region69: #{critic_heads.1} parent=5 // pred_check
        %p9169 = pneg %p9168
      $region70: #{critic_heads.1} parent=5 // pred_check_branch
        %9171 = sbr.rel (%p9169) target = $region72
      $region71: #{critic_heads.1} parent=5 // pred_region
        %s9172 = ssub.s32 %s15, 2
      $region72: #{critic_heads.1} parent=5 // pred_fallthru
        _
    $region6: #{critic_heads.1} parent=1 // loop_footer
      %s19 = sadd.s32 1, %s15
    $region7: #{critic_heads.1} parent=1 // loop_footer_branch
      %14 = sbr.rel target = $region3
    $region8: #{critic_heads.1} parent=1 // loop_exit
      _
    %9173 = vsyncpa [#allocation4], 1
    %s9174 = scalar_lea.sflag [#allocation4], 1
    %9175 = vsyncpa %s9174, 1
    %9176 = vsyncpa [#allocation6], 1

</llo_original>
